<compile_context>
chip_gen: v7x
topology: tpu7x:2x2x1
jax: 0.10.0
libtpu: 0.0.40
codegen_flags: <defaults>
</compile_context>

<pallas_src>
import math
import functools

import jax
import jax.numpy as jnp
from jax.experimental import pallas as pl
from jax.experimental.pallas import tpu as pltpu


# ----------------------------------------------------------------------------
# helpers
# ----------------------------------------------------------------------------
def _silu(x):
    # x * sigmoid(x); approx reciprocal rides the otherwise-idle EUP slot.
    return x * pl.reciprocal(1.0 + jnp.exp(-x), approx=True)


def _softplus(x):
    return jnp.where(x > 20.0, x, jnp.log(1.0 + jnp.exp(jnp.minimum(x, 20.0))))


def _round_up(x, m):
    return ((x + m - 1) // m) * m


def _pick_rows(m, cap=512):
    """Row-block size (multiple of 8) and padded row count for M-tiled kernels."""
    cap = max(8, min((cap // 8) * 8, _round_up(m, 8)))
    for bm in range(cap, 7, -8):
        if m % bm == 0:
            return bm, m
    return cap, _round_up(m, cap)


def _pick_scan_tl(L, n_state, d_inner, budget_bytes=8 << 20):
    """L-chunk (multiple of 8) for the scan + padded L + per-timestep VMEM bytes."""
    lane_c = _round_up(d_inner, 128)
    per_l = 3 * n_state * d_inner * 4                        # dA / Bx / Cx scratches
    per_l += 2 * 2 * _round_up(n_state, 8) * 128 * 4         # B/C (N,1) blocks, x2 buf
    per_l += 2 * 2 * 8 * lane_c * 4                          # u/delta (1,C) blocks, x2 buf
    per_l += 3 * 2 * d_inner * 4                             # dense u / y blocks
    cap = max(8, budget_bytes // per_l)
    cap = (cap // 8) * 8
    l_pad = _round_up(L, 8)
    for tl in range(min(cap, l_pad), 7, -8):
        if l_pad % tl == 0:
            return tl, l_pad, per_l
    return 8, l_pad, per_l


# ----------------------------------------------------------------------------
# Kernel 1: in_proj -> (x, z) as two outputs.  bf16 cast in-kernel, f32 accum.
# ----------------------------------------------------------------------------
def _in_proj_kernel(x_ref, wx_ref, wz_ref, xc_ref, z_ref):
    xb = x_ref[...].astype(jnp.bfloat16)
    xc_ref[...] = jnp.dot(xb, wx_ref[...], preferred_element_type=jnp.float32)
    z_ref[...] = jnp.dot(xb, wz_ref[...], preferred_element_type=jnp.float32)


def in_proj(x2d, w_in_x, w_in_z):
    M, Dm = x2d.shape
    Din = w_in_x.shape[1]
    bm, mp = _pick_rows(M)
    xp = x2d if mp == M else jnp.pad(x2d, ((0, mp - M), (0, 0)))
    xc, z = pl.pallas_call(
        _in_proj_kernel,
        grid=(mp // bm,),
        in_specs=[pl.BlockSpec((bm, Dm), lambda i: (i, 0)),
                  pl.BlockSpec((Dm, Din), lambda i: (0, 0)),
                  pl.BlockSpec((Dm, Din), lambda i: (0, 0))],
        out_specs=[pl.BlockSpec((bm, Din), lambda i: (i, 0)),
                   pl.BlockSpec((bm, Din), lambda i: (i, 0))],
        out_shape=[jax.ShapeDtypeStruct((mp, Din), jnp.float32),
                   jax.ShapeDtypeStruct((mp, Din), jnp.float32)],
        compiler_params=pltpu.CompilerParams(dimension_semantics=("parallel",)),
    )(xp, w_in_x, w_in_z)
    if mp != M:
        xc, z = xc[:M], z[:M]
    return xc, z


# ----------------------------------------------------------------------------
# Kernel 2: depthwise KxK conv (pad=(K-1)//2, groups=C) + bias + SiLU (NHWC).
#   Halo built in a VMEM scratch (no HBM pad roundtrip).
# ----------------------------------------------------------------------------
def _dwconv_silu_kernel(x_ref, w_ref, b_ref, o_ref, xp_ref):
    H, W, C = x_ref.shape
    K = w_ref.shape[0]
    p = (K - 1) // 2
    xp_ref[...] = jnp.zeros_like(xp_ref)          # zero halo
    xp_ref[p:p + H, p:p + W, :] = x_ref[...]      # interior
    w = w_ref[...]
    acc = jnp.zeros((H, W, C), jnp.float32)
    for kh in range(K):
        for kw in range(K):
            acc = acc + xp_ref[kh:kh + H, kw:kw + W, :] * w[kh:kh + 1, kw:kw + 1, :]
    acc = acc + b_ref[...]
    o_ref[...] = _silu(acc)


def dwconv_silu(x_nhwc, w_kkc, bias_1c):
    B, H, W, C = x_nhwc.shape
    k = w_kkc.shape[0]
    p = (k - 1) // 2
    return pl.pallas_call(
        _dwconv_silu_kernel,
        grid=(B,),
        in_specs=[
            pl.BlockSpec((None, H, W, C), lambda b: (b, 0, 0, 0)),
            pl.BlockSpec((k, k, C), lambda b: (0, 0, 0)),
            pl.BlockSpec((1, C), lambda b: (0, 0)),
        ],
        out_specs=pl.BlockSpec((None, H, W, C), lambda b: (b, 0, 0, 0)),
        out_shape=jax.ShapeDtypeStruct((B, H, W, C), jnp.float32),
        scratch_shapes=[pltpu.VMEM((H + 2 * p, W + 2 * p, C), jnp.float32)],
        compiler_params=pltpu.CompilerParams(dimension_semantics=("parallel",)),
    )(x_nhwc, w_kkc, bias_1c)


# ----------------------------------------------------------------------------
# Kernel 3: x_proj with dt_proj folded into the weight at init:
#   delta = softplus(u @ W_dt_fold + dt_bias);  B = u @ W_b;  C = u @ W_c
# ----------------------------------------------------------------------------
def _xproj_kernel(u_ref, wdt_ref, wb_ref, wc_ref, dtb_ref, delta_ref, bs_ref, cs_ref):
    ub = u_ref[...].astype(jnp.bfloat16)
    d_pre = jnp.dot(ub, wdt_ref[...], preferred_element_type=jnp.float32) + dtb_ref[...]
    delta_ref[...] = _softplus(d_pre)
    bs_ref[...] = jnp.dot(ub, wb_ref[...], preferred_element_type=jnp.float32)
    cs_ref[...] = jnp.dot(ub, wc_ref[...], preferred_element_type=jnp.float32)


def xproj(u2, w_dt, w_b, w_c, dt_bias):
    M, C = u2.shape
    N = w_b.shape[1]
    bm, mp = _pick_rows(M)
    up = u2 if mp == M else jnp.pad(u2, ((0, mp - M), (0, 0)))
    delta, bs, cs = pl.pallas_call(
        _xproj_kernel,
        grid=(mp // bm,),
        in_specs=[
            pl.BlockSpec((bm, C), lambda i: (i, 0)),
            pl.BlockSpec((C, C), lambda i: (0, 0)),
            pl.BlockSpec((C, N), lambda i: (0, 0)),
            pl.BlockSpec((C, N), lambda i: (0, 0)),
            pl.BlockSpec((1, C), lambda i: (0, 0)),
        ],
        out_specs=[
            pl.BlockSpec((bm, C), lambda i: (i, 0)),
            pl.BlockSpec((bm, N), lambda i: (i, 0)),
            pl.BlockSpec((bm, N), lambda i: (i, 0)),
        ],
        out_shape=[
            jax.ShapeDtypeStruct((mp, C), jnp.float32),
            jax.ShapeDtypeStruct((mp, N), jnp.float32),
            jax.ShapeDtypeStruct((mp, N), jnp.float32),
        ],
        compiler_params=pltpu.CompilerParams(dimension_semantics=("parallel",)),
    )(up, w_dt, w_b, w_c, dt_bias)
    if mp != M:
        delta, bs, cs = delta[:M], bs[:M], cs[:M]
    return delta, bs, cs


# ----------------------------------------------------------------------------
# Kernel 4: selective scan.  Grid = (batch "parallel", L-chunk "arbitrary").
#   Per chunk, everything not depending on h is built in bulk into (tl, N, Din)
#   scratches; the serial loop is h = dA[l]*h + Bx[l]; y[l] = sum_n Cx[l]*h,
#   with y rows stored 8 at a time.  D*u is added in one bulk op at the end.
# ----------------------------------------------------------------------------
def _scan_kernel(u_ref, u3_ref, dl3_ref, bs_ref, cs_ref, a_ref, d_ref, y_ref,
                 da_ref, bsx_ref, csx_ref, h_ref, *, n_group):
    tl, n_state, c = da_ref.shape

    @pl.when(pl.program_id(1) == 0)
    def _init():
        h_ref[...] = jnp.zeros_like(h_ref)

    # ---- bulk per-chunk prologue (independent of the recurrent state) ----
    dl3 = dl3_ref[...]                                       # (tl, 1, C)
    da_ref[...] = jnp.exp(dl3 * a_ref[...])                  # (tl, N, C)
    bsx_ref[...] = bs_ref[...] * (dl3 * u3_ref[...])         # (tl,N,1)*(tl,1,C)
    csx_ref[...] = jnp.broadcast_to(cs_ref[...], (tl, n_state, c))

    # ---- serial recurrence: h = dA*h + Bu ; y = <C, h> ----
    def group_body(g, h):
        base = pl.multiple_of(g * n_group, n_group)
        rows = []
        for j in range(n_group):
            h = da_ref[base + j] * h + bsx_ref[base + j]
            rows.append(jnp.sum(csx_ref[base + j] * h, axis=0, keepdims=True))
        y_ref[pl.ds(base, n_group), :] = jnp.concatenate(rows, axis=0)
        return h

    h_ref[...] = jax.lax.fori_loop(0, tl // n_group, group_body, h_ref[...])

    # skip connection D*u for the whole chunk in one bulk op
    y_ref[...] = y_ref[...] + d_ref[...] * u_ref[...]


def ss2d_scan(u_bld, delta_bld, bs_bln, cs_bln, a_nc, d_1c):
    B, L, C = u_bld.shape
    N = a_nc.shape[0]
    tl, lp, per_l = _pick_scan_tl(L, N, C)
    if lp != L:
        pad = ((0, 0), (0, lp - L), (0, 0))
        u_bld = jnp.pad(u_bld, pad)
        delta_bld = jnp.pad(delta_bld, pad)
        bs_bln = jnp.pad(bs_bln, pad)
        cs_bln = jnp.pad(cs_bln, pad)
    # free, contiguity-preserving views for broadcast-friendly in-kernel shapes
    u4 = u_bld.reshape(B, lp, 1, C)
    dl4 = delta_bld.reshape(B, lp, 1, C)
    bs4 = bs_bln.reshape(B, lp, N, 1)
    cs4 = cs_bln.reshape(B, lp, N, 1)
    a3 = a_nc.reshape(1, N, C)

    n_group = 8
    vmem_limit = int(min(48 * 1024 * 1024, per_l * tl + 8 * 1024 * 1024))
    kern = functools.partial(_scan_kernel, n_group=n_group)
    y = pl.pallas_call(
        kern,
        grid=(B, lp // tl),
        in_specs=[
            pl.BlockSpec((None, tl, C), lambda b, i: (b, i, 0)),        # u (dense)
            pl.BlockSpec((None, tl, 1, C), lambda b, i: (b, i, 0, 0)),  # u (bcastable)
            pl.BlockSpec((None, tl, 1, C), lambda b, i: (b, i, 0, 0)),  # delta
            pl.BlockSpec((None, tl, N, 1), lambda b, i: (b, i, 0, 0)),  # B_l
            pl.BlockSpec((None, tl, N, 1), lambda b, i: (b, i, 0, 0)),  # C_l
            pl.BlockSpec((1, N, C), lambda b, i: (0, 0, 0)),            # A (negative)
            pl.BlockSpec((1, C), lambda b, i: (0, 0)),                  # D
        ],
        out_specs=pl.BlockSpec((None, tl, C), lambda b, i: (b, i, 0)),
        out_shape=jax.ShapeDtypeStruct((B, lp, C), jnp.float32),
        scratch_shapes=[
            pltpu.VMEM((tl, N, C), jnp.float32),   # dA
            pltpu.VMEM((tl, N, C), jnp.float32),   # B_l * (delta*u), lane-expanded
            pltpu.VMEM((tl, N, C), jnp.float32),   # C_l, lane-expanded
            pltpu.VMEM((N, C), jnp.float32),       # carried state h
        ],
        compiler_params=pltpu.CompilerParams(
            dimension_semantics=("parallel", "arbitrary"),
            vmem_limit_bytes=vmem_limit,
        ),
    )(u_bld, u4, dl4, bs4, cs4, a3, d_1c)
    return y[:, :L] if lp != L else y


# ----------------------------------------------------------------------------
# Kernel 5: LayerNorm(y) * SiLU(z) then out_proj (bf16 MXU), M-tiled grid
# ----------------------------------------------------------------------------
def _norm_gate_proj_kernel(y_ref, z_ref, lnw_ref, lnb_ref, wo_ref, o_ref, *, eps):
    y = y_ref[...]
    mu = jnp.mean(y, axis=-1, keepdims=True)
    var = jnp.mean(jnp.square(y - mu), axis=-1, keepdims=True)
    yn = (y - mu) * jax.lax.rsqrt(var + eps)
    yn = yn * lnw_ref[...] + lnb_ref[...]
    g = _silu(z_ref[...])
    o_ref[...] = jnp.dot((yn * g).astype(jnp.bfloat16), wo_ref[...],
                         preferred_element_type=jnp.float32)


def norm_gate_proj(y2d, z2d, ln_w, ln_b, w_out, eps=1e-5):
    M, C = y2d.shape
    Dm = w_out.shape[1]
    bm, mp = _pick_rows(M)
    if mp != M:
        y2d = jnp.pad(y2d, ((0, mp - M), (0, 0)))
        z2d = jnp.pad(z2d, ((0, mp - M), (0, 0)))
    kern = functools.partial(_norm_gate_proj_kernel, eps=eps)
    out = pl.pallas_call(
        kern,
        grid=(mp // bm,),
        in_specs=[
            pl.BlockSpec((bm, C), lambda i: (i, 0)),
            pl.BlockSpec((bm, C), lambda i: (i, 0)),
            pl.BlockSpec((1, C), lambda i: (0, 0)),
            pl.BlockSpec((1, C), lambda i: (0, 0)),
            pl.BlockSpec((C, Dm), lambda i: (0, 0)),
        ],
        out_specs=pl.BlockSpec((bm, Dm), lambda i: (i, 0)),
        out_shape=jax.ShapeDtypeStruct((mp, Dm), jnp.float32),
        compiler_params=pltpu.CompilerParams(dimension_semantics=("parallel",)),
    )(y2d, z2d, ln_w, ln_b, w_out)
    return out[:M] if mp != M else out


# ----------------------------------------------------------------------------
# Parameters (deterministic, shapes follow SS2D_K1.__init__)
# ----------------------------------------------------------------------------
def init_params(key, d_model, d_state=16, d_conv=3, expand=1,
                dt_min=0.001, dt_max=0.1, dt_init_floor=1e-4):
    d_inner = int(expand * d_model)
    dt_rank = math.ceil(d_model / 16)
    R, N = dt_rank, d_state
    ks = jax.random.split(key, 7)

    k_in = 1.0 / math.sqrt(d_model)
    in_proj_w = jax.random.uniform(ks[0], (2 * d_inner, d_model),
                                   minval=-k_in, maxval=k_in)
    k_conv = 1.0 / math.sqrt(d_conv * d_conv)
    conv_w = jax.random.uniform(ks[1], (d_inner, 1, d_conv, d_conv),
                                minval=-k_conv, maxval=k_conv)
    conv_b = jax.random.uniform(ks[2], (d_inner,), minval=-k_conv, maxval=k_conv)
    k_x = 1.0 / math.sqrt(d_inner)
    x_proj_w = jax.random.uniform(ks[3], (R + 2 * N, d_inner),
                                  minval=-k_x, maxval=k_x)
    dt_std = R ** -0.5
    dt_proj_w = jax.random.uniform(ks[4], (d_inner, R), minval=-dt_std, maxval=dt_std)
    dt = jnp.exp(jax.random.uniform(ks[5], (d_inner,))
                 * (math.log(dt_max) - math.log(dt_min)) + math.log(dt_min))
    dt = jnp.maximum(dt, dt_init_floor)
    inv_dt = dt + jnp.log(-jnp.expm1(-dt))                           # dt_projs_bias
    A_log = jnp.log(jnp.broadcast_to(
        jnp.arange(1, N + 1, dtype=jnp.float32), (d_inner, N)))      # A_logs
    Ds = jnp.ones((d_inner,), jnp.float32)
    out_proj_w = jax.random.uniform(ks[6], (d_model, d_inner), minval=-k_x, maxval=k_x)

    # fold dt_proj into x_proj (associativity): delta_pre = u @ (Wx[:R].T @ Wdt.T)
    w_dt_fold = x_proj_w[:R, :].T @ dt_proj_w.T                      # (Din, Din), f32

    f32, bf16 = jnp.float32, jnp.bfloat16
    return {
        # bf16 MXU weights (f32 accumulation in-kernel)
        "w_in_x": in_proj_w[:d_inner, :].T.astype(bf16),             # (Dm, Din)
        "w_in_z": in_proj_w[d_inner:, :].T.astype(bf16),             # (Dm, Din)
        "w_dt": w_dt_fold.astype(bf16),                              # (Din, Din)
        "w_b": x_proj_w[R:R + N, :].T.astype(bf16),                  # (Din, N)
        "w_c": x_proj_w[R + N:, :].T.astype(bf16),                   # (Din, N)
        "w_out": out_proj_w.T.astype(bf16),                          # (Din, Dm)
        # f32 params
        "conv_w": jnp.transpose(conv_w[:, 0], (1, 2, 0)).astype(f32),  # (k, k, Din)
        "conv_b": conv_b.reshape(1, d_inner).astype(f32),
        "A_neg": (-jnp.exp(A_log)).T.astype(f32),                    # (N, Din)
        "D": Ds.reshape(1, d_inner).astype(f32),
        "dt_bias": inv_dt.reshape(1, d_inner).astype(f32),
        "ln_w": jnp.ones((1, d_inner), f32),
        "ln_b": jnp.zeros((1, d_inner), f32),
    }


# ----------------------------------------------------------------------------
# Full forward.  All glue reshapes are contiguity-preserving (no HBM transposes).
# ----------------------------------------------------------------------------
def ss2d_k1_forward(x, p):
    B, H, W, Dm = x.shape
    Din = p["conv_w"].shape[-1]
    N = p["A_neg"].shape[0]
    L = H * W
    M = B * L

    # 1) in_proj -> x branch and gate z, both (B*L, Din)
    xc2, z2 = in_proj(x.reshape(M, Dm), p["w_in_x"], p["w_in_z"])

    # 2) depthwise conv + bias + SiLU (NHWC, halo built in VMEM)
    u = dwconv_silu(xc2.reshape(B, H, W, Din), p["conv_w"], p["conv_b"])
    u_bld = u.reshape(B, L, Din)

    # 3) x_proj (dt_proj folded) -> softplus(delta), B_l, C_l
    delta2, bs2, cs2 = xproj(u_bld.reshape(M, Din),
                             p["w_dt"], p["w_b"], p["w_c"], p["dt_bias"])

    # 4) selective scan: batch "parallel", L-chunked "arbitrary", state in VMEM
    y_bld = ss2d_scan(u_bld,
                      delta2.reshape(B, L, Din),
                      bs2.reshape(B, L, N),
                      cs2.reshape(B, L, N),
                      p["A_neg"], p["D"])

    # 5) LayerNorm + SiLU(z) gate + out_proj
    out = norm_gate_proj(y_bld.reshape(M, Din), z2,
                         p["ln_w"], p["ln_b"], p["w_out"])
    # TODO(synk): nn.Dropout(p=0.5) skipped (eval-mode identity).
    return out.reshape(B, H, W, Dm)


if __name__ == "__main__":
    key = jax.random.PRNGKey(0)
    kx, kp = jax.random.split(key)

    B, H, W, d_model = 2, 8, 8, 32       # d_inner = 32, d_state = 16, dt_rank = 2
    x = jax.random.normal(kx, (B, H, W, d_model), dtype=jnp.float32)
    params = init_params(kp, d_model)

    out = jax.jit(ss2d_k1_forward)(x, params)
    out = jax.block_until_ready(out)
    assert out.shape == (B, H, W, d_model)
    assert out.dtype == jnp.float32
    print("KERNEL_OK")
</pallas_src>

<mosaic_0001>
module attributes {stable_mosaic.version = 11 : i64} {
  func.func @_in_proj_kernel(%arg0: i32, %arg1: memref<128x32xf32, #tpu.memory_space<vmem>>, %arg2: memref<32x32xbf16, #tpu.memory_space<vmem>>, %arg3: memref<32x32xbf16, #tpu.memory_space<vmem>>, %arg4: memref<128x32xf32, #tpu.memory_space<vmem>>, %arg5: memref<128x32xf32, #tpu.memory_space<vmem>>) attributes {dimension_semantics = [#tpu.dimension_semantics<parallel>], iteration_bounds = array<i64: 1>, scalar_prefetch = 0 : i64, scratch_operands = 0 : i64, tpu.core_type = #tpu.core_type<tc>, window_params = [{transform_indices = @transform_0, window_bounds = array<i64: 128, 32>}, {pipeline_mode = #tpu.pipeline_mode<synchronous>, transform_indices = @transform_1, window_bounds = array<i64: 32, 32>}, {pipeline_mode = #tpu.pipeline_mode<synchronous>, transform_indices = @transform_2, window_bounds = array<i64: 32, 32>}, {transform_indices = @transform_3, window_bounds = array<i64: 128, 32>}, {transform_indices = @transform_4, window_bounds = array<i64: 128, 32>}]} {
    %c0 = arith.constant 0 : index
    %c0_0 = arith.constant 0 : index
    %0 = vector.load %arg1[%c0, %c0_0] : memref<128x32xf32, #tpu.memory_space<vmem>>, vector<128x32xf32>
    %1 = arith.truncf %0 : vector<128x32xf32> to vector<128x32xbf16>
    %c0_1 = arith.constant 0 : index
    %c0_2 = arith.constant 0 : index
    %2 = vector.load %arg2[%c0_1, %c0_2] : memref<32x32xbf16, #tpu.memory_space<vmem>>, vector<32x32xbf16>
    %cst = arith.constant dense<0.000000e+00> : vector<128x32xf32>
    %3 = tpu.matmul %1, %2, %cst {dimension_numbers = #tpu.dot_dimension_numbers<[1], [0], [0], [1], [0, 0, 1, 1], [], []>} : vector<128x32xbf16>, vector<32x32xbf16>, vector<128x32xf32> -> vector<128x32xf32>
    %c0_3 = arith.constant 0 : index
    %c0_4 = arith.constant 0 : index
    %4 = vector.load %arg4[%c0_3, %c0_4] : memref<128x32xf32, #tpu.memory_space<vmem>>, vector<128x32xf32>
    tpu.vector_store %arg4[%c0_3, %c0_4], %3 {strides = array<i32>} : memref<128x32xf32, #tpu.memory_space<vmem>>, vector<128x32xf32>,
    %c0_5 = arith.constant 0 : index
    %c0_6 = arith.constant 0 : index
    %5 = vector.load %arg3[%c0_5, %c0_6] : memref<32x32xbf16, #tpu.memory_space<vmem>>, vector<32x32xbf16>
    %cst_7 = arith.constant dense<0.000000e+00> : vector<128x32xf32>
    %6 = tpu.matmul %1, %5, %cst_7 {dimension_numbers = #tpu.dot_dimension_numbers<[1], [0], [0], [1], [0, 0, 1, 1], [], []>} : vector<128x32xbf16>, vector<32x32xbf16>, vector<128x32xf32> -> vector<128x32xf32>
    %c0_8 = arith.constant 0 : index
    %c0_9 = arith.constant 0 : index
    %7 = vector.load %arg5[%c0_8, %c0_9] : memref<128x32xf32, #tpu.memory_space<vmem>>, vector<128x32xf32>
    tpu.vector_store %arg5[%c0_8, %c0_9], %6 {strides = array<i32>} : memref<128x32xf32, #tpu.memory_space<vmem>>, vector<128x32xf32>,
    return
  }
  func.func @transform_0(%arg0: i32) -> (i32, i32) {
    %c0_i32 = arith.constant 0 : i32
    %c0_i32_0 = arith.constant 0 : i32
    return %arg0, %c0_i32 : i32, i32
  }
  func.func @transform_1(%arg0: i32) -> (i32, i32) {
    %c0_i32 = arith.constant 0 : i32
    %c0_i32_0 = arith.constant 0 : i32
    %c0_i32_1 = arith.constant 0 : i32
    return %c0_i32, %c0_i32_0 : i32, i32
  }
  func.func @transform_2(%arg0: i32) -> (i32, i32) {
    %c0_i32 = arith.constant 0 : i32
    %c0_i32_0 = arith.constant 0 : i32
    %c0_i32_1 = arith.constant 0 : i32
    return %c0_i32, %c0_i32_0 : i32, i32
  }
  func.func @transform_3(%arg0: i32) -> (i32, i32) {
    %c0_i32 = arith.constant 0 : i32
    %c0_i32_0 = arith.constant 0 : i32
    return %arg0, %c0_i32 : i32, i32
  }
  func.func @transform_4(%arg0: i32) -> (i32, i32) {
    %c0_i32 = arith.constant 0 : i32
    %c0_i32_0 = arith.constant 0 : i32
    return %arg0, %c0_i32 : i32, i32
  }
}

module attributes {stable_mosaic.version = 11 : i64} {
  func.func @_xproj_kernel(%arg0: i32, %arg1: memref<128x32xf32, #tpu.memory_space<vmem>>, %arg2: memref<32x32xbf16, #tpu.memory_space<vmem>>, %arg3: memref<32x16xbf16, #tpu.memory_space<vmem>>, %arg4: memref<32x16xbf16, #tpu.memory_space<vmem>>, %arg5: memref<1x32xf32, #tpu.memory_space<vmem>>, %arg6: memref<128x32xf32, #tpu.memory_space<vmem>>, %arg7: memref<128x16xf32, #tpu.memory_space<vmem>>, %arg8: memref<128x16xf32, #tpu.memory_space<vmem>>) attributes {dimension_semantics = [#tpu.dimension_semantics<parallel>], iteration_bounds = array<i64: 1>, scalar_prefetch = 0 : i64, scratch_operands = 0 : i64, tpu.core_type = #tpu.core_type<tc>, window_params = [{transform_indices = @transform_0, window_bounds = array<i64: 128, 32>}, {pipeline_mode = #tpu.pipeline_mode<synchronous>, transform_indices = @transform_1, window_bounds = array<i64: 32, 32>}, {pipeline_mode = #tpu.pipeline_mode<synchronous>, transform_indices = @transform_2, window_bounds = array<i64: 32, 16>}, {pipeline_mode = #tpu.pipeline_mode<synchronous>, transform_indices = @transform_3, window_bounds = array<i64: 32, 16>}, {pipeline_mode = #tpu.pipeline_mode<synchronous>, transform_indices = @transform_4, window_bounds = array<i64: 1, 32>}, {transform_indices = @transform_5, window_bounds = array<i64: 128, 32>}, {transform_indices = @transform_6, window_bounds = array<i64: 128, 16>}, {transform_indices = @transform_7, window_bounds = array<i64: 128, 16>}]} {
    %c0 = arith.constant 0 : index
    %c0_0 = arith.constant 0 : index
    %0 = vector.load %arg1[%c0, %c0_0] : memref<128x32xf32, #tpu.memory_space<vmem>>, vector<128x32xf32>
    %1 = arith.truncf %0 : vector<128x32xf32> to vector<128x32xbf16>
    %c0_1 = arith.constant 0 : index
    %c0_2 = arith.constant 0 : index
    %2 = vector.load %arg2[%c0_1, %c0_2] : memref<32x32xbf16, #tpu.memory_space<vmem>>, vector<32x32xbf16>
    %cst = arith.constant dense<0.000000e+00> : vector<128x32xf32>
    %3 = tpu.matmul %1, %2, %cst {dimension_numbers = #tpu.dot_dimension_numbers<[1], [0], [0], [1], [0, 0, 1, 1], [], []>} : vector<128x32xbf16>, vector<32x32xbf16>, vector<128x32xf32> -> vector<128x32xf32>
    %c0_3 = arith.constant 0 : index
    %c0_4 = arith.constant 0 : index
    %4 = vector.load %arg5[%c0_3, %c0_4] : memref<1x32xf32, #tpu.memory_space<vmem>>, vector<1x32xf32>
    %5 = vector.broadcast %4 : vector<1x32xf32> to vector<128x32xf32>
    %6 = arith.addf %3, %5 : vector<128x32xf32>
    %cst_5 = arith.constant 2.000000e+01 : f32
    %7 = vector.broadcast %cst_5 : f32 to vector<128x32xf32>
    %8 = arith.cmpf ogt, %6, %7 : vector<128x32xf32>
    %cst_6 = arith.constant 2.000000e+01 : f32
    %9 = vector.broadcast %cst_6 : f32 to vector<128x32xf32>
    %10 = arith.minimumf %6, %9 : vector<128x32xf32>
    %11 = math.exp %10 : vector<128x32xf32>
    %cst_7 = arith.constant 1.000000e+00 : f32
    %12 = vector.broadcast %cst_7 : f32 to vector<128x32xf32>
    %13 = arith.addf %12, %11 : vector<128x32xf32>
    %14 = math.log %13 : vector<128x32xf32>
    %15 = arith.select %8, %6, %14 : vector<128x32xi1>, vector<128x32xf32>
    %c0_8 = arith.constant 0 : index
    %c0_9 = arith.constant 0 : index
    %16 = vector.load %arg6[%c0_8, %c0_9] : memref<128x32xf32, #tpu.memory_space<vmem>>, vector<128x32xf32>
    tpu.vector_store %arg6[%c0_8, %c0_9], %15 {strides = array<i32>} : memref<128x32xf32, #tpu.memory_space<vmem>>, vector<128x32xf32>,
    %c0_10 = arith.constant 0 : index
    %c0_11 = arith.constant 0 : index
    %17 = vector.load %arg3[%c0_10, %c0_11] : memref<32x16xbf16, #tpu.memory_space<vmem>>, vector<32x16xbf16>
    %cst_12 = arith.constant dense<0.000000e+00> : vector<128x16xf32>
    %18 = tpu.matmul %1, %17, %cst_12 {dimension_numbers = #tpu.dot_dimension_numbers<[1], [0], [0], [1], [0, 0, 1, 1], [], []>} : vector<128x32xbf16>, vector<32x16xbf16>, vector<128x16xf32> -> vector<128x16xf32>
    %c0_13 = arith.constant 0 : index
    %c0_14 = arith.constant 0 : index
    %19 = vector.load %arg7[%c0_13, %c0_14] : memref<128x16xf32, #tpu.memory_space<vmem>>, vector<128x16xf32>
    tpu.vector_store %arg7[%c0_13, %c0_14], %18 {strides = array<i32>} : memref<128x16xf32, #tpu.memory_space<vmem>>, vector<128x16xf32>,
    %c0_15 = arith.constant 0 : index
    %c0_16 = arith.constant 0 : index
    %20 = vector.load %arg4[%c0_15, %c0_16] : memref<32x16xbf16, #tpu.memory_space<vmem>>, vector<32x16xbf16>
    %cst_17 = arith.constant dense<0.000000e+00> : vector<128x16xf32>
    %21 = tpu.matmul %1, %20, %cst_17 {dimension_numbers = #tpu.dot_dimension_numbers<[1], [0], [0], [1], [0, 0, 1, 1], [], []>} : vector<128x32xbf16>, vector<32x16xbf16>, vector<128x16xf32> -> vector<128x16xf32>
    %c0_18 = arith.constant 0 : index
    %c0_19 = arith.constant 0 : index
    %22 = vector.load %arg8[%c0_18, %c0_19] : memref<128x16xf32, #tpu.memory_space<vmem>>, vector<128x16xf32>
    tpu.vector_store %arg8[%c0_18, %c0_19], %21 {strides = array<i32>} : memref<128x16xf32, #tpu.memory_space<vmem>>, vector<128x16xf32>,
    return
  }
  func.func @transform_0(%arg0: i32) -> (i32, i32) {
    %c0_i32 = arith.constant 0 : i32
    %c0_i32_0 = arith.constant 0 : i32
    return %arg0, %c0_i32 : i32, i32
  }
  func.func @transform_1(%arg0: i32) -> (i32, i32) {
    %c0_i32 = arith.constant 0 : i32
    %c0_i32_0 = arith.constant 0 : i32
    %c0_i32_1 = arith.constant 0 : i32
    return %c0_i32, %c0_i32_0 : i32, i32
  }
  func.func @transform_2(%arg0: i32) -> (i32, i32) {
    %c0_i32 = arith.constant 0 : i32
    %c0_i32_0 = arith.constant 0 : i32
    %c0_i32_1 = arith.constant 0 : i32
    return %c0_i32, %c0_i32_0 : i32, i32
  }
  func.func @transform_3(%arg0: i32) -> (i32, i32) {
    %c0_i32 = arith.constant 0 : i32
    %c0_i32_0 = arith.constant 0 : i32
    %c0_i32_1 = arith.constant 0 : i32
    return %c0_i32, %c0_i32_0 : i32, i32
  }
  func.func @transform_4(%arg0: i32) -> (i32, i32) {
    %c0_i32 = arith.constant 0 : i32
    %c0_i32_0 = arith.constant 0 : i32
    %c0_i32_1 = arith.constant 0 : i32
    return %c0_i32, %c0_i32_0 : i32, i32
  }
  func.func @transform_5(%arg0: i32) -> (i32, i32) {
    %c0_i32 = arith.constant 0 : i32
    %c0_i32_0 = arith.constant 0 : i32
    return %arg0, %c0_i32 : i32, i32
  }
  func.func @transform_6(%arg0: i32) -> (i32, i32) {
    %c0_i32 = arith.constant 0 : i32
    %c0_i32_0 = arith.constant 0 : i32
    return %arg0, %c0_i32 : i32, i32
  }
  func.func @transform_7(%arg0: i32) -> (i32, i32) {
    %c0_i32 = arith.constant 0 : i32
    %c0_i32_0 = arith.constant 0 : i32
    return %arg0, %c0_i32 : i32, i32
  }
}

module attributes {stable_mosaic.version = 11 : i64} {
  func.func @_dwconv_silu_kernel(%arg0: i32, %arg1: memref<1x8x8x32xf32, #tpu.memory_space<vmem>>, %arg2: memref<3x3x32xf32, #tpu.memory_space<vmem>>, %arg3: memref<1x32xf32, #tpu.memory_space<vmem>>, %arg4: memref<1x8x8x32xf32, #tpu.memory_space<vmem>>, %arg5: memref<10x10x32xf32, #tpu.memory_space<vmem>>) attributes {dimension_semantics = [#tpu.dimension_semantics<parallel>], iteration_bounds = array<i64: 2>, scalar_prefetch = 0 : i64, scratch_operands = 1 : i64, tpu.core_type = #tpu.core_type<tc>, window_params = [{transform_indices = @transform_0, window_bounds = array<i64: 1, 8, 8, 32>}, {pipeline_mode = #tpu.pipeline_mode<synchronous>, transform_indices = @transform_1, window_bounds = array<i64: 3, 3, 32>}, {pipeline_mode = #tpu.pipeline_mode<synchronous>, transform_indices = @transform_2, window_bounds = array<i64: 1, 32>}, {transform_indices = @transform_3, window_bounds = array<i64: 1, 8, 8, 32>}]} {
    %cst = arith.constant 0.000000e+00 : f32
    %0 = vector.broadcast %cst : f32 to vector<10x10x32xf32>
    %c0 = arith.constant 0 : index
    %c0_0 = arith.constant 0 : index
    %c0_1 = arith.constant 0 : index
    %1 = vector.load %arg5[%c0, %c0_0, %c0_1] : memref<10x10x32xf32, #tpu.memory_space<vmem>>, vector<10x10x32xf32>
    tpu.vector_store %arg5[%c0, %c0_0, %c0_1], %0 {strides = array<i32>} : memref<10x10x32xf32, #tpu.memory_space<vmem>>, vector<10x10x32xf32>,
    %c0_2 = arith.constant 0 : index
    %c0_3 = arith.constant 0 : index
    %c0_4 = arith.constant 0 : index
    %c0_5 = arith.constant 0 : index
    %2 = vector.load %arg1[%c0_2, %c0_3, %c0_4, %c0_5] : memref<1x8x8x32xf32, #tpu.memory_space<vmem>>, vector<1x8x8x32xf32>
    %3 = vector.shape_cast %2 : vector<1x8x8x32xf32> to vector<8x8x32xf32>
    %c1 = arith.constant 1 : index
    %c1_6 = arith.constant 1 : index
    %c0_7 = arith.constant 0 : index
    %4 = vector.load %arg5[%c1, %c1_6, %c0_7] : memref<10x10x32xf32, #tpu.memory_space<vmem>>, vector<8x8x32xf32>
    tpu.vector_store %arg5[%c1, %c1_6, %c0_7], %3 {strides = array<i32>} : memref<10x10x32xf32, #tpu.memory_space<vmem>>, vector<8x8x32xf32>,
    %c0_8 = arith.constant 0 : index
    %c0_9 = arith.constant 0 : index
    %c0_10 = arith.constant 0 : index
    %5 = vector.load %arg2[%c0_8, %c0_9, %c0_10] : memref<3x3x32xf32, #tpu.memory_space<vmem>>, vector<3x3x32xf32>
    %cst_11 = arith.constant 0.000000e+00 : f32
    %6 = vector.broadcast %cst_11 : f32 to vector<8x8x32xf32>
    %c0_12 = arith.constant 0 : index
    %c0_13 = arith.constant 0 : index
    %c0_14 = arith.constant 0 : index
    %7 = vector.load %arg5[%c0_12, %c0_13, %c0_14] : memref<10x10x32xf32, #tpu.memory_space<vmem>>, vector<8x8x32xf32>
    %8 = vector.extract_strided_slice %5 {offsets = [0, 0, 0], sizes = [1, 1, 32], strides = [1, 1, 1]} : vector<3x3x32xf32> to vector<1x1x32xf32>
    %9 = vector.broadcast %8 : vector<1x1x32xf32> to vector<8x8x32xf32>
    %10 = arith.mulf %7, %9 : vector<8x8x32xf32>
    %11 = arith.addf %6, %10 : vector<8x8x32xf32>
    %c0_15 = arith.constant 0 : index
    %c1_16 = arith.constant 1 : index
    %c0_17 = arith.constant 0 : index
    %12 = vector.load %arg5[%c0_15, %c1_16, %c0_17] : memref<10x10x32xf32, #tpu.memory_space<vmem>>, vector<8x8x32xf32>
    %13 = vector.extract_strided_slice %5 {offsets = [0, 1, 0], sizes = [1, 1, 32], strides = [1, 1, 1]} : vector<3x3x32xf32> to vector<1x1x32xf32>
    %14 = vector.broadcast %13 : vector<1x1x32xf32> to vector<8x8x32xf32>
    %15 = arith.mulf %12, %14 : vector<8x8x32xf32>
    %16 = arith.addf %11, %15 : vector<8x8x32xf32>
    %c0_18 = arith.constant 0 : index
    %c2 = arith.constant 2 : index
    %c0_19 = arith.constant 0 : index
    %17 = vector.load %arg5[%c0_18, %c2, %c0_19] : memref<10x10x32xf32, #tpu.memory_space<vmem>>, vector<8x8x32xf32>
    %18 = vector.extract_strided_slice %5 {offsets = [0, 2, 0], sizes = [1, 1, 32], strides = [1, 1, 1]} : vector<3x3x32xf32> to vector<1x1x32xf32>
    %19 = vector.broadcast %18 : vector<1x1x32xf32> to vector<8x8x32xf32>
    %20 = arith.mulf %17, %19 : vector<8x8x32xf32>
    %21 = arith.addf %16, %20 : vector<8x8x32xf32>
    %c1_20 = arith.constant 1 : index
    %c0_21 = arith.constant 0 : index
    %c0_22 = arith.constant 0 : index
    %22 = vector.load %arg5[%c1_20, %c0_21, %c0_22] : memref<10x10x32xf32, #tpu.memory_space<vmem>>, vector<8x8x32xf32>
    %23 = vector.extract_strided_slice %5 {offsets = [1, 0, 0], sizes = [1, 1, 32], strides = [1, 1, 1]} : vector<3x3x32xf32> to vector<1x1x32xf32>
    %24 = vector.broadcast %23 : vector<1x1x32xf32> to vector<8x8x32xf32>
    %25 = arith.mulf %22, %24 : vector<8x8x32xf32>
    %26 = arith.addf %21, %25 : vector<8x8x32xf32>
    %c1_23 = arith.constant 1 : index
    %c1_24 = arith.constant 1 : index
    %c0_25 = arith.constant 0 : index
    %27 = vector.load %arg5[%c1_23, %c1_24, %c0_25] : memref<10x10x32xf32, #tpu.memory_space<vmem>>, vector<8x8x32xf32>
    %28 = vector.extract_strided_slice %5 {offsets = [1, 1, 0], sizes = [1, 1, 32], strides = [1, 1, 1]} : vector<3x3x32xf32> to vector<1x1x32xf32>
    %29 = vector.broadcast %28 : vector<1x1x32xf32> to vector<8x8x32xf32>
    %30 = arith.mulf %27, %29 : vector<8x8x32xf32>
    %31 = arith.addf %26, %30 : vector<8x8x32xf32>
    %c1_26 = arith.constant 1 : index
    %c2_27 = arith.constant 2 : index
    %c0_28 = arith.constant 0 : index
    %32 = vector.load %arg5[%c1_26, %c2_27, %c0_28] : memref<10x10x32xf32, #tpu.memory_space<vmem>>, vector<8x8x32xf32>
    %33 = vector.extract_strided_slice %5 {offsets = [1, 2, 0], sizes = [1, 1, 32], strides = [1, 1, 1]} : vector<3x3x32xf32> to vector<1x1x32xf32>
    %34 = vector.broadcast %33 : vector<1x1x32xf32> to vector<8x8x32xf32>
    %35 = arith.mulf %32, %34 : vector<8x8x32xf32>
    %36 = arith.addf %31, %35 : vector<8x8x32xf32>
    %c2_29 = arith.constant 2 : index
    %c0_30 = arith.constant 0 : index
    %c0_31 = arith.constant 0 : index
    %37 = vector.load %arg5[%c2_29, %c0_30, %c0_31] : memref<10x10x32xf32, #tpu.memory_space<vmem>>, vector<8x8x32xf32>
    %38 = vector.extract_strided_slice %5 {offsets = [2, 0, 0], sizes = [1, 1, 32], strides = [1, 1, 1]} : vector<3x3x32xf32> to vector<1x1x32xf32>
    %39 = vector.broadcast %38 : vector<1x1x32xf32> to vector<8x8x32xf32>
    %40 = arith.mulf %37, %39 : vector<8x8x32xf32>
    %41 = arith.addf %36, %40 : vector<8x8x32xf32>
    %c2_32 = arith.constant 2 : index
    %c1_33 = arith.constant 1 : index
    %c0_34 = arith.constant 0 : index
    %42 = vector.load %arg5[%c2_32, %c1_33, %c0_34] : memref<10x10x32xf32, #tpu.memory_space<vmem>>, vector<8x8x32xf32>
    %43 = vector.extract_strided_slice %5 {offsets = [2, 1, 0], sizes = [1, 1, 32], strides = [1, 1, 1]} : vector<3x3x32xf32> to vector<1x1x32xf32>
    %44 = vector.broadcast %43 : vector<1x1x32xf32> to vector<8x8x32xf32>
    %45 = arith.mulf %42, %44 : vector<8x8x32xf32>
    %46 = arith.addf %41, %45 : vector<8x8x32xf32>
    %c2_35 = arith.constant 2 : index
    %c2_36 = arith.constant 2 : index
    %c0_37 = arith.constant 0 : index
    %47 = vector.load %arg5[%c2_35, %c2_36, %c0_37] : memref<10x10x32xf32, #tpu.memory_space<vmem>>, vector<8x8x32xf32>
    %48 = vector.extract_strided_slice %5 {offsets = [2, 2, 0], sizes = [1, 1, 32], strides = [1, 1, 1]} : vector<3x3x32xf32> to vector<1x1x32xf32>
    %49 = vector.broadcast %48 : vector<1x1x32xf32> to vector<8x8x32xf32>
    %50 = arith.mulf %47, %49 : vector<8x8x32xf32>
    %51 = arith.addf %46, %50 : vector<8x8x32xf32>
    %c0_38 = arith.constant 0 : index
    %c0_39 = arith.constant 0 : index
    %52 = vector.load %arg3[%c0_38, %c0_39] : memref<1x32xf32, #tpu.memory_space<vmem>>, vector<1x32xf32>
    %53 = vector.shape_cast %52 : vector<1x32xf32> to vector<1x1x32xf32>
    %54 = vector.broadcast %53 : vector<1x1x32xf32> to vector<8x8x32xf32>
    %55 = arith.addf %51, %54 : vector<8x8x32xf32>
    %cst_40 = arith.constant 0.000000e+00 : f32
    %56 = vector.broadcast %cst_40 : f32 to vector<8x8x32xf32>
    %57 = arith.subf %56, %55 : vector<8x8x32xf32>
    %58 = math.exp %57 : vector<8x8x32xf32>
    %cst_41 = arith.constant 1.000000e+00 : f32
    %59 = vector.broadcast %cst_41 : f32 to vector<8x8x32xf32>
    %60 = arith.addf %59, %58 : vector<8x8x32xf32>
    %61 = tpu.reciprocal %60 {approx = true} : vector<8x8x32xf32> -> vector<8x8x32xf32>
    %62 = arith.mulf %55, %61 : vector<8x8x32xf32>
    %c0_42 = arith.constant 0 : index
    %c0_43 = arith.constant 0 : index
    %c0_44 = arith.constant 0 : index
    %c0_45 = arith.constant 0 : index
    %63 = vector.load %arg4[%c0_42, %c0_43, %c0_44, %c0_45] : memref<1x8x8x32xf32, #tpu.memory_space<vmem>>, vector<1x8x8x32xf32>
    %64 = vector.shape_cast %63 : vector<1x8x8x32xf32> to vector<8x8x32xf32>
    %65 = vector.shape_cast %62 : vector<8x8x32xf32> to vector<1x8x8x32xf32>
    tpu.vector_store %arg4[%c0_42, %c0_43, %c0_44, %c0_45], %65 {strides = array<i32>} : memref<1x8x8x32xf32, #tpu.memory_space<vmem>>, vector<1x8x8x32xf32>,
    return
  }
  func.func @transform_0(%arg0: i32) -> (i32, i32, i32, i32) {
    %c0_i32 = arith.constant 0 : i32
    %c0_i32_0 = arith.constant 0 : i32
    %c0_i32_1 = arith.constant 0 : i32
    %c0_i32_2 = arith.constant 0 : i32
    return %arg0, %c0_i32, %c0_i32_0, %c0_i32_1 : i32, i32, i32, i32
  }
  func.func @transform_1(%arg0: i32) -> (i32, i32, i32) {
    %c0_i32 = arith.constant 0 : i32
    %c0_i32_0 = arith.constant 0 : i32
    %c0_i32_1 = arith.constant 0 : i32
    %c0_i32_2 = arith.constant 0 : i32
    return %c0_i32, %c0_i32_0, %c0_i32_1 : i32, i32, i32
  }
  func.func @transform_2(%arg0: i32) -> (i32, i32) {
    %c0_i32 = arith.constant 0 : i32
    %c0_i32_0 = arith.constant 0 : i32
    %c0_i32_1 = arith.constant 0 : i32
    return %c0_i32, %c0_i32_0 : i32, i32
  }
  func.func @transform_3(%arg0: i32) -> (i32, i32, i32, i32) {
    %c0_i32 = arith.constant 0 : i32
    %c0_i32_0 = arith.constant 0 : i32
    %c0_i32_1 = arith.constant 0 : i32
    %c0_i32_2 = arith.constant 0 : i32
    return %arg0, %c0_i32, %c0_i32_0, %c0_i32_1 : i32, i32, i32, i32
  }
}

module attributes {stable_mosaic.version = 11 : i64} {
  func.func @_norm_gate_proj_kernel(%arg0: i32, %arg1: memref<128x32xf32, #tpu.memory_space<vmem>>, %arg2: memref<128x32xf32, #tpu.memory_space<vmem>>, %arg3: memref<1x32xf32, #tpu.memory_space<vmem>>, %arg4: memref<1x32xf32, #tpu.memory_space<vmem>>, %arg5: memref<32x32xbf16, #tpu.memory_space<vmem>>, %arg6: memref<128x32xf32, #tpu.memory_space<vmem>>) attributes {dimension_semantics = [#tpu.dimension_semantics<parallel>], iteration_bounds = array<i64: 1>, scalar_prefetch = 0 : i64, scratch_operands = 0 : i64, tpu.core_type = #tpu.core_type<tc>, window_params = [{transform_indices = @transform_0, window_bounds = array<i64: 128, 32>}, {transform_indices = @transform_1, window_bounds = array<i64: 128, 32>}, {pipeline_mode = #tpu.pipeline_mode<synchronous>, transform_indices = @transform_2, window_bounds = array<i64: 1, 32>}, {pipeline_mode = #tpu.pipeline_mode<synchronous>, transform_indices = @transform_3, window_bounds = array<i64: 1, 32>}, {pipeline_mode = #tpu.pipeline_mode<synchronous>, transform_indices = @transform_4, window_bounds = array<i64: 32, 32>}, {transform_indices = @transform_5, window_bounds = array<i64: 128, 32>}]} {
    %c0 = arith.constant 0 : index
    %c0_0 = arith.constant 0 : index
    %0 = vector.load %arg1[%c0, %c0_0] : memref<128x32xf32, #tpu.memory_space<vmem>>, vector<128x32xf32>
    %cst = arith.constant dense<0.000000e+00> : vector<128xf32>
    %1 = vector.multi_reduction <add>, %0, %cst [1] : vector<128x32xf32> to vector<128xf32>
    %2 = vector.shape_cast %1 : vector<128xf32> to vector<128x1xf32>
    %cst_1 = arith.constant 3.200000e+01 : f32
    %3 = vector.broadcast %cst_1 : f32 to vector<128x1xf32>
    %4 = arith.divf %2, %3 : vector<128x1xf32>
    %5 = vector.broadcast %4 : vector<128x1xf32> to vector<128x32xf32>
    %6 = arith.subf %0, %5 : vector<128x32xf32>
    %7 = arith.mulf %6, %6 : vector<128x32xf32>
    %cst_2 = arith.constant dense<0.000000e+00> : vector<128xf32>
    %8 = vector.multi_reduction <add>, %7, %cst_2 [1] : vector<128x32xf32> to vector<128xf32>
    %9 = vector.shape_cast %8 : vector<128xf32> to vector<128x1xf32>
    %cst_3 = arith.constant 3.200000e+01 : f32
    %10 = vector.broadcast %cst_3 : f32 to vector<128x1xf32>
    %11 = arith.divf %9, %10 : vector<128x1xf32>
    %12 = vector.broadcast %4 : vector<128x1xf32> to vector<128x32xf32>
    %13 = arith.subf %0, %12 : vector<128x32xf32>
    %cst_4 = arith.constant 9.99999974E-6 : f32
    %14 = vector.broadcast %cst_4 : f32 to vector<128x1xf32>
    %15 = arith.addf %11, %14 : vector<128x1xf32>
    %16 = math.rsqrt %15 : vector<128x1xf32>
    %17 = vector.broadcast %16 : vector<128x1xf32> to vector<128x32xf32>
    %18 = arith.mulf %13, %17 : vector<128x32xf32>
    %c0_5 = arith.constant 0 : index
    %c0_6 = arith.constant 0 : index
    %19 = vector.load %arg3[%c0_5, %c0_6] : memref<1x32xf32, #tpu.memory_space<vmem>>, vector<1x32xf32>
    %20 = vector.broadcast %19 : vector<1x32xf32> to vector<128x32xf32>
    %21 = arith.mulf %18, %20 : vector<128x32xf32>
    %c0_7 = arith.constant 0 : index
    %c0_8 = arith.constant 0 : index
    %22 = vector.load %arg4[%c0_7, %c0_8] : memref<1x32xf32, #tpu.memory_space<vmem>>, vector<1x32xf32>
    %23 = vector.broadcast %22 : vector<1x32xf32> to vector<128x32xf32>
    %24 = arith.addf %21, %23 : vector<128x32xf32>
    %c0_9 = arith.constant 0 : index
    %c0_10 = arith.constant 0 : index
    %25 = vector.load %arg2[%c0_9, %c0_10] : memref<128x32xf32, #tpu.memory_space<vmem>>, vector<128x32xf32>
    %cst_11 = arith.constant 0.000000e+00 : f32
    %26 = vector.broadcast %cst_11 : f32 to vector<128x32xf32>
    %27 = arith.subf %26, %25 : vector<128x32xf32>
    %28 = math.exp %27 : vector<128x32xf32>
    %cst_12 = arith.constant 1.000000e+00 : f32
    %29 = vector.broadcast %cst_12 : f32 to vector<128x32xf32>
    %30 = arith.addf %29, %28 : vector<128x32xf32>
    %31 = tpu.reciprocal %30 {approx = true} : vector<128x32xf32> -> vector<128x32xf32>
    %32 = arith.mulf %25, %31 : vector<128x32xf32>
    %33 = arith.mulf %24, %32 : vector<128x32xf32>
    %34 = arith.truncf %33 : vector<128x32xf32> to vector<128x32xbf16>
    %c0_13 = arith.constant 0 : index
    %c0_14 = arith.constant 0 : index
    %35 = vector.load %arg5[%c0_13, %c0_14] : memref<32x32xbf16, #tpu.memory_space<vmem>>, vector<32x32xbf16>
    %cst_15 = arith.constant dense<0.000000e+00> : vector<128x32xf32>
    %36 = tpu.matmul %34, %35, %cst_15 {dimension_numbers = #tpu.dot_dimension_numbers<[1], [0], [0], [1], [0, 0, 1, 1], [], []>} : vector<128x32xbf16>, vector<32x32xbf16>, vector<128x32xf32> -> vector<128x32xf32>
    %c0_16 = arith.constant 0 : index
    %c0_17 = arith.constant 0 : index
    %37 = vector.load %arg6[%c0_16, %c0_17] : memref<128x32xf32, #tpu.memory_space<vmem>>, vector<128x32xf32>
    tpu.vector_store %arg6[%c0_16, %c0_17], %36 {strides = array<i32>} : memref<128x32xf32, #tpu.memory_space<vmem>>, vector<128x32xf32>,
    return
  }
  func.func @transform_0(%arg0: i32) -> (i32, i32) {
    %c0_i32 = arith.constant 0 : i32
    %c0_i32_0 = arith.constant 0 : i32
    return %arg0, %c0_i32 : i32, i32
  }
  func.func @transform_1(%arg0: i32) -> (i32, i32) {
    %c0_i32 = arith.constant 0 : i32
    %c0_i32_0 = arith.constant 0 : i32
    return %arg0, %c0_i32 : i32, i32
  }
  func.func @transform_2(%arg0: i32) -> (i32, i32) {
    %c0_i32 = arith.constant 0 : i32
    %c0_i32_0 = arith.constant 0 : i32
    %c0_i32_1 = arith.constant 0 : i32
    return %c0_i32, %c0_i32_0 : i32, i32
  }
  func.func @transform_3(%arg0: i32) -> (i32, i32) {
    %c0_i32 = arith.constant 0 : i32
    %c0_i32_0 = arith.constant 0 : i32
    %c0_i32_1 = arith.constant 0 : i32
    return %c0_i32, %c0_i32_0 : i32, i32
  }
  func.func @transform_4(%arg0: i32) -> (i32, i32) {
    %c0_i32 = arith.constant 0 : i32
    %c0_i32_0 = arith.constant 0 : i32
    %c0_i32_1 = arith.constant 0 : i32
    return %c0_i32, %c0_i32_0 : i32, i32
  }
  func.func @transform_5(%arg0: i32) -> (i32, i32) {
    %c0_i32 = arith.constant 0 : i32
    %c0_i32_0 = arith.constant 0 : i32
    return %arg0, %c0_i32 : i32, i32
  }
}

module attributes {stable_mosaic.version = 11 : i64} {
  func.func @_scan_kernel(%arg0: i32, %arg1: i32, %arg2: memref<1x64x32xf32, #tpu.memory_space<vmem>>, %arg3: memref<1x64x1x32xf32, #tpu.memory_space<vmem>>, %arg4: memref<1x64x1x32xf32, #tpu.memory_space<vmem>>, %arg5: memref<1x64x16x1xf32, #tpu.memory_space<vmem>>, %arg6: memref<1x64x16x1xf32, #tpu.memory_space<vmem>>, %arg7: memref<1x16x32xf32, #tpu.memory_space<vmem>>, %arg8: memref<1x32xf32, #tpu.memory_space<vmem>>, %arg9: memref<1x64x32xf32, #tpu.memory_space<vmem>>, %arg10: memref<64x16x32xf32, #tpu.memory_space<vmem>>, %arg11: memref<64x16x32xf32, #tpu.memory_space<vmem>>, %arg12: memref<64x16x32xf32, #tpu.memory_space<vmem>>, %arg13: memref<16x32xf32, #tpu.memory_space<vmem>>) attributes {dimension_semantics = [#tpu.dimension_semantics<parallel>, #tpu.dimension_semantics<arbitrary>], iteration_bounds = array<i64: 2, 1>, scalar_prefetch = 0 : i64, scratch_operands = 4 : i64, tpu.core_type = #tpu.core_type<tc>, window_params = [{transform_indices = @transform_0, window_bounds = array<i64: 1, 64, 32>}, {transform_indices = @transform_1, window_bounds = array<i64: 1, 64, 1, 32>}, {transform_indices = @transform_2, window_bounds = array<i64: 1, 64, 1, 32>}, {transform_indices = @transform_3, window_bounds = array<i64: 1, 64, 16, 1>}, {transform_indices = @transform_4, window_bounds = array<i64: 1, 64, 16, 1>}, {pipeline_mode = #tpu.pipeline_mode<synchronous>, transform_indices = @transform_5, window_bounds = array<i64: 1, 16, 32>}, {pipeline_mode = #tpu.pipeline_mode<synchronous>, transform_indices = @transform_6, window_bounds = array<i64: 1, 32>}, {transform_indices = @transform_7, window_bounds = array<i64: 1, 64, 32>}]} {
    %c0_i32 = arith.constant 0 : i32
    %0 = arith.cmpi eq, %arg1, %c0_i32 : i32
    %1 = arith.extui %0 : i1 to i32
    %c0_i32_0 = arith.constant 0 : i32
    %2 = arith.cmpi ne, %1, %c0_i32_0 : i32
    scf.if %2 {
      %cst = arith.constant 0.000000e+00 : f32
      %40 = vector.broadcast %cst : f32 to vector<16x32xf32>
      %c0_45 = arith.constant 0 : index
      %c0_46 = arith.constant 0 : index
      %41 = vector.load %arg13[%c0_45, %c0_46] : memref<16x32xf32, #tpu.memory_space<vmem>>, vector<16x32xf32>
      tpu.vector_store %arg13[%c0_45, %c0_46], %40 {strides = array<i32>} : memref<16x32xf32, #tpu.memory_space<vmem>>, vector<16x32xf32>,
    } else {
    }
    %c0 = arith.constant 0 : index
    %c0_1 = arith.constant 0 : index
    %c0_2 = arith.constant 0 : index
    %c0_3 = arith.constant 0 : index
    %3 = vector.load %arg4[%c0, %c0_1, %c0_2, %c0_3] : memref<1x64x1x32xf32, #tpu.memory_space<vmem>>, vector<1x64x1x32xf32>
    %4 = vector.shape_cast %3 : vector<1x64x1x32xf32> to vector<64x1x32xf32>
    %c0_4 = arith.constant 0 : index
    %c0_5 = arith.constant 0 : index
    %c0_6 = arith.constant 0 : index
    %5 = vector.load %arg7[%c0_4, %c0_5, %c0_6] : memref<1x16x32xf32, #tpu.memory_space<vmem>>, vector<1x16x32xf32>
    %6 = vector.broadcast %4 : vector<64x1x32xf32> to vector<64x16x32xf32>
    %7 = vector.broadcast %5 : vector<1x16x32xf32> to vector<64x16x32xf32>
    %8 = arith.mulf %6, %7 : vector<64x16x32xf32>
    %9 = math.exp %8 : vector<64x16x32xf32>
    %c0_7 = arith.constant 0 : index
    %c0_8 = arith.constant 0 : index
    %c0_9 = arith.constant 0 : index
    %10 = vector.load %arg10[%c0_7, %c0_8, %c0_9] : memref<64x16x32xf32, #tpu.memory_space<vmem>>, vector<64x16x32xf32>
    tpu.vector_store %arg10[%c0_7, %c0_8, %c0_9], %9 {strides = array<i32>} : memref<64x16x32xf32, #tpu.memory_space<vmem>>, vector<64x16x32xf32>,
    %c0_10 = arith.constant 0 : index
    %c0_11 = arith.constant 0 : index
    %c0_12 = arith.constant 0 : index
    %c0_13 = arith.constant 0 : index
    %11 = vector.load %arg5[%c0_10, %c0_11, %c0_12, %c0_13] : memref<1x64x16x1xf32, #tpu.memory_space<vmem>>, vector<1x64x16x1xf32>
    %12 = vector.shape_cast %11 : vector<1x64x16x1xf32> to vector<64x16x1xf32>
    %c0_14 = arith.constant 0 : index
    %c0_15 = arith.constant 0 : index
    %c0_16 = arith.constant 0 : index
    %c0_17 = arith.constant 0 : index
    %13 = vector.load %arg3[%c0_14, %c0_15, %c0_16, %c0_17] : memref<1x64x1x32xf32, #tpu.memory_space<vmem>>, vector<1x64x1x32xf32>
    %14 = vector.shape_cast %13 : vector<1x64x1x32xf32> to vector<64x1x32xf32>
    %15 = arith.mulf %4, %14 : vector<64x1x32xf32>
    %16 = vector.broadcast %12 : vector<64x16x1xf32> to vector<64x16x32xf32>
    %17 = vector.broadcast %15 : vector<64x1x32xf32> to vector<64x16x32xf32>
    %18 = arith.mulf %16, %17 : vector<64x16x32xf32>
    %c0_18 = arith.constant 0 : index
    %c0_19 = arith.constant 0 : index
    %c0_20 = arith.constant 0 : index
    %19 = vector.load %arg11[%c0_18, %c0_19, %c0_20] : memref<64x16x32xf32, #tpu.memory_space<vmem>>, vector<64x16x32xf32>
    tpu.vector_store %arg11[%c0_18, %c0_19, %c0_20], %18 {strides = array<i32>} : memref<64x16x32xf32, #tpu.memory_space<vmem>>, vector<64x16x32xf32>,
    %c0_21 = arith.constant 0 : index
    %c0_22 = arith.constant 0 : index
    %c0_23 = arith.constant 0 : index
    %c0_24 = arith.constant 0 : index
    %20 = vector.load %arg6[%c0_21, %c0_22, %c0_23, %c0_24] : memref<1x64x16x1xf32, #tpu.memory_space<vmem>>, vector<1x64x16x1xf32>
    %21 = vector.shape_cast %20 : vector<1x64x16x1xf32> to vector<64x16x1xf32>
    %22 = vector.shape_cast %21 : vector<64x16x1xf32> to vector<64x16x1xf32>
    %23 = vector.broadcast %22 : vector<64x16x1xf32> to vector<64x16x32xf32>
    %c0_25 = arith.constant 0 : index
    %c0_26 = arith.constant 0 : index
    %c0_27 = arith.constant 0 : index
    %24 = vector.load %arg12[%c0_25, %c0_26, %c0_27] : memref<64x16x32xf32, #tpu.memory_space<vmem>>, vector<64x16x32xf32>
    tpu.vector_store %arg12[%c0_25, %c0_26, %c0_27], %23 {strides = array<i32>} : memref<64x16x32xf32, #tpu.memory_space<vmem>>, vector<64x16x32xf32>,
    %c0_28 = arith.constant 0 : index
    %c0_29 = arith.constant 0 : index
    %25 = vector.load %arg13[%c0_28, %c0_29] : memref<16x32xf32, #tpu.memory_space<vmem>>, vector<16x32xf32>
    %c0_i32_30 = arith.constant 0 : i32
    %c8_i32 = arith.constant 8 : i32
    %26 = arith.addi %c0_i32_30, %c8_i32 : i32
    %c1_i32 = arith.constant 1 : i32
    %27 = scf.for %arg14 = %c0_i32_30 to %26 step %c1_i32 iter_args(%arg15 = %25) -> (vector<16x32xf32>)  : i32 {
      %c8_i32_45 = arith.constant 8 : i32
      %40 = arith.muli %arg14, %c8_i32_45 : i32
      %41 = tpu.assume_multiple %40, 8 : i32
      %c0_i32_46 = arith.constant 0 : i32
      %42 = arith.addi %41, %c0_i32_46 : i32
      %43 = arith.index_cast %42 : i32 to index
      %c0_47 = arith.constant 0 : index
      %c0_48 = arith.constant 0 : index
      %44 = vector.load %arg10[%43, %c0_47, %c0_48] : memref<64x16x32xf32, #tpu.memory_space<vmem>>, vector<1x16x32xf32>
      %45 = vector.shape_cast %44 : vector<1x16x32xf32> to vector<16x32xf32>
      %46 = arith.mulf %45, %arg15 : vector<16x32xf32>
      %c0_i32_49 = arith.constant 0 : i32
      %47 = arith.addi %41, %c0_i32_49 : i32
      %48 = arith.index_cast %47 : i32 to index
      %c0_50 = arith.constant 0 : index
      %c0_51 = arith.constant 0 : index
      %49 = vector.load %arg11[%48, %c0_50, %c0_51] : memref<64x16x32xf32, #tpu.memory_space<vmem>>, vector<1x16x32xf32>
      %50 = vector.shape_cast %49 : vector<1x16x32xf32> to vector<16x32xf32>
      %51 = arith.addf %46, %50 : vector<16x32xf32>
      %c0_i32_52 = arith.constant 0 : i32
      %52 = arith.addi %41, %c0_i32_52 : i32
      %53 = arith.index_cast %52 : i32 to index
      %c0_53 = arith.constant 0 : index
      %c0_54 = arith.constant 0 : index
      %54 = vector.load %arg12[%53, %c0_53, %c0_54] : memref<64x16x32xf32, #tpu.memory_space<vmem>>, vector<1x16x32xf32>
      %55 = vector.shape_cast %54 : vector<1x16x32xf32> to vector<16x32xf32>
      %56 = arith.mulf %55, %51 : vector<16x32xf32>
      %cst = arith.constant dense<0.000000e+00> : vector<32xf32>
      %57 = vector.multi_reduction <add>, %56, %cst [0] : vector<16x32xf32> to vector<32xf32>
      %58 = vector.shape_cast %57 : vector<32xf32> to vector<1x32xf32>
      %c1_i32_55 = arith.constant 1 : i32
      %59 = arith.addi %41, %c1_i32_55 : i32
      %60 = arith.index_cast %59 : i32 to index
      %c0_56 = arith.constant 0 : index
      %c0_57 = arith.constant 0 : index
      %61 = vector.load %arg10[%60, %c0_56, %c0_57] : memref<64x16x32xf32, #tpu.memory_space<vmem>>, vector<1x16x32xf32>
      %62 = vector.shape_cast %61 : vector<1x16x32xf32> to vector<16x32xf32>
      %63 = arith.mulf %62, %51 : vector<16x32xf32>
      %c1_i32_58 = arith.constant 1 : i32
      %64 = arith.addi %41, %c1_i32_58 : i32
      %65 = arith.index_cast %64 : i32 to index
      %c0_59 = arith.constant 0 : index
      %c0_60 = arith.constant 0 : index
      %66 = vector.load %arg11[%65, %c0_59, %c0_60] : memref<64x16x32xf32, #tpu.memory_space<vmem>>, vector<1x16x32xf32>
      %67 = vector.shape_cast %66 : vector<1x16x32xf32> to vector<16x32xf32>
      %68 = arith.addf %63, %67 : vector<16x32xf32>
      %c1_i32_61 = arith.constant 1 : i32
      %69 = arith.addi %41, %c1_i32_61 : i32
      %70 = arith.index_cast %69 : i32 to index
      %c0_62 = arith.constant 0 : index
      %c0_63 = arith.constant 0 : index
      %71 = vector.load %arg12[%70, %c0_62, %c0_63] : memref<64x16x32xf32, #tpu.memory_space<vmem>>, vector<1x16x32xf32>
      %72 = vector.shape_cast %71 : vector<1x16x32xf32> to vector<16x32xf32>
      %73 = arith.mulf %72, %68 : vector<16x32xf32>
      %cst_64 = arith.constant dense<0.000000e+00> : vector<32xf32>
      %74 = vector.multi_reduction <add>, %73, %cst_64 [0] : vector<16x32xf32> to vector<32xf32>
      %75 = vector.shape_cast %74 : vector<32xf32> to vector<1x32xf32>
      %c2_i32 = arith.constant 2 : i32
      %76 = arith.addi %41, %c2_i32 : i32
      %77 = arith.index_cast %76 : i32 to index
      %c0_65 = arith.constant 0 : index
      %c0_66 = arith.constant 0 : index
      %78 = vector.load %arg10[%77, %c0_65, %c0_66] : memref<64x16x32xf32, #tpu.memory_space<vmem>>, vector<1x16x32xf32>
      %79 = vector.shape_cast %78 : vector<1x16x32xf32> to vector<16x32xf32>
      %80 = arith.mulf %79, %68 : vector<16x32xf32>
      %c2_i32_67 = arith.constant 2 : i32
      %81 = arith.addi %41, %c2_i32_67 : i32
      %82 = arith.index_cast %81 : i32 to index
      %c0_68 = arith.constant 0 : index
      %c0_69 = arith.constant 0 : index
      %83 = vector.load %arg11[%82, %c0_68, %c0_69] : memref<64x16x32xf32, #tpu.memory_space<vmem>>, vector<1x16x32xf32>
      %84 = vector.shape_cast %83 : vector<1x16x32xf32> to vector<16x32xf32>
      %85 = arith.addf %80, %84 : vector<16x32xf32>
      %c2_i32_70 = arith.constant 2 : i32
      %86 = arith.addi %41, %c2_i32_70 : i32
      %87 = arith.index_cast %86 : i32 to index
      %c0_71 = arith.constant 0 : index
      %c0_72 = arith.constant 0 : index
      %88 = vector.load %arg12[%87, %c0_71, %c0_72] : memref<64x16x32xf32, #tpu.memory_space<vmem>>, vector<1x16x32xf32>
      %89 = vector.shape_cast %88 : vector<1x16x32xf32> to vector<16x32xf32>
      %90 = arith.mulf %89, %85 : vector<16x32xf32>
      %cst_73 = arith.constant dense<0.000000e+00> : vector<32xf32>
      %91 = vector.multi_reduction <add>, %90, %cst_73 [0] : vector<16x32xf32> to vector<32xf32>
      %92 = vector.shape_cast %91 : vector<32xf32> to vector<1x32xf32>
      %c3_i32 = arith.constant 3 : i32
      %93 = arith.addi %41, %c3_i32 : i32
      %94 = arith.index_cast %93 : i32 to index
      %c0_74 = arith.constant 0 : index
      %c0_75 = arith.constant 0 : index
      %95 = vector.load %arg10[%94, %c0_74, %c0_75] : memref<64x16x32xf32, #tpu.memory_space<vmem>>, vector<1x16x32xf32>
      %96 = vector.shape_cast %95 : vector<1x16x32xf32> to vector<16x32xf32>
      %97 = arith.mulf %96, %85 : vector<16x32xf32>
      %c3_i32_76 = arith.constant 3 : i32
      %98 = arith.addi %41, %c3_i32_76 : i32
      %99 = arith.index_cast %98 : i32 to index
      %c0_77 = arith.constant 0 : index
      %c0_78 = arith.constant 0 : index
      %100 = vector.load %arg11[%99, %c0_77, %c0_78] : memref<64x16x32xf32, #tpu.memory_space<vmem>>, vector<1x16x32xf32>
      %101 = vector.shape_cast %100 : vector<1x16x32xf32> to vector<16x32xf32>
      %102 = arith.addf %97, %101 : vector<16x32xf32>
      %c3_i32_79 = arith.constant 3 : i32
      %103 = arith.addi %41, %c3_i32_79 : i32
      %104 = arith.index_cast %103 : i32 to index
      %c0_80 = arith.constant 0 : index
      %c0_81 = arith.constant 0 : index
      %105 = vector.load %arg12[%104, %c0_80, %c0_81] : memref<64x16x32xf32, #tpu.memory_space<vmem>>, vector<1x16x32xf32>
      %106 = vector.shape_cast %105 : vector<1x16x32xf32> to vector<16x32xf32>
      %107 = arith.mulf %106, %102 : vector<16x32xf32>
      %cst_82 = arith.constant dense<0.000000e+00> : vector<32xf32>
      %108 = vector.multi_reduction <add>, %107, %cst_82 [0] : vector<16x32xf32> to vector<32xf32>
      %109 = vector.shape_cast %108 : vector<32xf32> to vector<1x32xf32>
      %c4_i32 = arith.constant 4 : i32
      %110 = arith.addi %41, %c4_i32 : i32
      %111 = arith.index_cast %110 : i32 to index
      %c0_83 = arith.constant 0 : index
      %c0_84 = arith.constant 0 : index
      %112 = vector.load %arg10[%111, %c0_83, %c0_84] : memref<64x16x32xf32, #tpu.memory_space<vmem>>, vector<1x16x32xf32>
      %113 = vector.shape_cast %112 : vector<1x16x32xf32> to vector<16x32xf32>
      %114 = arith.mulf %113, %102 : vector<16x32xf32>
      %c4_i32_85 = arith.constant 4 : i32
      %115 = arith.addi %41, %c4_i32_85 : i32
      %116 = arith.index_cast %115 : i32 to index
      %c0_86 = arith.constant 0 : index
      %c0_87 = arith.constant 0 : index
      %117 = vector.load %arg11[%116, %c0_86, %c0_87] : memref<64x16x32xf32, #tpu.memory_space<vmem>>, vector<1x16x32xf32>
      %118 = vector.shape_cast %117 : vector<1x16x32xf32> to vector<16x32xf32>
      %119 = arith.addf %114, %118 : vector<16x32xf32>
      %c4_i32_88 = arith.constant 4 : i32
      %120 = arith.addi %41, %c4_i32_88 : i32
      %121 = arith.index_cast %120 : i32 to index
      %c0_89 = arith.constant 0 : index
      %c0_90 = arith.constant 0 : index
      %122 = vector.load %arg12[%121, %c0_89, %c0_90] : memref<64x16x32xf32, #tpu.memory_space<vmem>>, vector<1x16x32xf32>
      %123 = vector.shape_cast %122 : vector<1x16x32xf32> to vector<16x32xf32>
      %124 = arith.mulf %123, %119 : vector<16x32xf32>
      %cst_91 = arith.constant dense<0.000000e+00> : vector<32xf32>
      %125 = vector.multi_reduction <add>, %124, %cst_91 [0] : vector<16x32xf32> to vector<32xf32>
      %126 = vector.shape_cast %125 : vector<32xf32> to vector<1x32xf32>
      %c5_i32 = arith.constant 5 : i32
      %127 = arith.addi %41, %c5_i32 : i32
      %128 = arith.index_cast %127 : i32 to index
      %c0_92 = arith.constant 0 : index
      %c0_93 = arith.constant 0 : index
      %129 = vector.load %arg10[%128, %c0_92, %c0_93] : memref<64x16x32xf32, #tpu.memory_space<vmem>>, vector<1x16x32xf32>
      %130 = vector.shape_cast %129 : vector<1x16x32xf32> to vector<16x32xf32>
      %131 = arith.mulf %130, %119 : vector<16x32xf32>
      %c5_i32_94 = arith.constant 5 : i32
      %132 = arith.addi %41, %c5_i32_94 : i32
      %133 = arith.index_cast %132 : i32 to index
      %c0_95 = arith.constant 0 : index
      %c0_96 = arith.constant 0 : index
      %134 = vector.load %arg11[%133, %c0_95, %c0_96] : memref<64x16x32xf32, #tpu.memory_space<vmem>>, vector<1x16x32xf32>
      %135 = vector.shape_cast %134 : vector<1x16x32xf32> to vector<16x32xf32>
      %136 = arith.addf %131, %135 : vector<16x32xf32>
      %c5_i32_97 = arith.constant 5 : i32
      %137 = arith.addi %41, %c5_i32_97 : i32
      %138 = arith.index_cast %137 : i32 to index
      %c0_98 = arith.constant 0 : index
      %c0_99 = arith.constant 0 : index
      %139 = vector.load %arg12[%138, %c0_98, %c0_99] : memref<64x16x32xf32, #tpu.memory_space<vmem>>, vector<1x16x32xf32>
      %140 = vector.shape_cast %139 : vector<1x16x32xf32> to vector<16x32xf32>
      %141 = arith.mulf %140, %136 : vector<16x32xf32>
      %cst_100 = arith.constant dense<0.000000e+00> : vector<32xf32>
      %142 = vector.multi_reduction <add>, %141, %cst_100 [0] : vector<16x32xf32> to vector<32xf32>
      %143 = vector.shape_cast %142 : vector<32xf32> to vector<1x32xf32>
      %c6_i32 = arith.constant 6 : i32
      %144 = arith.addi %41, %c6_i32 : i32
      %145 = arith.index_cast %144 : i32 to index
      %c0_101 = arith.constant 0 : index
      %c0_102 = arith.constant 0 : index
      %146 = vector.load %arg10[%145, %c0_101, %c0_102] : memref<64x16x32xf32, #tpu.memory_space<vmem>>, vector<1x16x32xf32>
      %147 = vector.shape_cast %146 : vector<1x16x32xf32> to vector<16x32xf32>
      %148 = arith.mulf %147, %136 : vector<16x32xf32>
      %c6_i32_103 = arith.constant 6 : i32
      %149 = arith.addi %41, %c6_i32_103 : i32
      %150 = arith.index_cast %149 : i32 to index
      %c0_104 = arith.constant 0 : index
      %c0_105 = arith.constant 0 : index
      %151 = vector.load %arg11[%150, %c0_104, %c0_105] : memref<64x16x32xf32, #tpu.memory_space<vmem>>, vector<1x16x32xf32>
      %152 = vector.shape_cast %151 : vector<1x16x32xf32> to vector<16x32xf32>
      %153 = arith.addf %148, %152 : vector<16x32xf32>
      %c6_i32_106 = arith.constant 6 : i32
      %154 = arith.addi %41, %c6_i32_106 : i32
      %155 = arith.index_cast %154 : i32 to index
      %c0_107 = arith.constant 0 : index
      %c0_108 = arith.constant 0 : index
      %156 = vector.load %arg12[%155, %c0_107, %c0_108] : memref<64x16x32xf32, #tpu.memory_space<vmem>>, vector<1x16x32xf32>
      %157 = vector.shape_cast %156 : vector<1x16x32xf32> to vector<16x32xf32>
      %158 = arith.mulf %157, %153 : vector<16x32xf32>
      %cst_109 = arith.constant dense<0.000000e+00> : vector<32xf32>
      %159 = vector.multi_reduction <add>, %158, %cst_109 [0] : vector<16x32xf32> to vector<32xf32>
      %160 = vector.shape_cast %159 : vector<32xf32> to vector<1x32xf32>
      %c7_i32 = arith.constant 7 : i32
      %161 = arith.addi %41, %c7_i32 : i32
      %162 = arith.index_cast %161 : i32 to index
      %c0_110 = arith.constant 0 : index
      %c0_111 = arith.constant 0 : index
      %163 = vector.load %arg10[%162, %c0_110, %c0_111] : memref<64x16x32xf32, #tpu.memory_space<vmem>>, vector<1x16x32xf32>
      %164 = vector.shape_cast %163 : vector<1x16x32xf32> to vector<16x32xf32>
      %165 = arith.mulf %164, %153 : vector<16x32xf32>
      %c7_i32_112 = arith.constant 7 : i32
      %166 = arith.addi %41, %c7_i32_112 : i32
      %167 = arith.index_cast %166 : i32 to index
      %c0_113 = arith.constant 0 : index
      %c0_114 = arith.constant 0 : index
      %168 = vector.load %arg11[%167, %c0_113, %c0_114] : memref<64x16x32xf32, #tpu.memory_space<vmem>>, vector<1x16x32xf32>
      %169 = vector.shape_cast %168 : vector<1x16x32xf32> to vector<16x32xf32>
      %170 = arith.addf %165, %169 : vector<16x32xf32>
      %c7_i32_115 = arith.constant 7 : i32
      %171 = arith.addi %41, %c7_i32_115 : i32
      %172 = arith.index_cast %171 : i32 to index
      %c0_116 = arith.constant 0 : index
      %c0_117 = arith.constant 0 : index
      %173 = vector.load %arg12[%172, %c0_116, %c0_117] : memref<64x16x32xf32, #tpu.memory_space<vmem>>, vector<1x16x32xf32>
      %174 = vector.shape_cast %173 : vector<1x16x32xf32> to vector<16x32xf32>
      %175 = arith.mulf %174, %170 : vector<16x32xf32>
      %cst_118 = arith.constant dense<0.000000e+00> : vector<32xf32>
      %176 = vector.multi_reduction <add>, %175, %cst_118 [0] : vector<16x32xf32> to vector<32xf32>
      %177 = vector.shape_cast %176 : vector<32xf32> to vector<1x32xf32>
      %178 = tpu.concatenate %58, %75, %92, %109, %126, %143, %160, %177 in 0 : vector<1x32xf32>, vector<1x32xf32>, vector<1x32xf32>, vector<1x32xf32>, vector<1x32xf32>, vector<1x32xf32>, vector<1x32xf32>, vector<1x32xf32> -> vector<8x32xf32>
      %c0_119 = arith.constant 0 : index
      %179 = arith.index_cast %41 : i32 to index
      %c0_120 = arith.constant 0 : index
      %180 = vector.load %arg9[%c0_119, %179, %c0_120] : memref<1x64x32xf32, #tpu.memory_space<vmem>>, vector<1x8x32xf32>
      %181 = vector.shape_cast %180 : vector<1x8x32xf32> to vector<8x32xf32>
      %182 = vector.shape_cast %178 : vector<8x32xf32> to vector<1x8x32xf32>
      tpu.vector_store %arg9[%c0_119, %179, %c0_120], %182 {strides = array<i32>} : memref<1x64x32xf32, #tpu.memory_space<vmem>>, vector<1x8x32xf32>,
      scf.yield %170 : vector<16x32xf32>
    }
    %c8_i32_31 = arith.constant 8 : i32
    %c0_32 = arith.constant 0 : index
    %c0_33 = arith.constant 0 : index
    %28 = vector.load %arg13[%c0_32, %c0_33] : memref<16x32xf32, #tpu.memory_space<vmem>>, vector<16x32xf32>
    tpu.vector_store %arg13[%c0_32, %c0_33], %27 {strides = array<i32>} : memref<16x32xf32, #tpu.memory_space<vmem>>, vector<16x32xf32>,
    %c0_34 = arith.constant 0 : index
    %c0_35 = arith.constant 0 : index
    %c0_36 = arith.constant 0 : index
    %29 = vector.load %arg9[%c0_34, %c0_35, %c0_36] : memref<1x64x32xf32, #tpu.memory_space<vmem>>, vector<1x64x32xf32>
    %30 = vector.shape_cast %29 : vector<1x64x32xf32> to vector<64x32xf32>
    %c0_37 = arith.constant 0 : index
    %c0_38 = arith.constant 0 : index
    %31 = vector.load %arg8[%c0_37, %c0_38] : memref<1x32xf32, #tpu.memory_space<vmem>>, vector<1x32xf32>
    %c0_39 = arith.constant 0 : index
    %c0_40 = arith.constant 0 : index
    %c0_41 = arith.constant 0 : index
    %32 = vector.load %arg2[%c0_39, %c0_40, %c0_41] : memref<1x64x32xf32, #tpu.memory_space<vmem>>, vector<1x64x32xf32>
    %33 = vector.shape_cast %32 : vector<1x64x32xf32> to vector<64x32xf32>
    %34 = vector.broadcast %31 : vector<1x32xf32> to vector<64x32xf32>
    %35 = arith.mulf %34, %33 : vector<64x32xf32>
    %36 = arith.addf %30, %35 : vector<64x32xf32>
    %c0_42 = arith.constant 0 : index
    %c0_43 = arith.constant 0 : index
    %c0_44 = arith.constant 0 : index
    %37 = vector.load %arg9[%c0_42, %c0_43, %c0_44] : memref<1x64x32xf32, #tpu.memory_space<vmem>>, vector<1x64x32xf32>
    %38 = vector.shape_cast %37 : vector<1x64x32xf32> to vector<64x32xf32>
    %39 = vector.shape_cast %36 : vector<64x32xf32> to vector<1x64x32xf32>
    tpu.vector_store %arg9[%c0_42, %c0_43, %c0_44], %39 {strides = array<i32>} : memref<1x64x32xf32, #tpu.memory_space<vmem>>, vector<1x64x32xf32>,
    return
  }
  func.func @transform_0(%arg0: i32, %arg1: i32) -> (i32, i32, i32) {
    %c0_i32 = arith.constant 0 : i32
    %c0_i32_0 = arith.constant 0 : i32
    return %arg0, %arg1, %c0_i32 : i32, i32, i32
  }
  func.func @transform_1(%arg0: i32, %arg1: i32) -> (i32, i32, i32, i32) {
    %c0_i32 = arith.constant 0 : i32
    %c0_i32_0 = arith.constant 0 : i32
    %c0_i32_1 = arith.constant 0 : i32
    return %arg0, %arg1, %c0_i32, %c0_i32_0 : i32, i32, i32, i32
  }
  func.func @transform_2(%arg0: i32, %arg1: i32) -> (i32, i32, i32, i32) {
    %c0_i32 = arith.constant 0 : i32
    %c0_i32_0 = arith.constant 0 : i32
    %c0_i32_1 = arith.constant 0 : i32
    return %arg0, %arg1, %c0_i32, %c0_i32_0 : i32, i32, i32, i32
  }
  func.func @transform_3(%arg0: i32, %arg1: i32) -> (i32, i32, i32, i32) {
    %c0_i32 = arith.constant 0 : i32
    %c0_i32_0 = arith.constant 0 : i32
    %c0_i32_1 = arith.constant 0 : i32
    return %arg0, %arg1, %c0_i32, %c0_i32_0 : i32, i32, i32, i32
  }
  func.func @transform_4(%arg0: i32, %arg1: i32) -> (i32, i32, i32, i32) {
    %c0_i32 = arith.constant 0 : i32
    %c0_i32_0 = arith.constant 0 : i32
    %c0_i32_1 = arith.constant 0 : i32
    return %arg0, %arg1, %c0_i32, %c0_i32_0 : i32, i32, i32, i32
  }
  func.func @transform_5(%arg0: i32, %arg1: i32) -> (i32, i32, i32) {
    %c0_i32 = arith.constant 0 : i32
    %c0_i32_0 = arith.constant 0 : i32
    %c0_i32_1 = arith.constant 0 : i32
    %c0_i32_2 = arith.constant 0 : i32
    return %c0_i32, %c0_i32_0, %c0_i32_1 : i32, i32, i32
  }
  func.func @transform_6(%arg0: i32, %arg1: i32) -> (i32, i32) {
    %c0_i32 = arith.constant 0 : i32
    %c0_i32_0 = arith.constant 0 : i32
    %c0_i32_1 = arith.constant 0 : i32
    return %c0_i32, %c0_i32_0 : i32, i32
  }
  func.func @transform_7(%arg0: i32, %arg1: i32) -> (i32, i32, i32) {
    %c0_i32 = arith.constant 0 : i32
    %c0_i32_0 = arith.constant 0 : i32
    return %arg0, %arg1, %c0_i32 : i32, i32, i32
  }
}

</mosaic_0001>

<llo_original>
// kernel: ss2d_k1_forward.7
$region0: #{ss2d_k1_forward.7}
  #allocation0 [shape = 'u32[]', space=smem, size = 0x4, offset = 0x4, fixed_abs, tag = 'smem constant byte address 0x4 - core index']
  #allocation1 [shape = 'u32[144,128]{1,0:T(1,128)}', space=vmem, size = 0x12000, scoped, tag = 'internal scratch']
  %s0 = inlined_call_operand.vmem [shape: f32[128,32], index: 0, kind: input, shape index: {}]
  %s1 = inlined_call_operand.vmem [shape: bf16[32,32], index: 1, kind: input, shape index: {}]
  %s2 = inlined_call_operand.vmem [shape: bf16[32,16], index: 2, kind: input, shape index: {}]
  %s3 = inlined_call_operand.vmem [shape: bf16[32,16], index: 3, kind: input, shape index: {}]
  %s4 = inlined_call_operand.vmem [shape: f32[1,32], index: 4, kind: input, shape index: {}]
  %s5 = inlined_call_operand.vmem [shape: f32[128,32], index: 5, kind: output, shape index: {0}]
  %s6 = inlined_call_operand.vmem [shape: f32[128,16], index: 6, kind: output, shape index: {1}]
  %s7 = inlined_call_operand.vmem [shape: f32[128,16], index: 7, kind: output, shape index: {2}]
  %8 = xla_tuple %s5, %s6, %s7
  %s9 = sld [smem:[#allocation0]]
  $region46: #{ss2d_k1_forward.7} parent=0
    _
  %s11 = ssub.s32 1, %s9
  %s12 = scalar_select 0, %s11, %s9
  // Predicated region
  $region2: #{ss2d_k1_forward.7} parent=0 // pred_check
    _
  $region3: #{ss2d_k1_forward.7} parent=0 // pred_check_branch
    %14 = sbr.rel (0) target = $region5
  $region4: #{ss2d_k1_forward.7} parent=0 // pred_region
    _
  $region5: #{ss2d_k1_forward.7} parent=0 // pred_fallthru
    _
  // Predicated region
  $region6: #{ss2d_k1_forward.7} parent=0 // pred_check
    _
  $region7: #{ss2d_k1_forward.7} parent=0 // pred_check_branch
    %16 = sbr.rel (0) target = $region9
  $region8: #{ss2d_k1_forward.7} parent=0 // pred_region
    _
  $region9: #{ss2d_k1_forward.7} parent=0 // pred_fallthru
    _
  // Predicated region
  $region10: #{ss2d_k1_forward.7} parent=0 // pred_check
    _
  $region11: #{ss2d_k1_forward.7} parent=0 // pred_check_branch
    %18 = sbr.rel (0) target = $region13
  $region12: #{ss2d_k1_forward.7} parent=0 // pred_region
    _
  $region13: #{ss2d_k1_forward.7} parent=0 // pred_fallthru
    _
  // Predicated region
  $region14: #{ss2d_k1_forward.7} parent=0 // pred_check
    _
  $region15: #{ss2d_k1_forward.7} parent=0 // pred_check_branch
    %20 = sbr.rel (0) target = $region17
  $region16: #{ss2d_k1_forward.7} parent=0 // pred_region
    _
  $region17: #{ss2d_k1_forward.7} parent=0 // pred_fallthru
    _
  // Predicated region
  $region18: #{ss2d_k1_forward.7} parent=0 // pred_check
    _
  $region19: #{ss2d_k1_forward.7} parent=0 // pred_check_branch
    %22 = sbr.rel (0) target = $region21
  $region20: #{ss2d_k1_forward.7} parent=0 // pred_region
    _
  $region21: #{ss2d_k1_forward.7} parent=0 // pred_fallthru
    _
  %v24 = vld [vmem:[%s0] sm:$0xff]
  %v25 = vld [vmem:[%s0 + $0x8] sm:$0xff]
  %v26 = vld [vmem:[%s0 + $0x10] sm:$0xff]
  %v27 = vld [vmem:[%s0 + $0x18] sm:$0xff]
  %v28 = vld [vmem:[%s0 + $0x20] sm:$0xff]
  %v29 = vld [vmem:[%s0 + $0x28] sm:$0xff]
  %v30 = vld [vmem:[%s0 + $0x30] sm:$0xff]
  %v31 = vld [vmem:[%s0 + $0x38] sm:$0xff]
  %v32 = vld [vmem:[%s0 + $0x40] sm:$0xff]
  %v33 = vld [vmem:[%s0 + $0x48] sm:$0xff]
  %v34 = vld [vmem:[%s0 + $0x50] sm:$0xff]
  %v35 = vld [vmem:[%s0 + $0x58] sm:$0xff]
  %v36 = vld [vmem:[%s0 + $0x60] sm:$0xff]
  %v37 = vld [vmem:[%s0 + $0x68] sm:$0xff]
  %v38 = vld [vmem:[%s0 + $0x70] sm:$0xff]
  %v39 = vld [vmem:[%s0 + $0x78] sm:$0xff]
  %v40 = vpack.c.bf16 %v25, %v24
  %v41 = vpack.c.bf16 %v27, %v26
  %v42 = vpack.c.bf16 %v29, %v28
  %v43 = vpack.c.bf16 %v31, %v30
  %v44 = vpack.c.bf16 %v33, %v32
  %v45 = vpack.c.bf16 %v35, %v34
  %v46 = vpack.c.bf16 %v37, %v36
  %v47 = vpack.c.bf16 %v39, %v38
  %v48 = vld [vmem:[%s1] sm:$0xf]
  %v49 = vld [vmem:[%s1 + $0x4] sm:$0xf]
  %v50 = vld [vmem:[%s1 + $0x8] sm:$0xf]
  %v51 = vld [vmem:[%s1 + $0xc] sm:$0xf]
  %v52 = vld [vmem:[%s4] sm:$0x1]
  %v54 = vlaneseq
  %v55 = vshrl.u32 %v54, 7
  %v56 = vsub.s32 0, %v55
  %v57 = vrot.slane %v52, %v56
  %v63 = vunpack.c.l.b16 %v48
  %v64 = vunpack.c.l.b16 %v49
  %v65 = vunpack.c.l.b16 %v50
  %v66 = vunpack.c.l.b16 %v51
  %v67 = vpack.c.b16 %v64, %v63
  %v68 = vpack.c.b16 %v66, %v65
  %vm71 = vcmask 261120
  %v73 = vsel %vm71, %v40, 0
  %v76 = vsel %vm71, %v41, 0
  %v79 = vsel %vm71, %v42, 0
  %v82 = vsel %vm71, %v43, 0
  %v85 = vsel %vm71, %v44, 0
  %v88 = vsel %vm71, %v45, 0
  %v91 = vsel %vm71, %v46, 0
  %v94 = vsel %vm71, %v47, 0
  %96 = vmatprep.subr.bf16.mxu0 0
  %97 = vmatpush1.bf16.msra.mxu0 %v67
  %98 = vmatprep.subr.bf16.mxu0 0
  %99 = vmatpush1.bf16.msra.mxu0 %v68
  %100 = vmatprep.subr.bf16.mxu0 0
  %101 = vmatpush1.bf16.msra.mxu0 0
  %102 = vmatprep.subr.bf16.mxu0 0
  %103 = vmatpush1.bf16.msra.mxu0 0
  %104 = vmatprep.subr.bf16.mxu0 0
  %105 = vmatpush1.bf16.msra.mxu0 0
  %106 = vmatprep.subr.bf16.mxu0 0
  %107 = vmatpush1.bf16.msra.mxu0 0
  %108 = vmatprep.subr.bf16.mxu0 0
  %109 = vmatpush1.bf16.msra.mxu0 0
  %110 = vmatprep.subr.bf16.mxu0 0
  %111 = vmatpush1.bf16.msra.mxu0 0
  %112 = vmatprep.subr.bf16.mxu0 0
  %113 = vmatpush1.bf16.msra.mxu0 0
  %114 = vmatprep.subr.bf16.mxu0 0
  %115 = vmatpush1.bf16.msra.mxu0 0
  %116 = vmatprep.subr.bf16.mxu0 0
  %117 = vmatpush1.bf16.msra.mxu0 0
  %118 = vmatprep.subr.bf16.mxu0 0
  %119 = vmatpush1.bf16.msra.mxu0 0
  %120 = vmatprep.subr.bf16.mxu0 0
  %121 = vmatpush1.bf16.msra.mxu0 0
  %122 = vmatprep.subr.bf16.mxu0 0
  %123 = vmatpush1.bf16.msra.mxu0 0
  %124 = vmatprep.subr.bf16.mxu0 0
  %125 = vmatpush1.bf16.msra.mxu0 0
  %126 = vmatprep.subr.bf16.mxu0 0
  %127 = vmatpush1.bf16.msra.mxu0 0
  %128 = vmatprep.mubr.bf16.mxu0 0
  %129 = vmatmul.mubr.bf16.gmra.mrb[0].mxu0 %v73
  %v130 = vpop.f32.mrb[0].mxu0
  %v131 = vadd.f32 %v57, %v130
  %v132 = vpop.f32.mrb[0].mxu0
  %v133 = vpop.f32.mrb[0].mxu0
  %v134 = vadd.f32 %v57, %v133
  %v135 = vpop.f32.mrb[0].mxu0
  %136 = vmatprep.mubr.bf16.mxu0 0
  %137 = vmatmul.mubr.bf16.gmra.mrb[0].mxu0 %v76
  %v138 = vpop.f32.mrb[0].mxu0
  %v139 = vadd.f32 %v57, %v138
  %v140 = vpop.f32.mrb[0].mxu0
  %v141 = vpop.f32.mrb[0].mxu0
  %v142 = vadd.f32 %v57, %v141
  %v143 = vpop.f32.mrb[0].mxu0
  %144 = vmatprep.mubr.bf16.mxu0 0
  %145 = vmatmul.mubr.bf16.gmra.mrb[0].mxu0 %v79
  %v146 = vpop.f32.mrb[0].mxu0
  %v147 = vadd.f32 %v57, %v146
  %v148 = vpop.f32.mrb[0].mxu0
  %v149 = vpop.f32.mrb[0].mxu0
  %v150 = vadd.f32 %v57, %v149
  %v151 = vpop.f32.mrb[0].mxu0
  %152 = vmatprep.mubr.bf16.mxu0 0
  %153 = vmatmul.mubr.bf16.gmra.mrb[0].mxu0 %v82
  %v154 = vpop.f32.mrb[0].mxu0
  %v155 = vadd.f32 %v57, %v154
  %v156 = vpop.f32.mrb[0].mxu0
  %v157 = vpop.f32.mrb[0].mxu0
  %v158 = vadd.f32 %v57, %v157
  %v159 = vpop.f32.mrb[0].mxu0
  %160 = vmatprep.mubr.bf16.mxu0 0
  %161 = vmatmul.mubr.bf16.gmra.mrb[0].mxu0 %v85
  %v162 = vpop.f32.mrb[0].mxu0
  %v163 = vadd.f32 %v57, %v162
  %v164 = vpop.f32.mrb[0].mxu0
  %v165 = vpop.f32.mrb[0].mxu0
  %v166 = vadd.f32 %v57, %v165
  %v167 = vpop.f32.mrb[0].mxu0
  %168 = vmatprep.mubr.bf16.mxu0 0
  %169 = vmatmul.mubr.bf16.gmra.mrb[0].mxu0 %v88
  %v170 = vpop.f32.mrb[0].mxu0
  %v171 = vadd.f32 %v57, %v170
  %v172 = vpop.f32.mrb[0].mxu0
  %v173 = vpop.f32.mrb[0].mxu0
  %v174 = vadd.f32 %v57, %v173
  %v175 = vpop.f32.mrb[0].mxu0
  %176 = vmatprep.mubr.bf16.mxu0 0
  %177 = vmatmul.mubr.bf16.gmra.mrb[0].mxu0 %v91
  %v178 = vpop.f32.mrb[0].mxu0
  %v179 = vadd.f32 %v57, %v178
  %v180 = vpop.f32.mrb[0].mxu0
  %v181 = vpop.f32.mrb[0].mxu0
  %v182 = vadd.f32 %v57, %v181
  %v183 = vpop.f32.mrb[0].mxu0
  %184 = vmatprep.mubr.bf16.mxu0 0
  %185 = vmatmul.mubr.bf16.gmra.mrb[0].mxu0 %v94
  %v186 = vpop.f32.mrb[0].mxu0
  %v187 = vadd.f32 %v57, %v186
  %v188 = vpop.f32.mrb[0].mxu0
  %v189 = vpop.f32.mrb[0].mxu0
  %v190 = vadd.f32 %v57, %v189
  %v191 = vpop.f32.mrb[0].mxu0
  %192 = vdwg.mxu0
  %vm193 = vcmp.gt.f32.partialorder %v131, 20.0
  %vm194 = vcmp.gt.f32.partialorder %v134, 20.0
  %vm195 = vcmp.gt.f32.partialorder %v139, 20.0
  %vm196 = vcmp.gt.f32.partialorder %v142, 20.0
  %vm197 = vcmp.gt.f32.partialorder %v147, 20.0
  %vm198 = vcmp.gt.f32.partialorder %v150, 20.0
  %vm199 = vcmp.gt.f32.partialorder %v155, 20.0
  %vm200 = vcmp.gt.f32.partialorder %v158, 20.0
  %vm201 = vcmp.gt.f32.partialorder %v163, 20.0
  %vm202 = vcmp.gt.f32.partialorder %v166, 20.0
  %vm203 = vcmp.gt.f32.partialorder %v171, 20.0
  %vm204 = vcmp.gt.f32.partialorder %v174, 20.0
  %vm205 = vcmp.gt.f32.partialorder %v179, 20.0
  %vm206 = vcmp.gt.f32.partialorder %v182, 20.0
  %vm207 = vcmp.gt.f32.partialorder %v187, 20.0
  %vm208 = vcmp.gt.f32.partialorder %v190, 20.0
  %v209 = vmin.f32 %v131, 20.0
  %v210 = vmin.f32 %v134, 20.0
  %v211 = vmin.f32 %v139, 20.0
  %v212 = vmin.f32 %v142, 20.0
  %v213 = vmin.f32 %v147, 20.0
  %v214 = vmin.f32 %v150, 20.0
  %v215 = vmin.f32 %v155, 20.0
  %v216 = vmin.f32 %v158, 20.0
  %v217 = vmin.f32 %v163, 20.0
  %v218 = vmin.f32 %v166, 20.0
  %v219 = vmin.f32 %v171, 20.0
  %v220 = vmin.f32 %v174, 20.0
  %v221 = vmin.f32 %v179, 20.0
  %v222 = vmin.f32 %v182, 20.0
  %v223 = vmin.f32 %v187, 20.0
  %v224 = vmin.f32 %v190, 20.0
  %v225 = vmul.f32 %v209, 1.442695
  %v226 = vpow.pop %v225
  %v227 = vmul.f32 %v210, 1.442695
  %v228 = vpow.pop %v227
  %v229 = vmul.f32 %v211, 1.442695
  %v230 = vpow.pop %v229
  %v231 = vmul.f32 %v212, 1.442695
  %v232 = vpow.pop %v231
  %v233 = vmul.f32 %v213, 1.442695
  %v234 = vpow.pop %v233
  %v235 = vmul.f32 %v214, 1.442695
  %v236 = vpow.pop %v235
  %v237 = vmul.f32 %v215, 1.442695
  %v238 = vpow.pop %v237
  %v239 = vmul.f32 %v216, 1.442695
  %v240 = vpow.pop %v239
  %v241 = vmul.f32 %v217, 1.442695
  %v242 = vpow.pop %v241
  %v243 = vmul.f32 %v218, 1.442695
  %v244 = vpow.pop %v243
  %v245 = vmul.f32 %v219, 1.442695
  %v246 = vpow.pop %v245
  %v247 = vmul.f32 %v220, 1.442695
  %v248 = vpow.pop %v247
  %v249 = vmul.f32 %v221, 1.442695
  %v250 = vpow.pop %v249
  %v251 = vmul.f32 %v222, 1.442695
  %v252 = vpow.pop %v251
  %v253 = vmul.f32 %v223, 1.442695
  %v254 = vpow.pop %v253
  %v255 = vmul.f32 %v224, 1.442695
  %v256 = vpow.pop %v255
  %v257 = vadd.f32 %v226, 1.0
  %v258 = vadd.f32 %v228, 1.0
  %v259 = vadd.f32 %v230, 1.0
  %v260 = vadd.f32 %v232, 1.0
  %v261 = vadd.f32 %v234, 1.0
  %v262 = vadd.f32 %v236, 1.0
  %v263 = vadd.f32 %v238, 1.0
  %v264 = vadd.f32 %v240, 1.0
  %v265 = vadd.f32 %v242, 1.0
  %v266 = vadd.f32 %v244, 1.0
  %v267 = vadd.f32 %v246, 1.0
  %v268 = vadd.f32 %v248, 1.0
  %v269 = vadd.f32 %v250, 1.0
  %v270 = vadd.f32 %v252, 1.0
  %v271 = vadd.f32 %v254, 1.0
  %v272 = vadd.f32 %v256, 1.0
  %v273 = vlog2.pop %v257
  %v274 = vmul.f32 %v273, 0.6931472
  %v275 = vlog2.pop %v258
  %v276 = vmul.f32 %v275, 0.6931472
  %v277 = vlog2.pop %v259
  %v278 = vmul.f32 %v277, 0.6931472
  %v279 = vlog2.pop %v260
  %v280 = vmul.f32 %v279, 0.6931472
  %v281 = vlog2.pop %v261
  %v282 = vmul.f32 %v281, 0.6931472
  %v283 = vlog2.pop %v262
  %v284 = vmul.f32 %v283, 0.6931472
  %v285 = vlog2.pop %v263
  %v286 = vmul.f32 %v285, 0.6931472
  %v287 = vlog2.pop %v264
  %v288 = vmul.f32 %v287, 0.6931472
  %v289 = vlog2.pop %v265
  %v290 = vmul.f32 %v289, 0.6931472
  %v291 = vlog2.pop %v266
  %v292 = vmul.f32 %v291, 0.6931472
  %v293 = vlog2.pop %v267
  %v294 = vmul.f32 %v293, 0.6931472
  %v295 = vlog2.pop %v268
  %v296 = vmul.f32 %v295, 0.6931472
  %v297 = vlog2.pop %v269
  %v298 = vmul.f32 %v297, 0.6931472
  %v299 = vlog2.pop %v270
  %v300 = vmul.f32 %v299, 0.6931472
  %v301 = vlog2.pop %v271
  %v302 = vmul.f32 %v301, 0.6931472
  %v303 = vlog2.pop %v272
  %v304 = vmul.f32 %v303, 0.6931472
  %v305 = vsel %vm193, %v131, %v274
  %v306 = vsel %vm194, %v134, %v276
  %v307 = vsel %vm195, %v139, %v278
  %v308 = vsel %vm196, %v142, %v280
  %v309 = vsel %vm197, %v147, %v282
  %v310 = vsel %vm198, %v150, %v284
  %v311 = vsel %vm199, %v155, %v286
  %v312 = vsel %vm200, %v158, %v288
  %v313 = vsel %vm201, %v163, %v290
  %v314 = vsel %vm202, %v166, %v292
  %v315 = vsel %vm203, %v171, %v294
  %v316 = vsel %vm204, %v174, %v296
  %v317 = vsel %vm205, %v179, %v298
  %v318 = vsel %vm206, %v182, %v300
  %v319 = vsel %vm207, %v187, %v302
  %v320 = vsel %vm208, %v190, %v304
  %321 = vst.msk [vmem:[%s5] sm:$0xff] %vm71, %v305
  %322 = vst.msk [vmem:[%s5 + $0x8] sm:$0xff] %vm71, %v306
  %323 = vst.msk [vmem:[%s5 + $0x10] sm:$0xff] %vm71, %v307
  %324 = vst.msk [vmem:[%s5 + $0x18] sm:$0xff] %vm71, %v308
  %325 = vst.msk [vmem:[%s5 + $0x20] sm:$0xff] %vm71, %v309
  %326 = vst.msk [vmem:[%s5 + $0x28] sm:$0xff] %vm71, %v310
  %327 = vst.msk [vmem:[%s5 + $0x30] sm:$0xff] %vm71, %v311
  %328 = vst.msk [vmem:[%s5 + $0x38] sm:$0xff] %vm71, %v312
  %329 = vst.msk [vmem:[%s5 + $0x40] sm:$0xff] %vm71, %v313
  %330 = vst.msk [vmem:[%s5 + $0x48] sm:$0xff] %vm71, %v314
  %331 = vst.msk [vmem:[%s5 + $0x50] sm:$0xff] %vm71, %v315
  %332 = vst.msk [vmem:[%s5 + $0x58] sm:$0xff] %vm71, %v316
  %333 = vst.msk [vmem:[%s5 + $0x60] sm:$0xff] %vm71, %v317
  %334 = vst.msk [vmem:[%s5 + $0x68] sm:$0xff] %vm71, %v318
  %335 = vst.msk [vmem:[%s5 + $0x70] sm:$0xff] %vm71, %v319
  %336 = vst.msk [vmem:[%s5 + $0x78] sm:$0xff] %vm71, %v320
  %v337 = vld [vmem:[%s2] sm:$0xf]
  %v338 = vld [vmem:[%s2 + $0x4] sm:$0xf]
  %v339 = vld [vmem:[%s2 + $0x8] sm:$0xf]
  %v340 = vld [vmem:[%s2 + $0xc] sm:$0xf]
  %v345 = vunpack.c.l.b16 %v337
  %v346 = vunpack.c.l.b16 %v338
  %v347 = vunpack.c.l.b16 %v339
  %v348 = vunpack.c.l.b16 %v340
  %v349 = vpack.c.b16 %v346, %v345
  %v350 = vpack.c.b16 %v348, %v347
  %353 = vmatprep.subr.bf16.mxu0 0
  %354 = vmatpush1.bf16.msra.mxu0 %v349
  %355 = vmatprep.subr.bf16.mxu0 0
  %356 = vmatpush1.bf16.msra.mxu0 %v350
  %357 = vmatprep.subr.bf16.mxu0 0
  %358 = vmatpush1.bf16.msra.mxu0 0
  %359 = vmatprep.subr.bf16.mxu0 0
  %360 = vmatpush1.bf16.msra.mxu0 0
  %361 = vmatprep.subr.bf16.mxu0 0
  %362 = vmatpush1.bf16.msra.mxu0 0
  %363 = vmatprep.subr.bf16.mxu0 0
  %364 = vmatpush1.bf16.msra.mxu0 0
  %365 = vmatprep.subr.bf16.mxu0 0
  %366 = vmatpush1.bf16.msra.mxu0 0
  %367 = vmatprep.subr.bf16.mxu0 0
  %368 = vmatpush1.bf16.msra.mxu0 0
  %369 = vmatprep.subr.bf16.mxu0 0
  %370 = vmatpush1.bf16.msra.mxu0 0
  %371 = vmatprep.subr.bf16.mxu0 0
  %372 = vmatpush1.bf16.msra.mxu0 0
  %373 = vmatprep.subr.bf16.mxu0 0
  %374 = vmatpush1.bf16.msra.mxu0 0
  %375 = vmatprep.subr.bf16.mxu0 0
  %376 = vmatpush1.bf16.msra.mxu0 0
  %377 = vmatprep.subr.bf16.mxu0 0
  %378 = vmatpush1.bf16.msra.mxu0 0
  %379 = vmatprep.subr.bf16.mxu0 0
  %380 = vmatpush1.bf16.msra.mxu0 0
  %381 = vmatprep.subr.bf16.mxu0 0
  %382 = vmatpush1.bf16.msra.mxu0 0
  %383 = vmatprep.subr.bf16.mxu0 0
  %384 = vmatpush1.bf16.msra.mxu0 0
  %385 = vmatprep.mubr.bf16.mxu0 0
  %386 = vmatmul.mubr.bf16.gmra.mrb[0].mxu0 %v73
  %v387 = vpop.f32.mrb[0].mxu0
  %v388 = vadd.f32 0.0, %v387
  %v389 = vpop.f32.mrb[0].mxu0
  %v390 = vpop.f32.mrb[0].mxu0
  %v391 = vadd.f32 0.0, %v390
  %v392 = vpop.f32.mrb[0].mxu0
  %393 = vmatprep.mubr.bf16.mxu0 0
  %394 = vmatmul.mubr.bf16.gmra.mrb[0].mxu0 %v76
  %v395 = vpop.f32.mrb[0].mxu0
  %v396 = vadd.f32 0.0, %v395
  %v397 = vpop.f32.mrb[0].mxu0
  %v398 = vpop.f32.mrb[0].mxu0
  %v399 = vadd.f32 0.0, %v398
  %v400 = vpop.f32.mrb[0].mxu0
  %401 = vmatprep.mubr.bf16.mxu0 0
  %402 = vmatmul.mubr.bf16.gmra.mrb[0].mxu0 %v79
  %v403 = vpop.f32.mrb[0].mxu0
  %v404 = vadd.f32 0.0, %v403
  %v405 = vpop.f32.mrb[0].mxu0
  %v406 = vpop.f32.mrb[0].mxu0
  %v407 = vadd.f32 0.0, %v406
  %v408 = vpop.f32.mrb[0].mxu0
  %409 = vmatprep.mubr.bf16.mxu0 0
  %410 = vmatmul.mubr.bf16.gmra.mrb[0].mxu0 %v82
  %v411 = vpop.f32.mrb[0].mxu0
  %v412 = vadd.f32 0.0, %v411
  %v413 = vpop.f32.mrb[0].mxu0
  %v414 = vpop.f32.mrb[0].mxu0
  %v415 = vadd.f32 0.0, %v414
  %v416 = vpop.f32.mrb[0].mxu0
  %417 = vmatprep.mubr.bf16.mxu0 0
  %418 = vmatmul.mubr.bf16.gmra.mrb[0].mxu0 %v85
  %v419 = vpop.f32.mrb[0].mxu0
  %v420 = vadd.f32 0.0, %v419
  %v421 = vpop.f32.mrb[0].mxu0
  %v422 = vpop.f32.mrb[0].mxu0
  %v423 = vadd.f32 0.0, %v422
  %v424 = vpop.f32.mrb[0].mxu0
  %425 = vmatprep.mubr.bf16.mxu0 0
  %426 = vmatmul.mubr.bf16.gmra.mrb[0].mxu0 %v88
  %v427 = vpop.f32.mrb[0].mxu0
  %v428 = vadd.f32 0.0, %v427
  %v429 = vpop.f32.mrb[0].mxu0
  %v430 = vpop.f32.mrb[0].mxu0
  %v431 = vadd.f32 0.0, %v430
  %v432 = vpop.f32.mrb[0].mxu0
  %433 = vmatprep.mubr.bf16.mxu0 0
  %434 = vmatmul.mubr.bf16.gmra.mrb[0].mxu0 %v91
  %v435 = vpop.f32.mrb[0].mxu0
  %v436 = vadd.f32 0.0, %v435
  %v437 = vpop.f32.mrb[0].mxu0
  %v438 = vpop.f32.mrb[0].mxu0
  %v439 = vadd.f32 0.0, %v438
  %v440 = vpop.f32.mrb[0].mxu0
  %441 = vmatprep.mubr.bf16.mxu0 0
  %442 = vmatmul.mubr.bf16.gmra.mrb[0].mxu0 %v94
  %v443 = vpop.f32.mrb[0].mxu0
  %v444 = vadd.f32 0.0, %v443
  %v445 = vpop.f32.mrb[0].mxu0
  %v446 = vpop.f32.mrb[0].mxu0
  %v447 = vadd.f32 0.0, %v446
  %v448 = vpop.f32.mrb[0].mxu0
  %449 = vdwg.mxu0
  %vm450 = vcmask 130048
  %451 = vst.msk [vmem:[%s6] sm:$0xff] %vm450, %v388
  %452 = vst.msk [vmem:[%s6 + $0x8] sm:$0xff] %vm450, %v391
  %453 = vst.msk [vmem:[%s6 + $0x10] sm:$0xff] %vm450, %v396
  %454 = vst.msk [vmem:[%s6 + $0x18] sm:$0xff] %vm450, %v399
  %455 = vst.msk [vmem:[%s6 + $0x20] sm:$0xff] %vm450, %v404
  %456 = vst.msk [vmem:[%s6 + $0x28] sm:$0xff] %vm450, %v407
  %457 = vst.msk [vmem:[%s6 + $0x30] sm:$0xff] %vm450, %v412
  %458 = vst.msk [vmem:[%s6 + $0x38] sm:$0xff] %vm450, %v415
  %459 = vst.msk [vmem:[%s6 + $0x40] sm:$0xff] %vm450, %v420
  %460 = vst.msk [vmem:[%s6 + $0x48] sm:$0xff] %vm450, %v423
  %461 = vst.msk [vmem:[%s6 + $0x50] sm:$0xff] %vm450, %v428
  %462 = vst.msk [vmem:[%s6 + $0x58] sm:$0xff] %vm450, %v431
  %463 = vst.msk [vmem:[%s6 + $0x60] sm:$0xff] %vm450, %v436
  %464 = vst.msk [vmem:[%s6 + $0x68] sm:$0xff] %vm450, %v439
  %465 = vst.msk [vmem:[%s6 + $0x70] sm:$0xff] %vm450, %v444
  %466 = vst.msk [vmem:[%s6 + $0x78] sm:$0xff] %vm450, %v447
  %v467 = vld [vmem:[%s3] sm:$0xf]
  %v468 = vld [vmem:[%s3 + $0x4] sm:$0xf]
  %v469 = vld [vmem:[%s3 + $0x8] sm:$0xf]
  %v470 = vld [vmem:[%s3 + $0xc] sm:$0xf]
  %v475 = vunpack.c.l.b16 %v467
  %v476 = vunpack.c.l.b16 %v468
  %v477 = vunpack.c.l.b16 %v469
  %v478 = vunpack.c.l.b16 %v470
  %v479 = vpack.c.b16 %v476, %v475
  %v480 = vpack.c.b16 %v478, %v477
  %483 = vmatprep.subr.bf16.mxu0 0
  %484 = vmatpush1.bf16.msra.mxu0 %v479
  %485 = vmatprep.subr.bf16.mxu0 0
  %486 = vmatpush1.bf16.msra.mxu0 %v480
  %487 = vmatprep.subr.bf16.mxu0 0
  %488 = vmatpush1.bf16.msra.mxu0 0
  %489 = vmatprep.subr.bf16.mxu0 0
  %490 = vmatpush1.bf16.msra.mxu0 0
  %491 = vmatprep.subr.bf16.mxu0 0
  %492 = vmatpush1.bf16.msra.mxu0 0
  %493 = vmatprep.subr.bf16.mxu0 0
  %494 = vmatpush1.bf16.msra.mxu0 0
  %495 = vmatprep.subr.bf16.mxu0 0
  %496 = vmatpush1.bf16.msra.mxu0 0
  %497 = vmatprep.subr.bf16.mxu0 0
  %498 = vmatpush1.bf16.msra.mxu0 0
  %499 = vmatprep.subr.bf16.mxu0 0
  %500 = vmatpush1.bf16.msra.mxu0 0
  %501 = vmatprep.subr.bf16.mxu0 0
  %502 = vmatpush1.bf16.msra.mxu0 0
  %503 = vmatprep.subr.bf16.mxu0 0
  %504 = vmatpush1.bf16.msra.mxu0 0
  %505 = vmatprep.subr.bf16.mxu0 0
  %506 = vmatpush1.bf16.msra.mxu0 0
  %507 = vmatprep.subr.bf16.mxu0 0
  %508 = vmatpush1.bf16.msra.mxu0 0
  %509 = vmatprep.subr.bf16.mxu0 0
  %510 = vmatpush1.bf16.msra.mxu0 0
  %511 = vmatprep.subr.bf16.mxu0 0
  %512 = vmatpush1.bf16.msra.mxu0 0
  %513 = vmatprep.subr.bf16.mxu0 0
  %514 = vmatpush1.bf16.msra.mxu0 0
  %515 = vmatprep.mubr.bf16.mxu0 0
  %516 = vmatmul.mubr.bf16.gmra.mrb[0].mxu0 %v73
  %v517 = vpop.f32.mrb[0].mxu0
  %v518 = vadd.f32 0.0, %v517
  %v519 = vpop.f32.mrb[0].mxu0
  %v520 = vpop.f32.mrb[0].mxu0
  %v521 = vadd.f32 0.0, %v520
  %v522 = vpop.f32.mrb[0].mxu0
  %523 = vmatprep.mubr.bf16.mxu0 0
  %524 = vmatmul.mubr.bf16.gmra.mrb[0].mxu0 %v76
  %v525 = vpop.f32.mrb[0].mxu0
  %v526 = vadd.f32 0.0, %v525
  %v527 = vpop.f32.mrb[0].mxu0
  %v528 = vpop.f32.mrb[0].mxu0
  %v529 = vadd.f32 0.0, %v528
  %v530 = vpop.f32.mrb[0].mxu0
  %531 = vmatprep.mubr.bf16.mxu0 0
  %532 = vmatmul.mubr.bf16.gmra.mrb[0].mxu0 %v79
  %v533 = vpop.f32.mrb[0].mxu0
  %v534 = vadd.f32 0.0, %v533
  %v535 = vpop.f32.mrb[0].mxu0
  %v536 = vpop.f32.mrb[0].mxu0
  %v537 = vadd.f32 0.0, %v536
  %v538 = vpop.f32.mrb[0].mxu0
  %539 = vmatprep.mubr.bf16.mxu0 0
  %540 = vmatmul.mubr.bf16.gmra.mrb[0].mxu0 %v82
  %v541 = vpop.f32.mrb[0].mxu0
  %v542 = vadd.f32 0.0, %v541
  %v543 = vpop.f32.mrb[0].mxu0
  %v544 = vpop.f32.mrb[0].mxu0
  %v545 = vadd.f32 0.0, %v544
  %v546 = vpop.f32.mrb[0].mxu0
  %547 = vmatprep.mubr.bf16.mxu0 0
  %548 = vmatmul.mubr.bf16.gmra.mrb[0].mxu0 %v85
  %v549 = vpop.f32.mrb[0].mxu0
  %v550 = vadd.f32 0.0, %v549
  %v551 = vpop.f32.mrb[0].mxu0
  %v552 = vpop.f32.mrb[0].mxu0
  %v553 = vadd.f32 0.0, %v552
  %v554 = vpop.f32.mrb[0].mxu0
  %555 = vmatprep.mubr.bf16.mxu0 0
  %556 = vmatmul.mubr.bf16.gmra.mrb[0].mxu0 %v88
  %v557 = vpop.f32.mrb[0].mxu0
  %v558 = vadd.f32 0.0, %v557
  %v559 = vpop.f32.mrb[0].mxu0
  %v560 = vpop.f32.mrb[0].mxu0
  %v561 = vadd.f32 0.0, %v560
  %v562 = vpop.f32.mrb[0].mxu0
  %563 = vmatprep.mubr.bf16.mxu0 0
  %564 = vmatmul.mubr.bf16.gmra.mrb[0].mxu0 %v91
  %v565 = vpop.f32.mrb[0].mxu0
  %v566 = vadd.f32 0.0, %v565
  %v567 = vpop.f32.mrb[0].mxu0
  %v568 = vpop.f32.mrb[0].mxu0
  %v569 = vadd.f32 0.0, %v568
  %v570 = vpop.f32.mrb[0].mxu0
  %571 = vmatprep.mubr.bf16.mxu0 0
  %572 = vmatmul.mubr.bf16.gmra.mrb[0].mxu0 %v94
  %v573 = vpop.f32.mrb[0].mxu0
  %v574 = vadd.f32 0.0, %v573
  %v575 = vpop.f32.mrb[0].mxu0
  %v576 = vpop.f32.mrb[0].mxu0
  %v577 = vadd.f32 0.0, %v576
  %v578 = vpop.f32.mrb[0].mxu0
  %579 = vdwg.mxu0
  %580 = vst.msk [vmem:[%s7] sm:$0xff] %vm450, %v518
  %581 = vst.msk [vmem:[%s7 + $0x8] sm:$0xff] %vm450, %v521
  %582 = vst.msk [vmem:[%s7 + $0x10] sm:$0xff] %vm450, %v526
  %583 = vst.msk [vmem:[%s7 + $0x18] sm:$0xff] %vm450, %v529
  %584 = vst.msk [vmem:[%s7 + $0x20] sm:$0xff] %vm450, %v534
  %585 = vst.msk [vmem:[%s7 + $0x28] sm:$0xff] %vm450, %v537
  %586 = vst.msk [vmem:[%s7 + $0x30] sm:$0xff] %vm450, %v542
  %587 = vst.msk [vmem:[%s7 + $0x38] sm:$0xff] %vm450, %v545
  %588 = vst.msk [vmem:[%s7 + $0x40] sm:$0xff] %vm450, %v550
  %589 = vst.msk [vmem:[%s7 + $0x48] sm:$0xff] %vm450, %v553
  %590 = vst.msk [vmem:[%s7 + $0x50] sm:$0xff] %vm450, %v558
  %591 = vst.msk [vmem:[%s7 + $0x58] sm:$0xff] %vm450, %v561
  %592 = vst.msk [vmem:[%s7 + $0x60] sm:$0xff] %vm450, %v566
  %593 = vst.msk [vmem:[%s7 + $0x68] sm:$0xff] %vm450, %v569
  %594 = vst.msk [vmem:[%s7 + $0x70] sm:$0xff] %vm450, %v574
  %595 = vst.msk [vmem:[%s7 + $0x78] sm:$0xff] %vm450, %v577
  // Predicated region
  $region22: #{ss2d_k1_forward.7} parent=0 // pred_check
    _
  $region23: #{ss2d_k1_forward.7} parent=0 // pred_check_branch
    %597 = sbr.rel (0) target = $region25
  $region24: #{ss2d_k1_forward.7} parent=0 // pred_region
    _
  $region25: #{ss2d_k1_forward.7} parent=0 // pred_fallthru
    _
  // Predicated region
  $region26: #{ss2d_k1_forward.7} parent=0 // pred_check
    _
  $region27: #{ss2d_k1_forward.7} parent=0 // pred_check_branch
    %599 = sbr.rel (0) target = $region29
  $region28: #{ss2d_k1_forward.7} parent=0 // pred_region
    _
  $region29: #{ss2d_k1_forward.7} parent=0 // pred_fallthru
    _
  // Predicated region
  $region30: #{ss2d_k1_forward.7} parent=0 // pred_check
    _
  $region31: #{ss2d_k1_forward.7} parent=0 // pred_check_branch
    %601 = sbr.rel (0) target = $region33
  $region32: #{ss2d_k1_forward.7} parent=0 // pred_region
    _
  $region33: #{ss2d_k1_forward.7} parent=0 // pred_fallthru
    _
  // Predicated region
  $region34: #{ss2d_k1_forward.7} parent=0 // pred_check
    _
  $region35: #{ss2d_k1_forward.7} parent=0 // pred_check_branch
    %603 = sbr.rel (0) target = $region37
  $region36: #{ss2d_k1_forward.7} parent=0 // pred_region
    _
  $region37: #{ss2d_k1_forward.7} parent=0 // pred_fallthru
    _
  // Predicated region
  $region38: #{ss2d_k1_forward.7} parent=0 // pred_check
    _
  $region39: #{ss2d_k1_forward.7} parent=0 // pred_check_branch
    %605 = sbr.rel (0) target = $region41
  $region40: #{ss2d_k1_forward.7} parent=0 // pred_region
    _
  $region41: #{ss2d_k1_forward.7} parent=0 // pred_fallthru
    _
  // Predicated region
  $region42: #{ss2d_k1_forward.7} parent=0 // pred_check
    _
  $region43: #{ss2d_k1_forward.7} parent=0 // pred_check_branch
    %607 = sbr.rel (0) target = $region45
  $region44: #{ss2d_k1_forward.7} parent=0 // pred_region
    _
  $region45: #{ss2d_k1_forward.7} parent=0 // pred_fallthru
    _

// kernel: ss2d_k1_forward.6
$region0: #{ss2d_k1_forward.6}
  #allocation0 [shape = 'u32[]', space=smem, size = 0x4, offset = 0x4, fixed_abs, tag = 'smem constant byte address 0x4 - core index']
  #allocation1 [shape = 'u32[144,128]{1,0:T(1,128)}', space=vmem, size = 0x12000, scoped, tag = 'internal scratch']
  #allocation2 [shape = 'f32[10,10,32]{2,1,0:T(8,128)}', space=vmem, size = 0x14000, scoped, tag = 'scratch operand']
  %s0 = inlined_call_operand.vmem [shape: f32[2,8,8,32], index: 0, kind: input, shape index: {}]
  %s1 = inlined_call_operand.vmem [shape: f32[3,3,32], index: 1, kind: input, shape index: {}]
  %s2 = inlined_call_operand.vmem [shape: f32[1,32], index: 2, kind: input, shape index: {}]
  %s3 = inlined_call_operand.vmem [shape: f32[2,8,8,32], index: 3, kind: output, shape index: {}]
  %s4 = sld [smem:[#allocation0]]
  $region45: #{ss2d_k1_forward.6} parent=0
    _
  %s6 = ssub.s32 1, %s4
  %s7 = scalar_select 0, %s6, %s4
  loop: start=0, step=1, limit=4
  $region2: #{ss2d_k1_forward.6} parent=0 // loop_pre_header
    _
  $region3: #{ss2d_k1_forward.6} parent=0 // loop_header
    %s9 = sphi 0, %s13
    %p10 = scmp.ge.s32.totalorder %s9, 4
    %s19 = sphi 0, %s21
    %s22 = sphi 0, %s19
    %s23 = sphi 0, %s22
    %s39 = sphi 0, %s23
    %s43 = sphi 0, %s43
    %s45 = sphi 0, %s43
    %s46 = sphi 0, %s45
    %s60 = sphi 0, %s46
    %s64 = sphi 0, %s64
    %s66 = sphi 0, %s64
    %s67 = sphi 0, %s66
    %s81 = sphi 0, %s67
    %s87 = sphi 0, %s89
    %s90 = sphi 0, %s87
    %s91 = sphi 0, %s90
    %s107 = sphi 0, %s91
  $region4: #{ss2d_k1_forward.6} parent=0 // loop_header_branch
    %12 = sbr.rel (%p10) target = $region8
  $region5: #{ss2d_k1_forward.6} parent=0 // loop_body
    %s14 = ssub.s32 %s9, 1
    %s15 = ssub.s32 %s9, 2
    %s16 = sadd.s32 %s9, 1
    %s17 = ssub.s32 %s9, %s16
    %p18 = scmp.eq.s32.totalorder %s17, 0
    %s20 = sadd.s32 %s19, 1
    %s21 = scalar_select %p18, %s19, %s20
    %p24 = pneg %p18
    %p25 = scmp.eq.s32.totalorder %s9, 1
    %p26 = por %p24, %p25
    %p27 = scmp.ne.s32.totalorder %s19, %s22
    %p28 = scmp.eq.s32.totalorder %s9, 0
    %p29 = por %p27, %p28
    %p30 = scmp.ne.s32.totalorder %s19, %s22
    %p31 = scmp.eq.s32.totalorder %s14, 1
    %p32 = por %p30, %p31
    %p33 = scmp.ne.s32.totalorder %s22, %s23
    %p34 = scmp.eq.s32.totalorder %s14, 0
    %p35 = por %p33, %p34
    %p36 = scmp.ne.s32.totalorder %s22, %s23
    %p37 = scmp.eq.s32.totalorder %s15, 1
    %p38 = por %p36, %p37
    %p40 = scmp.ne.s32.totalorder %s23, %s39
    %p41 = scmp.eq.s32.totalorder %s15, 0
    %p42 = por %p40, %p41
    %s44 = sadd.s32 %s43, 1
    %p47 = scmp.eq.s32.totalorder %s9, 1
    %p48 = scmp.ne.s32.totalorder %s43, %s45
    %p49 = scmp.eq.s32.totalorder %s9, 0
    %p50 = por %p48, %p49
    %p51 = scmp.ne.s32.totalorder %s43, %s45
    %p52 = scmp.eq.s32.totalorder %s14, 1
    %p53 = por %p51, %p52
    %p54 = scmp.ne.s32.totalorder %s45, %s46
    %p55 = scmp.eq.s32.totalorder %s14, 0
    %p56 = por %p54, %p55
    %p57 = scmp.ne.s32.totalorder %s45, %s46
    %p58 = scmp.eq.s32.totalorder %s15, 1
    %p59 = por %p57, %p58
    %p61 = scmp.ne.s32.totalorder %s46, %s60
    %p62 = scmp.eq.s32.totalorder %s15, 0
    %p63 = por %p61, %p62
    %s65 = sadd.s32 %s64, 1
    %p68 = scmp.eq.s32.totalorder %s9, 1
    %p69 = scmp.ne.s32.totalorder %s64, %s66
    %p70 = scmp.eq.s32.totalorder %s9, 0
    %p71 = por %p69, %p70
    %p72 = scmp.ne.s32.totalorder %s64, %s66
    %p73 = scmp.eq.s32.totalorder %s14, 1
    %p74 = por %p72, %p73
    %p75 = scmp.ne.s32.totalorder %s66, %s67
    %p76 = scmp.eq.s32.totalorder %s14, 0
    %p77 = por %p75, %p76
    %p78 = scmp.ne.s32.totalorder %s66, %s67
    %p79 = scmp.eq.s32.totalorder %s15, 1
    %p80 = por %p78, %p79
    %p82 = scmp.ne.s32.totalorder %s67, %s81
    %p83 = scmp.eq.s32.totalorder %s15, 0
    %p84 = por %p82, %p83
    %s85 = ssub.s32 %s9, %s16
    %p86 = scmp.eq.s32.totalorder %s85, 0
    %s88 = sadd.s32 %s87, 1
    %s89 = scalar_select %p86, %s87, %s88
    %p92 = pneg %p86
    %p93 = scmp.eq.s32.totalorder %s9, 1
    %p94 = por %p92, %p93
    %p95 = scmp.ne.s32.totalorder %s87, %s90
    %p96 = scmp.eq.s32.totalorder %s9, 0
    %p97 = por %p95, %p96
    %p98 = scmp.ne.s32.totalorder %s87, %s90
    %p99 = scmp.eq.s32.totalorder %s14, 1
    %p100 = por %p98, %p99
    %p101 = scmp.ne.s32.totalorder %s90, %s91
    %p102 = scmp.eq.s32.totalorder %s14, 0
    %p103 = por %p101, %p102
    %p104 = scmp.ne.s32.totalorder %s90, %s91
    %p105 = scmp.eq.s32.totalorder %s15, 1
    %p106 = por %p104, %p105
    %p108 = scmp.ne.s32.totalorder %s91, %s107
    %p109 = scmp.eq.s32.totalorder %s15, 0
    %p110 = por %p108, %p109
    %p111 = scmp.le.s32.totalorder 1, %s9
    %p112 = scmp.lt.s32.totalorder %s9, 3
    %p113 = pnand %p111, %p112
    %p114 = pneg %p113
    // Predicated region
    $region9: #{ss2d_k1_forward.6} parent=5 // pred_check
      _
    $region10: #{ss2d_k1_forward.6} parent=5 // pred_check_branch
      %116 = sbr.rel (%p113) target = $region12
    $region11: #{ss2d_k1_forward.6} parent=5 // pred_region
      %s117 = ssub.s32 %s9, 1
      // Predicated region
      $region13: #{ss2d_k1_forward.6} parent=11 // pred_check
        %p118 = pneg %p56
      $region14: #{ss2d_k1_forward.6} parent=11 // pred_check_branch
        %120 = sbr.rel (%p118) target = $region16
      $region15: #{ss2d_k1_forward.6} parent=11 // pred_region
        _
      $region16: #{ss2d_k1_forward.6} parent=11 // pred_fallthru
        _
      // Predicated region
      $region17: #{ss2d_k1_forward.6} parent=11 // pred_check
        %p121 = pneg %p77
      $region18: #{ss2d_k1_forward.6} parent=11 // pred_check_branch
        %123 = sbr.rel (%p121) target = $region20
      $region19: #{ss2d_k1_forward.6} parent=11 // pred_region
        _
      $region20: #{ss2d_k1_forward.6} parent=11 // pred_fallthru
        _
    $region12: #{ss2d_k1_forward.6} parent=5 // pred_fallthru
      _
    %p124 = scmp.lt.s32.totalorder %s9, 2
    // Predicated region
    $region21: #{ss2d_k1_forward.6} parent=5 // pred_check
      %p125 = pneg %p124
    $region22: #{ss2d_k1_forward.6} parent=5 // pred_check_branch
      %127 = sbr.rel (%p125) target = $region24
    $region23: #{ss2d_k1_forward.6} parent=5 // pred_region
      // Predicated region
      $region25: #{ss2d_k1_forward.6} parent=23 // pred_check
        %p128 = pneg %p29
      $region26: #{ss2d_k1_forward.6} parent=23 // pred_check_branch
        %130 = sbr.rel (%p128) target = $region28
      $region27: #{ss2d_k1_forward.6} parent=23 // pred_region
        %p131 = scmp.lt.s32.totalorder %s9, 1
        %s132 = scalar_select %p131, %s9, 1
        %s133 = smul.addr %s132, 8
        %s134 = smul.addr %s133, 8
        %s135 = scalar_lea.vmem %s0, %s134
      $region28: #{ss2d_k1_forward.6} parent=23 // pred_fallthru
        _
    $region24: #{ss2d_k1_forward.6} parent=5 // pred_fallthru
      _
    %p136 = scmp.le.s32.totalorder 1, %s9
    %p137 = scmp.lt.s32.totalorder %s9, 3
    %p138 = pnand %p136, %p137
    %p139 = pneg %p138
    // Predicated region
    $region29: #{ss2d_k1_forward.6} parent=5 // pred_check
      _
    $region30: #{ss2d_k1_forward.6} parent=5 // pred_check_branch
      %141 = sbr.rel (%p138) target = $region32
    $region31: #{ss2d_k1_forward.6} parent=5 // pred_region
      %s142 = ssub.s32 %s9, 1
      %p143 = scmp.lt.s32.totalorder %s14, 1
      %s144 = scalar_select %p143, %s14, 1
      %s145 = smul.addr %s144, 8
      %s146 = smul.addr %s145, 8
      %s147 = scalar_lea.vmem %s0, %s146
      %p148 = pneg %p35
      %p149 = pneg %p32
      %p150 = pneg %p56
      %p151 = pneg %p53
      %p152 = pneg %p77
      %p153 = pneg %p74
      %p154 = pneg %p103
      %p155 = pneg %p100
      %p156 = scmp.lt.s32.totalorder %s14, 1
      %s157 = scalar_select %p156, %s14, 1
      %s158 = smul.addr %s157, 8
      %s159 = smul.addr %s158, 8
      %s160 = scalar_lea.vmem %s3, %s159
      %p161 = scmp.lt.s32.totalorder %s14, 1
      %s162 = scalar_select %p161, %s14, 1
      %s163 = smul.addr %s162, 8
      %s164 = smul.addr %s163, 8
      %s165 = scalar_lea.vmem %s0, %s164
      %p166 = scmp.lt.s32.totalorder %s14, 1
      %s167 = scalar_select %p166, %s14, 1
      %s168 = smul.addr %s167, 8
      %s169 = smul.addr %s168, 8
      %s170 = scalar_lea.vmem %s3, %s169
      %vm171 = vcmask 261120
      %172 = vst.msk [vmem:[#allocation2] sm:$0xff] %vm171, 0.0
      %vm173 = vcmask 254976
      %174 = vst.msk [vmem:[#allocation2 + $0x8] sm:$0x3] %vm173, 0.0
      %175 = vst.msk [vmem:[#allocation2 + $0x10] sm:$0xff] %vm171, 0.0
      %176 = vst.msk [vmem:[#allocation2 + $0x18] sm:$0x3] %vm173, 0.0
      %177 = vst.msk [vmem:[#allocation2 + $0x20] sm:$0xff] %vm171, 0.0
      %178 = vst.msk [vmem:[#allocation2 + $0x28] sm:$0x3] %vm173, 0.0
      %179 = vst.msk [vmem:[#allocation2 + $0x30] sm:$0xff] %vm171, 0.0
      %180 = vst.msk [vmem:[#allocation2 + $0x38] sm:$0x3] %vm173, 0.0
      %181 = vst.msk [vmem:[#allocation2 + $0x40] sm:$0xff] %vm171, 0.0
      %182 = vst.msk [vmem:[#allocation2 + $0x48] sm:$0x3] %vm173, 0.0
      %183 = vst.msk [vmem:[#allocation2 + $0x50] sm:$0xff] %vm171, 0.0
      %184 = vst.msk [vmem:[#allocation2 + $0x58] sm:$0x3] %vm173, 0.0
      %185 = vst.msk [vmem:[#allocation2 + $0x60] sm:$0xff] %vm171, 0.0
      %186 = vst.msk [vmem:[#allocation2 + $0x68] sm:$0x3] %vm173, 0.0
      %187 = vst.msk [vmem:[#allocation2 + $0x70] sm:$0xff] %vm171, 0.0
      %188 = vst.msk [vmem:[#allocation2 + $0x78] sm:$0x3] %vm173, 0.0
      %189 = vst.msk [vmem:[#allocation2 + $0x80] sm:$0xff] %vm171, 0.0
      %190 = vst.msk [vmem:[#allocation2 + $0x88] sm:$0x3] %vm173, 0.0
      %191 = vst.msk [vmem:[#allocation2 + $0x90] sm:$0xff] %vm171, 0.0
      %192 = vst.msk [vmem:[#allocation2 + $0x98] sm:$0x3] %vm173, 0.0
      %v193 = vld [vmem:[%s165] sm:$0xff]
      %v194 = vld [vmem:[%s165 + $0x8] sm:$0xff]
      %v195 = vld [vmem:[%s165 + $0x10] sm:$0xff]
      %v196 = vld [vmem:[%s165 + $0x18] sm:$0xff]
      %v197 = vld [vmem:[%s165 + $0x20] sm:$0xff]
      %v198 = vld [vmem:[%s165 + $0x28] sm:$0xff]
      %v199 = vld [vmem:[%s165 + $0x30] sm:$0xff]
      %v200 = vld [vmem:[%s165 + $0x38] sm:$0xff]
      %s201 = scalar_lea.vmem [#allocation2], 16
      %202 = vst.msk [vmem:[%s201 + $0x1] sm:$0xff] %vm171, %v193
      %203 = vst.msk [vmem:[%s201 + $0x11] sm:$0xff] %vm171, %v194
      %204 = vst.msk [vmem:[%s201 + $0x21] sm:$0xff] %vm171, %v195
      %205 = vst.msk [vmem:[%s201 + $0x31] sm:$0xff] %vm171, %v196
      %206 = vst.msk [vmem:[%s201 + $0x41] sm:$0xff] %vm171, %v197
      %207 = vst.msk [vmem:[%s201 + $0x51] sm:$0xff] %vm171, %v198
      %208 = vst.msk [vmem:[%s201 + $0x61] sm:$0xff] %vm171, %v199
      %209 = vst.msk [vmem:[%s201 + $0x71] sm:$0xff] %vm171, %v200
      %v210 = vld [vmem:[%s1] sm:$0x7]
      %v211 = vld [vmem:[%s1 + $0x4] sm:$0x7]
      %v212 = vld [vmem:[%s1 + $0x8] sm:$0x7]
      %v213 = vld [vmem:[#allocation2] sm:$0xff]
      %v214 = vld [vmem:[#allocation2 + $0x10] sm:$0xff]
      %v215 = vld [vmem:[#allocation2 + $0x20] sm:$0xff]
      %v216 = vld [vmem:[#allocation2 + $0x30] sm:$0xff]
      %v217 = vld [vmem:[#allocation2 + $0x40] sm:$0xff]
      %v218 = vld [vmem:[#allocation2 + $0x50] sm:$0xff]
      %v219 = vld [vmem:[#allocation2 + $0x60] sm:$0xff]
      %v220 = vld [vmem:[#allocation2 + $0x70] sm:$0xff]
      %v221 = vlaneseq
      %v222 = vshrl.u32 %v221, 7
      %v223 = vsub.s32 0, %v222
      %v224 = vrot.slane %v210, %v223
      %v225 = vmul.f32 %v213, %v224
      %v226 = vmul.f32 %v214, %v224
      %v227 = vmul.f32 %v215, %v224
      %v228 = vmul.f32 %v216, %v224
      %v229 = vmul.f32 %v217, %v224
      %v230 = vmul.f32 %v218, %v224
      %v231 = vmul.f32 %v219, %v224
      %v232 = vmul.f32 %v220, %v224
      %v233 = vadd.f32 %v225, 0.0
      %v234 = vadd.f32 %v226, 0.0
      %v235 = vadd.f32 %v227, 0.0
      %v236 = vadd.f32 %v228, 0.0
      %v237 = vadd.f32 %v229, 0.0
      %v238 = vadd.f32 %v230, 0.0
      %v239 = vadd.f32 %v231, 0.0
      %v240 = vadd.f32 %v232, 0.0
      %v241 = vld [vmem:[#allocation2 + $0x1] sm:$0xff]
      %v242 = vld [vmem:[#allocation2 + $0x11] sm:$0xff]
      %v243 = vld [vmem:[#allocation2 + $0x21] sm:$0xff]
      %v244 = vld [vmem:[#allocation2 + $0x31] sm:$0xff]
      %v245 = vld [vmem:[#allocation2 + $0x41] sm:$0xff]
      %v246 = vld [vmem:[#allocation2 + $0x51] sm:$0xff]
      %v247 = vld [vmem:[#allocation2 + $0x61] sm:$0xff]
      %v248 = vld [vmem:[#allocation2 + $0x71] sm:$0xff]
      %v249 = vlaneseq
      %v250 = vshrl.u32 %v249, 7
      %v251 = vsub.s32 1, %v250
      %v252 = vrot.slane %v210, %v251
      %v253 = vmul.f32 %v241, %v252
      %v254 = vmul.f32 %v242, %v252
      %v255 = vmul.f32 %v243, %v252
      %v256 = vmul.f32 %v244, %v252
      %v257 = vmul.f32 %v245, %v252
      %v258 = vmul.f32 %v246, %v252
      %v259 = vmul.f32 %v247, %v252
      %v260 = vmul.f32 %v248, %v252
      %v261 = vadd.f32 %v233, %v253
      %v262 = vadd.f32 %v234, %v254
      %v263 = vadd.f32 %v235, %v255
      %v264 = vadd.f32 %v236, %v256
      %v265 = vadd.f32 %v237, %v257
      %v266 = vadd.f32 %v238, %v258
      %v267 = vadd.f32 %v239, %v259
      %v268 = vadd.f32 %v240, %v260
      %v269 = vld [vmem:[#allocation2 + $0x2] sm:$0xff]
      %v270 = vld [vmem:[#allocation2 + $0x12] sm:$0xff]
      %v271 = vld [vmem:[#allocation2 + $0x22] sm:$0xff]
      %v272 = vld [vmem:[#allocation2 + $0x32] sm:$0xff]
      %v273 = vld [vmem:[#allocation2 + $0x42] sm:$0xff]
      %v274 = vld [vmem:[#allocation2 + $0x52] sm:$0xff]
      %v275 = vld [vmem:[#allocation2 + $0x62] sm:$0xff]
      %v276 = vld [vmem:[#allocation2 + $0x72] sm:$0xff]
      %v277 = vlaneseq
      %v278 = vshrl.u32 %v277, 7
      %v279 = vsub.s32 2, %v278
      %v280 = vrot.slane %v210, %v279
      %v281 = vmul.f32 %v269, %v280
      %v282 = vmul.f32 %v270, %v280
      %v283 = vmul.f32 %v271, %v280
      %v284 = vmul.f32 %v272, %v280
      %v285 = vmul.f32 %v273, %v280
      %v286 = vmul.f32 %v274, %v280
      %v287 = vmul.f32 %v275, %v280
      %v288 = vmul.f32 %v276, %v280
      %v289 = vadd.f32 %v261, %v281
      %v290 = vadd.f32 %v262, %v282
      %v291 = vadd.f32 %v263, %v283
      %v292 = vadd.f32 %v264, %v284
      %v293 = vadd.f32 %v265, %v285
      %v294 = vadd.f32 %v266, %v286
      %v295 = vadd.f32 %v267, %v287
      %v296 = vadd.f32 %v268, %v288
      %v297 = vld [vmem:[%s201] sm:$0xff]
      %v298 = vld [vmem:[%s201 + $0x10] sm:$0xff]
      %v299 = vld [vmem:[%s201 + $0x20] sm:$0xff]
      %v300 = vld [vmem:[%s201 + $0x30] sm:$0xff]
      %v301 = vld [vmem:[%s201 + $0x40] sm:$0xff]
      %v302 = vld [vmem:[%s201 + $0x50] sm:$0xff]
      %v303 = vld [vmem:[%s201 + $0x60] sm:$0xff]
      %v304 = vld [vmem:[%s201 + $0x70] sm:$0xff]
      %v305 = vlaneseq
      %v306 = vshrl.u32 %v305, 7
      %v307 = vsub.s32 0, %v306
      %v308 = vrot.slane %v211, %v307
      %v309 = vmul.f32 %v297, %v308
      %v310 = vmul.f32 %v298, %v308
      %v311 = vmul.f32 %v299, %v308
      %v312 = vmul.f32 %v300, %v308
      %v313 = vmul.f32 %v301, %v308
      %v314 = vmul.f32 %v302, %v308
      %v315 = vmul.f32 %v303, %v308
      %v316 = vmul.f32 %v304, %v308
      %v317 = vadd.f32 %v289, %v309
      %v318 = vadd.f32 %v290, %v310
      %v319 = vadd.f32 %v291, %v311
      %v320 = vadd.f32 %v292, %v312
      %v321 = vadd.f32 %v293, %v313
      %v322 = vadd.f32 %v294, %v314
      %v323 = vadd.f32 %v295, %v315
      %v324 = vadd.f32 %v296, %v316
      %v325 = vld [vmem:[%s201 + $0x1] sm:$0xff]
      %v326 = vld [vmem:[%s201 + $0x11] sm:$0xff]
      %v327 = vld [vmem:[%s201 + $0x21] sm:$0xff]
      %v328 = vld [vmem:[%s201 + $0x31] sm:$0xff]
      %v329 = vld [vmem:[%s201 + $0x41] sm:$0xff]
      %v330 = vld [vmem:[%s201 + $0x51] sm:$0xff]
      %v331 = vld [vmem:[%s201 + $0x61] sm:$0xff]
      %v332 = vld [vmem:[%s201 + $0x71] sm:$0xff]
      %v333 = vlaneseq
      %v334 = vshrl.u32 %v333, 7
      %v335 = vsub.s32 1, %v334
      %v336 = vrot.slane %v211, %v335
      %v337 = vmul.f32 %v325, %v336
      %v338 = vmul.f32 %v326, %v336
      %v339 = vmul.f32 %v327, %v336
      %v340 = vmul.f32 %v328, %v336
      %v341 = vmul.f32 %v329, %v336
      %v342 = vmul.f32 %v330, %v336
      %v343 = vmul.f32 %v331, %v336
      %v344 = vmul.f32 %v332, %v336
      %v345 = vadd.f32 %v317, %v337
      %v346 = vadd.f32 %v318, %v338
      %v347 = vadd.f32 %v319, %v339
      %v348 = vadd.f32 %v320, %v340
      %v349 = vadd.f32 %v321, %v341
      %v350 = vadd.f32 %v322, %v342
      %v351 = vadd.f32 %v323, %v343
      %v352 = vadd.f32 %v324, %v344
      %v353 = vld [vmem:[%s201 + $0x2] sm:$0xff]
      %v354 = vld [vmem:[%s201 + $0x12] sm:$0xff]
      %v355 = vld [vmem:[%s201 + $0x22] sm:$0xff]
      %v356 = vld [vmem:[%s201 + $0x32] sm:$0xff]
      %v357 = vld [vmem:[%s201 + $0x42] sm:$0xff]
      %v358 = vld [vmem:[%s201 + $0x52] sm:$0xff]
      %v359 = vld [vmem:[%s201 + $0x62] sm:$0xff]
      %v360 = vld [vmem:[%s201 + $0x72] sm:$0xff]
      %v361 = vlaneseq
      %v362 = vshrl.u32 %v361, 7
      %v363 = vsub.s32 2, %v362
      %v364 = vrot.slane %v211, %v363
      %v365 = vmul.f32 %v353, %v364
      %v366 = vmul.f32 %v354, %v364
      %v367 = vmul.f32 %v355, %v364
      %v368 = vmul.f32 %v356, %v364
      %v369 = vmul.f32 %v357, %v364
      %v370 = vmul.f32 %v358, %v364
      %v371 = vmul.f32 %v359, %v364
      %v372 = vmul.f32 %v360, %v364
      %v373 = vadd.f32 %v345, %v365
      %v374 = vadd.f32 %v346, %v366
      %v375 = vadd.f32 %v347, %v367
      %v376 = vadd.f32 %v348, %v368
      %v377 = vadd.f32 %v349, %v369
      %v378 = vadd.f32 %v350, %v370
      %v379 = vadd.f32 %v351, %v371
      %v380 = vadd.f32 %v352, %v372
      %s381 = scalar_lea.vmem [#allocation2], 32
      %v382 = vld [vmem:[%s381] sm:$0xff]
      %v383 = vld [vmem:[%s381 + $0x10] sm:$0xff]
      %v384 = vld [vmem:[%s381 + $0x20] sm:$0xff]
      %v385 = vld [vmem:[%s381 + $0x30] sm:$0xff]
      %v386 = vld [vmem:[%s381 + $0x40] sm:$0xff]
      %v387 = vld [vmem:[%s381 + $0x50] sm:$0xff]
      %v388 = vld [vmem:[%s381 + $0x60] sm:$0xff]
      %v389 = vld [vmem:[%s381 + $0x70] sm:$0xff]
      %v390 = vlaneseq
      %v391 = vshrl.u32 %v390, 7
      %v392 = vsub.s32 0, %v391
      %v393 = vrot.slane %v212, %v392
      %v394 = vmul.f32 %v382, %v393
      %v395 = vmul.f32 %v383, %v393
      %v396 = vmul.f32 %v384, %v393
      %v397 = vmul.f32 %v385, %v393
      %v398 = vmul.f32 %v386, %v393
      %v399 = vmul.f32 %v387, %v393
      %v400 = vmul.f32 %v388, %v393
      %v401 = vmul.f32 %v389, %v393
      %v402 = vadd.f32 %v373, %v394
      %v403 = vadd.f32 %v374, %v395
      %v404 = vadd.f32 %v375, %v396
      %v405 = vadd.f32 %v376, %v397
      %v406 = vadd.f32 %v377, %v398
      %v407 = vadd.f32 %v378, %v399
      %v408 = vadd.f32 %v379, %v400
      %v409 = vadd.f32 %v380, %v401
      %v410 = vld [vmem:[%s381 + $0x1] sm:$0xff]
      %v411 = vld [vmem:[%s381 + $0x11] sm:$0xff]
      %v412 = vld [vmem:[%s381 + $0x21] sm:$0xff]
      %v413 = vld [vmem:[%s381 + $0x31] sm:$0xff]
      %v414 = vld [vmem:[%s381 + $0x41] sm:$0xff]
      %v415 = vld [vmem:[%s381 + $0x51] sm:$0xff]
      %v416 = vld [vmem:[%s381 + $0x61] sm:$0xff]
      %v417 = vld [vmem:[%s381 + $0x71] sm:$0xff]
      %v418 = vlaneseq
      %v419 = vshrl.u32 %v418, 7
      %v420 = vsub.s32 1, %v419
      %v421 = vrot.slane %v212, %v420
      %v422 = vmul.f32 %v410, %v421
      %v423 = vmul.f32 %v411, %v421
      %v424 = vmul.f32 %v412, %v421
      %v425 = vmul.f32 %v413, %v421
      %v426 = vmul.f32 %v414, %v421
      %v427 = vmul.f32 %v415, %v421
      %v428 = vmul.f32 %v416, %v421
      %v429 = vmul.f32 %v417, %v421
      %v430 = vadd.f32 %v402, %v422
      %v431 = vadd.f32 %v403, %v423
      %v432 = vadd.f32 %v404, %v424
      %v433 = vadd.f32 %v405, %v425
      %v434 = vadd.f32 %v406, %v426
      %v435 = vadd.f32 %v407, %v427
      %v436 = vadd.f32 %v408, %v428
      %v437 = vadd.f32 %v409, %v429
      %v438 = vld [vmem:[%s381 + $0x2] sm:$0xff]
      %v439 = vld [vmem:[%s381 + $0x12] sm:$0xff]
      %v440 = vld [vmem:[%s381 + $0x22] sm:$0xff]
      %v441 = vld [vmem:[%s381 + $0x32] sm:$0xff]
      %v442 = vld [vmem:[%s381 + $0x42] sm:$0xff]
      %v443 = vld [vmem:[%s381 + $0x52] sm:$0xff]
      %v444 = vld [vmem:[%s381 + $0x62] sm:$0xff]
      %v445 = vld [vmem:[%s381 + $0x72] sm:$0xff]
      %v446 = vlaneseq
      %v447 = vshrl.u32 %v446, 7
      %v448 = vsub.s32 2, %v447
      %v449 = vrot.slane %v212, %v448
      %v450 = vmul.f32 %v438, %v449
      %v451 = vmul.f32 %v439, %v449
      %v452 = vmul.f32 %v440, %v449
      %v453 = vmul.f32 %v441, %v449
      %v454 = vmul.f32 %v442, %v449
      %v455 = vmul.f32 %v443, %v449
      %v456 = vmul.f32 %v444, %v449
      %v457 = vmul.f32 %v445, %v449
      %v458 = vadd.f32 %v430, %v450
      %v459 = vadd.f32 %v431, %v451
      %v460 = vadd.f32 %v432, %v452
      %v461 = vadd.f32 %v433, %v453
      %v462 = vadd.f32 %v434, %v454
      %v463 = vadd.f32 %v435, %v455
      %v464 = vadd.f32 %v436, %v456
      %v465 = vadd.f32 %v437, %v457
      %v466 = vld [vmem:[%s2] sm:$0x1]
      %v468 = vlaneseq
      %v469 = vshrl.u32 %v468, 7
      %v470 = vsub.s32 0, %v469
      %v471 = vrot.slane %v466, %v470
      %v473 = vadd.f32 %v458, %v471
      %v474 = vadd.f32 %v459, %v471
      %v475 = vadd.f32 %v460, %v471
      %v476 = vadd.f32 %v461, %v471
      %v477 = vadd.f32 %v462, %v471
      %v478 = vadd.f32 %v463, %v471
      %v479 = vadd.f32 %v464, %v471
      %v480 = vadd.f32 %v465, %v471
      %v481 = vsub.f32 0.0, %v473
      %v482 = vsub.f32 0.0, %v474
      %v483 = vsub.f32 0.0, %v475
      %v484 = vsub.f32 0.0, %v476
      %v485 = vsub.f32 0.0, %v477
      %v486 = vsub.f32 0.0, %v478
      %v487 = vsub.f32 0.0, %v479
      %v488 = vsub.f32 0.0, %v480
      %v489 = vmul.f32 %v481, 1.442695
      %v490 = vpow.pop %v489
      %v491 = vmul.f32 %v482, 1.442695
      %v492 = vpow.pop %v491
      %v493 = vmul.f32 %v483, 1.442695
      %v494 = vpow.pop %v493
      %v495 = vmul.f32 %v484, 1.442695
      %v496 = vpow.pop %v495
      %v497 = vmul.f32 %v485, 1.442695
      %v498 = vpow.pop %v497
      %v499 = vmul.f32 %v486, 1.442695
      %v500 = vpow.pop %v499
      %v501 = vmul.f32 %v487, 1.442695
      %v502 = vpow.pop %v501
      %v503 = vmul.f32 %v488, 1.442695
      %v504 = vpow.pop %v503
      %v505 = vadd.f32 %v490, 1.0
      %v506 = vadd.f32 %v492, 1.0
      %v507 = vadd.f32 %v494, 1.0
      %v508 = vadd.f32 %v496, 1.0
      %v509 = vadd.f32 %v498, 1.0
      %v510 = vadd.f32 %v500, 1.0
      %v511 = vadd.f32 %v502, 1.0
      %v512 = vadd.f32 %v504, 1.0
      %v513 = vrcp.pop %v505
      %v514 = vrcp.pop %v506
      %v515 = vrcp.pop %v507
      %v516 = vrcp.pop %v508
      %v517 = vrcp.pop %v509
      %v518 = vrcp.pop %v510
      %v519 = vrcp.pop %v511
      %v520 = vrcp.pop %v512
      %v521 = vmul.f32 %v473, %v513
      %v522 = vmul.f32 %v474, %v514
      %v523 = vmul.f32 %v475, %v515
      %v524 = vmul.f32 %v476, %v516
      %v525 = vmul.f32 %v477, %v517
      %v526 = vmul.f32 %v478, %v518
      %v527 = vmul.f32 %v479, %v519
      %v528 = vmul.f32 %v480, %v520
      %529 = vst.msk [vmem:[%s170] sm:$0xff] %vm171, %v521
      %530 = vst.msk [vmem:[%s170 + $0x8] sm:$0xff] %vm171, %v522
      %531 = vst.msk [vmem:[%s170 + $0x10] sm:$0xff] %vm171, %v523
      %532 = vst.msk [vmem:[%s170 + $0x18] sm:$0xff] %vm171, %v524
      %533 = vst.msk [vmem:[%s170 + $0x20] sm:$0xff] %vm171, %v525
      %534 = vst.msk [vmem:[%s170 + $0x28] sm:$0xff] %vm171, %v526
      %535 = vst.msk [vmem:[%s170 + $0x30] sm:$0xff] %vm171, %v527
      %536 = vst.msk [vmem:[%s170 + $0x38] sm:$0xff] %vm171, %v528
      %p537 = scmp.lt.s32.totalorder %s14, 1
      %s538 = scalar_select %p537, %s14, 1
      %s539 = smul.addr %s538, 8
      %s540 = smul.addr %s539, 8
      %s541 = scalar_lea.vmem %s3, %s540
      // Predicated region
      $region33: #{ss2d_k1_forward.6} parent=31 // pred_check
        %p542 = pneg %p100
      $region34: #{ss2d_k1_forward.6} parent=31 // pred_check_branch
        %544 = sbr.rel (%p542) target = $region36
      $region35: #{ss2d_k1_forward.6} parent=31 // pred_region
        _
      $region36: #{ss2d_k1_forward.6} parent=31 // pred_fallthru
        _
    $region32: #{ss2d_k1_forward.6} parent=5 // pred_fallthru
      _
    %p545 = scmp.le.s32.totalorder 2, %s9
    // Predicated region
    $region37: #{ss2d_k1_forward.6} parent=5 // pred_check
      %p546 = pneg %p545
    $region38: #{ss2d_k1_forward.6} parent=5 // pred_check_branch
      %548 = sbr.rel (%p546) target = $region40
    $region39: #{ss2d_k1_forward.6} parent=5 // pred_region
      %s549 = ssub.s32 %s9, 2
      // Predicated region
      $region41: #{ss2d_k1_forward.6} parent=39 // pred_check
        %p550 = pneg %p106
      $region42: #{ss2d_k1_forward.6} parent=39 // pred_check_branch
        %552 = sbr.rel (%p550) target = $region44
      $region43: #{ss2d_k1_forward.6} parent=39 // pred_region
        %p553 = scmp.lt.s32.totalorder %s15, 1
        %s554 = scalar_select %p553, %s15, 1
        %s555 = smul.addr %s554, 8
        %s556 = smul.addr %s555, 8
        %s557 = scalar_lea.vmem %s3, %s556
      $region44: #{ss2d_k1_forward.6} parent=39 // pred_fallthru
        _
    $region40: #{ss2d_k1_forward.6} parent=5 // pred_fallthru
      _
  $region6: #{ss2d_k1_forward.6} parent=0 // loop_footer
    %s13 = sadd.s32 1, %s9
  $region7: #{ss2d_k1_forward.6} parent=0 // loop_footer_branch
    %8 = sbr.rel target = $region3
  $region8: #{ss2d_k1_forward.6} parent=0 // loop_exit
    _

// kernel: ss2d_k1_forward.5
$region0: #{ss2d_k1_forward.5}
  #allocation0 [shape = 'u32[]', space=smem, size = 0x4, offset = 0x4, fixed_abs, tag = 'smem constant byte address 0x4 - core index']
  #allocation1 [shape = 'u32[144,128]{1,0:T(1,128)}', space=vmem, size = 0x12000, scoped, tag = 'internal scratch']
  %s0 = inlined_call_operand.hbm [shape: f32[128,32], index: 0, kind: input, shape index: {}]
  %s1 = inlined_call_operand.vmem [shape: bf16[32,32], index: 1, kind: input, shape index: {}]
  %s2 = inlined_call_operand.vmem [shape: bf16[32,32], index: 2, kind: input, shape index: {}]
  %s3 = inlined_call_operand.vmem [shape: f32[128,32], index: 3, kind: output, shape index: {0}]
  %s4 = inlined_call_operand.vmem [shape: f32[128,32], index: 4, kind: output, shape index: {1}]
  %5 = xla_tuple %s3, %s4
  %s6 = sld [smem:[#allocation0]]
  $region34: #{ss2d_k1_forward.5} parent=0
    _
  %s8 = ssub.s32 1, %s6
  %s9 = scalar_select 0, %s8, %s6
  $region1: #{ss2d_k1_forward.5} parent=0
    #allocation2 [shape = 'u8[65536]{0}', space=vmem, size = 0x10000, scoped, tag = 'input window, operand 0, single buffered']
    #allocation3 [shape = 's32[1]{0}', space=sflag, size = 0x4, scoped, tag = 'scoped memory for ss2d_k1_forward.5']
    %10 = vsyncpa [#allocation3], 0
    // Predicated region
    $region2: #{ss2d_k1_forward.5} parent=1 // pred_check
      _
    $region3: #{ss2d_k1_forward.5} parent=1 // pred_check_branch
      %12 = sbr.rel (0) target = $region5
    $region4: #{ss2d_k1_forward.5} parent=1 // pred_region
      %s14 = ssub.s32 2048, 2048
      %15 = vsyncadd [#allocation3], %s14
      %s16 = sshll.u32 [#allocation2], 4
      %s17 = int_to_ptr.vmem [resolvable:$true] %s16
      %22 = dma.hbm_to_vmem [thread:$0]  %s0, 2048, %s17, [#allocation3], 128, 128, 8
    $region5: #{ss2d_k1_forward.5} parent=1 // pred_fallthru
      _
    // Predicated region
    $region6: #{ss2d_k1_forward.5} parent=1 // pred_check
      _
    $region7: #{ss2d_k1_forward.5} parent=1 // pred_check_branch
      %24 = sbr.rel (0) target = $region9
    $region8: #{ss2d_k1_forward.5} parent=1 // pred_region
      _
    $region9: #{ss2d_k1_forward.5} parent=1 // pred_fallthru
      _
    // Predicated region
    $region10: #{ss2d_k1_forward.5} parent=1 // pred_check
      _
    $region11: #{ss2d_k1_forward.5} parent=1 // pred_check_branch
      %26 = sbr.rel (0) target = $region13
    $region12: #{ss2d_k1_forward.5} parent=1 // pred_region
      _
    $region13: #{ss2d_k1_forward.5} parent=1 // pred_fallthru
      _
    // Predicated region
    $region14: #{ss2d_k1_forward.5} parent=1 // pred_check
      _
    $region15: #{ss2d_k1_forward.5} parent=1 // pred_check_branch
      %28 = sbr.rel (0) target = $region17
    $region16: #{ss2d_k1_forward.5} parent=1 // pred_region
      %29 = dma.done [#allocation3], 2048
    $region17: #{ss2d_k1_forward.5} parent=1 // pred_fallthru
      _
    %v31 = vld [vmem:[#allocation2] sm:$0xff]
    %v32 = vld [vmem:[#allocation2 + $0x8] sm:$0xff]
    %v33 = vld [vmem:[#allocation2 + $0x10] sm:$0xff]
    %v34 = vld [vmem:[#allocation2 + $0x18] sm:$0xff]
    %v35 = vld [vmem:[#allocation2 + $0x20] sm:$0xff]
    %v36 = vld [vmem:[#allocation2 + $0x28] sm:$0xff]
    %v37 = vld [vmem:[#allocation2 + $0x30] sm:$0xff]
    %v38 = vld [vmem:[#allocation2 + $0x38] sm:$0xff]
    %v39 = vld [vmem:[#allocation2 + $0x40] sm:$0xff]
    %v40 = vld [vmem:[#allocation2 + $0x48] sm:$0xff]
    %v41 = vld [vmem:[#allocation2 + $0x50] sm:$0xff]
    %v42 = vld [vmem:[#allocation2 + $0x58] sm:$0xff]
    %v43 = vld [vmem:[#allocation2 + $0x60] sm:$0xff]
    %v44 = vld [vmem:[#allocation2 + $0x68] sm:$0xff]
    %v45 = vld [vmem:[#allocation2 + $0x70] sm:$0xff]
    %v46 = vld [vmem:[#allocation2 + $0x78] sm:$0xff]
    %v47 = vpack.c.bf16 %v32, %v31
    %v48 = vpack.c.bf16 %v34, %v33
    %v49 = vpack.c.bf16 %v36, %v35
    %v50 = vpack.c.bf16 %v38, %v37
    %v51 = vpack.c.bf16 %v40, %v39
    %v52 = vpack.c.bf16 %v42, %v41
    %v53 = vpack.c.bf16 %v44, %v43
    %v54 = vpack.c.bf16 %v46, %v45
    %v55 = vld [vmem:[%s1] sm:$0xf]
    %v56 = vld [vmem:[%s1 + $0x4] sm:$0xf]
    %v57 = vld [vmem:[%s1 + $0x8] sm:$0xf]
    %v58 = vld [vmem:[%s1 + $0xc] sm:$0xf]
    %v63 = vunpack.c.l.b16 %v55
    %v64 = vunpack.c.l.b16 %v56
    %v65 = vunpack.c.l.b16 %v57
    %v66 = vunpack.c.l.b16 %v58
    %v67 = vpack.c.b16 %v64, %v63
    %v68 = vpack.c.b16 %v66, %v65
    %vm71 = vcmask 261120
    %v73 = vsel %vm71, %v47, 0
    %v76 = vsel %vm71, %v48, 0
    %v79 = vsel %vm71, %v49, 0
    %v82 = vsel %vm71, %v50, 0
    %v85 = vsel %vm71, %v51, 0
    %v88 = vsel %vm71, %v52, 0
    %v91 = vsel %vm71, %v53, 0
    %v94 = vsel %vm71, %v54, 0
    %96 = vmatprep.subr.bf16.mxu0 0
    %97 = vmatpush1.bf16.msra.mxu0 %v67
    %98 = vmatprep.subr.bf16.mxu0 0
    %99 = vmatpush1.bf16.msra.mxu0 %v68
    %100 = vmatprep.subr.bf16.mxu0 0
    %101 = vmatpush1.bf16.msra.mxu0 0
    %102 = vmatprep.subr.bf16.mxu0 0
    %103 = vmatpush1.bf16.msra.mxu0 0
    %104 = vmatprep.subr.bf16.mxu0 0
    %105 = vmatpush1.bf16.msra.mxu0 0
    %106 = vmatprep.subr.bf16.mxu0 0
    %107 = vmatpush1.bf16.msra.mxu0 0
    %108 = vmatprep.subr.bf16.mxu0 0
    %109 = vmatpush1.bf16.msra.mxu0 0
    %110 = vmatprep.subr.bf16.mxu0 0
    %111 = vmatpush1.bf16.msra.mxu0 0
    %112 = vmatprep.subr.bf16.mxu0 0
    %113 = vmatpush1.bf16.msra.mxu0 0
    %114 = vmatprep.subr.bf16.mxu0 0
    %115 = vmatpush1.bf16.msra.mxu0 0
    %116 = vmatprep.subr.bf16.mxu0 0
    %117 = vmatpush1.bf16.msra.mxu0 0
    %118 = vmatprep.subr.bf16.mxu0 0
    %119 = vmatpush1.bf16.msra.mxu0 0
    %120 = vmatprep.subr.bf16.mxu0 0
    %121 = vmatpush1.bf16.msra.mxu0 0
    %122 = vmatprep.subr.bf16.mxu0 0
    %123 = vmatpush1.bf16.msra.mxu0 0
    %124 = vmatprep.subr.bf16.mxu0 0
    %125 = vmatpush1.bf16.msra.mxu0 0
    %126 = vmatprep.subr.bf16.mxu0 0
    %127 = vmatpush1.bf16.msra.mxu0 0
    %128 = vmatprep.mubr.bf16.mxu0 0
    %129 = vmatmul.mubr.bf16.gmra.mrb[0].mxu0 %v73
    %v130 = vpop.f32.mrb[0].mxu0
    %v131 = vadd.f32 0.0, %v130
    %v132 = vpop.f32.mrb[0].mxu0
    %v133 = vpop.f32.mrb[0].mxu0
    %v134 = vadd.f32 0.0, %v133
    %v135 = vpop.f32.mrb[0].mxu0
    %136 = vmatprep.mubr.bf16.mxu0 0
    %137 = vmatmul.mubr.bf16.gmra.mrb[0].mxu0 %v76
    %v138 = vpop.f32.mrb[0].mxu0
    %v139 = vadd.f32 0.0, %v138
    %v140 = vpop.f32.mrb[0].mxu0
    %v141 = vpop.f32.mrb[0].mxu0
    %v142 = vadd.f32 0.0, %v141
    %v143 = vpop.f32.mrb[0].mxu0
    %144 = vmatprep.mubr.bf16.mxu0 0
    %145 = vmatmul.mubr.bf16.gmra.mrb[0].mxu0 %v79
    %v146 = vpop.f32.mrb[0].mxu0
    %v147 = vadd.f32 0.0, %v146
    %v148 = vpop.f32.mrb[0].mxu0
    %v149 = vpop.f32.mrb[0].mxu0
    %v150 = vadd.f32 0.0, %v149
    %v151 = vpop.f32.mrb[0].mxu0
    %152 = vmatprep.mubr.bf16.mxu0 0
    %153 = vmatmul.mubr.bf16.gmra.mrb[0].mxu0 %v82
    %v154 = vpop.f32.mrb[0].mxu0
    %v155 = vadd.f32 0.0, %v154
    %v156 = vpop.f32.mrb[0].mxu0
    %v157 = vpop.f32.mrb[0].mxu0
    %v158 = vadd.f32 0.0, %v157
    %v159 = vpop.f32.mrb[0].mxu0
    %160 = vmatprep.mubr.bf16.mxu0 0
    %161 = vmatmul.mubr.bf16.gmra.mrb[0].mxu0 %v85
    %v162 = vpop.f32.mrb[0].mxu0
    %v163 = vadd.f32 0.0, %v162
    %v164 = vpop.f32.mrb[0].mxu0
    %v165 = vpop.f32.mrb[0].mxu0
    %v166 = vadd.f32 0.0, %v165
    %v167 = vpop.f32.mrb[0].mxu0
    %168 = vmatprep.mubr.bf16.mxu0 0
    %169 = vmatmul.mubr.bf16.gmra.mrb[0].mxu0 %v88
    %v170 = vpop.f32.mrb[0].mxu0
    %v171 = vadd.f32 0.0, %v170
    %v172 = vpop.f32.mrb[0].mxu0
    %v173 = vpop.f32.mrb[0].mxu0
    %v174 = vadd.f32 0.0, %v173
    %v175 = vpop.f32.mrb[0].mxu0
    %176 = vmatprep.mubr.bf16.mxu0 0
    %177 = vmatmul.mubr.bf16.gmra.mrb[0].mxu0 %v91
    %v178 = vpop.f32.mrb[0].mxu0
    %v179 = vadd.f32 0.0, %v178
    %v180 = vpop.f32.mrb[0].mxu0
    %v181 = vpop.f32.mrb[0].mxu0
    %v182 = vadd.f32 0.0, %v181
    %v183 = vpop.f32.mrb[0].mxu0
    %184 = vmatprep.mubr.bf16.mxu0 0
    %185 = vmatmul.mubr.bf16.gmra.mrb[0].mxu0 %v94
    %v186 = vpop.f32.mrb[0].mxu0
    %v187 = vadd.f32 0.0, %v186
    %v188 = vpop.f32.mrb[0].mxu0
    %v189 = vpop.f32.mrb[0].mxu0
    %v190 = vadd.f32 0.0, %v189
    %v191 = vpop.f32.mrb[0].mxu0
    %192 = vdwg.mxu0
    %193 = vst.msk [vmem:[%s3] sm:$0xff] %vm71, %v131
    %194 = vst.msk [vmem:[%s3 + $0x8] sm:$0xff] %vm71, %v134
    %195 = vst.msk [vmem:[%s3 + $0x10] sm:$0xff] %vm71, %v139
    %196 = vst.msk [vmem:[%s3 + $0x18] sm:$0xff] %vm71, %v142
    %197 = vst.msk [vmem:[%s3 + $0x20] sm:$0xff] %vm71, %v147
    %198 = vst.msk [vmem:[%s3 + $0x28] sm:$0xff] %vm71, %v150
    %199 = vst.msk [vmem:[%s3 + $0x30] sm:$0xff] %vm71, %v155
    %200 = vst.msk [vmem:[%s3 + $0x38] sm:$0xff] %vm71, %v158
    %201 = vst.msk [vmem:[%s3 + $0x40] sm:$0xff] %vm71, %v163
    %202 = vst.msk [vmem:[%s3 + $0x48] sm:$0xff] %vm71, %v166
    %203 = vst.msk [vmem:[%s3 + $0x50] sm:$0xff] %vm71, %v171
    %204 = vst.msk [vmem:[%s3 + $0x58] sm:$0xff] %vm71, %v174
    %205 = vst.msk [vmem:[%s3 + $0x60] sm:$0xff] %vm71, %v179
    %206 = vst.msk [vmem:[%s3 + $0x68] sm:$0xff] %vm71, %v182
    %207 = vst.msk [vmem:[%s3 + $0x70] sm:$0xff] %vm71, %v187
    %208 = vst.msk [vmem:[%s3 + $0x78] sm:$0xff] %vm71, %v190
    %v209 = vld [vmem:[%s2] sm:$0xf]
    %v210 = vld [vmem:[%s2 + $0x4] sm:$0xf]
    %v211 = vld [vmem:[%s2 + $0x8] sm:$0xf]
    %v212 = vld [vmem:[%s2 + $0xc] sm:$0xf]
    %v217 = vunpack.c.l.b16 %v209
    %v218 = vunpack.c.l.b16 %v210
    %v219 = vunpack.c.l.b16 %v211
    %v220 = vunpack.c.l.b16 %v212
    %v221 = vpack.c.b16 %v218, %v217
    %v222 = vpack.c.b16 %v220, %v219
    %225 = vmatprep.subr.bf16.mxu0 0
    %226 = vmatpush1.bf16.msra.mxu0 %v221
    %227 = vmatprep.subr.bf16.mxu0 0
    %228 = vmatpush1.bf16.msra.mxu0 %v222
    %229 = vmatprep.subr.bf16.mxu0 0
    %230 = vmatpush1.bf16.msra.mxu0 0
    %231 = vmatprep.subr.bf16.mxu0 0
    %232 = vmatpush1.bf16.msra.mxu0 0
    %233 = vmatprep.subr.bf16.mxu0 0
    %234 = vmatpush1.bf16.msra.mxu0 0
    %235 = vmatprep.subr.bf16.mxu0 0
    %236 = vmatpush1.bf16.msra.mxu0 0
    %237 = vmatprep.subr.bf16.mxu0 0
    %238 = vmatpush1.bf16.msra.mxu0 0
    %239 = vmatprep.subr.bf16.mxu0 0
    %240 = vmatpush1.bf16.msra.mxu0 0
    %241 = vmatprep.subr.bf16.mxu0 0
    %242 = vmatpush1.bf16.msra.mxu0 0
    %243 = vmatprep.subr.bf16.mxu0 0
    %244 = vmatpush1.bf16.msra.mxu0 0
    %245 = vmatprep.subr.bf16.mxu0 0
    %246 = vmatpush1.bf16.msra.mxu0 0
    %247 = vmatprep.subr.bf16.mxu0 0
    %248 = vmatpush1.bf16.msra.mxu0 0
    %249 = vmatprep.subr.bf16.mxu0 0
    %250 = vmatpush1.bf16.msra.mxu0 0
    %251 = vmatprep.subr.bf16.mxu0 0
    %252 = vmatpush1.bf16.msra.mxu0 0
    %253 = vmatprep.subr.bf16.mxu0 0
    %254 = vmatpush1.bf16.msra.mxu0 0
    %255 = vmatprep.subr.bf16.mxu0 0
    %256 = vmatpush1.bf16.msra.mxu0 0
    %257 = vmatprep.mubr.bf16.mxu0 0
    %258 = vmatmul.mubr.bf16.gmra.mrb[0].mxu0 %v73
    %v259 = vpop.f32.mrb[0].mxu0
    %v260 = vadd.f32 0.0, %v259
    %v261 = vpop.f32.mrb[0].mxu0
    %v262 = vpop.f32.mrb[0].mxu0
    %v263 = vadd.f32 0.0, %v262
    %v264 = vpop.f32.mrb[0].mxu0
    %265 = vmatprep.mubr.bf16.mxu0 0
    %266 = vmatmul.mubr.bf16.gmra.mrb[0].mxu0 %v76
    %v267 = vpop.f32.mrb[0].mxu0
    %v268 = vadd.f32 0.0, %v267
    %v269 = vpop.f32.mrb[0].mxu0
    %v270 = vpop.f32.mrb[0].mxu0
    %v271 = vadd.f32 0.0, %v270
    %v272 = vpop.f32.mrb[0].mxu0
    %273 = vmatprep.mubr.bf16.mxu0 0
    %274 = vmatmul.mubr.bf16.gmra.mrb[0].mxu0 %v79
    %v275 = vpop.f32.mrb[0].mxu0
    %v276 = vadd.f32 0.0, %v275
    %v277 = vpop.f32.mrb[0].mxu0
    %v278 = vpop.f32.mrb[0].mxu0
    %v279 = vadd.f32 0.0, %v278
    %v280 = vpop.f32.mrb[0].mxu0
    %281 = vmatprep.mubr.bf16.mxu0 0
    %282 = vmatmul.mubr.bf16.gmra.mrb[0].mxu0 %v82
    %v283 = vpop.f32.mrb[0].mxu0
    %v284 = vadd.f32 0.0, %v283
    %v285 = vpop.f32.mrb[0].mxu0
    %v286 = vpop.f32.mrb[0].mxu0
    %v287 = vadd.f32 0.0, %v286
    %v288 = vpop.f32.mrb[0].mxu0
    %289 = vmatprep.mubr.bf16.mxu0 0
    %290 = vmatmul.mubr.bf16.gmra.mrb[0].mxu0 %v85
    %v291 = vpop.f32.mrb[0].mxu0
    %v292 = vadd.f32 0.0, %v291
    %v293 = vpop.f32.mrb[0].mxu0
    %v294 = vpop.f32.mrb[0].mxu0
    %v295 = vadd.f32 0.0, %v294
    %v296 = vpop.f32.mrb[0].mxu0
    %297 = vmatprep.mubr.bf16.mxu0 0
    %298 = vmatmul.mubr.bf16.gmra.mrb[0].mxu0 %v88
    %v299 = vpop.f32.mrb[0].mxu0
    %v300 = vadd.f32 0.0, %v299
    %v301 = vpop.f32.mrb[0].mxu0
    %v302 = vpop.f32.mrb[0].mxu0
    %v303 = vadd.f32 0.0, %v302
    %v304 = vpop.f32.mrb[0].mxu0
    %305 = vmatprep.mubr.bf16.mxu0 0
    %306 = vmatmul.mubr.bf16.gmra.mrb[0].mxu0 %v91
    %v307 = vpop.f32.mrb[0].mxu0
    %v308 = vadd.f32 0.0, %v307
    %v309 = vpop.f32.mrb[0].mxu0
    %v310 = vpop.f32.mrb[0].mxu0
    %v311 = vadd.f32 0.0, %v310
    %v312 = vpop.f32.mrb[0].mxu0
    %313 = vmatprep.mubr.bf16.mxu0 0
    %314 = vmatmul.mubr.bf16.gmra.mrb[0].mxu0 %v94
    %v315 = vpop.f32.mrb[0].mxu0
    %v316 = vadd.f32 0.0, %v315
    %v317 = vpop.f32.mrb[0].mxu0
    %v318 = vpop.f32.mrb[0].mxu0
    %v319 = vadd.f32 0.0, %v318
    %v320 = vpop.f32.mrb[0].mxu0
    %321 = vdwg.mxu0
    %322 = vst.msk [vmem:[%s4] sm:$0xff] %vm71, %v260
    %323 = vst.msk [vmem:[%s4 + $0x8] sm:$0xff] %vm71, %v263
    %324 = vst.msk [vmem:[%s4 + $0x10] sm:$0xff] %vm71, %v268
    %325 = vst.msk [vmem:[%s4 + $0x18] sm:$0xff] %vm71, %v271
    %326 = vst.msk [vmem:[%s4 + $0x20] sm:$0xff] %vm71, %v276
    %327 = vst.msk [vmem:[%s4 + $0x28] sm:$0xff] %vm71, %v279
    %328 = vst.msk [vmem:[%s4 + $0x30] sm:$0xff] %vm71, %v284
    %329 = vst.msk [vmem:[%s4 + $0x38] sm:$0xff] %vm71, %v287
    %330 = vst.msk [vmem:[%s4 + $0x40] sm:$0xff] %vm71, %v292
    %331 = vst.msk [vmem:[%s4 + $0x48] sm:$0xff] %vm71, %v295
    %332 = vst.msk [vmem:[%s4 + $0x50] sm:$0xff] %vm71, %v300
    %333 = vst.msk [vmem:[%s4 + $0x58] sm:$0xff] %vm71, %v303
    %334 = vst.msk [vmem:[%s4 + $0x60] sm:$0xff] %vm71, %v308
    %335 = vst.msk [vmem:[%s4 + $0x68] sm:$0xff] %vm71, %v311
    %336 = vst.msk [vmem:[%s4 + $0x70] sm:$0xff] %vm71, %v316
    %337 = vst.msk [vmem:[%s4 + $0x78] sm:$0xff] %vm71, %v319
    // Predicated region
    $region18: #{ss2d_k1_forward.5} parent=1 // pred_check
      _
    $region19: #{ss2d_k1_forward.5} parent=1 // pred_check_branch
      %339 = sbr.rel (0) target = $region21
    $region20: #{ss2d_k1_forward.5} parent=1 // pred_region
      _
    $region21: #{ss2d_k1_forward.5} parent=1 // pred_fallthru
      _
    // Predicated region
    $region22: #{ss2d_k1_forward.5} parent=1 // pred_check
      _
    $region23: #{ss2d_k1_forward.5} parent=1 // pred_check_branch
      %341 = sbr.rel (0) target = $region25
    $region24: #{ss2d_k1_forward.5} parent=1 // pred_region
      _
    $region25: #{ss2d_k1_forward.5} parent=1 // pred_fallthru
      _
    // Predicated region
    $region26: #{ss2d_k1_forward.5} parent=1 // pred_check
      _
    $region27: #{ss2d_k1_forward.5} parent=1 // pred_check_branch
      %343 = sbr.rel (0) target = $region29
    $region28: #{ss2d_k1_forward.5} parent=1 // pred_region
      _
    $region29: #{ss2d_k1_forward.5} parent=1 // pred_fallthru
      _
    // Predicated region
    $region30: #{ss2d_k1_forward.5} parent=1 // pred_check
      _
    $region31: #{ss2d_k1_forward.5} parent=1 // pred_check_branch
      %345 = sbr.rel (0) target = $region33
    $region32: #{ss2d_k1_forward.5} parent=1 // pred_region
      _
    $region33: #{ss2d_k1_forward.5} parent=1 // pred_fallthru
      _
    %346 = vsyncpa [#allocation3], 1

// kernel: ss2d_k1_forward.9
$region0: #{ss2d_k1_forward.9}
  #allocation0 [shape = 'u32[]', space=smem, size = 0x4, offset = 0x4, fixed_abs, tag = 'smem constant byte address 0x4 - core index']
  #allocation1 [shape = 'u32[144,128]{1,0:T(1,128)}', space=vmem, size = 0x12000, scoped, tag = 'internal scratch']
  %s0 = inlined_call_operand.vmem [shape: f32[128,32], index: 0, kind: input, shape index: {}]
  %s1 = inlined_call_operand.vmem [shape: f32[128,32], index: 1, kind: input, shape index: {}]
  %s2 = inlined_call_operand.vmem [shape: f32[1,32], index: 2, kind: input, shape index: {}]
  %s3 = inlined_call_operand.vmem [shape: f32[1,32], index: 3, kind: input, shape index: {}]
  %s4 = inlined_call_operand.vmem [shape: bf16[32,32], index: 4, kind: input, shape index: {}]
  %s5 = inlined_call_operand.hbm [shape: f32[128,32], index: 5, kind: output, shape index: {}]
  %s6 = sld [smem:[#allocation0]]
  $region30: #{ss2d_k1_forward.9} parent=0
    _
  %s8 = ssub.s32 1, %s6
  %s9 = scalar_select 0, %s8, %s6
  $region1: #{ss2d_k1_forward.9} parent=0
    #allocation2 [shape = 'u8[65536]{0}', space=vmem, size = 0x10000, scoped, tag = 'output window, operand 0, single buffered']
    #allocation3 [shape = 's32[1]{0}', space=sflag, size = 0x4, scoped, tag = 'scoped memory for ss2d_k1_forward.9']
    %10 = vsyncpa [#allocation3], 0
    // Predicated region
    $region2: #{ss2d_k1_forward.9} parent=1 // pred_check
      _
    $region3: #{ss2d_k1_forward.9} parent=1 // pred_check_branch
      %12 = sbr.rel (0) target = $region5
    $region4: #{ss2d_k1_forward.9} parent=1 // pred_region
      _
    $region5: #{ss2d_k1_forward.9} parent=1 // pred_fallthru
      _
    // Predicated region
    $region6: #{ss2d_k1_forward.9} parent=1 // pred_check
      _
    $region7: #{ss2d_k1_forward.9} parent=1 // pred_check_branch
      %14 = sbr.rel (0) target = $region9
    $region8: #{ss2d_k1_forward.9} parent=1 // pred_region
      _
    $region9: #{ss2d_k1_forward.9} parent=1 // pred_fallthru
      _
    // Predicated region
    $region10: #{ss2d_k1_forward.9} parent=1 // pred_check
      _
    $region11: #{ss2d_k1_forward.9} parent=1 // pred_check_branch
      %16 = sbr.rel (0) target = $region13
    $region12: #{ss2d_k1_forward.9} parent=1 // pred_region
      _
    $region13: #{ss2d_k1_forward.9} parent=1 // pred_fallthru
      _
    // Predicated region
    $region14: #{ss2d_k1_forward.9} parent=1 // pred_check
      _
    $region15: #{ss2d_k1_forward.9} parent=1 // pred_check_branch
      %18 = sbr.rel (0) target = $region17
    $region16: #{ss2d_k1_forward.9} parent=1 // pred_region
      _
    $region17: #{ss2d_k1_forward.9} parent=1 // pred_fallthru
      _
    // Predicated region
    $region18: #{ss2d_k1_forward.9} parent=1 // pred_check
      _
    $region19: #{ss2d_k1_forward.9} parent=1 // pred_check_branch
      %20 = sbr.rel (0) target = $region21
    $region20: #{ss2d_k1_forward.9} parent=1 // pred_region
      _
    $region21: #{ss2d_k1_forward.9} parent=1 // pred_fallthru
      _
    %v22 = vld [vmem:[%s0] sm:$0xff]
    %v23 = vld [vmem:[%s0 + $0x8] sm:$0xff]
    %v24 = vld [vmem:[%s0 + $0x10] sm:$0xff]
    %v25 = vld [vmem:[%s0 + $0x18] sm:$0xff]
    %v26 = vld [vmem:[%s0 + $0x20] sm:$0xff]
    %v27 = vld [vmem:[%s0 + $0x28] sm:$0xff]
    %v28 = vld [vmem:[%s0 + $0x30] sm:$0xff]
    %v29 = vld [vmem:[%s0 + $0x38] sm:$0xff]
    %v30 = vld [vmem:[%s0 + $0x40] sm:$0xff]
    %v31 = vld [vmem:[%s0 + $0x48] sm:$0xff]
    %v32 = vld [vmem:[%s0 + $0x50] sm:$0xff]
    %v33 = vld [vmem:[%s0 + $0x58] sm:$0xff]
    %v34 = vld [vmem:[%s0 + $0x60] sm:$0xff]
    %v35 = vld [vmem:[%s0 + $0x68] sm:$0xff]
    %v36 = vld [vmem:[%s0 + $0x70] sm:$0xff]
    %v37 = vld [vmem:[%s0 + $0x78] sm:$0xff]
    %vm38 = vcmask 261120
    %v39 = vsel %vm38, %v22, 0.0
    %40 = vadd.xlane.f32.xlu0 %v39
    %v41 = vpop.xlane.xlu0 %40
    %v42 = vsel %vm38, %v23, 0.0
    %43 = vadd.xlane.f32.xlu0 %v42
    %v44 = vpop.xlane.xlu0 %43
    %v45 = vsel %vm38, %v24, 0.0
    %46 = vadd.xlane.f32.xlu0 %v45
    %v47 = vpop.xlane.xlu0 %46
    %v48 = vsel %vm38, %v25, 0.0
    %49 = vadd.xlane.f32.xlu0 %v48
    %v50 = vpop.xlane.xlu0 %49
    %v51 = vsel %vm38, %v26, 0.0
    %52 = vadd.xlane.f32.xlu0 %v51
    %v53 = vpop.xlane.xlu0 %52
    %v54 = vsel %vm38, %v27, 0.0
    %55 = vadd.xlane.f32.xlu0 %v54
    %v56 = vpop.xlane.xlu0 %55
    %v57 = vsel %vm38, %v28, 0.0
    %58 = vadd.xlane.f32.xlu0 %v57
    %v59 = vpop.xlane.xlu0 %58
    %v60 = vsel %vm38, %v29, 0.0
    %61 = vadd.xlane.f32.xlu0 %v60
    %v62 = vpop.xlane.xlu0 %61
    %v63 = vsel %vm38, %v30, 0.0
    %64 = vadd.xlane.f32.xlu0 %v63
    %v65 = vpop.xlane.xlu0 %64
    %v66 = vsel %vm38, %v31, 0.0
    %67 = vadd.xlane.f32.xlu0 %v66
    %v68 = vpop.xlane.xlu0 %67
    %v69 = vsel %vm38, %v32, 0.0
    %70 = vadd.xlane.f32.xlu0 %v69
    %v71 = vpop.xlane.xlu0 %70
    %v72 = vsel %vm38, %v33, 0.0
    %73 = vadd.xlane.f32.xlu0 %v72
    %v74 = vpop.xlane.xlu0 %73
    %v75 = vsel %vm38, %v34, 0.0
    %76 = vadd.xlane.f32.xlu0 %v75
    %v77 = vpop.xlane.xlu0 %76
    %v78 = vsel %vm38, %v35, 0.0
    %79 = vadd.xlane.f32.xlu0 %v78
    %v80 = vpop.xlane.xlu0 %79
    %v81 = vsel %vm38, %v36, 0.0
    %82 = vadd.xlane.f32.xlu0 %v81
    %v83 = vpop.xlane.xlu0 %82
    %v84 = vsel %vm38, %v37, 0.0
    %85 = vadd.xlane.f32.xlu0 %v84
    %v86 = vpop.xlane.xlu0 %85
    %v87 = vrcp.pop 32.0
    %v88 = vmul.f32 %v41, %v87
    %v89 = vmul.f32 %v44, %v87
    %v90 = vmul.f32 %v47, %v87
    %v91 = vmul.f32 %v50, %v87
    %v92 = vmul.f32 %v53, %v87
    %v93 = vmul.f32 %v56, %v87
    %v94 = vmul.f32 %v59, %v87
    %v95 = vmul.f32 %v62, %v87
    %v96 = vmul.f32 %v65, %v87
    %v97 = vmul.f32 %v68, %v87
    %v98 = vmul.f32 %v71, %v87
    %v99 = vmul.f32 %v74, %v87
    %v100 = vmul.f32 %v77, %v87
    %v101 = vmul.f32 %v80, %v87
    %v102 = vmul.f32 %v83, %v87
    %v103 = vmul.f32 %v86, %v87
    %v104 = vsub.f32 %v22, %v88
    %v105 = vsub.f32 %v23, %v89
    %v106 = vsub.f32 %v24, %v90
    %v107 = vsub.f32 %v25, %v91
    %v108 = vsub.f32 %v26, %v92
    %v109 = vsub.f32 %v27, %v93
    %v110 = vsub.f32 %v28, %v94
    %v111 = vsub.f32 %v29, %v95
    %v112 = vsub.f32 %v30, %v96
    %v113 = vsub.f32 %v31, %v97
    %v114 = vsub.f32 %v32, %v98
    %v115 = vsub.f32 %v33, %v99
    %v116 = vsub.f32 %v34, %v100
    %v117 = vsub.f32 %v35, %v101
    %v118 = vsub.f32 %v36, %v102
    %v119 = vsub.f32 %v37, %v103
    %v120 = vmul.f32 %v104, %v104
    %v121 = vmul.f32 %v105, %v105
    %v122 = vmul.f32 %v106, %v106
    %v123 = vmul.f32 %v107, %v107
    %v124 = vmul.f32 %v108, %v108
    %v125 = vmul.f32 %v109, %v109
    %v126 = vmul.f32 %v110, %v110
    %v127 = vmul.f32 %v111, %v111
    %v128 = vmul.f32 %v112, %v112
    %v129 = vmul.f32 %v113, %v113
    %v130 = vmul.f32 %v114, %v114
    %v131 = vmul.f32 %v115, %v115
    %v132 = vmul.f32 %v116, %v116
    %v133 = vmul.f32 %v117, %v117
    %v134 = vmul.f32 %v118, %v118
    %v135 = vmul.f32 %v119, %v119
    %v136 = vsel %vm38, %v120, 0.0
    %137 = vadd.xlane.f32.xlu0 %v136
    %v138 = vpop.xlane.xlu0 %137
    %v139 = vsel %vm38, %v121, 0.0
    %140 = vadd.xlane.f32.xlu0 %v139
    %v141 = vpop.xlane.xlu0 %140
    %v142 = vsel %vm38, %v122, 0.0
    %143 = vadd.xlane.f32.xlu0 %v142
    %v144 = vpop.xlane.xlu0 %143
    %v145 = vsel %vm38, %v123, 0.0
    %146 = vadd.xlane.f32.xlu0 %v145
    %v147 = vpop.xlane.xlu0 %146
    %v148 = vsel %vm38, %v124, 0.0
    %149 = vadd.xlane.f32.xlu0 %v148
    %v150 = vpop.xlane.xlu0 %149
    %v151 = vsel %vm38, %v125, 0.0
    %152 = vadd.xlane.f32.xlu0 %v151
    %v153 = vpop.xlane.xlu0 %152
    %v154 = vsel %vm38, %v126, 0.0
    %155 = vadd.xlane.f32.xlu0 %v154
    %v156 = vpop.xlane.xlu0 %155
    %v157 = vsel %vm38, %v127, 0.0
    %158 = vadd.xlane.f32.xlu0 %v157
    %v159 = vpop.xlane.xlu0 %158
    %v160 = vsel %vm38, %v128, 0.0
    %161 = vadd.xlane.f32.xlu0 %v160
    %v162 = vpop.xlane.xlu0 %161
    %v163 = vsel %vm38, %v129, 0.0
    %164 = vadd.xlane.f32.xlu0 %v163
    %v165 = vpop.xlane.xlu0 %164
    %v166 = vsel %vm38, %v130, 0.0
    %167 = vadd.xlane.f32.xlu0 %v166
    %v168 = vpop.xlane.xlu0 %167
    %v169 = vsel %vm38, %v131, 0.0
    %170 = vadd.xlane.f32.xlu0 %v169
    %v171 = vpop.xlane.xlu0 %170
    %v172 = vsel %vm38, %v132, 0.0
    %173 = vadd.xlane.f32.xlu0 %v172
    %v174 = vpop.xlane.xlu0 %173
    %v175 = vsel %vm38, %v133, 0.0
    %176 = vadd.xlane.f32.xlu0 %v175
    %v177 = vpop.xlane.xlu0 %176
    %v178 = vsel %vm38, %v134, 0.0
    %179 = vadd.xlane.f32.xlu0 %v178
    %v180 = vpop.xlane.xlu0 %179
    %v181 = vsel %vm38, %v135, 0.0
    %182 = vadd.xlane.f32.xlu0 %v181
    %v183 = vpop.xlane.xlu0 %182
    %v184 = vmul.f32 %v138, %v87
    %v185 = vmul.f32 %v141, %v87
    %v186 = vmul.f32 %v144, %v87
    %v187 = vmul.f32 %v147, %v87
    %v188 = vmul.f32 %v150, %v87
    %v189 = vmul.f32 %v153, %v87
    %v190 = vmul.f32 %v156, %v87
    %v191 = vmul.f32 %v159, %v87
    %v192 = vmul.f32 %v162, %v87
    %v193 = vmul.f32 %v165, %v87
    %v194 = vmul.f32 %v168, %v87
    %v195 = vmul.f32 %v171, %v87
    %v196 = vmul.f32 %v174, %v87
    %v197 = vmul.f32 %v177, %v87
    %v198 = vmul.f32 %v180, %v87
    %v199 = vmul.f32 %v183, %v87
    %v200 = vadd.f32 %v184, 1e-05
    %v201 = vadd.f32 %v185, 1e-05
    %v202 = vadd.f32 %v186, 1e-05
    %v203 = vadd.f32 %v187, 1e-05
    %v204 = vadd.f32 %v188, 1e-05
    %v205 = vadd.f32 %v189, 1e-05
    %v206 = vadd.f32 %v190, 1e-05
    %v207 = vadd.f32 %v191, 1e-05
    %v208 = vadd.f32 %v192, 1e-05
    %v209 = vadd.f32 %v193, 1e-05
    %v210 = vadd.f32 %v194, 1e-05
    %v211 = vadd.f32 %v195, 1e-05
    %v212 = vadd.f32 %v196, 1e-05
    %v213 = vadd.f32 %v197, 1e-05
    %v214 = vadd.f32 %v198, 1e-05
    %v215 = vadd.f32 %v199, 1e-05
    %v216 = vrsqrt.pop %v200
    %v217 = vrsqrt.pop %v201
    %v218 = vrsqrt.pop %v202
    %v219 = vrsqrt.pop %v203
    %v220 = vrsqrt.pop %v204
    %v221 = vrsqrt.pop %v205
    %v222 = vrsqrt.pop %v206
    %v223 = vrsqrt.pop %v207
    %v224 = vrsqrt.pop %v208
    %v225 = vrsqrt.pop %v209
    %v226 = vrsqrt.pop %v210
    %v227 = vrsqrt.pop %v211
    %v228 = vrsqrt.pop %v212
    %v229 = vrsqrt.pop %v213
    %v230 = vrsqrt.pop %v214
    %v231 = vrsqrt.pop %v215
    %v232 = vmul.f32 %v104, %v216
    %v233 = vmul.f32 %v105, %v217
    %v234 = vmul.f32 %v106, %v218
    %v235 = vmul.f32 %v107, %v219
    %v236 = vmul.f32 %v108, %v220
    %v237 = vmul.f32 %v109, %v221
    %v238 = vmul.f32 %v110, %v222
    %v239 = vmul.f32 %v111, %v223
    %v240 = vmul.f32 %v112, %v224
    %v241 = vmul.f32 %v113, %v225
    %v242 = vmul.f32 %v114, %v226
    %v243 = vmul.f32 %v115, %v227
    %v244 = vmul.f32 %v116, %v228
    %v245 = vmul.f32 %v117, %v229
    %v246 = vmul.f32 %v118, %v230
    %v247 = vmul.f32 %v119, %v231
    %v248 = vld [vmem:[%s2] sm:$0x1]
    %v250 = vlaneseq
    %v251 = vshrl.u32 %v250, 7
    %v252 = vsub.s32 0, %v251
    %v253 = vrot.slane %v248, %v252
    %v255 = vmul.f32 %v232, %v253
    %v256 = vmul.f32 %v233, %v253
    %v257 = vmul.f32 %v234, %v253
    %v258 = vmul.f32 %v235, %v253
    %v259 = vmul.f32 %v236, %v253
    %v260 = vmul.f32 %v237, %v253
    %v261 = vmul.f32 %v238, %v253
    %v262 = vmul.f32 %v239, %v253
    %v263 = vmul.f32 %v240, %v253
    %v264 = vmul.f32 %v241, %v253
    %v265 = vmul.f32 %v242, %v253
    %v266 = vmul.f32 %v243, %v253
    %v267 = vmul.f32 %v244, %v253
    %v268 = vmul.f32 %v245, %v253
    %v269 = vmul.f32 %v246, %v253
    %v270 = vmul.f32 %v247, %v253
    %v271 = vld [vmem:[%s3] sm:$0x1]
    %v273 = vlaneseq
    %v274 = vshrl.u32 %v273, 7
    %v275 = vsub.s32 0, %v274
    %v276 = vrot.slane %v271, %v275
    %v278 = vadd.f32 %v255, %v276
    %v279 = vadd.f32 %v256, %v276
    %v280 = vadd.f32 %v257, %v276
    %v281 = vadd.f32 %v258, %v276
    %v282 = vadd.f32 %v259, %v276
    %v283 = vadd.f32 %v260, %v276
    %v284 = vadd.f32 %v261, %v276
    %v285 = vadd.f32 %v262, %v276
    %v286 = vadd.f32 %v263, %v276
    %v287 = vadd.f32 %v264, %v276
    %v288 = vadd.f32 %v265, %v276
    %v289 = vadd.f32 %v266, %v276
    %v290 = vadd.f32 %v267, %v276
    %v291 = vadd.f32 %v268, %v276
    %v292 = vadd.f32 %v269, %v276
    %v293 = vadd.f32 %v270, %v276
    %v294 = vld [vmem:[%s1] sm:$0xff]
    %v295 = vld [vmem:[%s1 + $0x8] sm:$0xff]
    %v296 = vld [vmem:[%s1 + $0x10] sm:$0xff]
    %v297 = vld [vmem:[%s1 + $0x18] sm:$0xff]
    %v298 = vld [vmem:[%s1 + $0x20] sm:$0xff]
    %v299 = vld [vmem:[%s1 + $0x28] sm:$0xff]
    %v300 = vld [vmem:[%s1 + $0x30] sm:$0xff]
    %v301 = vld [vmem:[%s1 + $0x38] sm:$0xff]
    %v302 = vld [vmem:[%s1 + $0x40] sm:$0xff]
    %v303 = vld [vmem:[%s1 + $0x48] sm:$0xff]
    %v304 = vld [vmem:[%s1 + $0x50] sm:$0xff]
    %v305 = vld [vmem:[%s1 + $0x58] sm:$0xff]
    %v306 = vld [vmem:[%s1 + $0x60] sm:$0xff]
    %v307 = vld [vmem:[%s1 + $0x68] sm:$0xff]
    %v308 = vld [vmem:[%s1 + $0x70] sm:$0xff]
    %v309 = vld [vmem:[%s1 + $0x78] sm:$0xff]
    %v310 = vsub.f32 0.0, %v294
    %v311 = vsub.f32 0.0, %v295
    %v312 = vsub.f32 0.0, %v296
    %v313 = vsub.f32 0.0, %v297
    %v314 = vsub.f32 0.0, %v298
    %v315 = vsub.f32 0.0, %v299
    %v316 = vsub.f32 0.0, %v300
    %v317 = vsub.f32 0.0, %v301
    %v318 = vsub.f32 0.0, %v302
    %v319 = vsub.f32 0.0, %v303
    %v320 = vsub.f32 0.0, %v304
    %v321 = vsub.f32 0.0, %v305
    %v322 = vsub.f32 0.0, %v306
    %v323 = vsub.f32 0.0, %v307
    %v324 = vsub.f32 0.0, %v308
    %v325 = vsub.f32 0.0, %v309
    %v326 = vmul.f32 %v310, 1.442695
    %v327 = vpow.pop %v326
    %v328 = vmul.f32 %v311, 1.442695
    %v329 = vpow.pop %v328
    %v330 = vmul.f32 %v312, 1.442695
    %v331 = vpow.pop %v330
    %v332 = vmul.f32 %v313, 1.442695
    %v333 = vpow.pop %v332
    %v334 = vmul.f32 %v314, 1.442695
    %v335 = vpow.pop %v334
    %v336 = vmul.f32 %v315, 1.442695
    %v337 = vpow.pop %v336
    %v338 = vmul.f32 %v316, 1.442695
    %v339 = vpow.pop %v338
    %v340 = vmul.f32 %v317, 1.442695
    %v341 = vpow.pop %v340
    %v342 = vmul.f32 %v318, 1.442695
    %v343 = vpow.pop %v342
    %v344 = vmul.f32 %v319, 1.442695
    %v345 = vpow.pop %v344
    %v346 = vmul.f32 %v320, 1.442695
    %v347 = vpow.pop %v346
    %v348 = vmul.f32 %v321, 1.442695
    %v349 = vpow.pop %v348
    %v350 = vmul.f32 %v322, 1.442695
    %v351 = vpow.pop %v350
    %v352 = vmul.f32 %v323, 1.442695
    %v353 = vpow.pop %v352
    %v354 = vmul.f32 %v324, 1.442695
    %v355 = vpow.pop %v354
    %v356 = vmul.f32 %v325, 1.442695
    %v357 = vpow.pop %v356
    %v358 = vadd.f32 %v327, 1.0
    %v359 = vadd.f32 %v329, 1.0
    %v360 = vadd.f32 %v331, 1.0
    %v361 = vadd.f32 %v333, 1.0
    %v362 = vadd.f32 %v335, 1.0
    %v363 = vadd.f32 %v337, 1.0
    %v364 = vadd.f32 %v339, 1.0
    %v365 = vadd.f32 %v341, 1.0
    %v366 = vadd.f32 %v343, 1.0
    %v367 = vadd.f32 %v345, 1.0
    %v368 = vadd.f32 %v347, 1.0
    %v369 = vadd.f32 %v349, 1.0
    %v370 = vadd.f32 %v351, 1.0
    %v371 = vadd.f32 %v353, 1.0
    %v372 = vadd.f32 %v355, 1.0
    %v373 = vadd.f32 %v357, 1.0
    %v374 = vrcp.pop %v358
    %v375 = vrcp.pop %v359
    %v376 = vrcp.pop %v360
    %v377 = vrcp.pop %v361
    %v378 = vrcp.pop %v362
    %v379 = vrcp.pop %v363
    %v380 = vrcp.pop %v364
    %v381 = vrcp.pop %v365
    %v382 = vrcp.pop %v366
    %v383 = vrcp.pop %v367
    %v384 = vrcp.pop %v368
    %v385 = vrcp.pop %v369
    %v386 = vrcp.pop %v370
    %v387 = vrcp.pop %v371
    %v388 = vrcp.pop %v372
    %v389 = vrcp.pop %v373
    %v390 = vmul.f32 %v294, %v374
    %v391 = vmul.f32 %v295, %v375
    %v392 = vmul.f32 %v296, %v376
    %v393 = vmul.f32 %v297, %v377
    %v394 = vmul.f32 %v298, %v378
    %v395 = vmul.f32 %v299, %v379
    %v396 = vmul.f32 %v300, %v380
    %v397 = vmul.f32 %v301, %v381
    %v398 = vmul.f32 %v302, %v382
    %v399 = vmul.f32 %v303, %v383
    %v400 = vmul.f32 %v304, %v384
    %v401 = vmul.f32 %v305, %v385
    %v402 = vmul.f32 %v306, %v386
    %v403 = vmul.f32 %v307, %v387
    %v404 = vmul.f32 %v308, %v388
    %v405 = vmul.f32 %v309, %v389
    %v406 = vmul.f32 %v278, %v390
    %v407 = vmul.f32 %v279, %v391
    %v408 = vmul.f32 %v280, %v392
    %v409 = vmul.f32 %v281, %v393
    %v410 = vmul.f32 %v282, %v394
    %v411 = vmul.f32 %v283, %v395
    %v412 = vmul.f32 %v284, %v396
    %v413 = vmul.f32 %v285, %v397
    %v414 = vmul.f32 %v286, %v398
    %v415 = vmul.f32 %v287, %v399
    %v416 = vmul.f32 %v288, %v400
    %v417 = vmul.f32 %v289, %v401
    %v418 = vmul.f32 %v290, %v402
    %v419 = vmul.f32 %v291, %v403
    %v420 = vmul.f32 %v292, %v404
    %v421 = vmul.f32 %v293, %v405
    %v422 = vpack.c.bf16 %v407, %v406
    %v423 = vpack.c.bf16 %v409, %v408
    %v424 = vpack.c.bf16 %v411, %v410
    %v425 = vpack.c.bf16 %v413, %v412
    %v426 = vpack.c.bf16 %v415, %v414
    %v427 = vpack.c.bf16 %v417, %v416
    %v428 = vpack.c.bf16 %v419, %v418
    %v429 = vpack.c.bf16 %v421, %v420
    %v430 = vld [vmem:[%s4] sm:$0xf]
    %v431 = vld [vmem:[%s4 + $0x4] sm:$0xf]
    %v432 = vld [vmem:[%s4 + $0x8] sm:$0xf]
    %v433 = vld [vmem:[%s4 + $0xc] sm:$0xf]
    %v438 = vunpack.c.l.b16 %v430
    %v439 = vunpack.c.l.b16 %v431
    %v440 = vunpack.c.l.b16 %v432
    %v441 = vunpack.c.l.b16 %v433
    %v442 = vpack.c.b16 %v439, %v438
    %v443 = vpack.c.b16 %v441, %v440
    %v447 = vsel %vm38, %v422, 0
    %v450 = vsel %vm38, %v423, 0
    %v453 = vsel %vm38, %v424, 0
    %v456 = vsel %vm38, %v425, 0
    %v459 = vsel %vm38, %v426, 0
    %v462 = vsel %vm38, %v427, 0
    %v465 = vsel %vm38, %v428, 0
    %v468 = vsel %vm38, %v429, 0
    %470 = vmatprep.subr.bf16.mxu0 0
    %471 = vmatpush1.bf16.msra.mxu0 %v442
    %472 = vmatprep.subr.bf16.mxu0 0
    %473 = vmatpush1.bf16.msra.mxu0 %v443
    %474 = vmatprep.subr.bf16.mxu0 0
    %475 = vmatpush1.bf16.msra.mxu0 0
    %476 = vmatprep.subr.bf16.mxu0 0
    %477 = vmatpush1.bf16.msra.mxu0 0
    %478 = vmatprep.subr.bf16.mxu0 0
    %479 = vmatpush1.bf16.msra.mxu0 0
    %480 = vmatprep.subr.bf16.mxu0 0
    %481 = vmatpush1.bf16.msra.mxu0 0
    %482 = vmatprep.subr.bf16.mxu0 0
    %483 = vmatpush1.bf16.msra.mxu0 0
    %484 = vmatprep.subr.bf16.mxu0 0
    %485 = vmatpush1.bf16.msra.mxu0 0
    %486 = vmatprep.subr.bf16.mxu0 0
    %487 = vmatpush1.bf16.msra.mxu0 0
    %488 = vmatprep.subr.bf16.mxu0 0
    %489 = vmatpush1.bf16.msra.mxu0 0
    %490 = vmatprep.subr.bf16.mxu0 0
    %491 = vmatpush1.bf16.msra.mxu0 0
    %492 = vmatprep.subr.bf16.mxu0 0
    %493 = vmatpush1.bf16.msra.mxu0 0
    %494 = vmatprep.subr.bf16.mxu0 0
    %495 = vmatpush1.bf16.msra.mxu0 0
    %496 = vmatprep.subr.bf16.mxu0 0
    %497 = vmatpush1.bf16.msra.mxu0 0
    %498 = vmatprep.subr.bf16.mxu0 0
    %499 = vmatpush1.bf16.msra.mxu0 0
    %500 = vmatprep.subr.bf16.mxu0 0
    %501 = vmatpush1.bf16.msra.mxu0 0
    %502 = vmatprep.mubr.bf16.mxu0 0
    %503 = vmatmul.mubr.bf16.gmra.mrb[0].mxu0 %v447
    %v504 = vpop.f32.mrb[0].mxu0
    %v505 = vadd.f32 0.0, %v504
    %v506 = vpop.f32.mrb[0].mxu0
    %v507 = vpop.f32.mrb[0].mxu0
    %v508 = vadd.f32 0.0, %v507
    %v509 = vpop.f32.mrb[0].mxu0
    %510 = vmatprep.mubr.bf16.mxu0 0
    %511 = vmatmul.mubr.bf16.gmra.mrb[0].mxu0 %v450
    %v512 = vpop.f32.mrb[0].mxu0
    %v513 = vadd.f32 0.0, %v512
    %v514 = vpop.f32.mrb[0].mxu0
    %v515 = vpop.f32.mrb[0].mxu0
    %v516 = vadd.f32 0.0, %v515
    %v517 = vpop.f32.mrb[0].mxu0
    %518 = vmatprep.mubr.bf16.mxu0 0
    %519 = vmatmul.mubr.bf16.gmra.mrb[0].mxu0 %v453
    %v520 = vpop.f32.mrb[0].mxu0
    %v521 = vadd.f32 0.0, %v520
    %v522 = vpop.f32.mrb[0].mxu0
    %v523 = vpop.f32.mrb[0].mxu0
    %v524 = vadd.f32 0.0, %v523
    %v525 = vpop.f32.mrb[0].mxu0
    %526 = vmatprep.mubr.bf16.mxu0 0
    %527 = vmatmul.mubr.bf16.gmra.mrb[0].mxu0 %v456
    %v528 = vpop.f32.mrb[0].mxu0
    %v529 = vadd.f32 0.0, %v528
    %v530 = vpop.f32.mrb[0].mxu0
    %v531 = vpop.f32.mrb[0].mxu0
    %v532 = vadd.f32 0.0, %v531
    %v533 = vpop.f32.mrb[0].mxu0
    %534 = vmatprep.mubr.bf16.mxu0 0
    %535 = vmatmul.mubr.bf16.gmra.mrb[0].mxu0 %v459
    %v536 = vpop.f32.mrb[0].mxu0
    %v537 = vadd.f32 0.0, %v536
    %v538 = vpop.f32.mrb[0].mxu0
    %v539 = vpop.f32.mrb[0].mxu0
    %v540 = vadd.f32 0.0, %v539
    %v541 = vpop.f32.mrb[0].mxu0
    %542 = vmatprep.mubr.bf16.mxu0 0
    %543 = vmatmul.mubr.bf16.gmra.mrb[0].mxu0 %v462
    %v544 = vpop.f32.mrb[0].mxu0
    %v545 = vadd.f32 0.0, %v544
    %v546 = vpop.f32.mrb[0].mxu0
    %v547 = vpop.f32.mrb[0].mxu0
    %v548 = vadd.f32 0.0, %v547
    %v549 = vpop.f32.mrb[0].mxu0
    %550 = vmatprep.mubr.bf16.mxu0 0
    %551 = vmatmul.mubr.bf16.gmra.mrb[0].mxu0 %v465
    %v552 = vpop.f32.mrb[0].mxu0
    %v553 = vadd.f32 0.0, %v552
    %v554 = vpop.f32.mrb[0].mxu0
    %v555 = vpop.f32.mrb[0].mxu0
    %v556 = vadd.f32 0.0, %v555
    %v557 = vpop.f32.mrb[0].mxu0
    %558 = vmatprep.mubr.bf16.mxu0 0
    %559 = vmatmul.mubr.bf16.gmra.mrb[0].mxu0 %v468
    %v560 = vpop.f32.mrb[0].mxu0
    %v561 = vadd.f32 0.0, %v560
    %v562 = vpop.f32.mrb[0].mxu0
    %v563 = vpop.f32.mrb[0].mxu0
    %v564 = vadd.f32 0.0, %v563
    %v565 = vpop.f32.mrb[0].mxu0
    %566 = vdwg.mxu0
    %567 = vst.msk [vmem:[#allocation2] sm:$0xff] %vm38, %v505
    %568 = vst.msk [vmem:[#allocation2 + $0x8] sm:$0xff] %vm38, %v508
    %569 = vst.msk [vmem:[#allocation2 + $0x10] sm:$0xff] %vm38, %v513
    %570 = vst.msk [vmem:[#allocation2 + $0x18] sm:$0xff] %vm38, %v516
    %571 = vst.msk [vmem:[#allocation2 + $0x20] sm:$0xff] %vm38, %v521
    %572 = vst.msk [vmem:[#allocation2 + $0x28] sm:$0xff] %vm38, %v524
    %573 = vst.msk [vmem:[#allocation2 + $0x30] sm:$0xff] %vm38, %v529
    %574 = vst.msk [vmem:[#allocation2 + $0x38] sm:$0xff] %vm38, %v532
    %575 = vst.msk [vmem:[#allocation2 + $0x40] sm:$0xff] %vm38, %v537
    %576 = vst.msk [vmem:[#allocation2 + $0x48] sm:$0xff] %vm38, %v540
    %577 = vst.msk [vmem:[#allocation2 + $0x50] sm:$0xff] %vm38, %v545
    %578 = vst.msk [vmem:[#allocation2 + $0x58] sm:$0xff] %vm38, %v548
    %579 = vst.msk [vmem:[#allocation2 + $0x60] sm:$0xff] %vm38, %v553
    %580 = vst.msk [vmem:[#allocation2 + $0x68] sm:$0xff] %vm38, %v556
    %581 = vst.msk [vmem:[#allocation2 + $0x70] sm:$0xff] %vm38, %v561
    %582 = vst.msk [vmem:[#allocation2 + $0x78] sm:$0xff] %vm38, %v564
    // Predicated region
    $region22: #{ss2d_k1_forward.9} parent=1 // pred_check
      _
    $region23: #{ss2d_k1_forward.9} parent=1 // pred_check_branch
      %584 = sbr.rel (0) target = $region25
    $region24: #{ss2d_k1_forward.9} parent=1 // pred_region
      %s586 = ssub.s32 2048, 2048
      %587 = vsyncadd [#allocation3], %s586
      %s588 = sshll.u32 [#allocation2], 4
      %s589 = int_to_ptr.vmem [resolvable:$true] %s588
      %594 = dma.vmem_to_hbm [thread:$0]  %s589, 2048, %s5, [#allocation3], 128, 128, 8
    $region25: #{ss2d_k1_forward.9} parent=1 // pred_fallthru
      _
    // Predicated region
    $region26: #{ss2d_k1_forward.9} parent=1 // pred_check
      _
    $region27: #{ss2d_k1_forward.9} parent=1 // pred_check_branch
      %596 = sbr.rel (0) target = $region29
    $region28: #{ss2d_k1_forward.9} parent=1 // pred_region
      %597 = dma.done [#allocation3], 2048
    $region29: #{ss2d_k1_forward.9} parent=1 // pred_fallthru
      _
    %598 = vsyncpa [#allocation3], 1

// kernel: ss2d_k1_forward.8
$region0: #{ss2d_k1_forward.8}
  #allocation0 [shape = 'u32[]', space=smem, size = 0x4, offset = 0x4, fixed_abs, tag = 'smem constant byte address 0x4 - core index']
  #allocation1 [shape = 'u32[144,128]{1,0:T(1,128)}', space=vmem, size = 0x12000, scoped, tag = 'internal scratch']
  #allocation2 [shape = 'f32[64,16,32]{2,1,0:T(8,128)}', space=vmem, size = 0x80000, scoped, tag = 'scratch operand']
  #allocation3 [shape = 'f32[64,16,32]{2,1,0:T(8,128)}', space=vmem, size = 0x80000, scoped, tag = 'scratch operand']
  #allocation4 [shape = 'f32[64,16,32]{2,1,0:T(8,128)}', space=vmem, size = 0x80000, scoped, tag = 'scratch operand']
  #allocation5 [shape = 'f32[16,32]{1,0:T(8,128)}', space=vmem, size = 0x2000, scoped, tag = 'scratch operand']
  %s0 = inlined_call_operand.vmem [shape: f32[2,64,32], index: 0, kind: input, shape index: {}, may-alias: {0,1}]
  %s1 = inlined_call_operand.vmem [shape: f32[2,64,1,32], index: 1, kind: input, shape index: {}, may-alias: {0,1}]
  %s2 = inlined_call_operand.vmem [shape: f32[2,64,1,32], index: 2, kind: input, shape index: {}]
  %s3 = inlined_call_operand.vmem [shape: f32[2,64,16,1], index: 3, kind: input, shape index: {}]
  %s4 = inlined_call_operand.vmem [shape: f32[2,64,16,1], index: 4, kind: input, shape index: {}]
  %s5 = inlined_call_operand.vmem [shape: f32[1,16,32], index: 5, kind: input, shape index: {}]
  %s6 = inlined_call_operand.vmem [shape: f32[1,32], index: 6, kind: input, shape index: {}]
  %s7 = inlined_call_operand.vmem [shape: f32[2,64,32], index: 7, kind: output, shape index: {}]
  %s8 = sld [smem:[#allocation0]]
  $region72: #{ss2d_k1_forward.8} parent=0
    _
  %s10 = ssub.s32 1, %s8
  %s11 = scalar_select 0, %s10, %s8
  loop: start=0, step=1, limit=4
  $region2: #{ss2d_k1_forward.8} parent=0 // loop_pre_header
    _
  $region3: #{ss2d_k1_forward.8} parent=0 // loop_header
    %s13 = sphi 0, %s17
    %p14 = scmp.ge.s32.totalorder %s13, 4
    %s20 = sphi 0, %s32
    %s21 = sphi 0, %s28
    %s22 = sphi 0, %s20
    %s23 = sphi 0, %s21
    %s24 = sphi 0, %s22
    %s25 = sphi 0, %s23
    %s37 = sphi 0, %s39
    %s40 = sphi 0, %s37
    %s41 = sphi 0, %s40
    %s57 = sphi 0, %s41
    %s65 = sphi 0, %s67
    %s68 = sphi 0, %s65
    %s69 = sphi 0, %s68
    %s85 = sphi 0, %s69
    %s93 = sphi 0, %s95
    %s96 = sphi 0, %s93
    %s97 = sphi 0, %s96
    %s113 = sphi 0, %s97
    %s121 = sphi 0, %s123
    %s124 = sphi 0, %s121
    %s125 = sphi 0, %s124
    %s141 = sphi 0, %s125
    %s149 = sphi 0, %s151
    %s152 = sphi 0, %s149
    %s153 = sphi 0, %s152
    %s169 = sphi 0, %s153
    %s173 = sphi 0, %s173
    %s175 = sphi 0, %s173
    %s176 = sphi 0, %s175
    %s190 = sphi 0, %s176
    %s194 = sphi 0, %s194
    %s196 = sphi 0, %s194
    %s197 = sphi 0, %s196
    %s211 = sphi 0, %s197
    %s219 = sphi 0, %s221
    %s222 = sphi 0, %s219
    %s223 = sphi 0, %s222
    %s239 = sphi 0, %s223
  $region4: #{ss2d_k1_forward.8} parent=0 // loop_header_branch
    %16 = sbr.rel (%p14) target = $region8
  $region5: #{ss2d_k1_forward.8} parent=0 // loop_body
    %s18 = ssub.s32 %s13, 1
    %s19 = ssub.s32 %s13, 2
    %s26 = sadd.s32 1, %s21
    %p27 = scmp.ge.s32.totalorder %s26, 1
    %s28 = scalar_select %p27, 0, %s26
    %s29 = sadd.s32 1, %s20
    %s30 = scalar_select %p27, %s29, %s20
    %p31 = scmp.ge.s32.totalorder %s30, 2
    %s32 = scalar_select %p31, 0, %s30
    %s33 = ssub.s32 %s20, %s32
    %s34 = ssub.s32 %s21, %s28
    %s35 = sor.u32 %s33, %s34
    %p36 = scmp.eq.s32.totalorder %s35, 0
    %s38 = sadd.s32 %s37, 1
    %s39 = scalar_select %p36, %s37, %s38
    %p42 = pneg %p36
    %p43 = scmp.eq.s32.totalorder %s13, 1
    %p44 = por %p42, %p43
    %p45 = scmp.ne.s32.totalorder %s37, %s40
    %p46 = scmp.eq.s32.totalorder %s13, 0
    %p47 = por %p45, %p46
    %p48 = scmp.ne.s32.totalorder %s37, %s40
    %p49 = scmp.eq.s32.totalorder %s18, 1
    %p50 = por %p48, %p49
    %p51 = scmp.ne.s32.totalorder %s40, %s41
    %p52 = scmp.eq.s32.totalorder %s18, 0
    %p53 = por %p51, %p52
    %p54 = scmp.ne.s32.totalorder %s40, %s41
    %p55 = scmp.eq.s32.totalorder %s19, 1
    %p56 = por %p54, %p55
    %p58 = scmp.ne.s32.totalorder %s41, %s57
    %p59 = scmp.eq.s32.totalorder %s19, 0
    %p60 = por %p58, %p59
    %s61 = ssub.s32 %s20, %s32
    %s62 = ssub.s32 %s21, %s28
    %s63 = sor.u32 %s61, %s62
    %p64 = scmp.eq.s32.totalorder %s63, 0
    %s66 = sadd.s32 %s65, 1
    %s67 = scalar_select %p64, %s65, %s66
    %p70 = pneg %p64
    %p71 = scmp.eq.s32.totalorder %s13, 1
    %p72 = por %p70, %p71
    %p73 = scmp.ne.s32.totalorder %s65, %s68
    %p74 = scmp.eq.s32.totalorder %s13, 0
    %p75 = por %p73, %p74
    %p76 = scmp.ne.s32.totalorder %s65, %s68
    %p77 = scmp.eq.s32.totalorder %s18, 1
    %p78 = por %p76, %p77
    %p79 = scmp.ne.s32.totalorder %s68, %s69
    %p80 = scmp.eq.s32.totalorder %s18, 0
    %p81 = por %p79, %p80
    %p82 = scmp.ne.s32.totalorder %s68, %s69
    %p83 = scmp.eq.s32.totalorder %s19, 1
    %p84 = por %p82, %p83
    %p86 = scmp.ne.s32.totalorder %s69, %s85
    %p87 = scmp.eq.s32.totalorder %s19, 0
    %p88 = por %p86, %p87
    %s89 = ssub.s32 %s20, %s32
    %s90 = ssub.s32 %s21, %s28
    %s91 = sor.u32 %s89, %s90
    %p92 = scmp.eq.s32.totalorder %s91, 0
    %s94 = sadd.s32 %s93, 1
    %s95 = scalar_select %p92, %s93, %s94
    %p98 = pneg %p92
    %p99 = scmp.eq.s32.totalorder %s13, 1
    %p100 = por %p98, %p99
    %p101 = scmp.ne.s32.totalorder %s93, %s96
    %p102 = scmp.eq.s32.totalorder %s13, 0
    %p103 = por %p101, %p102
    %p104 = scmp.ne.s32.totalorder %s93, %s96
    %p105 = scmp.eq.s32.totalorder %s18, 1
    %p106 = por %p104, %p105
    %p107 = scmp.ne.s32.totalorder %s96, %s97
    %p108 = scmp.eq.s32.totalorder %s18, 0
    %p109 = por %p107, %p108
    %p110 = scmp.ne.s32.totalorder %s96, %s97
    %p111 = scmp.eq.s32.totalorder %s19, 1
    %p112 = por %p110, %p111
    %p114 = scmp.ne.s32.totalorder %s97, %s113
    %p115 = scmp.eq.s32.totalorder %s19, 0
    %p116 = por %p114, %p115
    %s117 = ssub.s32 %s20, %s32
    %s118 = ssub.s32 %s21, %s28
    %s119 = sor.u32 %s117, %s118
    %p120 = scmp.eq.s32.totalorder %s119, 0
    %s122 = sadd.s32 %s121, 1
    %s123 = scalar_select %p120, %s121, %s122
    %p126 = pneg %p120
    %p127 = scmp.eq.s32.totalorder %s13, 1
    %p128 = por %p126, %p127
    %p129 = scmp.ne.s32.totalorder %s121, %s124
    %p130 = scmp.eq.s32.totalorder %s13, 0
    %p131 = por %p129, %p130
    %p132 = scmp.ne.s32.totalorder %s121, %s124
    %p133 = scmp.eq.s32.totalorder %s18, 1
    %p134 = por %p132, %p133
    %p135 = scmp.ne.s32.totalorder %s124, %s125
    %p136 = scmp.eq.s32.totalorder %s18, 0
    %p137 = por %p135, %p136
    %p138 = scmp.ne.s32.totalorder %s124, %s125
    %p139 = scmp.eq.s32.totalorder %s19, 1
    %p140 = por %p138, %p139
    %p142 = scmp.ne.s32.totalorder %s125, %s141
    %p143 = scmp.eq.s32.totalorder %s19, 0
    %p144 = por %p142, %p143
    %s145 = ssub.s32 %s20, %s32
    %s146 = ssub.s32 %s21, %s28
    %s147 = sor.u32 %s145, %s146
    %p148 = scmp.eq.s32.totalorder %s147, 0
    %s150 = sadd.s32 %s149, 1
    %s151 = scalar_select %p148, %s149, %s150
    %p154 = pneg %p148
    %p155 = scmp.eq.s32.totalorder %s13, 1
    %p156 = por %p154, %p155
    %p157 = scmp.ne.s32.totalorder %s149, %s152
    %p158 = scmp.eq.s32.totalorder %s13, 0
    %p159 = por %p157, %p158
    %p160 = scmp.ne.s32.totalorder %s149, %s152
    %p161 = scmp.eq.s32.totalorder %s18, 1
    %p162 = por %p160, %p161
    %p163 = scmp.ne.s32.totalorder %s152, %s153
    %p164 = scmp.eq.s32.totalorder %s18, 0
    %p165 = por %p163, %p164
    %p166 = scmp.ne.s32.totalorder %s152, %s153
    %p167 = scmp.eq.s32.totalorder %s19, 1
    %p168 = por %p166, %p167
    %p170 = scmp.ne.s32.totalorder %s153, %s169
    %p171 = scmp.eq.s32.totalorder %s19, 0
    %p172 = por %p170, %p171
    %s174 = sadd.s32 %s173, 1
    %p177 = scmp.eq.s32.totalorder %s13, 1
    %p178 = scmp.ne.s32.totalorder %s173, %s175
    %p179 = scmp.eq.s32.totalorder %s13, 0
    %p180 = por %p178, %p179
    %p181 = scmp.ne.s32.totalorder %s173, %s175
    %p182 = scmp.eq.s32.totalorder %s18, 1
    %p183 = por %p181, %p182
    %p184 = scmp.ne.s32.totalorder %s175, %s176
    %p185 = scmp.eq.s32.totalorder %s18, 0
    %p186 = por %p184, %p185
    %p187 = scmp.ne.s32.totalorder %s175, %s176
    %p188 = scmp.eq.s32.totalorder %s19, 1
    %p189 = por %p187, %p188
    %p191 = scmp.ne.s32.totalorder %s176, %s190
    %p192 = scmp.eq.s32.totalorder %s19, 0
    %p193 = por %p191, %p192
    %s195 = sadd.s32 %s194, 1
    %p198 = scmp.eq.s32.totalorder %s13, 1
    %p199 = scmp.ne.s32.totalorder %s194, %s196
    %p200 = scmp.eq.s32.totalorder %s13, 0
    %p201 = por %p199, %p200
    %p202 = scmp.ne.s32.totalorder %s194, %s196
    %p203 = scmp.eq.s32.totalorder %s18, 1
    %p204 = por %p202, %p203
    %p205 = scmp.ne.s32.totalorder %s196, %s197
    %p206 = scmp.eq.s32.totalorder %s18, 0
    %p207 = por %p205, %p206
    %p208 = scmp.ne.s32.totalorder %s196, %s197
    %p209 = scmp.eq.s32.totalorder %s19, 1
    %p210 = por %p208, %p209
    %p212 = scmp.ne.s32.totalorder %s197, %s211
    %p213 = scmp.eq.s32.totalorder %s19, 0
    %p214 = por %p212, %p213
    %s215 = ssub.s32 %s20, %s32
    %s216 = ssub.s32 %s21, %s28
    %s217 = sor.u32 %s215, %s216
    %p218 = scmp.eq.s32.totalorder %s217, 0
    %s220 = sadd.s32 %s219, 1
    %s221 = scalar_select %p218, %s219, %s220
    %p224 = pneg %p218
    %p225 = scmp.eq.s32.totalorder %s13, 1
    %p226 = por %p224, %p225
    %p227 = scmp.ne.s32.totalorder %s219, %s222
    %p228 = scmp.eq.s32.totalorder %s13, 0
    %p229 = por %p227, %p228
    %p230 = scmp.ne.s32.totalorder %s219, %s222
    %p231 = scmp.eq.s32.totalorder %s18, 1
    %p232 = por %p230, %p231
    %p233 = scmp.ne.s32.totalorder %s222, %s223
    %p234 = scmp.eq.s32.totalorder %s18, 0
    %p235 = por %p233, %p234
    %p236 = scmp.ne.s32.totalorder %s222, %s223
    %p237 = scmp.eq.s32.totalorder %s19, 1
    %p238 = por %p236, %p237
    %p240 = scmp.ne.s32.totalorder %s223, %s239
    %p241 = scmp.eq.s32.totalorder %s19, 0
    %p242 = por %p240, %p241
    %p243 = scmp.le.s32.totalorder 1, %s13
    %p244 = scmp.lt.s32.totalorder %s13, 3
    %p245 = pnand %p243, %p244
    %p246 = pneg %p245
    // Predicated region
    $region9: #{ss2d_k1_forward.8} parent=5 // pred_check
      _
    $region10: #{ss2d_k1_forward.8} parent=5 // pred_check_branch
      %248 = sbr.rel (%p245) target = $region12
    $region11: #{ss2d_k1_forward.8} parent=5 // pred_region
      %s249 = ssub.s32 %s13, 1
      // Predicated region
      $region13: #{ss2d_k1_forward.8} parent=11 // pred_check
        %p250 = pneg %p186
      $region14: #{ss2d_k1_forward.8} parent=11 // pred_check_branch
        %252 = sbr.rel (%p250) target = $region16
      $region15: #{ss2d_k1_forward.8} parent=11 // pred_region
        _
      $region16: #{ss2d_k1_forward.8} parent=11 // pred_fallthru
        _
      // Predicated region
      $region17: #{ss2d_k1_forward.8} parent=11 // pred_check
        %p253 = pneg %p207
      $region18: #{ss2d_k1_forward.8} parent=11 // pred_check_branch
        %255 = sbr.rel (%p253) target = $region20
      $region19: #{ss2d_k1_forward.8} parent=11 // pred_region
        _
      $region20: #{ss2d_k1_forward.8} parent=11 // pred_fallthru
        _
    $region12: #{ss2d_k1_forward.8} parent=5 // pred_fallthru
      _
    %p256 = scmp.lt.s32.totalorder %s13, 2
    // Predicated region
    $region21: #{ss2d_k1_forward.8} parent=5 // pred_check
      %p257 = pneg %p256
    $region22: #{ss2d_k1_forward.8} parent=5 // pred_check_branch
      %259 = sbr.rel (%p257) target = $region24
    $region23: #{ss2d_k1_forward.8} parent=5 // pred_region
      // Predicated region
      $region25: #{ss2d_k1_forward.8} parent=23 // pred_check
        %p260 = pneg %p47
      $region26: #{ss2d_k1_forward.8} parent=23 // pred_check_branch
        %262 = sbr.rel (%p260) target = $region28
      $region27: #{ss2d_k1_forward.8} parent=23 // pred_region
        %s263 = smul.u32 8, %s21
        %p264 = scmp.lt.s32.totalorder %s20, 1
        %s265 = scalar_select %p264, %s20, 1
        %p266 = scmp.lt.s32.totalorder %s263, 7
        %s267 = scalar_select %p266, %s263, 7
        %s268 = smul.addr %s265, 8
        %s269 = sadd.s32 %s267, %s268
        %s270 = smul.addr %s269, 8
        %s271 = scalar_lea.vmem %s0, %s270
        %s272 = smul.u32 8, %s21
      $region28: #{ss2d_k1_forward.8} parent=23 // pred_fallthru
        _
      // Predicated region
      $region29: #{ss2d_k1_forward.8} parent=23 // pred_check
        %p273 = pneg %p75
      $region30: #{ss2d_k1_forward.8} parent=23 // pred_check_branch
        %275 = sbr.rel (%p273) target = $region32
      $region31: #{ss2d_k1_forward.8} parent=23 // pred_region
        %s276 = smul.u32 64, %s21
        %p277 = scmp.lt.s32.totalorder %s20, 1
        %s278 = scalar_select %p277, %s20, 1
        %p279 = scmp.lt.s32.totalorder %s276, 63
        %s280 = scalar_select %p279, %s276, 63
        %s281 = smul.addr %s278, 64
        %s282 = sadd.s32 %s280, %s281
        %s283 = scalar_lea.vmem %s1, %s282
        %s284 = smul.u32 64, %s21
      $region32: #{ss2d_k1_forward.8} parent=23 // pred_fallthru
        _
      // Predicated region
      $region33: #{ss2d_k1_forward.8} parent=23 // pred_check
        %p285 = pneg %p103
      $region34: #{ss2d_k1_forward.8} parent=23 // pred_check_branch
        %287 = sbr.rel (%p285) target = $region36
      $region35: #{ss2d_k1_forward.8} parent=23 // pred_region
        %s288 = smul.u32 64, %s21
        %p289 = scmp.lt.s32.totalorder %s20, 1
        %s290 = scalar_select %p289, %s20, 1
        %p291 = scmp.lt.s32.totalorder %s288, 63
        %s292 = scalar_select %p291, %s288, 63
        %s293 = smul.addr %s290, 64
        %s294 = sadd.s32 %s292, %s293
        %s295 = scalar_lea.vmem %s2, %s294
        %s296 = smul.u32 64, %s21
      $region36: #{ss2d_k1_forward.8} parent=23 // pred_fallthru
        _
      // Predicated region
      $region37: #{ss2d_k1_forward.8} parent=23 // pred_check
        %p297 = pneg %p131
      $region38: #{ss2d_k1_forward.8} parent=23 // pred_check_branch
        %299 = sbr.rel (%p297) target = $region40
      $region39: #{ss2d_k1_forward.8} parent=23 // pred_region
        %s300 = smul.u32 64, %s21
        %p301 = scmp.lt.s32.totalorder %s20, 1
        %s302 = scalar_select %p301, %s20, 1
        %p303 = scmp.lt.s32.totalorder %s300, 63
        %s304 = scalar_select %p303, %s300, 63
        %s305 = smul.addr %s304, 2
        %s306 = smul.addr %s302, 128
        %s307 = sadd.s32 %s305, %s306
        %s308 = smul.addr %s307, 8
        %s309 = scalar_lea.vmem %s3, %s308
        %s310 = smul.u32 64, %s21
      $region40: #{ss2d_k1_forward.8} parent=23 // pred_fallthru
        _
      // Predicated region
      $region41: #{ss2d_k1_forward.8} parent=23 // pred_check
        %p311 = pneg %p159
      $region42: #{ss2d_k1_forward.8} parent=23 // pred_check_branch
        %313 = sbr.rel (%p311) target = $region44
      $region43: #{ss2d_k1_forward.8} parent=23 // pred_region
        %s314 = smul.u32 64, %s21
        %p315 = scmp.lt.s32.totalorder %s20, 1
        %s316 = scalar_select %p315, %s20, 1
        %p317 = scmp.lt.s32.totalorder %s314, 63
        %s318 = scalar_select %p317, %s314, 63
        %s319 = smul.addr %s318, 2
        %s320 = smul.addr %s316, 128
        %s321 = sadd.s32 %s319, %s320
        %s322 = smul.addr %s321, 8
        %s323 = scalar_lea.vmem %s4, %s322
        %s324 = smul.u32 64, %s21
      $region44: #{ss2d_k1_forward.8} parent=23 // pred_fallthru
        _
    $region24: #{ss2d_k1_forward.8} parent=5 // pred_fallthru
      _
    %p325 = scmp.le.s32.totalorder 1, %s13
    %p326 = scmp.lt.s32.totalorder %s13, 3
    %p327 = pnand %p325, %p326
    %p328 = pneg %p327
    // Predicated region
    $region45: #{ss2d_k1_forward.8} parent=5 // pred_check
      _
    $region46: #{ss2d_k1_forward.8} parent=5 // pred_check_branch
      %330 = sbr.rel (%p327) target = $region48
    $region47: #{ss2d_k1_forward.8} parent=5 // pred_region
      %s331 = ssub.s32 %s13, 1
      %s332 = smul.u32 8, %s23
      %p333 = scmp.lt.s32.totalorder %s22, 1
      %s334 = scalar_select %p333, %s22, 1
      %p335 = scmp.lt.s32.totalorder %s332, 7
      %s336 = scalar_select %p335, %s332, 7
      %s337 = smul.addr %s334, 8
      %s338 = sadd.s32 %s336, %s337
      %s339 = smul.addr %s338, 8
      %s340 = scalar_lea.vmem %s0, %s339
      %p341 = pneg %p53
      %p342 = pneg %p50
      %s343 = smul.u32 64, %s23
      %p344 = scmp.lt.s32.totalorder %s22, 1
      %s345 = scalar_select %p344, %s22, 1
      %p346 = scmp.lt.s32.totalorder %s343, 63
      %s347 = scalar_select %p346, %s343, 63
      %s348 = smul.addr %s345, 64
      %s349 = sadd.s32 %s347, %s348
      %s350 = scalar_lea.vmem %s1, %s349
      %p351 = pneg %p81
      %p352 = pneg %p78
      %s353 = smul.u32 64, %s23
      %p354 = scmp.lt.s32.totalorder %s22, 1
      %s355 = scalar_select %p354, %s22, 1
      %p356 = scmp.lt.s32.totalorder %s353, 63
      %s357 = scalar_select %p356, %s353, 63
      %s358 = smul.addr %s355, 64
      %s359 = sadd.s32 %s357, %s358
      %s360 = scalar_lea.vmem %s2, %s359
      %p361 = pneg %p109
      %p362 = pneg %p106
      %s363 = smul.u32 64, %s23
      %p364 = scmp.lt.s32.totalorder %s22, 1
      %s365 = scalar_select %p364, %s22, 1
      %p366 = scmp.lt.s32.totalorder %s363, 63
      %s367 = scalar_select %p366, %s363, 63
      %s368 = smul.addr %s367, 2
      %s369 = smul.addr %s365, 128
      %s370 = sadd.s32 %s368, %s369
      %s371 = smul.addr %s370, 8
      %s372 = scalar_lea.vmem %s3, %s371
      %p373 = pneg %p137
      %p374 = pneg %p134
      %s375 = smul.u32 64, %s23
      %p376 = scmp.lt.s32.totalorder %s22, 1
      %s377 = scalar_select %p376, %s22, 1
      %p378 = scmp.lt.s32.totalorder %s375, 63
      %s379 = scalar_select %p378, %s375, 63
      %s380 = smul.addr %s379, 2
      %s381 = smul.addr %s377, 128
      %s382 = sadd.s32 %s380, %s381
      %s383 = smul.addr %s382, 8
      %s384 = scalar_lea.vmem %s4, %s383
      %p385 = pneg %p165
      %p386 = pneg %p162
      %p387 = pneg %p186
      %p388 = pneg %p183
      %p389 = pneg %p207
      %p390 = pneg %p204
      %p391 = pneg %p235
      %p392 = pneg %p232
      %s393 = smul.u32 8, %s23
      %p394 = scmp.lt.s32.totalorder %s22, 1
      %s395 = scalar_select %p394, %s22, 1
      %p396 = scmp.lt.s32.totalorder %s393, 7
      %s397 = scalar_select %p396, %s393, 7
      %s398 = smul.addr %s395, 8
      %s399 = sadd.s32 %s397, %s398
      %s400 = smul.addr %s399, 8
      %s401 = scalar_lea.vmem %s7, %s400
      %s402 = smul.u32 8, %s23
      %p403 = scmp.lt.s32.totalorder %s22, 1
      %s404 = scalar_select %p403, %s22, 1
      %p405 = scmp.lt.s32.totalorder %s402, 7
      %s406 = scalar_select %p405, %s402, 7
      %s407 = smul.addr %s404, 8
      %s408 = sadd.s32 %s406, %s407
      %s409 = smul.addr %s408, 8
      %s410 = scalar_lea.vmem %s0, %s409
      %s411 = smul.u32 8, %s23
      %s412 = smul.u32 64, %s23
      %p413 = scmp.lt.s32.totalorder %s22, 1
      %s414 = scalar_select %p413, %s22, 1
      %p415 = scmp.lt.s32.totalorder %s412, 63
      %s416 = scalar_select %p415, %s412, 63
      %s417 = smul.addr %s414, 64
      %s418 = sadd.s32 %s416, %s417
      %s419 = scalar_lea.vmem %s1, %s418
      %s420 = smul.u32 64, %s23
      %s421 = smul.u32 64, %s23
      %p422 = scmp.lt.s32.totalorder %s22, 1
      %s423 = scalar_select %p422, %s22, 1
      %p424 = scmp.lt.s32.totalorder %s421, 63
      %s425 = scalar_select %p424, %s421, 63
      %s426 = smul.addr %s423, 64
      %s427 = sadd.s32 %s425, %s426
      %s428 = scalar_lea.vmem %s2, %s427
      %s429 = smul.u32 64, %s23
      %s430 = smul.u32 64, %s23
      %p431 = scmp.lt.s32.totalorder %s22, 1
      %s432 = scalar_select %p431, %s22, 1
      %p433 = scmp.lt.s32.totalorder %s430, 63
      %s434 = scalar_select %p433, %s430, 63
      %s435 = smul.addr %s434, 2
      %s436 = smul.addr %s432, 128
      %s437 = sadd.s32 %s435, %s436
      %s438 = smul.addr %s437, 8
      %s439 = scalar_lea.vmem %s3, %s438
      %s440 = smul.u32 64, %s23
      %s441 = smul.u32 64, %s23
      %p442 = scmp.lt.s32.totalorder %s22, 1
      %s443 = scalar_select %p442, %s22, 1
      %p444 = scmp.lt.s32.totalorder %s441, 63
      %s445 = scalar_select %p444, %s441, 63
      %s446 = smul.addr %s445, 2
      %s447 = smul.addr %s443, 128
      %s448 = sadd.s32 %s446, %s447
      %s449 = smul.addr %s448, 8
      %s450 = scalar_lea.vmem %s4, %s449
      %s451 = smul.u32 64, %s23
      %s452 = smul.u32 8, %s23
      %p453 = scmp.lt.s32.totalorder %s22, 1
      %s454 = scalar_select %p453, %s22, 1
      %p455 = scmp.lt.s32.totalorder %s452, 7
      %s456 = scalar_select %p455, %s452, 7
      %s457 = smul.addr %s454, 8
      %s458 = sadd.s32 %s456, %s457
      %s459 = smul.addr %s458, 8
      %s460 = scalar_lea.vmem %s7, %s459
      %s461 = smul.u32 8, %s23
      %p462 = scmp.eq.s32.totalorder %s23, 0
      // Predicated region
      $region49: #{ss2d_k1_forward.8} parent=47 // pred_check
        %p463 = pneg %p462
      $region50: #{ss2d_k1_forward.8} parent=47 // pred_check_branch
        %465 = sbr.rel (%p463) target = $region52
      $region51: #{ss2d_k1_forward.8} parent=47 // pred_region
        %vm466 = vcmask 261120
        %467 = vst.msk [vmem:[#allocation5] sm:$0xff] %vm466, 0.0
        %468 = vst.msk [vmem:[#allocation5 + $0x8] sm:$0xff] %vm466, 0.0
      $region52: #{ss2d_k1_forward.8} parent=47 // pred_fallthru
        _
      %v469 = vld [vmem:[%s428] sm:$0x1]
      %v470 = vld [vmem:[%s428 + $0x1] sm:$0x1]
      %v471 = vld [vmem:[%s428 + $0x2] sm:$0x1]
      %v472 = vld [vmem:[%s428 + $0x3] sm:$0x1]
      %v473 = vld [vmem:[%s428 + $0x4] sm:$0x1]
      %v474 = vld [vmem:[%s428 + $0x5] sm:$0x1]
      %v475 = vld [vmem:[%s428 + $0x6] sm:$0x1]
      %v476 = vld [vmem:[%s428 + $0x7] sm:$0x1]
      %v477 = vld [vmem:[%s428 + $0x8] sm:$0x1]
      %v478 = vld [vmem:[%s428 + $0x9] sm:$0x1]
      %v479 = vld [vmem:[%s428 + $0xa] sm:$0x1]
      %v480 = vld [vmem:[%s428 + $0xb] sm:$0x1]
      %v481 = vld [vmem:[%s428 + $0xc] sm:$0x1]
      %v482 = vld [vmem:[%s428 + $0xd] sm:$0x1]
      %v483 = vld [vmem:[%s428 + $0xe] sm:$0x1]
      %v484 = vld [vmem:[%s428 + $0xf] sm:$0x1]
      %v485 = vld [vmem:[%s428 + $0x10] sm:$0x1]
      %v486 = vld [vmem:[%s428 + $0x11] sm:$0x1]
      %v487 = vld [vmem:[%s428 + $0x12] sm:$0x1]
      %v488 = vld [vmem:[%s428 + $0x13] sm:$0x1]
      %v489 = vld [vmem:[%s428 + $0x14] sm:$0x1]
      %v490 = vld [vmem:[%s428 + $0x15] sm:$0x1]
      %v491 = vld [vmem:[%s428 + $0x16] sm:$0x1]
      %v492 = vld [vmem:[%s428 + $0x17] sm:$0x1]
      %v493 = vld [vmem:[%s428 + $0x18] sm:$0x1]
      %v494 = vld [vmem:[%s428 + $0x19] sm:$0x1]
      %v495 = vld [vmem:[%s428 + $0x1a] sm:$0x1]
      %v496 = vld [vmem:[%s428 + $0x1b] sm:$0x1]
      %v497 = vld [vmem:[%s428 + $0x1c] sm:$0x1]
      %v498 = vld [vmem:[%s428 + $0x1d] sm:$0x1]
      %v499 = vld [vmem:[%s428 + $0x1e] sm:$0x1]
      %v500 = vld [vmem:[%s428 + $0x1f] sm:$0x1]
      %v501 = vld [vmem:[%s428 + $0x20] sm:$0x1]
      %v502 = vld [vmem:[%s428 + $0x21] sm:$0x1]
      %v503 = vld [vmem:[%s428 + $0x22] sm:$0x1]
      %v504 = vld [vmem:[%s428 + $0x23] sm:$0x1]
      %v505 = vld [vmem:[%s428 + $0x24] sm:$0x1]
      %v506 = vld [vmem:[%s428 + $0x25] sm:$0x1]
      %v507 = vld [vmem:[%s428 + $0x26] sm:$0x1]
      %v508 = vld [vmem:[%s428 + $0x27] sm:$0x1]
      %v509 = vld [vmem:[%s428 + $0x28] sm:$0x1]
      %v510 = vld [vmem:[%s428 + $0x29] sm:$0x1]
      %v511 = vld [vmem:[%s428 + $0x2a] sm:$0x1]
      %v512 = vld [vmem:[%s428 + $0x2b] sm:$0x1]
      %v513 = vld [vmem:[%s428 + $0x2c] sm:$0x1]
      %v514 = vld [vmem:[%s428 + $0x2d] sm:$0x1]
      %v515 = vld [vmem:[%s428 + $0x2e] sm:$0x1]
      %v516 = vld [vmem:[%s428 + $0x2f] sm:$0x1]
      %v517 = vld [vmem:[%s428 + $0x30] sm:$0x1]
      %v518 = vld [vmem:[%s428 + $0x31] sm:$0x1]
      %v519 = vld [vmem:[%s428 + $0x32] sm:$0x1]
      %v520 = vld [vmem:[%s428 + $0x33] sm:$0x1]
      %v521 = vld [vmem:[%s428 + $0x34] sm:$0x1]
      %v522 = vld [vmem:[%s428 + $0x35] sm:$0x1]
      %v523 = vld [vmem:[%s428 + $0x36] sm:$0x1]
      %v524 = vld [vmem:[%s428 + $0x37] sm:$0x1]
      %v525 = vld [vmem:[%s428 + $0x38] sm:$0x1]
      %v526 = vld [vmem:[%s428 + $0x39] sm:$0x1]
      %v527 = vld [vmem:[%s428 + $0x3a] sm:$0x1]
      %v528 = vld [vmem:[%s428 + $0x3b] sm:$0x1]
      %v529 = vld [vmem:[%s428 + $0x3c] sm:$0x1]
      %v530 = vld [vmem:[%s428 + $0x3d] sm:$0x1]
      %v531 = vld [vmem:[%s428 + $0x3e] sm:$0x1]
      %v532 = vld [vmem:[%s428 + $0x3f] sm:$0x1]
      %v533 = vld [vmem:[%s5] sm:$0xff]
      %v534 = vld [vmem:[%s5 + $0x8] sm:$0xff]
      %v599 = vlaneseq
      %v600 = vshrl.u32 %v599, 7
      %v601 = vsub.s32 0, %v600
      %v602 = vrot.slane %v469, %v601
      %v603 = vlaneseq
      %v604 = vshrl.u32 %v603, 7
      %v605 = vsub.s32 0, %v604
      %v606 = vrot.slane %v470, %v605
      %v607 = vlaneseq
      %v608 = vshrl.u32 %v607, 7
      %v609 = vsub.s32 0, %v608
      %v610 = vrot.slane %v471, %v609
      %v611 = vlaneseq
      %v612 = vshrl.u32 %v611, 7
      %v613 = vsub.s32 0, %v612
      %v614 = vrot.slane %v472, %v613
      %v615 = vlaneseq
      %v616 = vshrl.u32 %v615, 7
      %v617 = vsub.s32 0, %v616
      %v618 = vrot.slane %v473, %v617
      %v619 = vlaneseq
      %v620 = vshrl.u32 %v619, 7
      %v621 = vsub.s32 0, %v620
      %v622 = vrot.slane %v474, %v621
      %v623 = vlaneseq
      %v624 = vshrl.u32 %v623, 7
      %v625 = vsub.s32 0, %v624
      %v626 = vrot.slane %v475, %v625
      %v627 = vlaneseq
      %v628 = vshrl.u32 %v627, 7
      %v629 = vsub.s32 0, %v628
      %v630 = vrot.slane %v476, %v629
      %v631 = vlaneseq
      %v632 = vshrl.u32 %v631, 7
      %v633 = vsub.s32 0, %v632
      %v634 = vrot.slane %v477, %v633
      %v635 = vlaneseq
      %v636 = vshrl.u32 %v635, 7
      %v637 = vsub.s32 0, %v636
      %v638 = vrot.slane %v478, %v637
      %v639 = vlaneseq
      %v640 = vshrl.u32 %v639, 7
      %v641 = vsub.s32 0, %v640
      %v642 = vrot.slane %v479, %v641
      %v643 = vlaneseq
      %v644 = vshrl.u32 %v643, 7
      %v645 = vsub.s32 0, %v644
      %v646 = vrot.slane %v480, %v645
      %v647 = vlaneseq
      %v648 = vshrl.u32 %v647, 7
      %v649 = vsub.s32 0, %v648
      %v650 = vrot.slane %v481, %v649
      %v651 = vlaneseq
      %v652 = vshrl.u32 %v651, 7
      %v653 = vsub.s32 0, %v652
      %v654 = vrot.slane %v482, %v653
      %v655 = vlaneseq
      %v656 = vshrl.u32 %v655, 7
      %v657 = vsub.s32 0, %v656
      %v658 = vrot.slane %v483, %v657
      %v659 = vlaneseq
      %v660 = vshrl.u32 %v659, 7
      %v661 = vsub.s32 0, %v660
      %v662 = vrot.slane %v484, %v661
      %v663 = vlaneseq
      %v664 = vshrl.u32 %v663, 7
      %v665 = vsub.s32 0, %v664
      %v666 = vrot.slane %v485, %v665
      %v667 = vlaneseq
      %v668 = vshrl.u32 %v667, 7
      %v669 = vsub.s32 0, %v668
      %v670 = vrot.slane %v486, %v669
      %v671 = vlaneseq
      %v672 = vshrl.u32 %v671, 7
      %v673 = vsub.s32 0, %v672
      %v674 = vrot.slane %v487, %v673
      %v675 = vlaneseq
      %v676 = vshrl.u32 %v675, 7
      %v677 = vsub.s32 0, %v676
      %v678 = vrot.slane %v488, %v677
      %v679 = vlaneseq
      %v680 = vshrl.u32 %v679, 7
      %v681 = vsub.s32 0, %v680
      %v682 = vrot.slane %v489, %v681
      %v683 = vlaneseq
      %v684 = vshrl.u32 %v683, 7
      %v685 = vsub.s32 0, %v684
      %v686 = vrot.slane %v490, %v685
      %v687 = vlaneseq
      %v688 = vshrl.u32 %v687, 7
      %v689 = vsub.s32 0, %v688
      %v690 = vrot.slane %v491, %v689
      %v691 = vlaneseq
      %v692 = vshrl.u32 %v691, 7
      %v693 = vsub.s32 0, %v692
      %v694 = vrot.slane %v492, %v693
      %v695 = vlaneseq
      %v696 = vshrl.u32 %v695, 7
      %v697 = vsub.s32 0, %v696
      %v698 = vrot.slane %v493, %v697
      %v699 = vlaneseq
      %v700 = vshrl.u32 %v699, 7
      %v701 = vsub.s32 0, %v700
      %v702 = vrot.slane %v494, %v701
      %v703 = vlaneseq
      %v704 = vshrl.u32 %v703, 7
      %v705 = vsub.s32 0, %v704
      %v706 = vrot.slane %v495, %v705
      %v707 = vlaneseq
      %v708 = vshrl.u32 %v707, 7
      %v709 = vsub.s32 0, %v708
      %v710 = vrot.slane %v496, %v709
      %v711 = vlaneseq
      %v712 = vshrl.u32 %v711, 7
      %v713 = vsub.s32 0, %v712
      %v714 = vrot.slane %v497, %v713
      %v715 = vlaneseq
      %v716 = vshrl.u32 %v715, 7
      %v717 = vsub.s32 0, %v716
      %v718 = vrot.slane %v498, %v717
      %v719 = vlaneseq
      %v720 = vshrl.u32 %v719, 7
      %v721 = vsub.s32 0, %v720
      %v722 = vrot.slane %v499, %v721
      %v723 = vlaneseq
      %v724 = vshrl.u32 %v723, 7
      %v725 = vsub.s32 0, %v724
      %v726 = vrot.slane %v500, %v725
      %v727 = vlaneseq
      %v728 = vshrl.u32 %v727, 7
      %v729 = vsub.s32 0, %v728
      %v730 = vrot.slane %v501, %v729
      %v731 = vlaneseq
      %v732 = vshrl.u32 %v731, 7
      %v733 = vsub.s32 0, %v732
      %v734 = vrot.slane %v502, %v733
      %v735 = vlaneseq
      %v736 = vshrl.u32 %v735, 7
      %v737 = vsub.s32 0, %v736
      %v738 = vrot.slane %v503, %v737
      %v739 = vlaneseq
      %v740 = vshrl.u32 %v739, 7
      %v741 = vsub.s32 0, %v740
      %v742 = vrot.slane %v504, %v741
      %v743 = vlaneseq
      %v744 = vshrl.u32 %v743, 7
      %v745 = vsub.s32 0, %v744
      %v746 = vrot.slane %v505, %v745
      %v747 = vlaneseq
      %v748 = vshrl.u32 %v747, 7
      %v749 = vsub.s32 0, %v748
      %v750 = vrot.slane %v506, %v749
      %v751 = vlaneseq
      %v752 = vshrl.u32 %v751, 7
      %v753 = vsub.s32 0, %v752
      %v754 = vrot.slane %v507, %v753
      %v755 = vlaneseq
      %v756 = vshrl.u32 %v755, 7
      %v757 = vsub.s32 0, %v756
      %v758 = vrot.slane %v508, %v757
      %v759 = vlaneseq
      %v760 = vshrl.u32 %v759, 7
      %v761 = vsub.s32 0, %v760
      %v762 = vrot.slane %v509, %v761
      %v763 = vlaneseq
      %v764 = vshrl.u32 %v763, 7
      %v765 = vsub.s32 0, %v764
      %v766 = vrot.slane %v510, %v765
      %v767 = vlaneseq
      %v768 = vshrl.u32 %v767, 7
      %v769 = vsub.s32 0, %v768
      %v770 = vrot.slane %v511, %v769
      %v771 = vlaneseq
      %v772 = vshrl.u32 %v771, 7
      %v773 = vsub.s32 0, %v772
      %v774 = vrot.slane %v512, %v773
      %v775 = vlaneseq
      %v776 = vshrl.u32 %v775, 7
      %v777 = vsub.s32 0, %v776
      %v778 = vrot.slane %v513, %v777
      %v779 = vlaneseq
      %v780 = vshrl.u32 %v779, 7
      %v781 = vsub.s32 0, %v780
      %v782 = vrot.slane %v514, %v781
      %v783 = vlaneseq
      %v784 = vshrl.u32 %v783, 7
      %v785 = vsub.s32 0, %v784
      %v786 = vrot.slane %v515, %v785
      %v787 = vlaneseq
      %v788 = vshrl.u32 %v787, 7
      %v789 = vsub.s32 0, %v788
      %v790 = vrot.slane %v516, %v789
      %v791 = vlaneseq
      %v792 = vshrl.u32 %v791, 7
      %v793 = vsub.s32 0, %v792
      %v794 = vrot.slane %v517, %v793
      %v795 = vlaneseq
      %v796 = vshrl.u32 %v795, 7
      %v797 = vsub.s32 0, %v796
      %v798 = vrot.slane %v518, %v797
      %v799 = vlaneseq
      %v800 = vshrl.u32 %v799, 7
      %v801 = vsub.s32 0, %v800
      %v802 = vrot.slane %v519, %v801
      %v803 = vlaneseq
      %v804 = vshrl.u32 %v803, 7
      %v805 = vsub.s32 0, %v804
      %v806 = vrot.slane %v520, %v805
      %v807 = vlaneseq
      %v808 = vshrl.u32 %v807, 7
      %v809 = vsub.s32 0, %v808
      %v810 = vrot.slane %v521, %v809
      %v811 = vlaneseq
      %v812 = vshrl.u32 %v811, 7
      %v813 = vsub.s32 0, %v812
      %v814 = vrot.slane %v522, %v813
      %v815 = vlaneseq
      %v816 = vshrl.u32 %v815, 7
      %v817 = vsub.s32 0, %v816
      %v818 = vrot.slane %v523, %v817
      %v819 = vlaneseq
      %v820 = vshrl.u32 %v819, 7
      %v821 = vsub.s32 0, %v820
      %v822 = vrot.slane %v524, %v821
      %v823 = vlaneseq
      %v824 = vshrl.u32 %v823, 7
      %v825 = vsub.s32 0, %v824
      %v826 = vrot.slane %v525, %v825
      %v827 = vlaneseq
      %v828 = vshrl.u32 %v827, 7
      %v829 = vsub.s32 0, %v828
      %v830 = vrot.slane %v526, %v829
      %v831 = vlaneseq
      %v832 = vshrl.u32 %v831, 7
      %v833 = vsub.s32 0, %v832
      %v834 = vrot.slane %v527, %v833
      %v835 = vlaneseq
      %v836 = vshrl.u32 %v835, 7
      %v837 = vsub.s32 0, %v836
      %v838 = vrot.slane %v528, %v837
      %v839 = vlaneseq
      %v840 = vshrl.u32 %v839, 7
      %v841 = vsub.s32 0, %v840
      %v842 = vrot.slane %v529, %v841
      %v843 = vlaneseq
      %v844 = vshrl.u32 %v843, 7
      %v845 = vsub.s32 0, %v844
      %v846 = vrot.slane %v530, %v845
      %v847 = vlaneseq
      %v848 = vshrl.u32 %v847, 7
      %v849 = vsub.s32 0, %v848
      %v850 = vrot.slane %v531, %v849
      %v851 = vlaneseq
      %v852 = vshrl.u32 %v851, 7
      %v853 = vsub.s32 0, %v852
      %v854 = vrot.slane %v532, %v853
      %v919 = vmul.f32 %v602, %v533
      %v920 = vmul.f32 %v602, %v534
      %v921 = vmul.f32 %v606, %v533
      %v922 = vmul.f32 %v606, %v534
      %v923 = vmul.f32 %v610, %v533
      %v924 = vmul.f32 %v610, %v534
      %v925 = vmul.f32 %v614, %v533
      %v926 = vmul.f32 %v614, %v534
      %v927 = vmul.f32 %v618, %v533
      %v928 = vmul.f32 %v618, %v534
      %v929 = vmul.f32 %v622, %v533
      %v930 = vmul.f32 %v622, %v534
      %v931 = vmul.f32 %v626, %v533
      %v932 = vmul.f32 %v626, %v534
      %v933 = vmul.f32 %v630, %v533
      %v934 = vmul.f32 %v630, %v534
      %v935 = vmul.f32 %v634, %v533
      %v936 = vmul.f32 %v634, %v534
      %v937 = vmul.f32 %v638, %v533
      %v938 = vmul.f32 %v638, %v534
      %v939 = vmul.f32 %v642, %v533
      %v940 = vmul.f32 %v642, %v534
      %v941 = vmul.f32 %v646, %v533
      %v942 = vmul.f32 %v646, %v534
      %v943 = vmul.f32 %v650, %v533
      %v944 = vmul.f32 %v650, %v534
      %v945 = vmul.f32 %v654, %v533
      %v946 = vmul.f32 %v654, %v534
      %v947 = vmul.f32 %v658, %v533
      %v948 = vmul.f32 %v658, %v534
      %v949 = vmul.f32 %v662, %v533
      %v950 = vmul.f32 %v662, %v534
      %v951 = vmul.f32 %v666, %v533
      %v952 = vmul.f32 %v666, %v534
      %v953 = vmul.f32 %v670, %v533
      %v954 = vmul.f32 %v670, %v534
      %v955 = vmul.f32 %v674, %v533
      %v956 = vmul.f32 %v674, %v534
      %v957 = vmul.f32 %v678, %v533
      %v958 = vmul.f32 %v678, %v534
      %v959 = vmul.f32 %v682, %v533
      %v960 = vmul.f32 %v682, %v534
      %v961 = vmul.f32 %v686, %v533
      %v962 = vmul.f32 %v686, %v534
      %v963 = vmul.f32 %v690, %v533
      %v964 = vmul.f32 %v690, %v534
      %v965 = vmul.f32 %v694, %v533
      %v966 = vmul.f32 %v694, %v534
      %v967 = vmul.f32 %v698, %v533
      %v968 = vmul.f32 %v698, %v534
      %v969 = vmul.f32 %v702, %v533
      %v970 = vmul.f32 %v702, %v534
      %v971 = vmul.f32 %v706, %v533
      %v972 = vmul.f32 %v706, %v534
      %v973 = vmul.f32 %v710, %v533
      %v974 = vmul.f32 %v710, %v534
      %v975 = vmul.f32 %v714, %v533
      %v976 = vmul.f32 %v714, %v534
      %v977 = vmul.f32 %v718, %v533
      %v978 = vmul.f32 %v718, %v534
      %v979 = vmul.f32 %v722, %v533
      %v980 = vmul.f32 %v722, %v534
      %v981 = vmul.f32 %v726, %v533
      %v982 = vmul.f32 %v726, %v534
      %v983 = vmul.f32 %v730, %v533
      %v984 = vmul.f32 %v730, %v534
      %v985 = vmul.f32 %v734, %v533
      %v986 = vmul.f32 %v734, %v534
      %v987 = vmul.f32 %v738, %v533
      %v988 = vmul.f32 %v738, %v534
      %v989 = vmul.f32 %v742, %v533
      %v990 = vmul.f32 %v742, %v534
      %v991 = vmul.f32 %v746, %v533
      %v992 = vmul.f32 %v746, %v534
      %v993 = vmul.f32 %v750, %v533
      %v994 = vmul.f32 %v750, %v534
      %v995 = vmul.f32 %v754, %v533
      %v996 = vmul.f32 %v754, %v534
      %v997 = vmul.f32 %v758, %v533
      %v998 = vmul.f32 %v758, %v534
      %v999 = vmul.f32 %v762, %v533
      %v1000 = vmul.f32 %v762, %v534
      %v1001 = vmul.f32 %v766, %v533
      %v1002 = vmul.f32 %v766, %v534
      %v1003 = vmul.f32 %v770, %v533
      %v1004 = vmul.f32 %v770, %v534
      %v1005 = vmul.f32 %v774, %v533
      %v1006 = vmul.f32 %v774, %v534
      %v1007 = vmul.f32 %v778, %v533
      %v1008 = vmul.f32 %v778, %v534
      %v1009 = vmul.f32 %v782, %v533
      %v1010 = vmul.f32 %v782, %v534
      %v1011 = vmul.f32 %v786, %v533
      %v1012 = vmul.f32 %v786, %v534
      %v1013 = vmul.f32 %v790, %v533
      %v1014 = vmul.f32 %v790, %v534
      %v1015 = vmul.f32 %v794, %v533
      %v1016 = vmul.f32 %v794, %v534
      %v1017 = vmul.f32 %v798, %v533
      %v1018 = vmul.f32 %v798, %v534
      %v1019 = vmul.f32 %v802, %v533
      %v1020 = vmul.f32 %v802, %v534
      %v1021 = vmul.f32 %v806, %v533
      %v1022 = vmul.f32 %v806, %v534
      %v1023 = vmul.f32 %v810, %v533
      %v1024 = vmul.f32 %v810, %v534
      %v1025 = vmul.f32 %v814, %v533
      %v1026 = vmul.f32 %v814, %v534
      %v1027 = vmul.f32 %v818, %v533
      %v1028 = vmul.f32 %v818, %v534
      %v1029 = vmul.f32 %v822, %v533
      %v1030 = vmul.f32 %v822, %v534
      %v1031 = vmul.f32 %v826, %v533
      %v1032 = vmul.f32 %v826, %v534
      %v1033 = vmul.f32 %v830, %v533
      %v1034 = vmul.f32 %v830, %v534
      %v1035 = vmul.f32 %v834, %v533
      %v1036 = vmul.f32 %v834, %v534
      %v1037 = vmul.f32 %v838, %v533
      %v1038 = vmul.f32 %v838, %v534
      %v1039 = vmul.f32 %v842, %v533
      %v1040 = vmul.f32 %v842, %v534
      %v1041 = vmul.f32 %v846, %v533
      %v1042 = vmul.f32 %v846, %v534
      %v1043 = vmul.f32 %v850, %v533
      %v1044 = vmul.f32 %v850, %v534
      %v1045 = vmul.f32 %v854, %v533
      %v1046 = vmul.f32 %v854, %v534
      %v1047 = vmul.f32 %v919, 1.442695
      %v1048 = vpow.pop %v1047
      %v1049 = vmul.f32 %v920, 1.442695
      %v1050 = vpow.pop %v1049
      %v1051 = vmul.f32 %v921, 1.442695
      %v1052 = vpow.pop %v1051
      %v1053 = vmul.f32 %v922, 1.442695
      %v1054 = vpow.pop %v1053
      %v1055 = vmul.f32 %v923, 1.442695
      %v1056 = vpow.pop %v1055
      %v1057 = vmul.f32 %v924, 1.442695
      %v1058 = vpow.pop %v1057
      %v1059 = vmul.f32 %v925, 1.442695
      %v1060 = vpow.pop %v1059
      %v1061 = vmul.f32 %v926, 1.442695
      %v1062 = vpow.pop %v1061
      %v1063 = vmul.f32 %v927, 1.442695
      %v1064 = vpow.pop %v1063
      %v1065 = vmul.f32 %v928, 1.442695
      %v1066 = vpow.pop %v1065
      %v1067 = vmul.f32 %v929, 1.442695
      %v1068 = vpow.pop %v1067
      %v1069 = vmul.f32 %v930, 1.442695
      %v1070 = vpow.pop %v1069
      %v1071 = vmul.f32 %v931, 1.442695
      %v1072 = vpow.pop %v1071
      %v1073 = vmul.f32 %v932, 1.442695
      %v1074 = vpow.pop %v1073
      %v1075 = vmul.f32 %v933, 1.442695
      %v1076 = vpow.pop %v1075
      %v1077 = vmul.f32 %v934, 1.442695
      %v1078 = vpow.pop %v1077
      %v1079 = vmul.f32 %v935, 1.442695
      %v1080 = vpow.pop %v1079
      %v1081 = vmul.f32 %v936, 1.442695
      %v1082 = vpow.pop %v1081
      %v1083 = vmul.f32 %v937, 1.442695
      %v1084 = vpow.pop %v1083
      %v1085 = vmul.f32 %v938, 1.442695
      %v1086 = vpow.pop %v1085
      %v1087 = vmul.f32 %v939, 1.442695
      %v1088 = vpow.pop %v1087
      %v1089 = vmul.f32 %v940, 1.442695
      %v1090 = vpow.pop %v1089
      %v1091 = vmul.f32 %v941, 1.442695
      %v1092 = vpow.pop %v1091
      %v1093 = vmul.f32 %v942, 1.442695
      %v1094 = vpow.pop %v1093
      %v1095 = vmul.f32 %v943, 1.442695
      %v1096 = vpow.pop %v1095
      %v1097 = vmul.f32 %v944, 1.442695
      %v1098 = vpow.pop %v1097
      %v1099 = vmul.f32 %v945, 1.442695
      %v1100 = vpow.pop %v1099
      %v1101 = vmul.f32 %v946, 1.442695
      %v1102 = vpow.pop %v1101
      %v1103 = vmul.f32 %v947, 1.442695
      %v1104 = vpow.pop %v1103
      %v1105 = vmul.f32 %v948, 1.442695
      %v1106 = vpow.pop %v1105
      %v1107 = vmul.f32 %v949, 1.442695
      %v1108 = vpow.pop %v1107
      %v1109 = vmul.f32 %v950, 1.442695
      %v1110 = vpow.pop %v1109
      %v1111 = vmul.f32 %v951, 1.442695
      %v1112 = vpow.pop %v1111
      %v1113 = vmul.f32 %v952, 1.442695
      %v1114 = vpow.pop %v1113
      %v1115 = vmul.f32 %v953, 1.442695
      %v1116 = vpow.pop %v1115
      %v1117 = vmul.f32 %v954, 1.442695
      %v1118 = vpow.pop %v1117
      %v1119 = vmul.f32 %v955, 1.442695
      %v1120 = vpow.pop %v1119
      %v1121 = vmul.f32 %v956, 1.442695
      %v1122 = vpow.pop %v1121
      %v1123 = vmul.f32 %v957, 1.442695
      %v1124 = vpow.pop %v1123
      %v1125 = vmul.f32 %v958, 1.442695
      %v1126 = vpow.pop %v1125
      %v1127 = vmul.f32 %v959, 1.442695
      %v1128 = vpow.pop %v1127
      %v1129 = vmul.f32 %v960, 1.442695
      %v1130 = vpow.pop %v1129
      %v1131 = vmul.f32 %v961, 1.442695
      %v1132 = vpow.pop %v1131
      %v1133 = vmul.f32 %v962, 1.442695
      %v1134 = vpow.pop %v1133
      %v1135 = vmul.f32 %v963, 1.442695
      %v1136 = vpow.pop %v1135
      %v1137 = vmul.f32 %v964, 1.442695
      %v1138 = vpow.pop %v1137
      %v1139 = vmul.f32 %v965, 1.442695
      %v1140 = vpow.pop %v1139
      %v1141 = vmul.f32 %v966, 1.442695
      %v1142 = vpow.pop %v1141
      %v1143 = vmul.f32 %v967, 1.442695
      %v1144 = vpow.pop %v1143
      %v1145 = vmul.f32 %v968, 1.442695
      %v1146 = vpow.pop %v1145
      %v1147 = vmul.f32 %v969, 1.442695
      %v1148 = vpow.pop %v1147
      %v1149 = vmul.f32 %v970, 1.442695
      %v1150 = vpow.pop %v1149
      %v1151 = vmul.f32 %v971, 1.442695
      %v1152 = vpow.pop %v1151
      %v1153 = vmul.f32 %v972, 1.442695
      %v1154 = vpow.pop %v1153
      %v1155 = vmul.f32 %v973, 1.442695
      %v1156 = vpow.pop %v1155
      %v1157 = vmul.f32 %v974, 1.442695
      %v1158 = vpow.pop %v1157
      %v1159 = vmul.f32 %v975, 1.442695
      %v1160 = vpow.pop %v1159
      %v1161 = vmul.f32 %v976, 1.442695
      %v1162 = vpow.pop %v1161
      %v1163 = vmul.f32 %v977, 1.442695
      %v1164 = vpow.pop %v1163
      %v1165 = vmul.f32 %v978, 1.442695
      %v1166 = vpow.pop %v1165
      %v1167 = vmul.f32 %v979, 1.442695
      %v1168 = vpow.pop %v1167
      %v1169 = vmul.f32 %v980, 1.442695
      %v1170 = vpow.pop %v1169
      %v1171 = vmul.f32 %v981, 1.442695
      %v1172 = vpow.pop %v1171
      %v1173 = vmul.f32 %v982, 1.442695
      %v1174 = vpow.pop %v1173
      %v1175 = vmul.f32 %v983, 1.442695
      %v1176 = vpow.pop %v1175
      %v1177 = vmul.f32 %v984, 1.442695
      %v1178 = vpow.pop %v1177
      %v1179 = vmul.f32 %v985, 1.442695
      %v1180 = vpow.pop %v1179
      %v1181 = vmul.f32 %v986, 1.442695
      %v1182 = vpow.pop %v1181
      %v1183 = vmul.f32 %v987, 1.442695
      %v1184 = vpow.pop %v1183
      %v1185 = vmul.f32 %v988, 1.442695
      %v1186 = vpow.pop %v1185
      %v1187 = vmul.f32 %v989, 1.442695
      %v1188 = vpow.pop %v1187
      %v1189 = vmul.f32 %v990, 1.442695
      %v1190 = vpow.pop %v1189
      %v1191 = vmul.f32 %v991, 1.442695
      %v1192 = vpow.pop %v1191
      %v1193 = vmul.f32 %v992, 1.442695
      %v1194 = vpow.pop %v1193
      %v1195 = vmul.f32 %v993, 1.442695
      %v1196 = vpow.pop %v1195
      %v1197 = vmul.f32 %v994, 1.442695
      %v1198 = vpow.pop %v1197
      %v1199 = vmul.f32 %v995, 1.442695
      %v1200 = vpow.pop %v1199
      %v1201 = vmul.f32 %v996, 1.442695
      %v1202 = vpow.pop %v1201
      %v1203 = vmul.f32 %v997, 1.442695
      %v1204 = vpow.pop %v1203
      %v1205 = vmul.f32 %v998, 1.442695
      %v1206 = vpow.pop %v1205
      %v1207 = vmul.f32 %v999, 1.442695
      %v1208 = vpow.pop %v1207
      %v1209 = vmul.f32 %v1000, 1.442695
      %v1210 = vpow.pop %v1209
      %v1211 = vmul.f32 %v1001, 1.442695
      %v1212 = vpow.pop %v1211
      %v1213 = vmul.f32 %v1002, 1.442695
      %v1214 = vpow.pop %v1213
      %v1215 = vmul.f32 %v1003, 1.442695
      %v1216 = vpow.pop %v1215
      %v1217 = vmul.f32 %v1004, 1.442695
      %v1218 = vpow.pop %v1217
      %v1219 = vmul.f32 %v1005, 1.442695
      %v1220 = vpow.pop %v1219
      %v1221 = vmul.f32 %v1006, 1.442695
      %v1222 = vpow.pop %v1221
      %v1223 = vmul.f32 %v1007, 1.442695
      %v1224 = vpow.pop %v1223
      %v1225 = vmul.f32 %v1008, 1.442695
      %v1226 = vpow.pop %v1225
      %v1227 = vmul.f32 %v1009, 1.442695
      %v1228 = vpow.pop %v1227
      %v1229 = vmul.f32 %v1010, 1.442695
      %v1230 = vpow.pop %v1229
      %v1231 = vmul.f32 %v1011, 1.442695
      %v1232 = vpow.pop %v1231
      %v1233 = vmul.f32 %v1012, 1.442695
      %v1234 = vpow.pop %v1233
      %v1235 = vmul.f32 %v1013, 1.442695
      %v1236 = vpow.pop %v1235
      %v1237 = vmul.f32 %v1014, 1.442695
      %v1238 = vpow.pop %v1237
      %v1239 = vmul.f32 %v1015, 1.442695
      %v1240 = vpow.pop %v1239
      %v1241 = vmul.f32 %v1016, 1.442695
      %v1242 = vpow.pop %v1241
      %v1243 = vmul.f32 %v1017, 1.442695
      %v1244 = vpow.pop %v1243
      %v1245 = vmul.f32 %v1018, 1.442695
      %v1246 = vpow.pop %v1245
      %v1247 = vmul.f32 %v1019, 1.442695
      %v1248 = vpow.pop %v1247
      %v1249 = vmul.f32 %v1020, 1.442695
      %v1250 = vpow.pop %v1249
      %v1251 = vmul.f32 %v1021, 1.442695
      %v1252 = vpow.pop %v1251
      %v1253 = vmul.f32 %v1022, 1.442695
      %v1254 = vpow.pop %v1253
      %v1255 = vmul.f32 %v1023, 1.442695
      %v1256 = vpow.pop %v1255
      %v1257 = vmul.f32 %v1024, 1.442695
      %v1258 = vpow.pop %v1257
      %v1259 = vmul.f32 %v1025, 1.442695
      %v1260 = vpow.pop %v1259
      %v1261 = vmul.f32 %v1026, 1.442695
      %v1262 = vpow.pop %v1261
      %v1263 = vmul.f32 %v1027, 1.442695
      %v1264 = vpow.pop %v1263
      %v1265 = vmul.f32 %v1028, 1.442695
      %v1266 = vpow.pop %v1265
      %v1267 = vmul.f32 %v1029, 1.442695
      %v1268 = vpow.pop %v1267
      %v1269 = vmul.f32 %v1030, 1.442695
      %v1270 = vpow.pop %v1269
      %v1271 = vmul.f32 %v1031, 1.442695
      %v1272 = vpow.pop %v1271
      %v1273 = vmul.f32 %v1032, 1.442695
      %v1274 = vpow.pop %v1273
      %v1275 = vmul.f32 %v1033, 1.442695
      %v1276 = vpow.pop %v1275
      %v1277 = vmul.f32 %v1034, 1.442695
      %v1278 = vpow.pop %v1277
      %v1279 = vmul.f32 %v1035, 1.442695
      %v1280 = vpow.pop %v1279
      %v1281 = vmul.f32 %v1036, 1.442695
      %v1282 = vpow.pop %v1281
      %v1283 = vmul.f32 %v1037, 1.442695
      %v1284 = vpow.pop %v1283
      %v1285 = vmul.f32 %v1038, 1.442695
      %v1286 = vpow.pop %v1285
      %v1287 = vmul.f32 %v1039, 1.442695
      %v1288 = vpow.pop %v1287
      %v1289 = vmul.f32 %v1040, 1.442695
      %v1290 = vpow.pop %v1289
      %v1291 = vmul.f32 %v1041, 1.442695
      %v1292 = vpow.pop %v1291
      %v1293 = vmul.f32 %v1042, 1.442695
      %v1294 = vpow.pop %v1293
      %v1295 = vmul.f32 %v1043, 1.442695
      %v1296 = vpow.pop %v1295
      %v1297 = vmul.f32 %v1044, 1.442695
      %v1298 = vpow.pop %v1297
      %v1299 = vmul.f32 %v1045, 1.442695
      %v1300 = vpow.pop %v1299
      %v1301 = vmul.f32 %v1046, 1.442695
      %v1302 = vpow.pop %v1301
      %vm1303 = vcmask 261120
      %1304 = vst.msk [vmem:[#allocation2] sm:$0xff] %vm1303, %v1048
      %1305 = vst.msk [vmem:[#allocation2 + $0x8] sm:$0xff] %vm1303, %v1050
      %1306 = vst.msk [vmem:[#allocation2 + $0x10] sm:$0xff] %vm1303, %v1052
      %1307 = vst.msk [vmem:[#allocation2 + $0x18] sm:$0xff] %vm1303, %v1054
      %1308 = vst.msk [vmem:[#allocation2 + $0x20] sm:$0xff] %vm1303, %v1056
      %1309 = vst.msk [vmem:[#allocation2 + $0x28] sm:$0xff] %vm1303, %v1058
      %1310 = vst.msk [vmem:[#allocation2 + $0x30] sm:$0xff] %vm1303, %v1060
      %1311 = vst.msk [vmem:[#allocation2 + $0x38] sm:$0xff] %vm1303, %v1062
      %1312 = vst.msk [vmem:[#allocation2 + $0x40] sm:$0xff] %vm1303, %v1064
      %1313 = vst.msk [vmem:[#allocation2 + $0x48] sm:$0xff] %vm1303, %v1066
      %1314 = vst.msk [vmem:[#allocation2 + $0x50] sm:$0xff] %vm1303, %v1068
      %1315 = vst.msk [vmem:[#allocation2 + $0x58] sm:$0xff] %vm1303, %v1070
      %1316 = vst.msk [vmem:[#allocation2 + $0x60] sm:$0xff] %vm1303, %v1072
      %1317 = vst.msk [vmem:[#allocation2 + $0x68] sm:$0xff] %vm1303, %v1074
      %1318 = vst.msk [vmem:[#allocation2 + $0x70] sm:$0xff] %vm1303, %v1076
      %1319 = vst.msk [vmem:[#allocation2 + $0x78] sm:$0xff] %vm1303, %v1078
      %1320 = vst.msk [vmem:[#allocation2 + $0x80] sm:$0xff] %vm1303, %v1080
      %1321 = vst.msk [vmem:[#allocation2 + $0x88] sm:$0xff] %vm1303, %v1082
      %1322 = vst.msk [vmem:[#allocation2 + $0x90] sm:$0xff] %vm1303, %v1084
      %1323 = vst.msk [vmem:[#allocation2 + $0x98] sm:$0xff] %vm1303, %v1086
      %1324 = vst.msk [vmem:[#allocation2 + $0xa0] sm:$0xff] %vm1303, %v1088
      %1325 = vst.msk [vmem:[#allocation2 + $0xa8] sm:$0xff] %vm1303, %v1090
      %1326 = vst.msk [vmem:[#allocation2 + $0xb0] sm:$0xff] %vm1303, %v1092
      %1327 = vst.msk [vmem:[#allocation2 + $0xb8] sm:$0xff] %vm1303, %v1094
      %1328 = vst.msk [vmem:[#allocation2 + $0xc0] sm:$0xff] %vm1303, %v1096
      %1329 = vst.msk [vmem:[#allocation2 + $0xc8] sm:$0xff] %vm1303, %v1098
      %1330 = vst.msk [vmem:[#allocation2 + $0xd0] sm:$0xff] %vm1303, %v1100
      %1331 = vst.msk [vmem:[#allocation2 + $0xd8] sm:$0xff] %vm1303, %v1102
      %1332 = vst.msk [vmem:[#allocation2 + $0xe0] sm:$0xff] %vm1303, %v1104
      %1333 = vst.msk [vmem:[#allocation2 + $0xe8] sm:$0xff] %vm1303, %v1106
      %1334 = vst.msk [vmem:[#allocation2 + $0xf0] sm:$0xff] %vm1303, %v1108
      %1335 = vst.msk [vmem:[#allocation2 + $0xf8] sm:$0xff] %vm1303, %v1110
      %1336 = vst.msk [vmem:[#allocation2 + $0x100] sm:$0xff] %vm1303, %v1112
      %1337 = vst.msk [vmem:[#allocation2 + $0x108] sm:$0xff] %vm1303, %v1114
      %1338 = vst.msk [vmem:[#allocation2 + $0x110] sm:$0xff] %vm1303, %v1116
      %1339 = vst.msk [vmem:[#allocation2 + $0x118] sm:$0xff] %vm1303, %v1118
      %1340 = vst.msk [vmem:[#allocation2 + $0x120] sm:$0xff] %vm1303, %v1120
      %1341 = vst.msk [vmem:[#allocation2 + $0x128] sm:$0xff] %vm1303, %v1122
      %1342 = vst.msk [vmem:[#allocation2 + $0x130] sm:$0xff] %vm1303, %v1124
      %1343 = vst.msk [vmem:[#allocation2 + $0x138] sm:$0xff] %vm1303, %v1126
      %1344 = vst.msk [vmem:[#allocation2 + $0x140] sm:$0xff] %vm1303, %v1128
      %1345 = vst.msk [vmem:[#allocation2 + $0x148] sm:$0xff] %vm1303, %v1130
      %1346 = vst.msk [vmem:[#allocation2 + $0x150] sm:$0xff] %vm1303, %v1132
      %1347 = vst.msk [vmem:[#allocation2 + $0x158] sm:$0xff] %vm1303, %v1134
      %1348 = vst.msk [vmem:[#allocation2 + $0x160] sm:$0xff] %vm1303, %v1136
      %1349 = vst.msk [vmem:[#allocation2 + $0x168] sm:$0xff] %vm1303, %v1138
      %1350 = vst.msk [vmem:[#allocation2 + $0x170] sm:$0xff] %vm1303, %v1140
      %1351 = vst.msk [vmem:[#allocation2 + $0x178] sm:$0xff] %vm1303, %v1142
      %1352 = vst.msk [vmem:[#allocation2 + $0x180] sm:$0xff] %vm1303, %v1144
      %1353 = vst.msk [vmem:[#allocation2 + $0x188] sm:$0xff] %vm1303, %v1146
      %1354 = vst.msk [vmem:[#allocation2 + $0x190] sm:$0xff] %vm1303, %v1148
      %1355 = vst.msk [vmem:[#allocation2 + $0x198] sm:$0xff] %vm1303, %v1150
      %1356 = vst.msk [vmem:[#allocation2 + $0x1a0] sm:$0xff] %vm1303, %v1152
      %1357 = vst.msk [vmem:[#allocation2 + $0x1a8] sm:$0xff] %vm1303, %v1154
      %1358 = vst.msk [vmem:[#allocation2 + $0x1b0] sm:$0xff] %vm1303, %v1156
      %1359 = vst.msk [vmem:[#allocation2 + $0x1b8] sm:$0xff] %vm1303, %v1158
      %1360 = vst.msk [vmem:[#allocation2 + $0x1c0] sm:$0xff] %vm1303, %v1160
      %1361 = vst.msk [vmem:[#allocation2 + $0x1c8] sm:$0xff] %vm1303, %v1162
      %1362 = vst.msk [vmem:[#allocation2 + $0x1d0] sm:$0xff] %vm1303, %v1164
      %1363 = vst.msk [vmem:[#allocation2 + $0x1d8] sm:$0xff] %vm1303, %v1166
      %1364 = vst.msk [vmem:[#allocation2 + $0x1e0] sm:$0xff] %vm1303, %v1168
      %1365 = vst.msk [vmem:[#allocation2 + $0x1e8] sm:$0xff] %vm1303, %v1170
      %1366 = vst.msk [vmem:[#allocation2 + $0x1f0] sm:$0xff] %vm1303, %v1172
      %1367 = vst.msk [vmem:[#allocation2 + $0x1f8] sm:$0xff] %vm1303, %v1174
      %1368 = vst.msk [vmem:[#allocation2 + $0x200] sm:$0xff] %vm1303, %v1176
      %1369 = vst.msk [vmem:[#allocation2 + $0x208] sm:$0xff] %vm1303, %v1178
      %1370 = vst.msk [vmem:[#allocation2 + $0x210] sm:$0xff] %vm1303, %v1180
      %1371 = vst.msk [vmem:[#allocation2 + $0x218] sm:$0xff] %vm1303, %v1182
      %1372 = vst.msk [vmem:[#allocation2 + $0x220] sm:$0xff] %vm1303, %v1184
      %1373 = vst.msk [vmem:[#allocation2 + $0x228] sm:$0xff] %vm1303, %v1186
      %1374 = vst.msk [vmem:[#allocation2 + $0x230] sm:$0xff] %vm1303, %v1188
      %1375 = vst.msk [vmem:[#allocation2 + $0x238] sm:$0xff] %vm1303, %v1190
      %1376 = vst.msk [vmem:[#allocation2 + $0x240] sm:$0xff] %vm1303, %v1192
      %1377 = vst.msk [vmem:[#allocation2 + $0x248] sm:$0xff] %vm1303, %v1194
      %1378 = vst.msk [vmem:[#allocation2 + $0x250] sm:$0xff] %vm1303, %v1196
      %1379 = vst.msk [vmem:[#allocation2 + $0x258] sm:$0xff] %vm1303, %v1198
      %1380 = vst.msk [vmem:[#allocation2 + $0x260] sm:$0xff] %vm1303, %v1200
      %1381 = vst.msk [vmem:[#allocation2 + $0x268] sm:$0xff] %vm1303, %v1202
      %1382 = vst.msk [vmem:[#allocation2 + $0x270] sm:$0xff] %vm1303, %v1204
      %1383 = vst.msk [vmem:[#allocation2 + $0x278] sm:$0xff] %vm1303, %v1206
      %1384 = vst.msk [vmem:[#allocation2 + $0x280] sm:$0xff] %vm1303, %v1208
      %1385 = vst.msk [vmem:[#allocation2 + $0x288] sm:$0xff] %vm1303, %v1210
      %1386 = vst.msk [vmem:[#allocation2 + $0x290] sm:$0xff] %vm1303, %v1212
      %1387 = vst.msk [vmem:[#allocation2 + $0x298] sm:$0xff] %vm1303, %v1214
      %1388 = vst.msk [vmem:[#allocation2 + $0x2a0] sm:$0xff] %vm1303, %v1216
      %1389 = vst.msk [vmem:[#allocation2 + $0x2a8] sm:$0xff] %vm1303, %v1218
      %1390 = vst.msk [vmem:[#allocation2 + $0x2b0] sm:$0xff] %vm1303, %v1220
      %1391 = vst.msk [vmem:[#allocation2 + $0x2b8] sm:$0xff] %vm1303, %v1222
      %1392 = vst.msk [vmem:[#allocation2 + $0x2c0] sm:$0xff] %vm1303, %v1224
      %1393 = vst.msk [vmem:[#allocation2 + $0x2c8] sm:$0xff] %vm1303, %v1226
      %1394 = vst.msk [vmem:[#allocation2 + $0x2d0] sm:$0xff] %vm1303, %v1228
      %1395 = vst.msk [vmem:[#allocation2 + $0x2d8] sm:$0xff] %vm1303, %v1230
      %1396 = vst.msk [vmem:[#allocation2 + $0x2e0] sm:$0xff] %vm1303, %v1232
      %1397 = vst.msk [vmem:[#allocation2 + $0x2e8] sm:$0xff] %vm1303, %v1234
      %1398 = vst.msk [vmem:[#allocation2 + $0x2f0] sm:$0xff] %vm1303, %v1236
      %1399 = vst.msk [vmem:[#allocation2 + $0x2f8] sm:$0xff] %vm1303, %v1238
      %1400 = vst.msk [vmem:[#allocation2 + $0x300] sm:$0xff] %vm1303, %v1240
      %1401 = vst.msk [vmem:[#allocation2 + $0x308] sm:$0xff] %vm1303, %v1242
      %1402 = vst.msk [vmem:[#allocation2 + $0x310] sm:$0xff] %vm1303, %v1244
      %1403 = vst.msk [vmem:[#allocation2 + $0x318] sm:$0xff] %vm1303, %v1246
      %1404 = vst.msk [vmem:[#allocation2 + $0x320] sm:$0xff] %vm1303, %v1248
      %1405 = vst.msk [vmem:[#allocation2 + $0x328] sm:$0xff] %vm1303, %v1250
      %1406 = vst.msk [vmem:[#allocation2 + $0x330] sm:$0xff] %vm1303, %v1252
      %1407 = vst.msk [vmem:[#allocation2 + $0x338] sm:$0xff] %vm1303, %v1254
      %1408 = vst.msk [vmem:[#allocation2 + $0x340] sm:$0xff] %vm1303, %v1256
      %1409 = vst.msk [vmem:[#allocation2 + $0x348] sm:$0xff] %vm1303, %v1258
      %1410 = vst.msk [vmem:[#allocation2 + $0x350] sm:$0xff] %vm1303, %v1260
      %1411 = vst.msk [vmem:[#allocation2 + $0x358] sm:$0xff] %vm1303, %v1262
      %1412 = vst.msk [vmem:[#allocation2 + $0x360] sm:$0xff] %vm1303, %v1264
      %1413 = vst.msk [vmem:[#allocation2 + $0x368] sm:$0xff] %vm1303, %v1266
      %1414 = vst.msk [vmem:[#allocation2 + $0x370] sm:$0xff] %vm1303, %v1268
      %1415 = vst.msk [vmem:[#allocation2 + $0x378] sm:$0xff] %vm1303, %v1270
      %1416 = vst.msk [vmem:[#allocation2 + $0x380] sm:$0xff] %vm1303, %v1272
      %1417 = vst.msk [vmem:[#allocation2 + $0x388] sm:$0xff] %vm1303, %v1274
      %1418 = vst.msk [vmem:[#allocation2 + $0x390] sm:$0xff] %vm1303, %v1276
      %1419 = vst.msk [vmem:[#allocation2 + $0x398] sm:$0xff] %vm1303, %v1278
      %1420 = vst.msk [vmem:[#allocation2 + $0x3a0] sm:$0xff] %vm1303, %v1280
      %1421 = vst.msk [vmem:[#allocation2 + $0x3a8] sm:$0xff] %vm1303, %v1282
      %1422 = vst.msk [vmem:[#allocation2 + $0x3b0] sm:$0xff] %vm1303, %v1284
      %1423 = vst.msk [vmem:[#allocation2 + $0x3b8] sm:$0xff] %vm1303, %v1286
      %1424 = vst.msk [vmem:[#allocation2 + $0x3c0] sm:$0xff] %vm1303, %v1288
      %1425 = vst.msk [vmem:[#allocation2 + $0x3c8] sm:$0xff] %vm1303, %v1290
      %1426 = vst.msk [vmem:[#allocation2 + $0x3d0] sm:$0xff] %vm1303, %v1292
      %1427 = vst.msk [vmem:[#allocation2 + $0x3d8] sm:$0xff] %vm1303, %v1294
      %1428 = vst.msk [vmem:[#allocation2 + $0x3e0] sm:$0xff] %vm1303, %v1296
      %1429 = vst.msk [vmem:[#allocation2 + $0x3e8] sm:$0xff] %vm1303, %v1298
      %1430 = vst.msk [vmem:[#allocation2 + $0x3f0] sm:$0xff] %vm1303, %v1300
      %1431 = vst.msk [vmem:[#allocation2 + $0x3f8] sm:$0xff] %vm1303, %v1302
      %v1432 = vld [vmem:[%s439] sm:$0xff]
      %v1433 = vld [vmem:[%s439 + $0x8] sm:$0xff]
      %v1434 = vld [vmem:[%s439 + $0x10] sm:$0xff]
      %v1435 = vld [vmem:[%s439 + $0x18] sm:$0xff]
      %v1436 = vld [vmem:[%s439 + $0x20] sm:$0xff]
      %v1437 = vld [vmem:[%s439 + $0x28] sm:$0xff]
      %v1438 = vld [vmem:[%s439 + $0x30] sm:$0xff]
      %v1439 = vld [vmem:[%s439 + $0x38] sm:$0xff]
      %v1440 = vld [vmem:[%s439 + $0x40] sm:$0xff]
      %v1441 = vld [vmem:[%s439 + $0x48] sm:$0xff]
      %v1442 = vld [vmem:[%s439 + $0x50] sm:$0xff]
      %v1443 = vld [vmem:[%s439 + $0x58] sm:$0xff]
      %v1444 = vld [vmem:[%s439 + $0x60] sm:$0xff]
      %v1445 = vld [vmem:[%s439 + $0x68] sm:$0xff]
      %v1446 = vld [vmem:[%s439 + $0x70] sm:$0xff]
      %v1447 = vld [vmem:[%s439 + $0x78] sm:$0xff]
      %v1448 = vld [vmem:[%s439 + $0x80] sm:$0xff]
      %v1449 = vld [vmem:[%s439 + $0x88] sm:$0xff]
      %v1450 = vld [vmem:[%s439 + $0x90] sm:$0xff]
      %v1451 = vld [vmem:[%s439 + $0x98] sm:$0xff]
      %v1452 = vld [vmem:[%s439 + $0xa0] sm:$0xff]
      %v1453 = vld [vmem:[%s439 + $0xa8] sm:$0xff]
      %v1454 = vld [vmem:[%s439 + $0xb0] sm:$0xff]
      %v1455 = vld [vmem:[%s439 + $0xb8] sm:$0xff]
      %v1456 = vld [vmem:[%s439 + $0xc0] sm:$0xff]
      %v1457 = vld [vmem:[%s439 + $0xc8] sm:$0xff]
      %v1458 = vld [vmem:[%s439 + $0xd0] sm:$0xff]
      %v1459 = vld [vmem:[%s439 + $0xd8] sm:$0xff]
      %v1460 = vld [vmem:[%s439 + $0xe0] sm:$0xff]
      %v1461 = vld [vmem:[%s439 + $0xe8] sm:$0xff]
      %v1462 = vld [vmem:[%s439 + $0xf0] sm:$0xff]
      %v1463 = vld [vmem:[%s439 + $0xf8] sm:$0xff]
      %v1464 = vld [vmem:[%s439 + $0x100] sm:$0xff]
      %v1465 = vld [vmem:[%s439 + $0x108] sm:$0xff]
      %v1466 = vld [vmem:[%s439 + $0x110] sm:$0xff]
      %v1467 = vld [vmem:[%s439 + $0x118] sm:$0xff]
      %v1468 = vld [vmem:[%s439 + $0x120] sm:$0xff]
      %v1469 = vld [vmem:[%s439 + $0x128] sm:$0xff]
      %v1470 = vld [vmem:[%s439 + $0x130] sm:$0xff]
      %v1471 = vld [vmem:[%s439 + $0x138] sm:$0xff]
      %v1472 = vld [vmem:[%s439 + $0x140] sm:$0xff]
      %v1473 = vld [vmem:[%s439 + $0x148] sm:$0xff]
      %v1474 = vld [vmem:[%s439 + $0x150] sm:$0xff]
      %v1475 = vld [vmem:[%s439 + $0x158] sm:$0xff]
      %v1476 = vld [vmem:[%s439 + $0x160] sm:$0xff]
      %v1477 = vld [vmem:[%s439 + $0x168] sm:$0xff]
      %v1478 = vld [vmem:[%s439 + $0x170] sm:$0xff]
      %v1479 = vld [vmem:[%s439 + $0x178] sm:$0xff]
      %v1480 = vld [vmem:[%s439 + $0x180] sm:$0xff]
      %v1481 = vld [vmem:[%s439 + $0x188] sm:$0xff]
      %v1482 = vld [vmem:[%s439 + $0x190] sm:$0xff]
      %v1483 = vld [vmem:[%s439 + $0x198] sm:$0xff]
      %v1484 = vld [vmem:[%s439 + $0x1a0] sm:$0xff]
      %v1485 = vld [vmem:[%s439 + $0x1a8] sm:$0xff]
      %v1486 = vld [vmem:[%s439 + $0x1b0] sm:$0xff]
      %v1487 = vld [vmem:[%s439 + $0x1b8] sm:$0xff]
      %v1488 = vld [vmem:[%s439 + $0x1c0] sm:$0xff]
      %v1489 = vld [vmem:[%s439 + $0x1c8] sm:$0xff]
      %v1490 = vld [vmem:[%s439 + $0x1d0] sm:$0xff]
      %v1491 = vld [vmem:[%s439 + $0x1d8] sm:$0xff]
      %v1492 = vld [vmem:[%s439 + $0x1e0] sm:$0xff]
      %v1493 = vld [vmem:[%s439 + $0x1e8] sm:$0xff]
      %v1494 = vld [vmem:[%s439 + $0x1f0] sm:$0xff]
      %v1495 = vld [vmem:[%s439 + $0x1f8] sm:$0xff]
      %v1496 = vld [vmem:[%s439 + $0x200] sm:$0xff]
      %v1497 = vld [vmem:[%s439 + $0x208] sm:$0xff]
      %v1498 = vld [vmem:[%s439 + $0x210] sm:$0xff]
      %v1499 = vld [vmem:[%s439 + $0x218] sm:$0xff]
      %v1500 = vld [vmem:[%s439 + $0x220] sm:$0xff]
      %v1501 = vld [vmem:[%s439 + $0x228] sm:$0xff]
      %v1502 = vld [vmem:[%s439 + $0x230] sm:$0xff]
      %v1503 = vld [vmem:[%s439 + $0x238] sm:$0xff]
      %v1504 = vld [vmem:[%s439 + $0x240] sm:$0xff]
      %v1505 = vld [vmem:[%s439 + $0x248] sm:$0xff]
      %v1506 = vld [vmem:[%s439 + $0x250] sm:$0xff]
      %v1507 = vld [vmem:[%s439 + $0x258] sm:$0xff]
      %v1508 = vld [vmem:[%s439 + $0x260] sm:$0xff]
      %v1509 = vld [vmem:[%s439 + $0x268] sm:$0xff]
      %v1510 = vld [vmem:[%s439 + $0x270] sm:$0xff]
      %v1511 = vld [vmem:[%s439 + $0x278] sm:$0xff]
      %v1512 = vld [vmem:[%s439 + $0x280] sm:$0xff]
      %v1513 = vld [vmem:[%s439 + $0x288] sm:$0xff]
      %v1514 = vld [vmem:[%s439 + $0x290] sm:$0xff]
      %v1515 = vld [vmem:[%s439 + $0x298] sm:$0xff]
      %v1516 = vld [vmem:[%s439 + $0x2a0] sm:$0xff]
      %v1517 = vld [vmem:[%s439 + $0x2a8] sm:$0xff]
      %v1518 = vld [vmem:[%s439 + $0x2b0] sm:$0xff]
      %v1519 = vld [vmem:[%s439 + $0x2b8] sm:$0xff]
      %v1520 = vld [vmem:[%s439 + $0x2c0] sm:$0xff]
      %v1521 = vld [vmem:[%s439 + $0x2c8] sm:$0xff]
      %v1522 = vld [vmem:[%s439 + $0x2d0] sm:$0xff]
      %v1523 = vld [vmem:[%s439 + $0x2d8] sm:$0xff]
      %v1524 = vld [vmem:[%s439 + $0x2e0] sm:$0xff]
      %v1525 = vld [vmem:[%s439 + $0x2e8] sm:$0xff]
      %v1526 = vld [vmem:[%s439 + $0x2f0] sm:$0xff]
      %v1527 = vld [vmem:[%s439 + $0x2f8] sm:$0xff]
      %v1528 = vld [vmem:[%s439 + $0x300] sm:$0xff]
      %v1529 = vld [vmem:[%s439 + $0x308] sm:$0xff]
      %v1530 = vld [vmem:[%s439 + $0x310] sm:$0xff]
      %v1531 = vld [vmem:[%s439 + $0x318] sm:$0xff]
      %v1532 = vld [vmem:[%s439 + $0x320] sm:$0xff]
      %v1533 = vld [vmem:[%s439 + $0x328] sm:$0xff]
      %v1534 = vld [vmem:[%s439 + $0x330] sm:$0xff]
      %v1535 = vld [vmem:[%s439 + $0x338] sm:$0xff]
      %v1536 = vld [vmem:[%s439 + $0x340] sm:$0xff]
      %v1537 = vld [vmem:[%s439 + $0x348] sm:$0xff]
      %v1538 = vld [vmem:[%s439 + $0x350] sm:$0xff]
      %v1539 = vld [vmem:[%s439 + $0x358] sm:$0xff]
      %v1540 = vld [vmem:[%s439 + $0x360] sm:$0xff]
      %v1541 = vld [vmem:[%s439 + $0x368] sm:$0xff]
      %v1542 = vld [vmem:[%s439 + $0x370] sm:$0xff]
      %v1543 = vld [vmem:[%s439 + $0x378] sm:$0xff]
      %v1544 = vld [vmem:[%s439 + $0x380] sm:$0xff]
      %v1545 = vld [vmem:[%s439 + $0x388] sm:$0xff]
      %v1546 = vld [vmem:[%s439 + $0x390] sm:$0xff]
      %v1547 = vld [vmem:[%s439 + $0x398] sm:$0xff]
      %v1548 = vld [vmem:[%s439 + $0x3a0] sm:$0xff]
      %v1549 = vld [vmem:[%s439 + $0x3a8] sm:$0xff]
      %v1550 = vld [vmem:[%s439 + $0x3b0] sm:$0xff]
      %v1551 = vld [vmem:[%s439 + $0x3b8] sm:$0xff]
      %v1552 = vld [vmem:[%s439 + $0x3c0] sm:$0xff]
      %v1553 = vld [vmem:[%s439 + $0x3c8] sm:$0xff]
      %v1554 = vld [vmem:[%s439 + $0x3d0] sm:$0xff]
      %v1555 = vld [vmem:[%s439 + $0x3d8] sm:$0xff]
      %v1556 = vld [vmem:[%s439 + $0x3e0] sm:$0xff]
      %v1557 = vld [vmem:[%s439 + $0x3e8] sm:$0xff]
      %v1558 = vld [vmem:[%s439 + $0x3f0] sm:$0xff]
      %v1559 = vld [vmem:[%s439 + $0x3f8] sm:$0xff]
      %v1560 = vld [vmem:[%s419] sm:$0x1]
      %v1561 = vld [vmem:[%s419 + $0x1] sm:$0x1]
      %v1562 = vld [vmem:[%s419 + $0x2] sm:$0x1]
      %v1563 = vld [vmem:[%s419 + $0x3] sm:$0x1]
      %v1564 = vld [vmem:[%s419 + $0x4] sm:$0x1]
      %v1565 = vld [vmem:[%s419 + $0x5] sm:$0x1]
      %v1566 = vld [vmem:[%s419 + $0x6] sm:$0x1]
      %v1567 = vld [vmem:[%s419 + $0x7] sm:$0x1]
      %v1568 = vld [vmem:[%s419 + $0x8] sm:$0x1]
      %v1569 = vld [vmem:[%s419 + $0x9] sm:$0x1]
      %v1570 = vld [vmem:[%s419 + $0xa] sm:$0x1]
      %v1571 = vld [vmem:[%s419 + $0xb] sm:$0x1]
      %v1572 = vld [vmem:[%s419 + $0xc] sm:$0x1]
      %v1573 = vld [vmem:[%s419 + $0xd] sm:$0x1]
      %v1574 = vld [vmem:[%s419 + $0xe] sm:$0x1]
      %v1575 = vld [vmem:[%s419 + $0xf] sm:$0x1]
      %v1576 = vld [vmem:[%s419 + $0x10] sm:$0x1]
      %v1577 = vld [vmem:[%s419 + $0x11] sm:$0x1]
      %v1578 = vld [vmem:[%s419 + $0x12] sm:$0x1]
      %v1579 = vld [vmem:[%s419 + $0x13] sm:$0x1]
      %v1580 = vld [vmem:[%s419 + $0x14] sm:$0x1]
      %v1581 = vld [vmem:[%s419 + $0x15] sm:$0x1]
      %v1582 = vld [vmem:[%s419 + $0x16] sm:$0x1]
      %v1583 = vld [vmem:[%s419 + $0x17] sm:$0x1]
      %v1584 = vld [vmem:[%s419 + $0x18] sm:$0x1]
      %v1585 = vld [vmem:[%s419 + $0x19] sm:$0x1]
      %v1586 = vld [vmem:[%s419 + $0x1a] sm:$0x1]
      %v1587 = vld [vmem:[%s419 + $0x1b] sm:$0x1]
      %v1588 = vld [vmem:[%s419 + $0x1c] sm:$0x1]
      %v1589 = vld [vmem:[%s419 + $0x1d] sm:$0x1]
      %v1590 = vld [vmem:[%s419 + $0x1e] sm:$0x1]
      %v1591 = vld [vmem:[%s419 + $0x1f] sm:$0x1]
      %v1592 = vld [vmem:[%s419 + $0x20] sm:$0x1]
      %v1593 = vld [vmem:[%s419 + $0x21] sm:$0x1]
      %v1594 = vld [vmem:[%s419 + $0x22] sm:$0x1]
      %v1595 = vld [vmem:[%s419 + $0x23] sm:$0x1]
      %v1596 = vld [vmem:[%s419 + $0x24] sm:$0x1]
      %v1597 = vld [vmem:[%s419 + $0x25] sm:$0x1]
      %v1598 = vld [vmem:[%s419 + $0x26] sm:$0x1]
      %v1599 = vld [vmem:[%s419 + $0x27] sm:$0x1]
      %v1600 = vld [vmem:[%s419 + $0x28] sm:$0x1]
      %v1601 = vld [vmem:[%s419 + $0x29] sm:$0x1]
      %v1602 = vld [vmem:[%s419 + $0x2a] sm:$0x1]
      %v1603 = vld [vmem:[%s419 + $0x2b] sm:$0x1]
      %v1604 = vld [vmem:[%s419 + $0x2c] sm:$0x1]
      %v1605 = vld [vmem:[%s419 + $0x2d] sm:$0x1]
      %v1606 = vld [vmem:[%s419 + $0x2e] sm:$0x1]
      %v1607 = vld [vmem:[%s419 + $0x2f] sm:$0x1]
      %v1608 = vld [vmem:[%s419 + $0x30] sm:$0x1]
      %v1609 = vld [vmem:[%s419 + $0x31] sm:$0x1]
      %v1610 = vld [vmem:[%s419 + $0x32] sm:$0x1]
      %v1611 = vld [vmem:[%s419 + $0x33] sm:$0x1]
      %v1612 = vld [vmem:[%s419 + $0x34] sm:$0x1]
      %v1613 = vld [vmem:[%s419 + $0x35] sm:$0x1]
      %v1614 = vld [vmem:[%s419 + $0x36] sm:$0x1]
      %v1615 = vld [vmem:[%s419 + $0x37] sm:$0x1]
      %v1616 = vld [vmem:[%s419 + $0x38] sm:$0x1]
      %v1617 = vld [vmem:[%s419 + $0x39] sm:$0x1]
      %v1618 = vld [vmem:[%s419 + $0x3a] sm:$0x1]
      %v1619 = vld [vmem:[%s419 + $0x3b] sm:$0x1]
      %v1620 = vld [vmem:[%s419 + $0x3c] sm:$0x1]
      %v1621 = vld [vmem:[%s419 + $0x3d] sm:$0x1]
      %v1622 = vld [vmem:[%s419 + $0x3e] sm:$0x1]
      %v1623 = vld [vmem:[%s419 + $0x3f] sm:$0x1]
      %v1624 = vmul.f32 %v469, %v1560
      %v1625 = vmul.f32 %v470, %v1561
      %v1626 = vmul.f32 %v471, %v1562
      %v1627 = vmul.f32 %v472, %v1563
      %v1628 = vmul.f32 %v473, %v1564
      %v1629 = vmul.f32 %v474, %v1565
      %v1630 = vmul.f32 %v475, %v1566
      %v1631 = vmul.f32 %v476, %v1567
      %v1632 = vmul.f32 %v477, %v1568
      %v1633 = vmul.f32 %v478, %v1569
      %v1634 = vmul.f32 %v479, %v1570
      %v1635 = vmul.f32 %v480, %v1571
      %v1636 = vmul.f32 %v481, %v1572
      %v1637 = vmul.f32 %v482, %v1573
      %v1638 = vmul.f32 %v483, %v1574
      %v1639 = vmul.f32 %v484, %v1575
      %v1640 = vmul.f32 %v485, %v1576
      %v1641 = vmul.f32 %v486, %v1577
      %v1642 = vmul.f32 %v487, %v1578
      %v1643 = vmul.f32 %v488, %v1579
      %v1644 = vmul.f32 %v489, %v1580
      %v1645 = vmul.f32 %v490, %v1581
      %v1646 = vmul.f32 %v491, %v1582
      %v1647 = vmul.f32 %v492, %v1583
      %v1648 = vmul.f32 %v493, %v1584
      %v1649 = vmul.f32 %v494, %v1585
      %v1650 = vmul.f32 %v495, %v1586
      %v1651 = vmul.f32 %v496, %v1587
      %v1652 = vmul.f32 %v497, %v1588
      %v1653 = vmul.f32 %v498, %v1589
      %v1654 = vmul.f32 %v499, %v1590
      %v1655 = vmul.f32 %v500, %v1591
      %v1656 = vmul.f32 %v501, %v1592
      %v1657 = vmul.f32 %v502, %v1593
      %v1658 = vmul.f32 %v503, %v1594
      %v1659 = vmul.f32 %v504, %v1595
      %v1660 = vmul.f32 %v505, %v1596
      %v1661 = vmul.f32 %v506, %v1597
      %v1662 = vmul.f32 %v507, %v1598
      %v1663 = vmul.f32 %v508, %v1599
      %v1664 = vmul.f32 %v509, %v1600
      %v1665 = vmul.f32 %v510, %v1601
      %v1666 = vmul.f32 %v511, %v1602
      %v1667 = vmul.f32 %v512, %v1603
      %v1668 = vmul.f32 %v513, %v1604
      %v1669 = vmul.f32 %v514, %v1605
      %v1670 = vmul.f32 %v515, %v1606
      %v1671 = vmul.f32 %v516, %v1607
      %v1672 = vmul.f32 %v517, %v1608
      %v1673 = vmul.f32 %v518, %v1609
      %v1674 = vmul.f32 %v519, %v1610
      %v1675 = vmul.f32 %v520, %v1611
      %v1676 = vmul.f32 %v521, %v1612
      %v1677 = vmul.f32 %v522, %v1613
      %v1678 = vmul.f32 %v523, %v1614
      %v1679 = vmul.f32 %v524, %v1615
      %v1680 = vmul.f32 %v525, %v1616
      %v1681 = vmul.f32 %v526, %v1617
      %v1682 = vmul.f32 %v527, %v1618
      %v1683 = vmul.f32 %v528, %v1619
      %v1684 = vmul.f32 %v529, %v1620
      %v1685 = vmul.f32 %v530, %v1621
      %v1686 = vmul.f32 %v531, %v1622
      %v1687 = vmul.f32 %v532, %v1623
      %1689 = vset.pattern.permute.xlu0 0
      %1690 = vperm.xlu0 %1689, %v1432
      %v1691 = vpop.permute.xlu0 %1690
      %1694 = vset.pattern.permute.xlu0 0
      %1695 = vperm.xlu0 %1694, %v1433
      %v1696 = vpop.permute.xlu0 %1695
      %1699 = vset.pattern.permute.xlu0 0
      %1700 = vperm.xlu0 %1699, %v1434
      %v1701 = vpop.permute.xlu0 %1700
      %1704 = vset.pattern.permute.xlu0 0
      %1705 = vperm.xlu0 %1704, %v1435
      %v1706 = vpop.permute.xlu0 %1705
      %1709 = vset.pattern.permute.xlu0 0
      %1710 = vperm.xlu0 %1709, %v1436
      %v1711 = vpop.permute.xlu0 %1710
      %1714 = vset.pattern.permute.xlu0 0
      %1715 = vperm.xlu0 %1714, %v1437
      %v1716 = vpop.permute.xlu0 %1715
      %1719 = vset.pattern.permute.xlu0 0
      %1720 = vperm.xlu0 %1719, %v1438
      %v1721 = vpop.permute.xlu0 %1720
      %1724 = vset.pattern.permute.xlu0 0
      %1725 = vperm.xlu0 %1724, %v1439
      %v1726 = vpop.permute.xlu0 %1725
      %1729 = vset.pattern.permute.xlu0 0
      %1730 = vperm.xlu0 %1729, %v1440
      %v1731 = vpop.permute.xlu0 %1730
      %1734 = vset.pattern.permute.xlu0 0
      %1735 = vperm.xlu0 %1734, %v1441
      %v1736 = vpop.permute.xlu0 %1735
      %1739 = vset.pattern.permute.xlu0 0
      %1740 = vperm.xlu0 %1739, %v1442
      %v1741 = vpop.permute.xlu0 %1740
      %1744 = vset.pattern.permute.xlu0 0
      %1745 = vperm.xlu0 %1744, %v1443
      %v1746 = vpop.permute.xlu0 %1745
      %1749 = vset.pattern.permute.xlu0 0
      %1750 = vperm.xlu0 %1749, %v1444
      %v1751 = vpop.permute.xlu0 %1750
      %1754 = vset.pattern.permute.xlu0 0
      %1755 = vperm.xlu0 %1754, %v1445
      %v1756 = vpop.permute.xlu0 %1755
      %1759 = vset.pattern.permute.xlu0 0
      %1760 = vperm.xlu0 %1759, %v1446
      %v1761 = vpop.permute.xlu0 %1760
      %1764 = vset.pattern.permute.xlu0 0
      %1765 = vperm.xlu0 %1764, %v1447
      %v1766 = vpop.permute.xlu0 %1765
      %1769 = vset.pattern.permute.xlu0 0
      %1770 = vperm.xlu0 %1769, %v1448
      %v1771 = vpop.permute.xlu0 %1770
      %1774 = vset.pattern.permute.xlu0 0
      %1775 = vperm.xlu0 %1774, %v1449
      %v1776 = vpop.permute.xlu0 %1775
      %1779 = vset.pattern.permute.xlu0 0
      %1780 = vperm.xlu0 %1779, %v1450
      %v1781 = vpop.permute.xlu0 %1780
      %1784 = vset.pattern.permute.xlu0 0
      %1785 = vperm.xlu0 %1784, %v1451
      %v1786 = vpop.permute.xlu0 %1785
      %1789 = vset.pattern.permute.xlu0 0
      %1790 = vperm.xlu0 %1789, %v1452
      %v1791 = vpop.permute.xlu0 %1790
      %1794 = vset.pattern.permute.xlu0 0
      %1795 = vperm.xlu0 %1794, %v1453
      %v1796 = vpop.permute.xlu0 %1795
      %1799 = vset.pattern.permute.xlu0 0
      %1800 = vperm.xlu0 %1799, %v1454
      %v1801 = vpop.permute.xlu0 %1800
      %1804 = vset.pattern.permute.xlu0 0
      %1805 = vperm.xlu0 %1804, %v1455
      %v1806 = vpop.permute.xlu0 %1805
      %1809 = vset.pattern.permute.xlu0 0
      %1810 = vperm.xlu0 %1809, %v1456
      %v1811 = vpop.permute.xlu0 %1810
      %1814 = vset.pattern.permute.xlu0 0
      %1815 = vperm.xlu0 %1814, %v1457
      %v1816 = vpop.permute.xlu0 %1815
      %1819 = vset.pattern.permute.xlu0 0
      %1820 = vperm.xlu0 %1819, %v1458
      %v1821 = vpop.permute.xlu0 %1820
      %1824 = vset.pattern.permute.xlu0 0
      %1825 = vperm.xlu0 %1824, %v1459
      %v1826 = vpop.permute.xlu0 %1825
      %1829 = vset.pattern.permute.xlu0 0
      %1830 = vperm.xlu0 %1829, %v1460
      %v1831 = vpop.permute.xlu0 %1830
      %1834 = vset.pattern.permute.xlu0 0
      %1835 = vperm.xlu0 %1834, %v1461
      %v1836 = vpop.permute.xlu0 %1835
      %1839 = vset.pattern.permute.xlu0 0
      %1840 = vperm.xlu0 %1839, %v1462
      %v1841 = vpop.permute.xlu0 %1840
      %1844 = vset.pattern.permute.xlu0 0
      %1845 = vperm.xlu0 %1844, %v1463
      %v1846 = vpop.permute.xlu0 %1845
      %1849 = vset.pattern.permute.xlu0 0
      %1850 = vperm.xlu0 %1849, %v1464
      %v1851 = vpop.permute.xlu0 %1850
      %1854 = vset.pattern.permute.xlu0 0
      %1855 = vperm.xlu0 %1854, %v1465
      %v1856 = vpop.permute.xlu0 %1855
      %1859 = vset.pattern.permute.xlu0 0
      %1860 = vperm.xlu0 %1859, %v1466
      %v1861 = vpop.permute.xlu0 %1860
      %1864 = vset.pattern.permute.xlu0 0
      %1865 = vperm.xlu0 %1864, %v1467
      %v1866 = vpop.permute.xlu0 %1865
      %1869 = vset.pattern.permute.xlu0 0
      %1870 = vperm.xlu0 %1869, %v1468
      %v1871 = vpop.permute.xlu0 %1870
      %1874 = vset.pattern.permute.xlu0 0
      %1875 = vperm.xlu0 %1874, %v1469
      %v1876 = vpop.permute.xlu0 %1875
      %1879 = vset.pattern.permute.xlu0 0
      %1880 = vperm.xlu0 %1879, %v1470
      %v1881 = vpop.permute.xlu0 %1880
      %1884 = vset.pattern.permute.xlu0 0
      %1885 = vperm.xlu0 %1884, %v1471
      %v1886 = vpop.permute.xlu0 %1885
      %1889 = vset.pattern.permute.xlu0 0
      %1890 = vperm.xlu0 %1889, %v1472
      %v1891 = vpop.permute.xlu0 %1890
      %1894 = vset.pattern.permute.xlu0 0
      %1895 = vperm.xlu0 %1894, %v1473
      %v1896 = vpop.permute.xlu0 %1895
      %1899 = vset.pattern.permute.xlu0 0
      %1900 = vperm.xlu0 %1899, %v1474
      %v1901 = vpop.permute.xlu0 %1900
      %1904 = vset.pattern.permute.xlu0 0
      %1905 = vperm.xlu0 %1904, %v1475
      %v1906 = vpop.permute.xlu0 %1905
      %1909 = vset.pattern.permute.xlu0 0
      %1910 = vperm.xlu0 %1909, %v1476
      %v1911 = vpop.permute.xlu0 %1910
      %1914 = vset.pattern.permute.xlu0 0
      %1915 = vperm.xlu0 %1914, %v1477
      %v1916 = vpop.permute.xlu0 %1915
      %1919 = vset.pattern.permute.xlu0 0
      %1920 = vperm.xlu0 %1919, %v1478
      %v1921 = vpop.permute.xlu0 %1920
      %1924 = vset.pattern.permute.xlu0 0
      %1925 = vperm.xlu0 %1924, %v1479
      %v1926 = vpop.permute.xlu0 %1925
      %1929 = vset.pattern.permute.xlu0 0
      %1930 = vperm.xlu0 %1929, %v1480
      %v1931 = vpop.permute.xlu0 %1930
      %1934 = vset.pattern.permute.xlu0 0
      %1935 = vperm.xlu0 %1934, %v1481
      %v1936 = vpop.permute.xlu0 %1935
      %1939 = vset.pattern.permute.xlu0 0
      %1940 = vperm.xlu0 %1939, %v1482
      %v1941 = vpop.permute.xlu0 %1940
      %1944 = vset.pattern.permute.xlu0 0
      %1945 = vperm.xlu0 %1944, %v1483
      %v1946 = vpop.permute.xlu0 %1945
      %1949 = vset.pattern.permute.xlu0 0
      %1950 = vperm.xlu0 %1949, %v1484
      %v1951 = vpop.permute.xlu0 %1950
      %1954 = vset.pattern.permute.xlu0 0
      %1955 = vperm.xlu0 %1954, %v1485
      %v1956 = vpop.permute.xlu0 %1955
      %1959 = vset.pattern.permute.xlu0 0
      %1960 = vperm.xlu0 %1959, %v1486
      %v1961 = vpop.permute.xlu0 %1960
      %1964 = vset.pattern.permute.xlu0 0
      %1965 = vperm.xlu0 %1964, %v1487
      %v1966 = vpop.permute.xlu0 %1965
      %1969 = vset.pattern.permute.xlu0 0
      %1970 = vperm.xlu0 %1969, %v1488
      %v1971 = vpop.permute.xlu0 %1970
      %1974 = vset.pattern.permute.xlu0 0
      %1975 = vperm.xlu0 %1974, %v1489
      %v1976 = vpop.permute.xlu0 %1975
      %1979 = vset.pattern.permute.xlu0 0
      %1980 = vperm.xlu0 %1979, %v1490
      %v1981 = vpop.permute.xlu0 %1980
      %1984 = vset.pattern.permute.xlu0 0
      %1985 = vperm.xlu0 %1984, %v1491
      %v1986 = vpop.permute.xlu0 %1985
      %1989 = vset.pattern.permute.xlu0 0
      %1990 = vperm.xlu0 %1989, %v1492
      %v1991 = vpop.permute.xlu0 %1990
      %1994 = vset.pattern.permute.xlu0 0
      %1995 = vperm.xlu0 %1994, %v1493
      %v1996 = vpop.permute.xlu0 %1995
      %1999 = vset.pattern.permute.xlu0 0
      %2000 = vperm.xlu0 %1999, %v1494
      %v2001 = vpop.permute.xlu0 %2000
      %2004 = vset.pattern.permute.xlu0 0
      %2005 = vperm.xlu0 %2004, %v1495
      %v2006 = vpop.permute.xlu0 %2005
      %2009 = vset.pattern.permute.xlu0 0
      %2010 = vperm.xlu0 %2009, %v1496
      %v2011 = vpop.permute.xlu0 %2010
      %2014 = vset.pattern.permute.xlu0 0
      %2015 = vperm.xlu0 %2014, %v1497
      %v2016 = vpop.permute.xlu0 %2015
      %2019 = vset.pattern.permute.xlu0 0
      %2020 = vperm.xlu0 %2019, %v1498
      %v2021 = vpop.permute.xlu0 %2020
      %2024 = vset.pattern.permute.xlu0 0
      %2025 = vperm.xlu0 %2024, %v1499
      %v2026 = vpop.permute.xlu0 %2025
      %2029 = vset.pattern.permute.xlu0 0
      %2030 = vperm.xlu0 %2029, %v1500
      %v2031 = vpop.permute.xlu0 %2030
      %2034 = vset.pattern.permute.xlu0 0
      %2035 = vperm.xlu0 %2034, %v1501
      %v2036 = vpop.permute.xlu0 %2035
      %2039 = vset.pattern.permute.xlu0 0
      %2040 = vperm.xlu0 %2039, %v1502
      %v2041 = vpop.permute.xlu0 %2040
      %2044 = vset.pattern.permute.xlu0 0
      %2045 = vperm.xlu0 %2044, %v1503
      %v2046 = vpop.permute.xlu0 %2045
      %2049 = vset.pattern.permute.xlu0 0
      %2050 = vperm.xlu0 %2049, %v1504
      %v2051 = vpop.permute.xlu0 %2050
      %2054 = vset.pattern.permute.xlu0 0
      %2055 = vperm.xlu0 %2054, %v1505
      %v2056 = vpop.permute.xlu0 %2055
      %2059 = vset.pattern.permute.xlu0 0
      %2060 = vperm.xlu0 %2059, %v1506
      %v2061 = vpop.permute.xlu0 %2060
      %2064 = vset.pattern.permute.xlu0 0
      %2065 = vperm.xlu0 %2064, %v1507
      %v2066 = vpop.permute.xlu0 %2065
      %2069 = vset.pattern.permute.xlu0 0
      %2070 = vperm.xlu0 %2069, %v1508
      %v2071 = vpop.permute.xlu0 %2070
      %2074 = vset.pattern.permute.xlu0 0
      %2075 = vperm.xlu0 %2074, %v1509
      %v2076 = vpop.permute.xlu0 %2075
      %2079 = vset.pattern.permute.xlu0 0
      %2080 = vperm.xlu0 %2079, %v1510
      %v2081 = vpop.permute.xlu0 %2080
      %2084 = vset.pattern.permute.xlu0 0
      %2085 = vperm.xlu0 %2084, %v1511
      %v2086 = vpop.permute.xlu0 %2085
      %2089 = vset.pattern.permute.xlu0 0
      %2090 = vperm.xlu0 %2089, %v1512
      %v2091 = vpop.permute.xlu0 %2090
      %2094 = vset.pattern.permute.xlu0 0
      %2095 = vperm.xlu0 %2094, %v1513
      %v2096 = vpop.permute.xlu0 %2095
      %2099 = vset.pattern.permute.xlu0 0
      %2100 = vperm.xlu0 %2099, %v1514
      %v2101 = vpop.permute.xlu0 %2100
      %2104 = vset.pattern.permute.xlu0 0
      %2105 = vperm.xlu0 %2104, %v1515
      %v2106 = vpop.permute.xlu0 %2105
      %2109 = vset.pattern.permute.xlu0 0
      %2110 = vperm.xlu0 %2109, %v1516
      %v2111 = vpop.permute.xlu0 %2110
      %2114 = vset.pattern.permute.xlu0 0
      %2115 = vperm.xlu0 %2114, %v1517
      %v2116 = vpop.permute.xlu0 %2115
      %2119 = vset.pattern.permute.xlu0 0
      %2120 = vperm.xlu0 %2119, %v1518
      %v2121 = vpop.permute.xlu0 %2120
      %2124 = vset.pattern.permute.xlu0 0
      %2125 = vperm.xlu0 %2124, %v1519
      %v2126 = vpop.permute.xlu0 %2125
      %2129 = vset.pattern.permute.xlu0 0
      %2130 = vperm.xlu0 %2129, %v1520
      %v2131 = vpop.permute.xlu0 %2130
      %2134 = vset.pattern.permute.xlu0 0
      %2135 = vperm.xlu0 %2134, %v1521
      %v2136 = vpop.permute.xlu0 %2135
      %2139 = vset.pattern.permute.xlu0 0
      %2140 = vperm.xlu0 %2139, %v1522
      %v2141 = vpop.permute.xlu0 %2140
      %2144 = vset.pattern.permute.xlu0 0
      %2145 = vperm.xlu0 %2144, %v1523
      %v2146 = vpop.permute.xlu0 %2145
      %2149 = vset.pattern.permute.xlu0 0
      %2150 = vperm.xlu0 %2149, %v1524
      %v2151 = vpop.permute.xlu0 %2150
      %2154 = vset.pattern.permute.xlu0 0
      %2155 = vperm.xlu0 %2154, %v1525
      %v2156 = vpop.permute.xlu0 %2155
      %2159 = vset.pattern.permute.xlu0 0
      %2160 = vperm.xlu0 %2159, %v1526
      %v2161 = vpop.permute.xlu0 %2160
      %2164 = vset.pattern.permute.xlu0 0
      %2165 = vperm.xlu0 %2164, %v1527
      %v2166 = vpop.permute.xlu0 %2165
      %2169 = vset.pattern.permute.xlu0 0
      %2170 = vperm.xlu0 %2169, %v1528
      %v2171 = vpop.permute.xlu0 %2170
      %2174 = vset.pattern.permute.xlu0 0
      %2175 = vperm.xlu0 %2174, %v1529
      %v2176 = vpop.permute.xlu0 %2175
      %2179 = vset.pattern.permute.xlu0 0
      %2180 = vperm.xlu0 %2179, %v1530
      %v2181 = vpop.permute.xlu0 %2180
      %2184 = vset.pattern.permute.xlu0 0
      %2185 = vperm.xlu0 %2184, %v1531
      %v2186 = vpop.permute.xlu0 %2185
      %2189 = vset.pattern.permute.xlu0 0
      %2190 = vperm.xlu0 %2189, %v1532
      %v2191 = vpop.permute.xlu0 %2190
      %2194 = vset.pattern.permute.xlu0 0
      %2195 = vperm.xlu0 %2194, %v1533
      %v2196 = vpop.permute.xlu0 %2195
      %2199 = vset.pattern.permute.xlu0 0
      %2200 = vperm.xlu0 %2199, %v1534
      %v2201 = vpop.permute.xlu0 %2200
      %2204 = vset.pattern.permute.xlu0 0
      %2205 = vperm.xlu0 %2204, %v1535
      %v2206 = vpop.permute.xlu0 %2205
      %2209 = vset.pattern.permute.xlu0 0
      %2210 = vperm.xlu0 %2209, %v1536
      %v2211 = vpop.permute.xlu0 %2210
      %2214 = vset.pattern.permute.xlu0 0
      %2215 = vperm.xlu0 %2214, %v1537
      %v2216 = vpop.permute.xlu0 %2215
      %2219 = vset.pattern.permute.xlu0 0
      %2220 = vperm.xlu0 %2219, %v1538
      %v2221 = vpop.permute.xlu0 %2220
      %2224 = vset.pattern.permute.xlu0 0
      %2225 = vperm.xlu0 %2224, %v1539
      %v2226 = vpop.permute.xlu0 %2225
      %2229 = vset.pattern.permute.xlu0 0
      %2230 = vperm.xlu0 %2229, %v1540
      %v2231 = vpop.permute.xlu0 %2230
      %2234 = vset.pattern.permute.xlu0 0
      %2235 = vperm.xlu0 %2234, %v1541
      %v2236 = vpop.permute.xlu0 %2235
      %2239 = vset.pattern.permute.xlu0 0
      %2240 = vperm.xlu0 %2239, %v1542
      %v2241 = vpop.permute.xlu0 %2240
      %2244 = vset.pattern.permute.xlu0 0
      %2245 = vperm.xlu0 %2244, %v1543
      %v2246 = vpop.permute.xlu0 %2245
      %2249 = vset.pattern.permute.xlu0 0
      %2250 = vperm.xlu0 %2249, %v1544
      %v2251 = vpop.permute.xlu0 %2250
      %2254 = vset.pattern.permute.xlu0 0
      %2255 = vperm.xlu0 %2254, %v1545
      %v2256 = vpop.permute.xlu0 %2255
      %2259 = vset.pattern.permute.xlu0 0
      %2260 = vperm.xlu0 %2259, %v1546
      %v2261 = vpop.permute.xlu0 %2260
      %2264 = vset.pattern.permute.xlu0 0
      %2265 = vperm.xlu0 %2264, %v1547
      %v2266 = vpop.permute.xlu0 %2265
      %2269 = vset.pattern.permute.xlu0 0
      %2270 = vperm.xlu0 %2269, %v1548
      %v2271 = vpop.permute.xlu0 %2270
      %2274 = vset.pattern.permute.xlu0 0
      %2275 = vperm.xlu0 %2274, %v1549
      %v2276 = vpop.permute.xlu0 %2275
      %2279 = vset.pattern.permute.xlu0 0
      %2280 = vperm.xlu0 %2279, %v1550
      %v2281 = vpop.permute.xlu0 %2280
      %2284 = vset.pattern.permute.xlu0 0
      %2285 = vperm.xlu0 %2284, %v1551
      %v2286 = vpop.permute.xlu0 %2285
      %2289 = vset.pattern.permute.xlu0 0
      %2290 = vperm.xlu0 %2289, %v1552
      %v2291 = vpop.permute.xlu0 %2290
      %2294 = vset.pattern.permute.xlu0 0
      %2295 = vperm.xlu0 %2294, %v1553
      %v2296 = vpop.permute.xlu0 %2295
      %2299 = vset.pattern.permute.xlu0 0
      %2300 = vperm.xlu0 %2299, %v1554
      %v2301 = vpop.permute.xlu0 %2300
      %2304 = vset.pattern.permute.xlu0 0
      %2305 = vperm.xlu0 %2304, %v1555
      %v2306 = vpop.permute.xlu0 %2305
      %2309 = vset.pattern.permute.xlu0 0
      %2310 = vperm.xlu0 %2309, %v1556
      %v2311 = vpop.permute.xlu0 %2310
      %2314 = vset.pattern.permute.xlu0 0
      %2315 = vperm.xlu0 %2314, %v1557
      %v2316 = vpop.permute.xlu0 %2315
      %2319 = vset.pattern.permute.xlu0 0
      %2320 = vperm.xlu0 %2319, %v1558
      %v2321 = vpop.permute.xlu0 %2320
      %2324 = vset.pattern.permute.xlu0 0
      %2325 = vperm.xlu0 %2324, %v1559
      %v2326 = vpop.permute.xlu0 %2325
      %v2392 = vlaneseq
      %v2393 = vshrl.u32 %v2392, 7
      %v2394 = vsub.s32 0, %v2393
      %v2395 = vrot.slane %v1624, %v2394
      %v2396 = vlaneseq
      %v2397 = vshrl.u32 %v2396, 7
      %v2398 = vsub.s32 0, %v2397
      %v2399 = vrot.slane %v1625, %v2398
      %v2400 = vlaneseq
      %v2401 = vshrl.u32 %v2400, 7
      %v2402 = vsub.s32 0, %v2401
      %v2403 = vrot.slane %v1626, %v2402
      %v2404 = vlaneseq
      %v2405 = vshrl.u32 %v2404, 7
      %v2406 = vsub.s32 0, %v2405
      %v2407 = vrot.slane %v1627, %v2406
      %v2408 = vlaneseq
      %v2409 = vshrl.u32 %v2408, 7
      %v2410 = vsub.s32 0, %v2409
      %v2411 = vrot.slane %v1628, %v2410
      %v2412 = vlaneseq
      %v2413 = vshrl.u32 %v2412, 7
      %v2414 = vsub.s32 0, %v2413
      %v2415 = vrot.slane %v1629, %v2414
      %v2416 = vlaneseq
      %v2417 = vshrl.u32 %v2416, 7
      %v2418 = vsub.s32 0, %v2417
      %v2419 = vrot.slane %v1630, %v2418
      %v2420 = vlaneseq
      %v2421 = vshrl.u32 %v2420, 7
      %v2422 = vsub.s32 0, %v2421
      %v2423 = vrot.slane %v1631, %v2422
      %v2424 = vlaneseq
      %v2425 = vshrl.u32 %v2424, 7
      %v2426 = vsub.s32 0, %v2425
      %v2427 = vrot.slane %v1632, %v2426
      %v2428 = vlaneseq
      %v2429 = vshrl.u32 %v2428, 7
      %v2430 = vsub.s32 0, %v2429
      %v2431 = vrot.slane %v1633, %v2430
      %v2432 = vlaneseq
      %v2433 = vshrl.u32 %v2432, 7
      %v2434 = vsub.s32 0, %v2433
      %v2435 = vrot.slane %v1634, %v2434
      %v2436 = vlaneseq
      %v2437 = vshrl.u32 %v2436, 7
      %v2438 = vsub.s32 0, %v2437
      %v2439 = vrot.slane %v1635, %v2438
      %v2440 = vlaneseq
      %v2441 = vshrl.u32 %v2440, 7
      %v2442 = vsub.s32 0, %v2441
      %v2443 = vrot.slane %v1636, %v2442
      %v2444 = vlaneseq
      %v2445 = vshrl.u32 %v2444, 7
      %v2446 = vsub.s32 0, %v2445
      %v2447 = vrot.slane %v1637, %v2446
      %v2448 = vlaneseq
      %v2449 = vshrl.u32 %v2448, 7
      %v2450 = vsub.s32 0, %v2449
      %v2451 = vrot.slane %v1638, %v2450
      %v2452 = vlaneseq
      %v2453 = vshrl.u32 %v2452, 7
      %v2454 = vsub.s32 0, %v2453
      %v2455 = vrot.slane %v1639, %v2454
      %v2456 = vlaneseq
      %v2457 = vshrl.u32 %v2456, 7
      %v2458 = vsub.s32 0, %v2457
      %v2459 = vrot.slane %v1640, %v2458
      %v2460 = vlaneseq
      %v2461 = vshrl.u32 %v2460, 7
      %v2462 = vsub.s32 0, %v2461
      %v2463 = vrot.slane %v1641, %v2462
      %v2464 = vlaneseq
      %v2465 = vshrl.u32 %v2464, 7
      %v2466 = vsub.s32 0, %v2465
      %v2467 = vrot.slane %v1642, %v2466
      %v2468 = vlaneseq
      %v2469 = vshrl.u32 %v2468, 7
      %v2470 = vsub.s32 0, %v2469
      %v2471 = vrot.slane %v1643, %v2470
      %v2472 = vlaneseq
      %v2473 = vshrl.u32 %v2472, 7
      %v2474 = vsub.s32 0, %v2473
      %v2475 = vrot.slane %v1644, %v2474
      %v2476 = vlaneseq
      %v2477 = vshrl.u32 %v2476, 7
      %v2478 = vsub.s32 0, %v2477
      %v2479 = vrot.slane %v1645, %v2478
      %v2480 = vlaneseq
      %v2481 = vshrl.u32 %v2480, 7
      %v2482 = vsub.s32 0, %v2481
      %v2483 = vrot.slane %v1646, %v2482
      %v2484 = vlaneseq
      %v2485 = vshrl.u32 %v2484, 7
      %v2486 = vsub.s32 0, %v2485
      %v2487 = vrot.slane %v1647, %v2486
      %v2488 = vlaneseq
      %v2489 = vshrl.u32 %v2488, 7
      %v2490 = vsub.s32 0, %v2489
      %v2491 = vrot.slane %v1648, %v2490
      %v2492 = vlaneseq
      %v2493 = vshrl.u32 %v2492, 7
      %v2494 = vsub.s32 0, %v2493
      %v2495 = vrot.slane %v1649, %v2494
      %v2496 = vlaneseq
      %v2497 = vshrl.u32 %v2496, 7
      %v2498 = vsub.s32 0, %v2497
      %v2499 = vrot.slane %v1650, %v2498
      %v2500 = vlaneseq
      %v2501 = vshrl.u32 %v2500, 7
      %v2502 = vsub.s32 0, %v2501
      %v2503 = vrot.slane %v1651, %v2502
      %v2504 = vlaneseq
      %v2505 = vshrl.u32 %v2504, 7
      %v2506 = vsub.s32 0, %v2505
      %v2507 = vrot.slane %v1652, %v2506
      %v2508 = vlaneseq
      %v2509 = vshrl.u32 %v2508, 7
      %v2510 = vsub.s32 0, %v2509
      %v2511 = vrot.slane %v1653, %v2510
      %v2512 = vlaneseq
      %v2513 = vshrl.u32 %v2512, 7
      %v2514 = vsub.s32 0, %v2513
      %v2515 = vrot.slane %v1654, %v2514
      %v2516 = vlaneseq
      %v2517 = vshrl.u32 %v2516, 7
      %v2518 = vsub.s32 0, %v2517
      %v2519 = vrot.slane %v1655, %v2518
      %v2520 = vlaneseq
      %v2521 = vshrl.u32 %v2520, 7
      %v2522 = vsub.s32 0, %v2521
      %v2523 = vrot.slane %v1656, %v2522
      %v2524 = vlaneseq
      %v2525 = vshrl.u32 %v2524, 7
      %v2526 = vsub.s32 0, %v2525
      %v2527 = vrot.slane %v1657, %v2526
      %v2528 = vlaneseq
      %v2529 = vshrl.u32 %v2528, 7
      %v2530 = vsub.s32 0, %v2529
      %v2531 = vrot.slane %v1658, %v2530
      %v2532 = vlaneseq
      %v2533 = vshrl.u32 %v2532, 7
      %v2534 = vsub.s32 0, %v2533
      %v2535 = vrot.slane %v1659, %v2534
      %v2536 = vlaneseq
      %v2537 = vshrl.u32 %v2536, 7
      %v2538 = vsub.s32 0, %v2537
      %v2539 = vrot.slane %v1660, %v2538
      %v2540 = vlaneseq
      %v2541 = vshrl.u32 %v2540, 7
      %v2542 = vsub.s32 0, %v2541
      %v2543 = vrot.slane %v1661, %v2542
      %v2544 = vlaneseq
      %v2545 = vshrl.u32 %v2544, 7
      %v2546 = vsub.s32 0, %v2545
      %v2547 = vrot.slane %v1662, %v2546
      %v2548 = vlaneseq
      %v2549 = vshrl.u32 %v2548, 7
      %v2550 = vsub.s32 0, %v2549
      %v2551 = vrot.slane %v1663, %v2550
      %v2552 = vlaneseq
      %v2553 = vshrl.u32 %v2552, 7
      %v2554 = vsub.s32 0, %v2553
      %v2555 = vrot.slane %v1664, %v2554
      %v2556 = vlaneseq
      %v2557 = vshrl.u32 %v2556, 7
      %v2558 = vsub.s32 0, %v2557
      %v2559 = vrot.slane %v1665, %v2558
      %v2560 = vlaneseq
      %v2561 = vshrl.u32 %v2560, 7
      %v2562 = vsub.s32 0, %v2561
      %v2563 = vrot.slane %v1666, %v2562
      %v2564 = vlaneseq
      %v2565 = vshrl.u32 %v2564, 7
      %v2566 = vsub.s32 0, %v2565
      %v2567 = vrot.slane %v1667, %v2566
      %v2568 = vlaneseq
      %v2569 = vshrl.u32 %v2568, 7
      %v2570 = vsub.s32 0, %v2569
      %v2571 = vrot.slane %v1668, %v2570
      %v2572 = vlaneseq
      %v2573 = vshrl.u32 %v2572, 7
      %v2574 = vsub.s32 0, %v2573
      %v2575 = vrot.slane %v1669, %v2574
      %v2576 = vlaneseq
      %v2577 = vshrl.u32 %v2576, 7
      %v2578 = vsub.s32 0, %v2577
      %v2579 = vrot.slane %v1670, %v2578
      %v2580 = vlaneseq
      %v2581 = vshrl.u32 %v2580, 7
      %v2582 = vsub.s32 0, %v2581
      %v2583 = vrot.slane %v1671, %v2582
      %v2584 = vlaneseq
      %v2585 = vshrl.u32 %v2584, 7
      %v2586 = vsub.s32 0, %v2585
      %v2587 = vrot.slane %v1672, %v2586
      %v2588 = vlaneseq
      %v2589 = vshrl.u32 %v2588, 7
      %v2590 = vsub.s32 0, %v2589
      %v2591 = vrot.slane %v1673, %v2590
      %v2592 = vlaneseq
      %v2593 = vshrl.u32 %v2592, 7
      %v2594 = vsub.s32 0, %v2593
      %v2595 = vrot.slane %v1674, %v2594
      %v2596 = vlaneseq
      %v2597 = vshrl.u32 %v2596, 7
      %v2598 = vsub.s32 0, %v2597
      %v2599 = vrot.slane %v1675, %v2598
      %v2600 = vlaneseq
      %v2601 = vshrl.u32 %v2600, 7
      %v2602 = vsub.s32 0, %v2601
      %v2603 = vrot.slane %v1676, %v2602
      %v2604 = vlaneseq
      %v2605 = vshrl.u32 %v2604, 7
      %v2606 = vsub.s32 0, %v2605
      %v2607 = vrot.slane %v1677, %v2606
      %v2608 = vlaneseq
      %v2609 = vshrl.u32 %v2608, 7
      %v2610 = vsub.s32 0, %v2609
      %v2611 = vrot.slane %v1678, %v2610
      %v2612 = vlaneseq
      %v2613 = vshrl.u32 %v2612, 7
      %v2614 = vsub.s32 0, %v2613
      %v2615 = vrot.slane %v1679, %v2614
      %v2616 = vlaneseq
      %v2617 = vshrl.u32 %v2616, 7
      %v2618 = vsub.s32 0, %v2617
      %v2619 = vrot.slane %v1680, %v2618
      %v2620 = vlaneseq
      %v2621 = vshrl.u32 %v2620, 7
      %v2622 = vsub.s32 0, %v2621
      %v2623 = vrot.slane %v1681, %v2622
      %v2624 = vlaneseq
      %v2625 = vshrl.u32 %v2624, 7
      %v2626 = vsub.s32 0, %v2625
      %v2627 = vrot.slane %v1682, %v2626
      %v2628 = vlaneseq
      %v2629 = vshrl.u32 %v2628, 7
      %v2630 = vsub.s32 0, %v2629
      %v2631 = vrot.slane %v1683, %v2630
      %v2632 = vlaneseq
      %v2633 = vshrl.u32 %v2632, 7
      %v2634 = vsub.s32 0, %v2633
      %v2635 = vrot.slane %v1684, %v2634
      %v2636 = vlaneseq
      %v2637 = vshrl.u32 %v2636, 7
      %v2638 = vsub.s32 0, %v2637
      %v2639 = vrot.slane %v1685, %v2638
      %v2640 = vlaneseq
      %v2641 = vshrl.u32 %v2640, 7
      %v2642 = vsub.s32 0, %v2641
      %v2643 = vrot.slane %v1686, %v2642
      %v2644 = vlaneseq
      %v2645 = vshrl.u32 %v2644, 7
      %v2646 = vsub.s32 0, %v2645
      %v2647 = vrot.slane %v1687, %v2646
      %v2712 = vmul.f32 %v1691, %v2395
      %v2713 = vmul.f32 %v1696, %v2395
      %v2714 = vmul.f32 %v1701, %v2399
      %v2715 = vmul.f32 %v1706, %v2399
      %v2716 = vmul.f32 %v1711, %v2403
      %v2717 = vmul.f32 %v1716, %v2403
      %v2718 = vmul.f32 %v1721, %v2407
      %v2719 = vmul.f32 %v1726, %v2407
      %v2720 = vmul.f32 %v1731, %v2411
      %v2721 = vmul.f32 %v1736, %v2411
      %v2722 = vmul.f32 %v1741, %v2415
      %v2723 = vmul.f32 %v1746, %v2415
      %v2724 = vmul.f32 %v1751, %v2419
      %v2725 = vmul.f32 %v1756, %v2419
      %v2726 = vmul.f32 %v1761, %v2423
      %v2727 = vmul.f32 %v1766, %v2423
      %v2728 = vmul.f32 %v1771, %v2427
      %v2729 = vmul.f32 %v1776, %v2427
      %v2730 = vmul.f32 %v1781, %v2431
      %v2731 = vmul.f32 %v1786, %v2431
      %v2732 = vmul.f32 %v1791, %v2435
      %v2733 = vmul.f32 %v1796, %v2435
      %v2734 = vmul.f32 %v1801, %v2439
      %v2735 = vmul.f32 %v1806, %v2439
      %v2736 = vmul.f32 %v1811, %v2443
      %v2737 = vmul.f32 %v1816, %v2443
      %v2738 = vmul.f32 %v1821, %v2447
      %v2739 = vmul.f32 %v1826, %v2447
      %v2740 = vmul.f32 %v1831, %v2451
      %v2741 = vmul.f32 %v1836, %v2451
      %v2742 = vmul.f32 %v1841, %v2455
      %v2743 = vmul.f32 %v1846, %v2455
      %v2744 = vmul.f32 %v1851, %v2459
      %v2745 = vmul.f32 %v1856, %v2459
      %v2746 = vmul.f32 %v1861, %v2463
      %v2747 = vmul.f32 %v1866, %v2463
      %v2748 = vmul.f32 %v1871, %v2467
      %v2749 = vmul.f32 %v1876, %v2467
      %v2750 = vmul.f32 %v1881, %v2471
      %v2751 = vmul.f32 %v1886, %v2471
      %v2752 = vmul.f32 %v1891, %v2475
      %v2753 = vmul.f32 %v1896, %v2475
      %v2754 = vmul.f32 %v1901, %v2479
      %v2755 = vmul.f32 %v1906, %v2479
      %v2756 = vmul.f32 %v1911, %v2483
      %v2757 = vmul.f32 %v1916, %v2483
      %v2758 = vmul.f32 %v1921, %v2487
      %v2759 = vmul.f32 %v1926, %v2487
      %v2760 = vmul.f32 %v1931, %v2491
      %v2761 = vmul.f32 %v1936, %v2491
      %v2762 = vmul.f32 %v1941, %v2495
      %v2763 = vmul.f32 %v1946, %v2495
      %v2764 = vmul.f32 %v1951, %v2499
      %v2765 = vmul.f32 %v1956, %v2499
      %v2766 = vmul.f32 %v1961, %v2503
      %v2767 = vmul.f32 %v1966, %v2503
      %v2768 = vmul.f32 %v1971, %v2507
      %v2769 = vmul.f32 %v1976, %v2507
      %v2770 = vmul.f32 %v1981, %v2511
      %v2771 = vmul.f32 %v1986, %v2511
      %v2772 = vmul.f32 %v1991, %v2515
      %v2773 = vmul.f32 %v1996, %v2515
      %v2774 = vmul.f32 %v2001, %v2519
      %v2775 = vmul.f32 %v2006, %v2519
      %v2776 = vmul.f32 %v2011, %v2523
      %v2777 = vmul.f32 %v2016, %v2523
      %v2778 = vmul.f32 %v2021, %v2527
      %v2779 = vmul.f32 %v2026, %v2527
      %v2780 = vmul.f32 %v2031, %v2531
      %v2781 = vmul.f32 %v2036, %v2531
      %v2782 = vmul.f32 %v2041, %v2535
      %v2783 = vmul.f32 %v2046, %v2535
      %v2784 = vmul.f32 %v2051, %v2539
      %v2785 = vmul.f32 %v2056, %v2539
      %v2786 = vmul.f32 %v2061, %v2543
      %v2787 = vmul.f32 %v2066, %v2543
      %v2788 = vmul.f32 %v2071, %v2547
      %v2789 = vmul.f32 %v2076, %v2547
      %v2790 = vmul.f32 %v2081, %v2551
      %v2791 = vmul.f32 %v2086, %v2551
      %v2792 = vmul.f32 %v2091, %v2555
      %v2793 = vmul.f32 %v2096, %v2555
      %v2794 = vmul.f32 %v2101, %v2559
      %v2795 = vmul.f32 %v2106, %v2559
      %v2796 = vmul.f32 %v2111, %v2563
      %v2797 = vmul.f32 %v2116, %v2563
      %v2798 = vmul.f32 %v2121, %v2567
      %v2799 = vmul.f32 %v2126, %v2567
      %v2800 = vmul.f32 %v2131, %v2571
      %v2801 = vmul.f32 %v2136, %v2571
      %v2802 = vmul.f32 %v2141, %v2575
      %v2803 = vmul.f32 %v2146, %v2575
      %v2804 = vmul.f32 %v2151, %v2579
      %v2805 = vmul.f32 %v2156, %v2579
      %v2806 = vmul.f32 %v2161, %v2583
      %v2807 = vmul.f32 %v2166, %v2583
      %v2808 = vmul.f32 %v2171, %v2587
      %v2809 = vmul.f32 %v2176, %v2587
      %v2810 = vmul.f32 %v2181, %v2591
      %v2811 = vmul.f32 %v2186, %v2591
      %v2812 = vmul.f32 %v2191, %v2595
      %v2813 = vmul.f32 %v2196, %v2595
      %v2814 = vmul.f32 %v2201, %v2599
      %v2815 = vmul.f32 %v2206, %v2599
      %v2816 = vmul.f32 %v2211, %v2603
      %v2817 = vmul.f32 %v2216, %v2603
      %v2818 = vmul.f32 %v2221, %v2607
      %v2819 = vmul.f32 %v2226, %v2607
      %v2820 = vmul.f32 %v2231, %v2611
      %v2821 = vmul.f32 %v2236, %v2611
      %v2822 = vmul.f32 %v2241, %v2615
      %v2823 = vmul.f32 %v2246, %v2615
      %v2824 = vmul.f32 %v2251, %v2619
      %v2825 = vmul.f32 %v2256, %v2619
      %v2826 = vmul.f32 %v2261, %v2623
      %v2827 = vmul.f32 %v2266, %v2623
      %v2828 = vmul.f32 %v2271, %v2627
      %v2829 = vmul.f32 %v2276, %v2627
      %v2830 = vmul.f32 %v2281, %v2631
      %v2831 = vmul.f32 %v2286, %v2631
      %v2832 = vmul.f32 %v2291, %v2635
      %v2833 = vmul.f32 %v2296, %v2635
      %v2834 = vmul.f32 %v2301, %v2639
      %v2835 = vmul.f32 %v2306, %v2639
      %v2836 = vmul.f32 %v2311, %v2643
      %v2837 = vmul.f32 %v2316, %v2643
      %v2838 = vmul.f32 %v2321, %v2647
      %v2839 = vmul.f32 %v2326, %v2647
      %2840 = vst.msk [vmem:[#allocation3] sm:$0xff] %vm1303, %v2712
      %2841 = vst.msk [vmem:[#allocation3 + $0x8] sm:$0xff] %vm1303, %v2713
      %2842 = vst.msk [vmem:[#allocation3 + $0x10] sm:$0xff] %vm1303, %v2714
      %2843 = vst.msk [vmem:[#allocation3 + $0x18] sm:$0xff] %vm1303, %v2715
      %2844 = vst.msk [vmem:[#allocation3 + $0x20] sm:$0xff] %vm1303, %v2716
      %2845 = vst.msk [vmem:[#allocation3 + $0x28] sm:$0xff] %vm1303, %v2717
      %2846 = vst.msk [vmem:[#allocation3 + $0x30] sm:$0xff] %vm1303, %v2718
      %2847 = vst.msk [vmem:[#allocation3 + $0x38] sm:$0xff] %vm1303, %v2719
      %2848 = vst.msk [vmem:[#allocation3 + $0x40] sm:$0xff] %vm1303, %v2720
      %2849 = vst.msk [vmem:[#allocation3 + $0x48] sm:$0xff] %vm1303, %v2721
      %2850 = vst.msk [vmem:[#allocation3 + $0x50] sm:$0xff] %vm1303, %v2722
      %2851 = vst.msk [vmem:[#allocation3 + $0x58] sm:$0xff] %vm1303, %v2723
      %2852 = vst.msk [vmem:[#allocation3 + $0x60] sm:$0xff] %vm1303, %v2724
      %2853 = vst.msk [vmem:[#allocation3 + $0x68] sm:$0xff] %vm1303, %v2725
      %2854 = vst.msk [vmem:[#allocation3 + $0x70] sm:$0xff] %vm1303, %v2726
      %2855 = vst.msk [vmem:[#allocation3 + $0x78] sm:$0xff] %vm1303, %v2727
      %2856 = vst.msk [vmem:[#allocation3 + $0x80] sm:$0xff] %vm1303, %v2728
      %2857 = vst.msk [vmem:[#allocation3 + $0x88] sm:$0xff] %vm1303, %v2729
      %2858 = vst.msk [vmem:[#allocation3 + $0x90] sm:$0xff] %vm1303, %v2730
      %2859 = vst.msk [vmem:[#allocation3 + $0x98] sm:$0xff] %vm1303, %v2731
      %2860 = vst.msk [vmem:[#allocation3 + $0xa0] sm:$0xff] %vm1303, %v2732
      %2861 = vst.msk [vmem:[#allocation3 + $0xa8] sm:$0xff] %vm1303, %v2733
      %2862 = vst.msk [vmem:[#allocation3 + $0xb0] sm:$0xff] %vm1303, %v2734
      %2863 = vst.msk [vmem:[#allocation3 + $0xb8] sm:$0xff] %vm1303, %v2735
      %2864 = vst.msk [vmem:[#allocation3 + $0xc0] sm:$0xff] %vm1303, %v2736
      %2865 = vst.msk [vmem:[#allocation3 + $0xc8] sm:$0xff] %vm1303, %v2737
      %2866 = vst.msk [vmem:[#allocation3 + $0xd0] sm:$0xff] %vm1303, %v2738
      %2867 = vst.msk [vmem:[#allocation3 + $0xd8] sm:$0xff] %vm1303, %v2739
      %2868 = vst.msk [vmem:[#allocation3 + $0xe0] sm:$0xff] %vm1303, %v2740
      %2869 = vst.msk [vmem:[#allocation3 + $0xe8] sm:$0xff] %vm1303, %v2741
      %2870 = vst.msk [vmem:[#allocation3 + $0xf0] sm:$0xff] %vm1303, %v2742
      %2871 = vst.msk [vmem:[#allocation3 + $0xf8] sm:$0xff] %vm1303, %v2743
      %2872 = vst.msk [vmem:[#allocation3 + $0x100] sm:$0xff] %vm1303, %v2744
      %2873 = vst.msk [vmem:[#allocation3 + $0x108] sm:$0xff] %vm1303, %v2745
      %2874 = vst.msk [vmem:[#allocation3 + $0x110] sm:$0xff] %vm1303, %v2746
      %2875 = vst.msk [vmem:[#allocation3 + $0x118] sm:$0xff] %vm1303, %v2747
      %2876 = vst.msk [vmem:[#allocation3 + $0x120] sm:$0xff] %vm1303, %v2748
      %2877 = vst.msk [vmem:[#allocation3 + $0x128] sm:$0xff] %vm1303, %v2749
      %2878 = vst.msk [vmem:[#allocation3 + $0x130] sm:$0xff] %vm1303, %v2750
      %2879 = vst.msk [vmem:[#allocation3 + $0x138] sm:$0xff] %vm1303, %v2751
      %2880 = vst.msk [vmem:[#allocation3 + $0x140] sm:$0xff] %vm1303, %v2752
      %2881 = vst.msk [vmem:[#allocation3 + $0x148] sm:$0xff] %vm1303, %v2753
      %2882 = vst.msk [vmem:[#allocation3 + $0x150] sm:$0xff] %vm1303, %v2754
      %2883 = vst.msk [vmem:[#allocation3 + $0x158] sm:$0xff] %vm1303, %v2755
      %2884 = vst.msk [vmem:[#allocation3 + $0x160] sm:$0xff] %vm1303, %v2756
      %2885 = vst.msk [vmem:[#allocation3 + $0x168] sm:$0xff] %vm1303, %v2757
      %2886 = vst.msk [vmem:[#allocation3 + $0x170] sm:$0xff] %vm1303, %v2758
      %2887 = vst.msk [vmem:[#allocation3 + $0x178] sm:$0xff] %vm1303, %v2759
      %2888 = vst.msk [vmem:[#allocation3 + $0x180] sm:$0xff] %vm1303, %v2760
      %2889 = vst.msk [vmem:[#allocation3 + $0x188] sm:$0xff] %vm1303, %v2761
      %2890 = vst.msk [vmem:[#allocation3 + $0x190] sm:$0xff] %vm1303, %v2762
      %2891 = vst.msk [vmem:[#allocation3 + $0x198] sm:$0xff] %vm1303, %v2763
      %2892 = vst.msk [vmem:[#allocation3 + $0x1a0] sm:$0xff] %vm1303, %v2764
      %2893 = vst.msk [vmem:[#allocation3 + $0x1a8] sm:$0xff] %vm1303, %v2765
      %2894 = vst.msk [vmem:[#allocation3 + $0x1b0] sm:$0xff] %vm1303, %v2766
      %2895 = vst.msk [vmem:[#allocation3 + $0x1b8] sm:$0xff] %vm1303, %v2767
      %2896 = vst.msk [vmem:[#allocation3 + $0x1c0] sm:$0xff] %vm1303, %v2768
      %2897 = vst.msk [vmem:[#allocation3 + $0x1c8] sm:$0xff] %vm1303, %v2769
      %2898 = vst.msk [vmem:[#allocation3 + $0x1d0] sm:$0xff] %vm1303, %v2770
      %2899 = vst.msk [vmem:[#allocation3 + $0x1d8] sm:$0xff] %vm1303, %v2771
      %2900 = vst.msk [vmem:[#allocation3 + $0x1e0] sm:$0xff] %vm1303, %v2772
      %2901 = vst.msk [vmem:[#allocation3 + $0x1e8] sm:$0xff] %vm1303, %v2773
      %2902 = vst.msk [vmem:[#allocation3 + $0x1f0] sm:$0xff] %vm1303, %v2774
      %2903 = vst.msk [vmem:[#allocation3 + $0x1f8] sm:$0xff] %vm1303, %v2775
      %2904 = vst.msk [vmem:[#allocation3 + $0x200] sm:$0xff] %vm1303, %v2776
      %2905 = vst.msk [vmem:[#allocation3 + $0x208] sm:$0xff] %vm1303, %v2777
      %2906 = vst.msk [vmem:[#allocation3 + $0x210] sm:$0xff] %vm1303, %v2778
      %2907 = vst.msk [vmem:[#allocation3 + $0x218] sm:$0xff] %vm1303, %v2779
      %2908 = vst.msk [vmem:[#allocation3 + $0x220] sm:$0xff] %vm1303, %v2780
      %2909 = vst.msk [vmem:[#allocation3 + $0x228] sm:$0xff] %vm1303, %v2781
      %2910 = vst.msk [vmem:[#allocation3 + $0x230] sm:$0xff] %vm1303, %v2782
      %2911 = vst.msk [vmem:[#allocation3 + $0x238] sm:$0xff] %vm1303, %v2783
      %2912 = vst.msk [vmem:[#allocation3 + $0x240] sm:$0xff] %vm1303, %v2784
      %2913 = vst.msk [vmem:[#allocation3 + $0x248] sm:$0xff] %vm1303, %v2785
      %2914 = vst.msk [vmem:[#allocation3 + $0x250] sm:$0xff] %vm1303, %v2786
      %2915 = vst.msk [vmem:[#allocation3 + $0x258] sm:$0xff] %vm1303, %v2787
      %2916 = vst.msk [vmem:[#allocation3 + $0x260] sm:$0xff] %vm1303, %v2788
      %2917 = vst.msk [vmem:[#allocation3 + $0x268] sm:$0xff] %vm1303, %v2789
      %2918 = vst.msk [vmem:[#allocation3 + $0x270] sm:$0xff] %vm1303, %v2790
      %2919 = vst.msk [vmem:[#allocation3 + $0x278] sm:$0xff] %vm1303, %v2791
      %2920 = vst.msk [vmem:[#allocation3 + $0x280] sm:$0xff] %vm1303, %v2792
      %2921 = vst.msk [vmem:[#allocation3 + $0x288] sm:$0xff] %vm1303, %v2793
      %2922 = vst.msk [vmem:[#allocation3 + $0x290] sm:$0xff] %vm1303, %v2794
      %2923 = vst.msk [vmem:[#allocation3 + $0x298] sm:$0xff] %vm1303, %v2795
      %2924 = vst.msk [vmem:[#allocation3 + $0x2a0] sm:$0xff] %vm1303, %v2796
      %2925 = vst.msk [vmem:[#allocation3 + $0x2a8] sm:$0xff] %vm1303, %v2797
      %2926 = vst.msk [vmem:[#allocation3 + $0x2b0] sm:$0xff] %vm1303, %v2798
      %2927 = vst.msk [vmem:[#allocation3 + $0x2b8] sm:$0xff] %vm1303, %v2799
      %2928 = vst.msk [vmem:[#allocation3 + $0x2c0] sm:$0xff] %vm1303, %v2800
      %2929 = vst.msk [vmem:[#allocation3 + $0x2c8] sm:$0xff] %vm1303, %v2801
      %2930 = vst.msk [vmem:[#allocation3 + $0x2d0] sm:$0xff] %vm1303, %v2802
      %2931 = vst.msk [vmem:[#allocation3 + $0x2d8] sm:$0xff] %vm1303, %v2803
      %2932 = vst.msk [vmem:[#allocation3 + $0x2e0] sm:$0xff] %vm1303, %v2804
      %2933 = vst.msk [vmem:[#allocation3 + $0x2e8] sm:$0xff] %vm1303, %v2805
      %2934 = vst.msk [vmem:[#allocation3 + $0x2f0] sm:$0xff] %vm1303, %v2806
      %2935 = vst.msk [vmem:[#allocation3 + $0x2f8] sm:$0xff] %vm1303, %v2807
      %2936 = vst.msk [vmem:[#allocation3 + $0x300] sm:$0xff] %vm1303, %v2808
      %2937 = vst.msk [vmem:[#allocation3 + $0x308] sm:$0xff] %vm1303, %v2809
      %2938 = vst.msk [vmem:[#allocation3 + $0x310] sm:$0xff] %vm1303, %v2810
      %2939 = vst.msk [vmem:[#allocation3 + $0x318] sm:$0xff] %vm1303, %v2811
      %2940 = vst.msk [vmem:[#allocation3 + $0x320] sm:$0xff] %vm1303, %v2812
      %2941 = vst.msk [vmem:[#allocation3 + $0x328] sm:$0xff] %vm1303, %v2813
      %2942 = vst.msk [vmem:[#allocation3 + $0x330] sm:$0xff] %vm1303, %v2814
      %2943 = vst.msk [vmem:[#allocation3 + $0x338] sm:$0xff] %vm1303, %v2815
      %2944 = vst.msk [vmem:[#allocation3 + $0x340] sm:$0xff] %vm1303, %v2816
      %2945 = vst.msk [vmem:[#allocation3 + $0x348] sm:$0xff] %vm1303, %v2817
      %2946 = vst.msk [vmem:[#allocation3 + $0x350] sm:$0xff] %vm1303, %v2818
      %2947 = vst.msk [vmem:[#allocation3 + $0x358] sm:$0xff] %vm1303, %v2819
      %2948 = vst.msk [vmem:[#allocation3 + $0x360] sm:$0xff] %vm1303, %v2820
      %2949 = vst.msk [vmem:[#allocation3 + $0x368] sm:$0xff] %vm1303, %v2821
      %2950 = vst.msk [vmem:[#allocation3 + $0x370] sm:$0xff] %vm1303, %v2822
      %2951 = vst.msk [vmem:[#allocation3 + $0x378] sm:$0xff] %vm1303, %v2823
      %2952 = vst.msk [vmem:[#allocation3 + $0x380] sm:$0xff] %vm1303, %v2824
      %2953 = vst.msk [vmem:[#allocation3 + $0x388] sm:$0xff] %vm1303, %v2825
      %2954 = vst.msk [vmem:[#allocation3 + $0x390] sm:$0xff] %vm1303, %v2826
      %2955 = vst.msk [vmem:[#allocation3 + $0x398] sm:$0xff] %vm1303, %v2827
      %2956 = vst.msk [vmem:[#allocation3 + $0x3a0] sm:$0xff] %vm1303, %v2828
      %2957 = vst.msk [vmem:[#allocation3 + $0x3a8] sm:$0xff] %vm1303, %v2829
      %2958 = vst.msk [vmem:[#allocation3 + $0x3b0] sm:$0xff] %vm1303, %v2830
      %2959 = vst.msk [vmem:[#allocation3 + $0x3b8] sm:$0xff] %vm1303, %v2831
      %2960 = vst.msk [vmem:[#allocation3 + $0x3c0] sm:$0xff] %vm1303, %v2832
      %2961 = vst.msk [vmem:[#allocation3 + $0x3c8] sm:$0xff] %vm1303, %v2833
      %2962 = vst.msk [vmem:[#allocation3 + $0x3d0] sm:$0xff] %vm1303, %v2834
      %2963 = vst.msk [vmem:[#allocation3 + $0x3d8] sm:$0xff] %vm1303, %v2835
      %2964 = vst.msk [vmem:[#allocation3 + $0x3e0] sm:$0xff] %vm1303, %v2836
      %2965 = vst.msk [vmem:[#allocation3 + $0x3e8] sm:$0xff] %vm1303, %v2837
      %2966 = vst.msk [vmem:[#allocation3 + $0x3f0] sm:$0xff] %vm1303, %v2838
      %2967 = vst.msk [vmem:[#allocation3 + $0x3f8] sm:$0xff] %vm1303, %v2839
      %v2968 = vld [vmem:[%s450] sm:$0xff]
      %v2969 = vld [vmem:[%s450 + $0x8] sm:$0xff]
      %v2970 = vld [vmem:[%s450 + $0x10] sm:$0xff]
      %v2971 = vld [vmem:[%s450 + $0x18] sm:$0xff]
      %v2972 = vld [vmem:[%s450 + $0x20] sm:$0xff]
      %v2973 = vld [vmem:[%s450 + $0x28] sm:$0xff]
      %v2974 = vld [vmem:[%s450 + $0x30] sm:$0xff]
      %v2975 = vld [vmem:[%s450 + $0x38] sm:$0xff]
      %v2976 = vld [vmem:[%s450 + $0x40] sm:$0xff]
      %v2977 = vld [vmem:[%s450 + $0x48] sm:$0xff]
      %v2978 = vld [vmem:[%s450 + $0x50] sm:$0xff]
      %v2979 = vld [vmem:[%s450 + $0x58] sm:$0xff]
      %v2980 = vld [vmem:[%s450 + $0x60] sm:$0xff]
      %v2981 = vld [vmem:[%s450 + $0x68] sm:$0xff]
      %v2982 = vld [vmem:[%s450 + $0x70] sm:$0xff]
      %v2983 = vld [vmem:[%s450 + $0x78] sm:$0xff]
      %v2984 = vld [vmem:[%s450 + $0x80] sm:$0xff]
      %v2985 = vld [vmem:[%s450 + $0x88] sm:$0xff]
      %v2986 = vld [vmem:[%s450 + $0x90] sm:$0xff]
      %v2987 = vld [vmem:[%s450 + $0x98] sm:$0xff]
      %v2988 = vld [vmem:[%s450 + $0xa0] sm:$0xff]
      %v2989 = vld [vmem:[%s450 + $0xa8] sm:$0xff]
      %v2990 = vld [vmem:[%s450 + $0xb0] sm:$0xff]
      %v2991 = vld [vmem:[%s450 + $0xb8] sm:$0xff]
      %v2992 = vld [vmem:[%s450 + $0xc0] sm:$0xff]
      %v2993 = vld [vmem:[%s450 + $0xc8] sm:$0xff]
      %v2994 = vld [vmem:[%s450 + $0xd0] sm:$0xff]
      %v2995 = vld [vmem:[%s450 + $0xd8] sm:$0xff]
      %v2996 = vld [vmem:[%s450 + $0xe0] sm:$0xff]
      %v2997 = vld [vmem:[%s450 + $0xe8] sm:$0xff]
      %v2998 = vld [vmem:[%s450 + $0xf0] sm:$0xff]
      %v2999 = vld [vmem:[%s450 + $0xf8] sm:$0xff]
      %v3000 = vld [vmem:[%s450 + $0x100] sm:$0xff]
      %v3001 = vld [vmem:[%s450 + $0x108] sm:$0xff]
      %v3002 = vld [vmem:[%s450 + $0x110] sm:$0xff]
      %v3003 = vld [vmem:[%s450 + $0x118] sm:$0xff]
      %v3004 = vld [vmem:[%s450 + $0x120] sm:$0xff]
      %v3005 = vld [vmem:[%s450 + $0x128] sm:$0xff]
      %v3006 = vld [vmem:[%s450 + $0x130] sm:$0xff]
      %v3007 = vld [vmem:[%s450 + $0x138] sm:$0xff]
      %v3008 = vld [vmem:[%s450 + $0x140] sm:$0xff]
      %v3009 = vld [vmem:[%s450 + $0x148] sm:$0xff]
      %v3010 = vld [vmem:[%s450 + $0x150] sm:$0xff]
      %v3011 = vld [vmem:[%s450 + $0x158] sm:$0xff]
      %v3012 = vld [vmem:[%s450 + $0x160] sm:$0xff]
      %v3013 = vld [vmem:[%s450 + $0x168] sm:$0xff]
      %v3014 = vld [vmem:[%s450 + $0x170] sm:$0xff]
      %v3015 = vld [vmem:[%s450 + $0x178] sm:$0xff]
      %v3016 = vld [vmem:[%s450 + $0x180] sm:$0xff]
      %v3017 = vld [vmem:[%s450 + $0x188] sm:$0xff]
      %v3018 = vld [vmem:[%s450 + $0x190] sm:$0xff]
      %v3019 = vld [vmem:[%s450 + $0x198] sm:$0xff]
      %v3020 = vld [vmem:[%s450 + $0x1a0] sm:$0xff]
      %v3021 = vld [vmem:[%s450 + $0x1a8] sm:$0xff]
      %v3022 = vld [vmem:[%s450 + $0x1b0] sm:$0xff]
      %v3023 = vld [vmem:[%s450 + $0x1b8] sm:$0xff]
      %v3024 = vld [vmem:[%s450 + $0x1c0] sm:$0xff]
      %v3025 = vld [vmem:[%s450 + $0x1c8] sm:$0xff]
      %v3026 = vld [vmem:[%s450 + $0x1d0] sm:$0xff]
      %v3027 = vld [vmem:[%s450 + $0x1d8] sm:$0xff]
      %v3028 = vld [vmem:[%s450 + $0x1e0] sm:$0xff]
      %v3029 = vld [vmem:[%s450 + $0x1e8] sm:$0xff]
      %v3030 = vld [vmem:[%s450 + $0x1f0] sm:$0xff]
      %v3031 = vld [vmem:[%s450 + $0x1f8] sm:$0xff]
      %v3032 = vld [vmem:[%s450 + $0x200] sm:$0xff]
      %v3033 = vld [vmem:[%s450 + $0x208] sm:$0xff]
      %v3034 = vld [vmem:[%s450 + $0x210] sm:$0xff]
      %v3035 = vld [vmem:[%s450 + $0x218] sm:$0xff]
      %v3036 = vld [vmem:[%s450 + $0x220] sm:$0xff]
      %v3037 = vld [vmem:[%s450 + $0x228] sm:$0xff]
      %v3038 = vld [vmem:[%s450 + $0x230] sm:$0xff]
      %v3039 = vld [vmem:[%s450 + $0x238] sm:$0xff]
      %v3040 = vld [vmem:[%s450 + $0x240] sm:$0xff]
      %v3041 = vld [vmem:[%s450 + $0x248] sm:$0xff]
      %v3042 = vld [vmem:[%s450 + $0x250] sm:$0xff]
      %v3043 = vld [vmem:[%s450 + $0x258] sm:$0xff]
      %v3044 = vld [vmem:[%s450 + $0x260] sm:$0xff]
      %v3045 = vld [vmem:[%s450 + $0x268] sm:$0xff]
      %v3046 = vld [vmem:[%s450 + $0x270] sm:$0xff]
      %v3047 = vld [vmem:[%s450 + $0x278] sm:$0xff]
      %v3048 = vld [vmem:[%s450 + $0x280] sm:$0xff]
      %v3049 = vld [vmem:[%s450 + $0x288] sm:$0xff]
      %v3050 = vld [vmem:[%s450 + $0x290] sm:$0xff]
      %v3051 = vld [vmem:[%s450 + $0x298] sm:$0xff]
      %v3052 = vld [vmem:[%s450 + $0x2a0] sm:$0xff]
      %v3053 = vld [vmem:[%s450 + $0x2a8] sm:$0xff]
      %v3054 = vld [vmem:[%s450 + $0x2b0] sm:$0xff]
      %v3055 = vld [vmem:[%s450 + $0x2b8] sm:$0xff]
      %v3056 = vld [vmem:[%s450 + $0x2c0] sm:$0xff]
      %v3057 = vld [vmem:[%s450 + $0x2c8] sm:$0xff]
      %v3058 = vld [vmem:[%s450 + $0x2d0] sm:$0xff]
      %v3059 = vld [vmem:[%s450 + $0x2d8] sm:$0xff]
      %v3060 = vld [vmem:[%s450 + $0x2e0] sm:$0xff]
      %v3061 = vld [vmem:[%s450 + $0x2e8] sm:$0xff]
      %v3062 = vld [vmem:[%s450 + $0x2f0] sm:$0xff]
      %v3063 = vld [vmem:[%s450 + $0x2f8] sm:$0xff]
      %v3064 = vld [vmem:[%s450 + $0x300] sm:$0xff]
      %v3065 = vld [vmem:[%s450 + $0x308] sm:$0xff]
      %v3066 = vld [vmem:[%s450 + $0x310] sm:$0xff]
      %v3067 = vld [vmem:[%s450 + $0x318] sm:$0xff]
      %v3068 = vld [vmem:[%s450 + $0x320] sm:$0xff]
      %v3069 = vld [vmem:[%s450 + $0x328] sm:$0xff]
      %v3070 = vld [vmem:[%s450 + $0x330] sm:$0xff]
      %v3071 = vld [vmem:[%s450 + $0x338] sm:$0xff]
      %v3072 = vld [vmem:[%s450 + $0x340] sm:$0xff]
      %v3073 = vld [vmem:[%s450 + $0x348] sm:$0xff]
      %v3074 = vld [vmem:[%s450 + $0x350] sm:$0xff]
      %v3075 = vld [vmem:[%s450 + $0x358] sm:$0xff]
      %v3076 = vld [vmem:[%s450 + $0x360] sm:$0xff]
      %v3077 = vld [vmem:[%s450 + $0x368] sm:$0xff]
      %v3078 = vld [vmem:[%s450 + $0x370] sm:$0xff]
      %v3079 = vld [vmem:[%s450 + $0x378] sm:$0xff]
      %v3080 = vld [vmem:[%s450 + $0x380] sm:$0xff]
      %v3081 = vld [vmem:[%s450 + $0x388] sm:$0xff]
      %v3082 = vld [vmem:[%s450 + $0x390] sm:$0xff]
      %v3083 = vld [vmem:[%s450 + $0x398] sm:$0xff]
      %v3084 = vld [vmem:[%s450 + $0x3a0] sm:$0xff]
      %v3085 = vld [vmem:[%s450 + $0x3a8] sm:$0xff]
      %v3086 = vld [vmem:[%s450 + $0x3b0] sm:$0xff]
      %v3087 = vld [vmem:[%s450 + $0x3b8] sm:$0xff]
      %v3088 = vld [vmem:[%s450 + $0x3c0] sm:$0xff]
      %v3089 = vld [vmem:[%s450 + $0x3c8] sm:$0xff]
      %v3090 = vld [vmem:[%s450 + $0x3d0] sm:$0xff]
      %v3091 = vld [vmem:[%s450 + $0x3d8] sm:$0xff]
      %v3092 = vld [vmem:[%s450 + $0x3e0] sm:$0xff]
      %v3093 = vld [vmem:[%s450 + $0x3e8] sm:$0xff]
      %v3094 = vld [vmem:[%s450 + $0x3f0] sm:$0xff]
      %v3095 = vld [vmem:[%s450 + $0x3f8] sm:$0xff]
      %3097 = vset.pattern.permute.xlu0 0
      %3098 = vperm.xlu0 %3097, %v2968
      %v3099 = vpop.permute.xlu0 %3098
      %3102 = vset.pattern.permute.xlu0 0
      %3103 = vperm.xlu0 %3102, %v2969
      %v3104 = vpop.permute.xlu0 %3103
      %3107 = vset.pattern.permute.xlu0 0
      %3108 = vperm.xlu0 %3107, %v2970
      %v3109 = vpop.permute.xlu0 %3108
      %3112 = vset.pattern.permute.xlu0 0
      %3113 = vperm.xlu0 %3112, %v2971
      %v3114 = vpop.permute.xlu0 %3113
      %3117 = vset.pattern.permute.xlu0 0
      %3118 = vperm.xlu0 %3117, %v2972
      %v3119 = vpop.permute.xlu0 %3118
      %3122 = vset.pattern.permute.xlu0 0
      %3123 = vperm.xlu0 %3122, %v2973
      %v3124 = vpop.permute.xlu0 %3123
      %3127 = vset.pattern.permute.xlu0 0
      %3128 = vperm.xlu0 %3127, %v2974
      %v3129 = vpop.permute.xlu0 %3128
      %3132 = vset.pattern.permute.xlu0 0
      %3133 = vperm.xlu0 %3132, %v2975
      %v3134 = vpop.permute.xlu0 %3133
      %3137 = vset.pattern.permute.xlu0 0
      %3138 = vperm.xlu0 %3137, %v2976
      %v3139 = vpop.permute.xlu0 %3138
      %3142 = vset.pattern.permute.xlu0 0
      %3143 = vperm.xlu0 %3142, %v2977
      %v3144 = vpop.permute.xlu0 %3143
      %3147 = vset.pattern.permute.xlu0 0
      %3148 = vperm.xlu0 %3147, %v2978
      %v3149 = vpop.permute.xlu0 %3148
      %3152 = vset.pattern.permute.xlu0 0
      %3153 = vperm.xlu0 %3152, %v2979
      %v3154 = vpop.permute.xlu0 %3153
      %3157 = vset.pattern.permute.xlu0 0
      %3158 = vperm.xlu0 %3157, %v2980
      %v3159 = vpop.permute.xlu0 %3158
      %3162 = vset.pattern.permute.xlu0 0
      %3163 = vperm.xlu0 %3162, %v2981
      %v3164 = vpop.permute.xlu0 %3163
      %3167 = vset.pattern.permute.xlu0 0
      %3168 = vperm.xlu0 %3167, %v2982
      %v3169 = vpop.permute.xlu0 %3168
      %3172 = vset.pattern.permute.xlu0 0
      %3173 = vperm.xlu0 %3172, %v2983
      %v3174 = vpop.permute.xlu0 %3173
      %3177 = vset.pattern.permute.xlu0 0
      %3178 = vperm.xlu0 %3177, %v2984
      %v3179 = vpop.permute.xlu0 %3178
      %3182 = vset.pattern.permute.xlu0 0
      %3183 = vperm.xlu0 %3182, %v2985
      %v3184 = vpop.permute.xlu0 %3183
      %3187 = vset.pattern.permute.xlu0 0
      %3188 = vperm.xlu0 %3187, %v2986
      %v3189 = vpop.permute.xlu0 %3188
      %3192 = vset.pattern.permute.xlu0 0
      %3193 = vperm.xlu0 %3192, %v2987
      %v3194 = vpop.permute.xlu0 %3193
      %3197 = vset.pattern.permute.xlu0 0
      %3198 = vperm.xlu0 %3197, %v2988
      %v3199 = vpop.permute.xlu0 %3198
      %3202 = vset.pattern.permute.xlu0 0
      %3203 = vperm.xlu0 %3202, %v2989
      %v3204 = vpop.permute.xlu0 %3203
      %3207 = vset.pattern.permute.xlu0 0
      %3208 = vperm.xlu0 %3207, %v2990
      %v3209 = vpop.permute.xlu0 %3208
      %3212 = vset.pattern.permute.xlu0 0
      %3213 = vperm.xlu0 %3212, %v2991
      %v3214 = vpop.permute.xlu0 %3213
      %3217 = vset.pattern.permute.xlu0 0
      %3218 = vperm.xlu0 %3217, %v2992
      %v3219 = vpop.permute.xlu0 %3218
      %3222 = vset.pattern.permute.xlu0 0
      %3223 = vperm.xlu0 %3222, %v2993
      %v3224 = vpop.permute.xlu0 %3223
      %3227 = vset.pattern.permute.xlu0 0
      %3228 = vperm.xlu0 %3227, %v2994
      %v3229 = vpop.permute.xlu0 %3228
      %3232 = vset.pattern.permute.xlu0 0
      %3233 = vperm.xlu0 %3232, %v2995
      %v3234 = vpop.permute.xlu0 %3233
      %3237 = vset.pattern.permute.xlu0 0
      %3238 = vperm.xlu0 %3237, %v2996
      %v3239 = vpop.permute.xlu0 %3238
      %3242 = vset.pattern.permute.xlu0 0
      %3243 = vperm.xlu0 %3242, %v2997
      %v3244 = vpop.permute.xlu0 %3243
      %3247 = vset.pattern.permute.xlu0 0
      %3248 = vperm.xlu0 %3247, %v2998
      %v3249 = vpop.permute.xlu0 %3248
      %3252 = vset.pattern.permute.xlu0 0
      %3253 = vperm.xlu0 %3252, %v2999
      %v3254 = vpop.permute.xlu0 %3253
      %3257 = vset.pattern.permute.xlu0 0
      %3258 = vperm.xlu0 %3257, %v3000
      %v3259 = vpop.permute.xlu0 %3258
      %3262 = vset.pattern.permute.xlu0 0
      %3263 = vperm.xlu0 %3262, %v3001
      %v3264 = vpop.permute.xlu0 %3263
      %3267 = vset.pattern.permute.xlu0 0
      %3268 = vperm.xlu0 %3267, %v3002
      %v3269 = vpop.permute.xlu0 %3268
      %3272 = vset.pattern.permute.xlu0 0
      %3273 = vperm.xlu0 %3272, %v3003
      %v3274 = vpop.permute.xlu0 %3273
      %3277 = vset.pattern.permute.xlu0 0
      %3278 = vperm.xlu0 %3277, %v3004
      %v3279 = vpop.permute.xlu0 %3278
      %3282 = vset.pattern.permute.xlu0 0
      %3283 = vperm.xlu0 %3282, %v3005
      %v3284 = vpop.permute.xlu0 %3283
      %3287 = vset.pattern.permute.xlu0 0
      %3288 = vperm.xlu0 %3287, %v3006
      %v3289 = vpop.permute.xlu0 %3288
      %3292 = vset.pattern.permute.xlu0 0
      %3293 = vperm.xlu0 %3292, %v3007
      %v3294 = vpop.permute.xlu0 %3293
      %3297 = vset.pattern.permute.xlu0 0
      %3298 = vperm.xlu0 %3297, %v3008
      %v3299 = vpop.permute.xlu0 %3298
      %3302 = vset.pattern.permute.xlu0 0
      %3303 = vperm.xlu0 %3302, %v3009
      %v3304 = vpop.permute.xlu0 %3303
      %3307 = vset.pattern.permute.xlu0 0
      %3308 = vperm.xlu0 %3307, %v3010
      %v3309 = vpop.permute.xlu0 %3308
      %3312 = vset.pattern.permute.xlu0 0
      %3313 = vperm.xlu0 %3312, %v3011
      %v3314 = vpop.permute.xlu0 %3313
      %3317 = vset.pattern.permute.xlu0 0
      %3318 = vperm.xlu0 %3317, %v3012
      %v3319 = vpop.permute.xlu0 %3318
      %3322 = vset.pattern.permute.xlu0 0
      %3323 = vperm.xlu0 %3322, %v3013
      %v3324 = vpop.permute.xlu0 %3323
      %3327 = vset.pattern.permute.xlu0 0
      %3328 = vperm.xlu0 %3327, %v3014
      %v3329 = vpop.permute.xlu0 %3328
      %3332 = vset.pattern.permute.xlu0 0
      %3333 = vperm.xlu0 %3332, %v3015
      %v3334 = vpop.permute.xlu0 %3333
      %3337 = vset.pattern.permute.xlu0 0
      %3338 = vperm.xlu0 %3337, %v3016
      %v3339 = vpop.permute.xlu0 %3338
      %3342 = vset.pattern.permute.xlu0 0
      %3343 = vperm.xlu0 %3342, %v3017
      %v3344 = vpop.permute.xlu0 %3343
      %3347 = vset.pattern.permute.xlu0 0
      %3348 = vperm.xlu0 %3347, %v3018
      %v3349 = vpop.permute.xlu0 %3348
      %3352 = vset.pattern.permute.xlu0 0
      %3353 = vperm.xlu0 %3352, %v3019
      %v3354 = vpop.permute.xlu0 %3353
      %3357 = vset.pattern.permute.xlu0 0
      %3358 = vperm.xlu0 %3357, %v3020
      %v3359 = vpop.permute.xlu0 %3358
      %3362 = vset.pattern.permute.xlu0 0
      %3363 = vperm.xlu0 %3362, %v3021
      %v3364 = vpop.permute.xlu0 %3363
      %3367 = vset.pattern.permute.xlu0 0
      %3368 = vperm.xlu0 %3367, %v3022
      %v3369 = vpop.permute.xlu0 %3368
      %3372 = vset.pattern.permute.xlu0 0
      %3373 = vperm.xlu0 %3372, %v3023
      %v3374 = vpop.permute.xlu0 %3373
      %3377 = vset.pattern.permute.xlu0 0
      %3378 = vperm.xlu0 %3377, %v3024
      %v3379 = vpop.permute.xlu0 %3378
      %3382 = vset.pattern.permute.xlu0 0
      %3383 = vperm.xlu0 %3382, %v3025
      %v3384 = vpop.permute.xlu0 %3383
      %3387 = vset.pattern.permute.xlu0 0
      %3388 = vperm.xlu0 %3387, %v3026
      %v3389 = vpop.permute.xlu0 %3388
      %3392 = vset.pattern.permute.xlu0 0
      %3393 = vperm.xlu0 %3392, %v3027
      %v3394 = vpop.permute.xlu0 %3393
      %3397 = vset.pattern.permute.xlu0 0
      %3398 = vperm.xlu0 %3397, %v3028
      %v3399 = vpop.permute.xlu0 %3398
      %3402 = vset.pattern.permute.xlu0 0
      %3403 = vperm.xlu0 %3402, %v3029
      %v3404 = vpop.permute.xlu0 %3403
      %3407 = vset.pattern.permute.xlu0 0
      %3408 = vperm.xlu0 %3407, %v3030
      %v3409 = vpop.permute.xlu0 %3408
      %3412 = vset.pattern.permute.xlu0 0
      %3413 = vperm.xlu0 %3412, %v3031
      %v3414 = vpop.permute.xlu0 %3413
      %3417 = vset.pattern.permute.xlu0 0
      %3418 = vperm.xlu0 %3417, %v3032
      %v3419 = vpop.permute.xlu0 %3418
      %3422 = vset.pattern.permute.xlu0 0
      %3423 = vperm.xlu0 %3422, %v3033
      %v3424 = vpop.permute.xlu0 %3423
      %3427 = vset.pattern.permute.xlu0 0
      %3428 = vperm.xlu0 %3427, %v3034
      %v3429 = vpop.permute.xlu0 %3428
      %3432 = vset.pattern.permute.xlu0 0
      %3433 = vperm.xlu0 %3432, %v3035
      %v3434 = vpop.permute.xlu0 %3433
      %3437 = vset.pattern.permute.xlu0 0
      %3438 = vperm.xlu0 %3437, %v3036
      %v3439 = vpop.permute.xlu0 %3438
      %3442 = vset.pattern.permute.xlu0 0
      %3443 = vperm.xlu0 %3442, %v3037
      %v3444 = vpop.permute.xlu0 %3443
      %3447 = vset.pattern.permute.xlu0 0
      %3448 = vperm.xlu0 %3447, %v3038
      %v3449 = vpop.permute.xlu0 %3448
      %3452 = vset.pattern.permute.xlu0 0
      %3453 = vperm.xlu0 %3452, %v3039
      %v3454 = vpop.permute.xlu0 %3453
      %3457 = vset.pattern.permute.xlu0 0
      %3458 = vperm.xlu0 %3457, %v3040
      %v3459 = vpop.permute.xlu0 %3458
      %3462 = vset.pattern.permute.xlu0 0
      %3463 = vperm.xlu0 %3462, %v3041
      %v3464 = vpop.permute.xlu0 %3463
      %3467 = vset.pattern.permute.xlu0 0
      %3468 = vperm.xlu0 %3467, %v3042
      %v3469 = vpop.permute.xlu0 %3468
      %3472 = vset.pattern.permute.xlu0 0
      %3473 = vperm.xlu0 %3472, %v3043
      %v3474 = vpop.permute.xlu0 %3473
      %3477 = vset.pattern.permute.xlu0 0
      %3478 = vperm.xlu0 %3477, %v3044
      %v3479 = vpop.permute.xlu0 %3478
      %3482 = vset.pattern.permute.xlu0 0
      %3483 = vperm.xlu0 %3482, %v3045
      %v3484 = vpop.permute.xlu0 %3483
      %3487 = vset.pattern.permute.xlu0 0
      %3488 = vperm.xlu0 %3487, %v3046
      %v3489 = vpop.permute.xlu0 %3488
      %3492 = vset.pattern.permute.xlu0 0
      %3493 = vperm.xlu0 %3492, %v3047
      %v3494 = vpop.permute.xlu0 %3493
      %3497 = vset.pattern.permute.xlu0 0
      %3498 = vperm.xlu0 %3497, %v3048
      %v3499 = vpop.permute.xlu0 %3498
      %3502 = vset.pattern.permute.xlu0 0
      %3503 = vperm.xlu0 %3502, %v3049
      %v3504 = vpop.permute.xlu0 %3503
      %3507 = vset.pattern.permute.xlu0 0
      %3508 = vperm.xlu0 %3507, %v3050
      %v3509 = vpop.permute.xlu0 %3508
      %3512 = vset.pattern.permute.xlu0 0
      %3513 = vperm.xlu0 %3512, %v3051
      %v3514 = vpop.permute.xlu0 %3513
      %3517 = vset.pattern.permute.xlu0 0
      %3518 = vperm.xlu0 %3517, %v3052
      %v3519 = vpop.permute.xlu0 %3518
      %3522 = vset.pattern.permute.xlu0 0
      %3523 = vperm.xlu0 %3522, %v3053
      %v3524 = vpop.permute.xlu0 %3523
      %3527 = vset.pattern.permute.xlu0 0
      %3528 = vperm.xlu0 %3527, %v3054
      %v3529 = vpop.permute.xlu0 %3528
      %3532 = vset.pattern.permute.xlu0 0
      %3533 = vperm.xlu0 %3532, %v3055
      %v3534 = vpop.permute.xlu0 %3533
      %3537 = vset.pattern.permute.xlu0 0
      %3538 = vperm.xlu0 %3537, %v3056
      %v3539 = vpop.permute.xlu0 %3538
      %3542 = vset.pattern.permute.xlu0 0
      %3543 = vperm.xlu0 %3542, %v3057
      %v3544 = vpop.permute.xlu0 %3543
      %3547 = vset.pattern.permute.xlu0 0
      %3548 = vperm.xlu0 %3547, %v3058
      %v3549 = vpop.permute.xlu0 %3548
      %3552 = vset.pattern.permute.xlu0 0
      %3553 = vperm.xlu0 %3552, %v3059
      %v3554 = vpop.permute.xlu0 %3553
      %3557 = vset.pattern.permute.xlu0 0
      %3558 = vperm.xlu0 %3557, %v3060
      %v3559 = vpop.permute.xlu0 %3558
      %3562 = vset.pattern.permute.xlu0 0
      %3563 = vperm.xlu0 %3562, %v3061
      %v3564 = vpop.permute.xlu0 %3563
      %3567 = vset.pattern.permute.xlu0 0
      %3568 = vperm.xlu0 %3567, %v3062
      %v3569 = vpop.permute.xlu0 %3568
      %3572 = vset.pattern.permute.xlu0 0
      %3573 = vperm.xlu0 %3572, %v3063
      %v3574 = vpop.permute.xlu0 %3573
      %3577 = vset.pattern.permute.xlu0 0
      %3578 = vperm.xlu0 %3577, %v3064
      %v3579 = vpop.permute.xlu0 %3578
      %3582 = vset.pattern.permute.xlu0 0
      %3583 = vperm.xlu0 %3582, %v3065
      %v3584 = vpop.permute.xlu0 %3583
      %3587 = vset.pattern.permute.xlu0 0
      %3588 = vperm.xlu0 %3587, %v3066
      %v3589 = vpop.permute.xlu0 %3588
      %3592 = vset.pattern.permute.xlu0 0
      %3593 = vperm.xlu0 %3592, %v3067
      %v3594 = vpop.permute.xlu0 %3593
      %3597 = vset.pattern.permute.xlu0 0
      %3598 = vperm.xlu0 %3597, %v3068
      %v3599 = vpop.permute.xlu0 %3598
      %3602 = vset.pattern.permute.xlu0 0
      %3603 = vperm.xlu0 %3602, %v3069
      %v3604 = vpop.permute.xlu0 %3603
      %3607 = vset.pattern.permute.xlu0 0
      %3608 = vperm.xlu0 %3607, %v3070
      %v3609 = vpop.permute.xlu0 %3608
      %3612 = vset.pattern.permute.xlu0 0
      %3613 = vperm.xlu0 %3612, %v3071
      %v3614 = vpop.permute.xlu0 %3613
      %3617 = vset.pattern.permute.xlu0 0
      %3618 = vperm.xlu0 %3617, %v3072
      %v3619 = vpop.permute.xlu0 %3618
      %3622 = vset.pattern.permute.xlu0 0
      %3623 = vperm.xlu0 %3622, %v3073
      %v3624 = vpop.permute.xlu0 %3623
      %3627 = vset.pattern.permute.xlu0 0
      %3628 = vperm.xlu0 %3627, %v3074
      %v3629 = vpop.permute.xlu0 %3628
      %3632 = vset.pattern.permute.xlu0 0
      %3633 = vperm.xlu0 %3632, %v3075
      %v3634 = vpop.permute.xlu0 %3633
      %3637 = vset.pattern.permute.xlu0 0
      %3638 = vperm.xlu0 %3637, %v3076
      %v3639 = vpop.permute.xlu0 %3638
      %3642 = vset.pattern.permute.xlu0 0
      %3643 = vperm.xlu0 %3642, %v3077
      %v3644 = vpop.permute.xlu0 %3643
      %3647 = vset.pattern.permute.xlu0 0
      %3648 = vperm.xlu0 %3647, %v3078
      %v3649 = vpop.permute.xlu0 %3648
      %3652 = vset.pattern.permute.xlu0 0
      %3653 = vperm.xlu0 %3652, %v3079
      %v3654 = vpop.permute.xlu0 %3653
      %3657 = vset.pattern.permute.xlu0 0
      %3658 = vperm.xlu0 %3657, %v3080
      %v3659 = vpop.permute.xlu0 %3658
      %3662 = vset.pattern.permute.xlu0 0
      %3663 = vperm.xlu0 %3662, %v3081
      %v3664 = vpop.permute.xlu0 %3663
      %3667 = vset.pattern.permute.xlu0 0
      %3668 = vperm.xlu0 %3667, %v3082
      %v3669 = vpop.permute.xlu0 %3668
      %3672 = vset.pattern.permute.xlu0 0
      %3673 = vperm.xlu0 %3672, %v3083
      %v3674 = vpop.permute.xlu0 %3673
      %3677 = vset.pattern.permute.xlu0 0
      %3678 = vperm.xlu0 %3677, %v3084
      %v3679 = vpop.permute.xlu0 %3678
      %3682 = vset.pattern.permute.xlu0 0
      %3683 = vperm.xlu0 %3682, %v3085
      %v3684 = vpop.permute.xlu0 %3683
      %3687 = vset.pattern.permute.xlu0 0
      %3688 = vperm.xlu0 %3687, %v3086
      %v3689 = vpop.permute.xlu0 %3688
      %3692 = vset.pattern.permute.xlu0 0
      %3693 = vperm.xlu0 %3692, %v3087
      %v3694 = vpop.permute.xlu0 %3693
      %3697 = vset.pattern.permute.xlu0 0
      %3698 = vperm.xlu0 %3697, %v3088
      %v3699 = vpop.permute.xlu0 %3698
      %3702 = vset.pattern.permute.xlu0 0
      %3703 = vperm.xlu0 %3702, %v3089
      %v3704 = vpop.permute.xlu0 %3703
      %3707 = vset.pattern.permute.xlu0 0
      %3708 = vperm.xlu0 %3707, %v3090
      %v3709 = vpop.permute.xlu0 %3708
      %3712 = vset.pattern.permute.xlu0 0
      %3713 = vperm.xlu0 %3712, %v3091
      %v3714 = vpop.permute.xlu0 %3713
      %3717 = vset.pattern.permute.xlu0 0
      %3718 = vperm.xlu0 %3717, %v3092
      %v3719 = vpop.permute.xlu0 %3718
      %3722 = vset.pattern.permute.xlu0 0
      %3723 = vperm.xlu0 %3722, %v3093
      %v3724 = vpop.permute.xlu0 %3723
      %3727 = vset.pattern.permute.xlu0 0
      %3728 = vperm.xlu0 %3727, %v3094
      %v3729 = vpop.permute.xlu0 %3728
      %3732 = vset.pattern.permute.xlu0 0
      %3733 = vperm.xlu0 %3732, %v3095
      %v3734 = vpop.permute.xlu0 %3733
      %3736 = vst.msk [vmem:[#allocation4] sm:$0xff] %vm1303, %v3099
      %3737 = vst.msk [vmem:[#allocation4 + $0x8] sm:$0xff] %vm1303, %v3104
      %3738 = vst.msk [vmem:[#allocation4 + $0x10] sm:$0xff] %vm1303, %v3109
      %3739 = vst.msk [vmem:[#allocation4 + $0x18] sm:$0xff] %vm1303, %v3114
      %3740 = vst.msk [vmem:[#allocation4 + $0x20] sm:$0xff] %vm1303, %v3119
      %3741 = vst.msk [vmem:[#allocation4 + $0x28] sm:$0xff] %vm1303, %v3124
      %3742 = vst.msk [vmem:[#allocation4 + $0x30] sm:$0xff] %vm1303, %v3129
      %3743 = vst.msk [vmem:[#allocation4 + $0x38] sm:$0xff] %vm1303, %v3134
      %3744 = vst.msk [vmem:[#allocation4 + $0x40] sm:$0xff] %vm1303, %v3139
      %3745 = vst.msk [vmem:[#allocation4 + $0x48] sm:$0xff] %vm1303, %v3144
      %3746 = vst.msk [vmem:[#allocation4 + $0x50] sm:$0xff] %vm1303, %v3149
      %3747 = vst.msk [vmem:[#allocation4 + $0x58] sm:$0xff] %vm1303, %v3154
      %3748 = vst.msk [vmem:[#allocation4 + $0x60] sm:$0xff] %vm1303, %v3159
      %3749 = vst.msk [vmem:[#allocation4 + $0x68] sm:$0xff] %vm1303, %v3164
      %3750 = vst.msk [vmem:[#allocation4 + $0x70] sm:$0xff] %vm1303, %v3169
      %3751 = vst.msk [vmem:[#allocation4 + $0x78] sm:$0xff] %vm1303, %v3174
      %3752 = vst.msk [vmem:[#allocation4 + $0x80] sm:$0xff] %vm1303, %v3179
      %3753 = vst.msk [vmem:[#allocation4 + $0x88] sm:$0xff] %vm1303, %v3184
      %3754 = vst.msk [vmem:[#allocation4 + $0x90] sm:$0xff] %vm1303, %v3189
      %3755 = vst.msk [vmem:[#allocation4 + $0x98] sm:$0xff] %vm1303, %v3194
      %3756 = vst.msk [vmem:[#allocation4 + $0xa0] sm:$0xff] %vm1303, %v3199
      %3757 = vst.msk [vmem:[#allocation4 + $0xa8] sm:$0xff] %vm1303, %v3204
      %3758 = vst.msk [vmem:[#allocation4 + $0xb0] sm:$0xff] %vm1303, %v3209
      %3759 = vst.msk [vmem:[#allocation4 + $0xb8] sm:$0xff] %vm1303, %v3214
      %3760 = vst.msk [vmem:[#allocation4 + $0xc0] sm:$0xff] %vm1303, %v3219
      %3761 = vst.msk [vmem:[#allocation4 + $0xc8] sm:$0xff] %vm1303, %v3224
      %3762 = vst.msk [vmem:[#allocation4 + $0xd0] sm:$0xff] %vm1303, %v3229
      %3763 = vst.msk [vmem:[#allocation4 + $0xd8] sm:$0xff] %vm1303, %v3234
      %3764 = vst.msk [vmem:[#allocation4 + $0xe0] sm:$0xff] %vm1303, %v3239
      %3765 = vst.msk [vmem:[#allocation4 + $0xe8] sm:$0xff] %vm1303, %v3244
      %3766 = vst.msk [vmem:[#allocation4 + $0xf0] sm:$0xff] %vm1303, %v3249
      %3767 = vst.msk [vmem:[#allocation4 + $0xf8] sm:$0xff] %vm1303, %v3254
      %3768 = vst.msk [vmem:[#allocation4 + $0x100] sm:$0xff] %vm1303, %v3259
      %3769 = vst.msk [vmem:[#allocation4 + $0x108] sm:$0xff] %vm1303, %v3264
      %3770 = vst.msk [vmem:[#allocation4 + $0x110] sm:$0xff] %vm1303, %v3269
      %3771 = vst.msk [vmem:[#allocation4 + $0x118] sm:$0xff] %vm1303, %v3274
      %3772 = vst.msk [vmem:[#allocation4 + $0x120] sm:$0xff] %vm1303, %v3279
      %3773 = vst.msk [vmem:[#allocation4 + $0x128] sm:$0xff] %vm1303, %v3284
      %3774 = vst.msk [vmem:[#allocation4 + $0x130] sm:$0xff] %vm1303, %v3289
      %3775 = vst.msk [vmem:[#allocation4 + $0x138] sm:$0xff] %vm1303, %v3294
      %3776 = vst.msk [vmem:[#allocation4 + $0x140] sm:$0xff] %vm1303, %v3299
      %3777 = vst.msk [vmem:[#allocation4 + $0x148] sm:$0xff] %vm1303, %v3304
      %3778 = vst.msk [vmem:[#allocation4 + $0x150] sm:$0xff] %vm1303, %v3309
      %3779 = vst.msk [vmem:[#allocation4 + $0x158] sm:$0xff] %vm1303, %v3314
      %3780 = vst.msk [vmem:[#allocation4 + $0x160] sm:$0xff] %vm1303, %v3319
      %3781 = vst.msk [vmem:[#allocation4 + $0x168] sm:$0xff] %vm1303, %v3324
      %3782 = vst.msk [vmem:[#allocation4 + $0x170] sm:$0xff] %vm1303, %v3329
      %3783 = vst.msk [vmem:[#allocation4 + $0x178] sm:$0xff] %vm1303, %v3334
      %3784 = vst.msk [vmem:[#allocation4 + $0x180] sm:$0xff] %vm1303, %v3339
      %3785 = vst.msk [vmem:[#allocation4 + $0x188] sm:$0xff] %vm1303, %v3344
      %3786 = vst.msk [vmem:[#allocation4 + $0x190] sm:$0xff] %vm1303, %v3349
      %3787 = vst.msk [vmem:[#allocation4 + $0x198] sm:$0xff] %vm1303, %v3354
      %3788 = vst.msk [vmem:[#allocation4 + $0x1a0] sm:$0xff] %vm1303, %v3359
      %3789 = vst.msk [vmem:[#allocation4 + $0x1a8] sm:$0xff] %vm1303, %v3364
      %3790 = vst.msk [vmem:[#allocation4 + $0x1b0] sm:$0xff] %vm1303, %v3369
      %3791 = vst.msk [vmem:[#allocation4 + $0x1b8] sm:$0xff] %vm1303, %v3374
      %3792 = vst.msk [vmem:[#allocation4 + $0x1c0] sm:$0xff] %vm1303, %v3379
      %3793 = vst.msk [vmem:[#allocation4 + $0x1c8] sm:$0xff] %vm1303, %v3384
      %3794 = vst.msk [vmem:[#allocation4 + $0x1d0] sm:$0xff] %vm1303, %v3389
      %3795 = vst.msk [vmem:[#allocation4 + $0x1d8] sm:$0xff] %vm1303, %v3394
      %3796 = vst.msk [vmem:[#allocation4 + $0x1e0] sm:$0xff] %vm1303, %v3399
      %3797 = vst.msk [vmem:[#allocation4 + $0x1e8] sm:$0xff] %vm1303, %v3404
      %3798 = vst.msk [vmem:[#allocation4 + $0x1f0] sm:$0xff] %vm1303, %v3409
      %3799 = vst.msk [vmem:[#allocation4 + $0x1f8] sm:$0xff] %vm1303, %v3414
      %3800 = vst.msk [vmem:[#allocation4 + $0x200] sm:$0xff] %vm1303, %v3419
      %3801 = vst.msk [vmem:[#allocation4 + $0x208] sm:$0xff] %vm1303, %v3424
      %3802 = vst.msk [vmem:[#allocation4 + $0x210] sm:$0xff] %vm1303, %v3429
      %3803 = vst.msk [vmem:[#allocation4 + $0x218] sm:$0xff] %vm1303, %v3434
      %3804 = vst.msk [vmem:[#allocation4 + $0x220] sm:$0xff] %vm1303, %v3439
      %3805 = vst.msk [vmem:[#allocation4 + $0x228] sm:$0xff] %vm1303, %v3444
      %3806 = vst.msk [vmem:[#allocation4 + $0x230] sm:$0xff] %vm1303, %v3449
      %3807 = vst.msk [vmem:[#allocation4 + $0x238] sm:$0xff] %vm1303, %v3454
      %3808 = vst.msk [vmem:[#allocation4 + $0x240] sm:$0xff] %vm1303, %v3459
      %3809 = vst.msk [vmem:[#allocation4 + $0x248] sm:$0xff] %vm1303, %v3464
      %3810 = vst.msk [vmem:[#allocation4 + $0x250] sm:$0xff] %vm1303, %v3469
      %3811 = vst.msk [vmem:[#allocation4 + $0x258] sm:$0xff] %vm1303, %v3474
      %3812 = vst.msk [vmem:[#allocation4 + $0x260] sm:$0xff] %vm1303, %v3479
      %3813 = vst.msk [vmem:[#allocation4 + $0x268] sm:$0xff] %vm1303, %v3484
      %3814 = vst.msk [vmem:[#allocation4 + $0x270] sm:$0xff] %vm1303, %v3489
      %3815 = vst.msk [vmem:[#allocation4 + $0x278] sm:$0xff] %vm1303, %v3494
      %3816 = vst.msk [vmem:[#allocation4 + $0x280] sm:$0xff] %vm1303, %v3499
      %3817 = vst.msk [vmem:[#allocation4 + $0x288] sm:$0xff] %vm1303, %v3504
      %3818 = vst.msk [vmem:[#allocation4 + $0x290] sm:$0xff] %vm1303, %v3509
      %3819 = vst.msk [vmem:[#allocation4 + $0x298] sm:$0xff] %vm1303, %v3514
      %3820 = vst.msk [vmem:[#allocation4 + $0x2a0] sm:$0xff] %vm1303, %v3519
      %3821 = vst.msk [vmem:[#allocation4 + $0x2a8] sm:$0xff] %vm1303, %v3524
      %3822 = vst.msk [vmem:[#allocation4 + $0x2b0] sm:$0xff] %vm1303, %v3529
      %3823 = vst.msk [vmem:[#allocation4 + $0x2b8] sm:$0xff] %vm1303, %v3534
      %3824 = vst.msk [vmem:[#allocation4 + $0x2c0] sm:$0xff] %vm1303, %v3539
      %3825 = vst.msk [vmem:[#allocation4 + $0x2c8] sm:$0xff] %vm1303, %v3544
      %3826 = vst.msk [vmem:[#allocation4 + $0x2d0] sm:$0xff] %vm1303, %v3549
      %3827 = vst.msk [vmem:[#allocation4 + $0x2d8] sm:$0xff] %vm1303, %v3554
      %3828 = vst.msk [vmem:[#allocation4 + $0x2e0] sm:$0xff] %vm1303, %v3559
      %3829 = vst.msk [vmem:[#allocation4 + $0x2e8] sm:$0xff] %vm1303, %v3564
      %3830 = vst.msk [vmem:[#allocation4 + $0x2f0] sm:$0xff] %vm1303, %v3569
      %3831 = vst.msk [vmem:[#allocation4 + $0x2f8] sm:$0xff] %vm1303, %v3574
      %3832 = vst.msk [vmem:[#allocation4 + $0x300] sm:$0xff] %vm1303, %v3579
      %3833 = vst.msk [vmem:[#allocation4 + $0x308] sm:$0xff] %vm1303, %v3584
      %3834 = vst.msk [vmem:[#allocation4 + $0x310] sm:$0xff] %vm1303, %v3589
      %3835 = vst.msk [vmem:[#allocation4 + $0x318] sm:$0xff] %vm1303, %v3594
      %3836 = vst.msk [vmem:[#allocation4 + $0x320] sm:$0xff] %vm1303, %v3599
      %3837 = vst.msk [vmem:[#allocation4 + $0x328] sm:$0xff] %vm1303, %v3604
      %3838 = vst.msk [vmem:[#allocation4 + $0x330] sm:$0xff] %vm1303, %v3609
      %3839 = vst.msk [vmem:[#allocation4 + $0x338] sm:$0xff] %vm1303, %v3614
      %3840 = vst.msk [vmem:[#allocation4 + $0x340] sm:$0xff] %vm1303, %v3619
      %3841 = vst.msk [vmem:[#allocation4 + $0x348] sm:$0xff] %vm1303, %v3624
      %3842 = vst.msk [vmem:[#allocation4 + $0x350] sm:$0xff] %vm1303, %v3629
      %3843 = vst.msk [vmem:[#allocation4 + $0x358] sm:$0xff] %vm1303, %v3634
      %3844 = vst.msk [vmem:[#allocation4 + $0x360] sm:$0xff] %vm1303, %v3639
      %3845 = vst.msk [vmem:[#allocation4 + $0x368] sm:$0xff] %vm1303, %v3644
      %3846 = vst.msk [vmem:[#allocation4 + $0x370] sm:$0xff] %vm1303, %v3649
      %3847 = vst.msk [vmem:[#allocation4 + $0x378] sm:$0xff] %vm1303, %v3654
      %3848 = vst.msk [vmem:[#allocation4 + $0x380] sm:$0xff] %vm1303, %v3659
      %3849 = vst.msk [vmem:[#allocation4 + $0x388] sm:$0xff] %vm1303, %v3664
      %3850 = vst.msk [vmem:[#allocation4 + $0x390] sm:$0xff] %vm1303, %v3669
      %3851 = vst.msk [vmem:[#allocation4 + $0x398] sm:$0xff] %vm1303, %v3674
      %3852 = vst.msk [vmem:[#allocation4 + $0x3a0] sm:$0xff] %vm1303, %v3679
      %3853 = vst.msk [vmem:[#allocation4 + $0x3a8] sm:$0xff] %vm1303, %v3684
      %3854 = vst.msk [vmem:[#allocation4 + $0x3b0] sm:$0xff] %vm1303, %v3689
      %3855 = vst.msk [vmem:[#allocation4 + $0x3b8] sm:$0xff] %vm1303, %v3694
      %3856 = vst.msk [vmem:[#allocation4 + $0x3c0] sm:$0xff] %vm1303, %v3699
      %3857 = vst.msk [vmem:[#allocation4 + $0x3c8] sm:$0xff] %vm1303, %v3704
      %3858 = vst.msk [vmem:[#allocation4 + $0x3d0] sm:$0xff] %vm1303, %v3709
      %3859 = vst.msk [vmem:[#allocation4 + $0x3d8] sm:$0xff] %vm1303, %v3714
      %3860 = vst.msk [vmem:[#allocation4 + $0x3e0] sm:$0xff] %vm1303, %v3719
      %3861 = vst.msk [vmem:[#allocation4 + $0x3e8] sm:$0xff] %vm1303, %v3724
      %3862 = vst.msk [vmem:[#allocation4 + $0x3f0] sm:$0xff] %vm1303, %v3729
      %3863 = vst.msk [vmem:[#allocation4 + $0x3f8] sm:$0xff] %vm1303, %v3734
      %v3864 = vld [vmem:[#allocation5] sm:$0xff]
      %v3865 = vld [vmem:[#allocation5 + $0x8] sm:$0xff]
      loop: start=0, step=1, limit=8
      $region53: #{ss2d_k1_forward.8} parent=47 // loop_pre_header
        _
      $region54: #{ss2d_k1_forward.8} parent=47 // loop_header
        %s3867 = sphi 0, %s3871
        %p3868 = scmp.ge.s32.totalorder %s3867, 8
        %v3872 = vphi %v3864, %v4066
        %v3873 = vphi %v3865, %v4067
      $region55: #{ss2d_k1_forward.8} parent=47 // loop_header_branch
        %3870 = sbr.rel (%p3868) target = $region59
      $region56: #{ss2d_k1_forward.8} parent=47 // loop_body
        %s3874 = smul.u32 %s3867, 8
        %s3875 = smul.u32 %s3874, 16
        %s3876 = scalar_lea.vmem [#allocation2], %s3875
        %v3877 = vld [vmem:[%s3876] sm:$0xff]
        %v3878 = vld [vmem:[%s3876 + $0x8] sm:$0xff]
        %v3879 = vmul.f32 %v3877, %v3872
        %v3880 = vmul.f32 %v3878, %v3873
        %s3881 = scalar_lea.vmem [#allocation3], %s3875
        %v3882 = vld [vmem:[%s3881] sm:$0xff]
        %v3883 = vld [vmem:[%s3881 + $0x8] sm:$0xff]
        %v3884 = vadd.f32 %v3879, %v3882
        %v3885 = vadd.f32 %v3880, %v3883
        %s3886 = scalar_lea.vmem [#allocation4], %s3875
        %v3887 = vld [vmem:[%s3886] sm:$0xff]
        %v3888 = vld [vmem:[%s3886 + $0x8] sm:$0xff]
        %v3889 = vmul.f32 %v3887, %v3884
        %v3890 = vmul.f32 %v3888, %v3885
        %v3891 = vsel %vm1303, %v3889, 0.0
        %v3892 = vsel %vm1303, %v3890, 0.0
        %v3893 = vadd.f32 %v3891, %v3892
        %v3894 = vrot.slane %v3893, 4
        %v3895 = vadd.f32 %v3893, %v3894
        %v3896 = vrot.slane %v3895, 2
        %v3897 = vadd.f32 %v3895, %v3896
        %v3898 = vrot.slane %v3897, 1
        %v3899 = vadd.f32 %v3897, %v3898
        %s3900 = sadd.s32 %s3874, 1
        %s3901 = smul.u32 %s3900, 16
        %s3902 = scalar_lea.vmem [#allocation2], %s3901
        %v3903 = vld [vmem:[%s3902] sm:$0xff]
        %v3904 = vld [vmem:[%s3902 + $0x8] sm:$0xff]
        %v3905 = vmul.f32 %v3903, %v3884
        %v3906 = vmul.f32 %v3904, %v3885
        %s3907 = scalar_lea.vmem [#allocation3], %s3901
        %v3908 = vld [vmem:[%s3907] sm:$0xff]
        %v3909 = vld [vmem:[%s3907 + $0x8] sm:$0xff]
        %v3910 = vadd.f32 %v3905, %v3908
        %v3911 = vadd.f32 %v3906, %v3909
        %s3912 = scalar_lea.vmem [#allocation4], %s3901
        %v3913 = vld [vmem:[%s3912] sm:$0xff]
        %v3914 = vld [vmem:[%s3912 + $0x8] sm:$0xff]
        %v3915 = vmul.f32 %v3913, %v3910
        %v3916 = vmul.f32 %v3914, %v3911
        %v3917 = vsel %vm1303, %v3915, 0.0
        %v3918 = vsel %vm1303, %v3916, 0.0
        %v3919 = vadd.f32 %v3917, %v3918
        %v3920 = vrot.slane %v3919, 4
        %v3921 = vadd.f32 %v3919, %v3920
        %v3922 = vrot.slane %v3921, 2
        %v3923 = vadd.f32 %v3921, %v3922
        %v3924 = vrot.slane %v3923, 1
        %v3925 = vadd.f32 %v3923, %v3924
        %s3926 = sadd.s32 %s3874, 2
        %s3927 = smul.u32 %s3926, 16
        %s3928 = scalar_lea.vmem [#allocation2], %s3927
        %v3929 = vld [vmem:[%s3928] sm:$0xff]
        %v3930 = vld [vmem:[%s3928 + $0x8] sm:$0xff]
        %v3931 = vmul.f32 %v3929, %v3910
        %v3932 = vmul.f32 %v3930, %v3911
        %s3933 = scalar_lea.vmem [#allocation3], %s3927
        %v3934 = vld [vmem:[%s3933] sm:$0xff]
        %v3935 = vld [vmem:[%s3933 + $0x8] sm:$0xff]
        %v3936 = vadd.f32 %v3931, %v3934
        %v3937 = vadd.f32 %v3932, %v3935
        %s3938 = scalar_lea.vmem [#allocation4], %s3927
        %v3939 = vld [vmem:[%s3938] sm:$0xff]
        %v3940 = vld [vmem:[%s3938 + $0x8] sm:$0xff]
        %v3941 = vmul.f32 %v3939, %v3936
        %v3942 = vmul.f32 %v3940, %v3937
        %v3943 = vsel %vm1303, %v3941, 0.0
        %v3944 = vsel %vm1303, %v3942, 0.0
        %v3945 = vadd.f32 %v3943, %v3944
        %v3946 = vrot.slane %v3945, 4
        %v3947 = vadd.f32 %v3945, %v3946
        %v3948 = vrot.slane %v3947, 2
        %v3949 = vadd.f32 %v3947, %v3948
        %v3950 = vrot.slane %v3949, 1
        %v3951 = vadd.f32 %v3949, %v3950
        %s3952 = sadd.s32 %s3874, 3
        %s3953 = smul.u32 %s3952, 16
        %s3954 = scalar_lea.vmem [#allocation2], %s3953
        %v3955 = vld [vmem:[%s3954] sm:$0xff]
        %v3956 = vld [vmem:[%s3954 + $0x8] sm:$0xff]
        %v3957 = vmul.f32 %v3955, %v3936
        %v3958 = vmul.f32 %v3956, %v3937
        %s3959 = scalar_lea.vmem [#allocation3], %s3953
        %v3960 = vld [vmem:[%s3959] sm:$0xff]
        %v3961 = vld [vmem:[%s3959 + $0x8] sm:$0xff]
        %v3962 = vadd.f32 %v3957, %v3960
        %v3963 = vadd.f32 %v3958, %v3961
        %s3964 = scalar_lea.vmem [#allocation4], %s3953
        %v3965 = vld [vmem:[%s3964] sm:$0xff]
        %v3966 = vld [vmem:[%s3964 + $0x8] sm:$0xff]
        %v3967 = vmul.f32 %v3965, %v3962
        %v3968 = vmul.f32 %v3966, %v3963
        %v3969 = vsel %vm1303, %v3967, 0.0
        %v3970 = vsel %vm1303, %v3968, 0.0
        %v3971 = vadd.f32 %v3969, %v3970
        %v3972 = vrot.slane %v3971, 4
        %v3973 = vadd.f32 %v3971, %v3972
        %v3974 = vrot.slane %v3973, 2
        %v3975 = vadd.f32 %v3973, %v3974
        %v3976 = vrot.slane %v3975, 1
        %v3977 = vadd.f32 %v3975, %v3976
        %s3978 = sadd.s32 %s3874, 4
        %s3979 = smul.u32 %s3978, 16
        %s3980 = scalar_lea.vmem [#allocation2], %s3979
        %v3981 = vld [vmem:[%s3980] sm:$0xff]
        %v3982 = vld [vmem:[%s3980 + $0x8] sm:$0xff]
        %v3983 = vmul.f32 %v3981, %v3962
        %v3984 = vmul.f32 %v3982, %v3963
        %s3985 = scalar_lea.vmem [#allocation3], %s3979
        %v3986 = vld [vmem:[%s3985] sm:$0xff]
        %v3987 = vld [vmem:[%s3985 + $0x8] sm:$0xff]
        %v3988 = vadd.f32 %v3983, %v3986
        %v3989 = vadd.f32 %v3984, %v3987
        %s3990 = scalar_lea.vmem [#allocation4], %s3979
        %v3991 = vld [vmem:[%s3990] sm:$0xff]
        %v3992 = vld [vmem:[%s3990 + $0x8] sm:$0xff]
        %v3993 = vmul.f32 %v3991, %v3988
        %v3994 = vmul.f32 %v3992, %v3989
        %v3995 = vsel %vm1303, %v3993, 0.0
        %v3996 = vsel %vm1303, %v3994, 0.0
        %v3997 = vadd.f32 %v3995, %v3996
        %v3998 = vrot.slane %v3997, 4
        %v3999 = vadd.f32 %v3997, %v3998
        %v4000 = vrot.slane %v3999, 2
        %v4001 = vadd.f32 %v3999, %v4000
        %v4002 = vrot.slane %v4001, 1
        %v4003 = vadd.f32 %v4001, %v4002
        %s4004 = sadd.s32 %s3874, 5
        %s4005 = smul.u32 %s4004, 16
        %s4006 = scalar_lea.vmem [#allocation2], %s4005
        %v4007 = vld [vmem:[%s4006] sm:$0xff]
        %v4008 = vld [vmem:[%s4006 + $0x8] sm:$0xff]
        %v4009 = vmul.f32 %v4007, %v3988
        %v4010 = vmul.f32 %v4008, %v3989
        %s4011 = scalar_lea.vmem [#allocation3], %s4005
        %v4012 = vld [vmem:[%s4011] sm:$0xff]
        %v4013 = vld [vmem:[%s4011 + $0x8] sm:$0xff]
        %v4014 = vadd.f32 %v4009, %v4012
        %v4015 = vadd.f32 %v4010, %v4013
        %s4016 = scalar_lea.vmem [#allocation4], %s4005
        %v4017 = vld [vmem:[%s4016] sm:$0xff]
        %v4018 = vld [vmem:[%s4016 + $0x8] sm:$0xff]
        %v4019 = vmul.f32 %v4017, %v4014
        %v4020 = vmul.f32 %v4018, %v4015
        %v4021 = vsel %vm1303, %v4019, 0.0
        %v4022 = vsel %vm1303, %v4020, 0.0
        %v4023 = vadd.f32 %v4021, %v4022
        %v4024 = vrot.slane %v4023, 4
        %v4025 = vadd.f32 %v4023, %v4024
        %v4026 = vrot.slane %v4025, 2
        %v4027 = vadd.f32 %v4025, %v4026
        %v4028 = vrot.slane %v4027, 1
        %v4029 = vadd.f32 %v4027, %v4028
        %s4030 = sadd.s32 %s3874, 6
        %s4031 = smul.u32 %s4030, 16
        %s4032 = scalar_lea.vmem [#allocation2], %s4031
        %v4033 = vld [vmem:[%s4032] sm:$0xff]
        %v4034 = vld [vmem:[%s4032 + $0x8] sm:$0xff]
        %v4035 = vmul.f32 %v4033, %v4014
        %v4036 = vmul.f32 %v4034, %v4015
        %s4037 = scalar_lea.vmem [#allocation3], %s4031
        %v4038 = vld [vmem:[%s4037] sm:$0xff]
        %v4039 = vld [vmem:[%s4037 + $0x8] sm:$0xff]
        %v4040 = vadd.f32 %v4035, %v4038
        %v4041 = vadd.f32 %v4036, %v4039
        %s4042 = scalar_lea.vmem [#allocation4], %s4031
        %v4043 = vld [vmem:[%s4042] sm:$0xff]
        %v4044 = vld [vmem:[%s4042 + $0x8] sm:$0xff]
        %v4045 = vmul.f32 %v4043, %v4040
        %v4046 = vmul.f32 %v4044, %v4041
        %v4047 = vsel %vm1303, %v4045, 0.0
        %v4048 = vsel %vm1303, %v4046, 0.0
        %v4049 = vadd.f32 %v4047, %v4048
        %v4050 = vrot.slane %v4049, 4
        %v4051 = vadd.f32 %v4049, %v4050
        %v4052 = vrot.slane %v4051, 2
        %v4053 = vadd.f32 %v4051, %v4052
        %v4054 = vrot.slane %v4053, 1
        %v4055 = vadd.f32 %v4053, %v4054
        %s4056 = sadd.s32 %s3874, 7
        %s4057 = smul.u32 %s4056, 16
        %s4058 = scalar_lea.vmem [#allocation2], %s4057
        %v4059 = vld [vmem:[%s4058] sm:$0xff]
        %v4060 = vld [vmem:[%s4058 + $0x8] sm:$0xff]
        %v4061 = vmul.f32 %v4059, %v4040
        %v4062 = vmul.f32 %v4060, %v4041
        %s4063 = scalar_lea.vmem [#allocation3], %s4057
        %v4064 = vld [vmem:[%s4063] sm:$0xff]
        %v4065 = vld [vmem:[%s4063 + $0x8] sm:$0xff]
        %v4066 = vadd.f32 %v4061, %v4064
        %v4067 = vadd.f32 %v4062, %v4065
        %s4068 = scalar_lea.vmem [#allocation4], %s4057
        %v4069 = vld [vmem:[%s4068] sm:$0xff]
        %v4070 = vld [vmem:[%s4068 + $0x8] sm:$0xff]
        %v4071 = vmul.f32 %v4069, %v4066
        %v4072 = vmul.f32 %v4070, %v4067
        %v4073 = vsel %vm1303, %v4071, 0.0
        %v4074 = vsel %vm1303, %v4072, 0.0
        %v4075 = vadd.f32 %v4073, %v4074
        %v4076 = vrot.slane %v4075, 4
        %v4077 = vadd.f32 %v4075, %v4076
        %v4078 = vrot.slane %v4077, 2
        %v4079 = vadd.f32 %v4077, %v4078
        %v4080 = vrot.slane %v4079, 1
        %v4081 = vadd.f32 %v4079, %v4080
        %vm4082 = vcmask 1040384
        %v4083 = vsel %vm4082, %v3899, %v3925
        %vm4084 = vcmask 1041408
        %v4085 = vsel %vm4084, %v4083, %v3951
        %vm4086 = vcmask 1042432
        %v4087 = vsel %vm4086, %v4085, %v3977
        %vm4088 = vcmask 1043456
        %v4089 = vsel %vm4088, %v4087, %v4003
        %vm4090 = vcmask 1044480
        %v4091 = vsel %vm4090, %v4089, %v4029
        %vm4092 = vcmask 1045504
        %v4093 = vsel %vm4092, %v4091, %v4055
        %vm4094 = vcmask 1046528
        %v4095 = vsel %vm4094, %v4093, %v4081
        %s4096 = scalar_lea.vmem %s460, %s3874
        %4097 = vst.msk [vmem:[%s4096] sm:$0xff] %vm1303, %v4095
      $region57: #{ss2d_k1_forward.8} parent=47 // loop_footer
        %s3871 = sadd.s32 1, %s3867
      $region58: #{ss2d_k1_forward.8} parent=47 // loop_footer_branch
        %3866 = sbr.rel target = $region54
      $region59: #{ss2d_k1_forward.8} parent=47 // loop_exit
        _
      %4098 = vst.msk [vmem:[#allocation5] sm:$0xff] %vm1303, %v3872
      %4099 = vst.msk [vmem:[#allocation5 + $0x8] sm:$0xff] %vm1303, %v3873
      %v4100 = vld [vmem:[%s460] sm:$0xff]
      %v4101 = vld [vmem:[%s460 + $0x8] sm:$0xff]
      %v4102 = vld [vmem:[%s460 + $0x10] sm:$0xff]
      %v4103 = vld [vmem:[%s460 + $0x18] sm:$0xff]
      %v4104 = vld [vmem:[%s460 + $0x20] sm:$0xff]
      %v4105 = vld [vmem:[%s460 + $0x28] sm:$0xff]
      %v4106 = vld [vmem:[%s460 + $0x30] sm:$0xff]
      %v4107 = vld [vmem:[%s460 + $0x38] sm:$0xff]
      %v4108 = vld [vmem:[%s6] sm:$0x1]
      %v4109 = vld [vmem:[%s410] sm:$0xff]
      %v4110 = vld [vmem:[%s410 + $0x8] sm:$0xff]
      %v4111 = vld [vmem:[%s410 + $0x10] sm:$0xff]
      %v4112 = vld [vmem:[%s410 + $0x18] sm:$0xff]
      %v4113 = vld [vmem:[%s410 + $0x20] sm:$0xff]
      %v4114 = vld [vmem:[%s410 + $0x28] sm:$0xff]
      %v4115 = vld [vmem:[%s410 + $0x30] sm:$0xff]
      %v4116 = vld [vmem:[%s410 + $0x38] sm:$0xff]
      %v4118 = vlaneseq
      %v4119 = vshrl.u32 %v4118, 7
      %v4120 = vsub.s32 0, %v4119
      %v4121 = vrot.slane %v4108, %v4120
      %v4123 = vmul.f32 %v4121, %v4109
      %v4124 = vmul.f32 %v4121, %v4110
      %v4125 = vmul.f32 %v4121, %v4111
      %v4126 = vmul.f32 %v4121, %v4112
      %v4127 = vmul.f32 %v4121, %v4113
      %v4128 = vmul.f32 %v4121, %v4114
      %v4129 = vmul.f32 %v4121, %v4115
      %v4130 = vmul.f32 %v4121, %v4116
      %v4131 = vadd.f32 %v4100, %v4123
      %v4132 = vadd.f32 %v4101, %v4124
      %v4133 = vadd.f32 %v4102, %v4125
      %v4134 = vadd.f32 %v4103, %v4126
      %v4135 = vadd.f32 %v4104, %v4127
      %v4136 = vadd.f32 %v4105, %v4128
      %v4137 = vadd.f32 %v4106, %v4129
      %v4138 = vadd.f32 %v4107, %v4130
      %4139 = vst.msk [vmem:[%s460] sm:$0xff] %vm1303, %v4131
      %4140 = vst.msk [vmem:[%s460 + $0x8] sm:$0xff] %vm1303, %v4132
      %4141 = vst.msk [vmem:[%s460 + $0x10] sm:$0xff] %vm1303, %v4133
      %4142 = vst.msk [vmem:[%s460 + $0x18] sm:$0xff] %vm1303, %v4134
      %4143 = vst.msk [vmem:[%s460 + $0x20] sm:$0xff] %vm1303, %v4135
      %4144 = vst.msk [vmem:[%s460 + $0x28] sm:$0xff] %vm1303, %v4136
      %4145 = vst.msk [vmem:[%s460 + $0x30] sm:$0xff] %vm1303, %v4137
      %4146 = vst.msk [vmem:[%s460 + $0x38] sm:$0xff] %vm1303, %v4138
      %s4147 = smul.u32 8, %s23
      %p4148 = scmp.lt.s32.totalorder %s22, 1
      %s4149 = scalar_select %p4148, %s22, 1
      %p4150 = scmp.lt.s32.totalorder %s4147, 7
      %s4151 = scalar_select %p4150, %s4147, 7
      %s4152 = smul.addr %s4149, 8
      %s4153 = sadd.s32 %s4151, %s4152
      %s4154 = smul.addr %s4153, 8
      %s4155 = scalar_lea.vmem %s7, %s4154
      // Predicated region
      $region60: #{ss2d_k1_forward.8} parent=47 // pred_check
        %p4156 = pneg %p232
      $region61: #{ss2d_k1_forward.8} parent=47 // pred_check_branch
        %4158 = sbr.rel (%p4156) target = $region63
      $region62: #{ss2d_k1_forward.8} parent=47 // pred_region
        %s4159 = smul.u32 8, %s23
      $region63: #{ss2d_k1_forward.8} parent=47 // pred_fallthru
        _
    $region48: #{ss2d_k1_forward.8} parent=5 // pred_fallthru
      _
    %p4160 = scmp.le.s32.totalorder 2, %s13
    // Predicated region
    $region64: #{ss2d_k1_forward.8} parent=5 // pred_check
      %p4161 = pneg %p4160
    $region65: #{ss2d_k1_forward.8} parent=5 // pred_check_branch
      %4163 = sbr.rel (%p4161) target = $region67
    $region66: #{ss2d_k1_forward.8} parent=5 // pred_region
      %s4164 = ssub.s32 %s13, 2
      // Predicated region
      $region68: #{ss2d_k1_forward.8} parent=66 // pred_check
        %p4165 = pneg %p238
      $region69: #{ss2d_k1_forward.8} parent=66 // pred_check_branch
        %4167 = sbr.rel (%p4165) target = $region71
      $region70: #{ss2d_k1_forward.8} parent=66 // pred_region
        %s4168 = smul.u32 8, %s25
        %p4169 = scmp.lt.s32.totalorder %s24, 1
        %s4170 = scalar_select %p4169, %s24, 1
        %p4171 = scmp.lt.s32.totalorder %s4168, 7
        %s4172 = scalar_select %p4171, %s4168, 7
        %s4173 = smul.addr %s4170, 8
        %s4174 = sadd.s32 %s4172, %s4173
        %s4175 = smul.addr %s4174, 8
        %s4176 = scalar_lea.vmem %s7, %s4175
      $region71: #{ss2d_k1_forward.8} parent=66 // pred_fallthru
        _
    $region67: #{ss2d_k1_forward.8} parent=5 // pred_fallthru
      _
  $region6: #{ss2d_k1_forward.8} parent=0 // loop_footer
    %s17 = sadd.s32 1, %s13
  $region7: #{ss2d_k1_forward.8} parent=0 // loop_footer_branch
    %12 = sbr.rel target = $region3
  $region8: #{ss2d_k1_forward.8} parent=0 // loop_exit
    _

</llo_original>
